<compile_context>
chip_gen: v5e
topology: v5e:2x2
jax: 0.10.0
libtpu: 0.0.40
codegen_flags: <defaults>
</compile_context>

<pallas_src>
import jax
import jax.numpy as jnp
from jax.experimental import pallas as pl
from jax.experimental.pallas import tpu as pltpu


# ---------------------------------------------------------------------------
# helpers
# ---------------------------------------------------------------------------
def _block_diag_mask(B, P, dtype):
    """(B, B*P) 0/1 mask with ones at [b, b*P:(b+1)*P] (hoisted out of kernel)."""
    col = jax.lax.broadcasted_iota(jnp.int32, (B, B * P), 1)
    row = jax.lax.broadcasted_iota(jnp.int32, (B, B * P), 0)
    return jnp.logical_and(col >= row * P, col < (row + 1) * P).astype(dtype)


def _vmem_resident():
    # Unblocked VMEM spec: whole array staged into VMEM once, single buffer
    # (no per-grid-step double-buffering for constant operands).
    return pl.BlockSpec(memory_space=pltpu.MemorySpace.VMEM)


# ---------------------------------------------------------------------------
# fused recurrent kernel: grid = (T,)
# ---------------------------------------------------------------------------
def decoder_kernel(
    # inputs
    enc_ref,                  # (1, B*P, E) bf16 -- streamed, this timestep
    h0_ref, c0_ref,           # (B, D) f32       -- initial LSTM state
    mask_ref,                 # (B, B*P) bf16    -- block-diag selection mask
    w_ea_ref, b_ea_ref,       # encoder_att  (E, A) bf16 / (1, A) f32
    w_h_ref, b_h_ref,         # fused [decoder_att | f_beta | LSTM hidden] (D, A+E+4D)
    w_fa_ref, b_fa_ref,       # full_att weight (1, A) f32 / bias (1,1) in SMEM
    w_ih_ref,                 # LSTM input weights (E, 4D) bf16
    # outputs
    h_out_ref, alpha_ref,     # (1, B, D) f32 / (1, B, P) f32
    # scratch (persists across the whole T grid)
    h_scr, c_scr,
):
    t = pl.program_id(0)
    f32 = jnp.float32
    bf16 = jnp.bfloat16

    B, D = h_scr.shape
    P = alpha_ref.shape[-1]
    E, A = w_ea_ref.shape

    # ---- t == 0: load the initial hidden/cell state (computed in wrapper)
    @pl.when(t == 0)
    def _init():
        h_scr[...] = h0_ref[...]
        c_scr[...] = c0_ref[...]

    enc = enc_ref[0]                        # (B*P, E) bf16, this timestep
    h = h_scr[...]                          # (B, D) f32
    c = c_scr[...]
    h_b = h.astype(bf16)

    # ---- ONE fused matmul for every h-consumer (decoder_att | f_beta | w_hh)
    hproj = jnp.dot(h_b, w_h_ref[...], preferred_element_type=f32) + b_h_ref[...]
    att2 = hproj[:, :A]                           # decoder_att(h)        (B, A)
    gate = jax.nn.sigmoid(hproj[:, A:A + E])      # sigmoid(f_beta(h))    (B, E)
    gates_h = hproj[:, A + E:]                    # h @ w_hh + b_lstm     (B, 4D)

    # ---- attention scores: encoder_att on the MXU, full_att on VPU/XLU
    att1 = (jnp.dot(enc, w_ea_ref[...], preferred_element_type=f32)
            + b_ea_ref[...])                      # (B*P, A)
    act = jnp.maximum(att1.reshape(B, P, A) + att2[:, None, :], 0.0)
    # full_att Linear(A, 1): lane reduce kept f32 (v5e has no bf16 VPU).
    scores = (jnp.sum(act * w_fa_ref[...][None, :, :], axis=-1)
              + b_fa_ref[0, 0])                   # (B, P)

    # softmax over pixels (exact normalization: alphas feed the clicking argmax)
    m = jnp.max(scores, axis=-1, keepdims=True)
    e = jnp.exp(scores - m)
    alpha = e / jnp.sum(e, axis=-1, keepdims=True)     # (B, P)
    alpha_ref[0] = alpha

    # ---- attention-weighted encoding as ONE 2-D MXU matmul:
    # (B, B*P) block-diagonal alpha @ (B*P, E) flattened encoder features.
    rep = jnp.concatenate([alpha.astype(bf16)] * B, axis=1)   # (B, B*P)
    sel = mask_ref[...] * rep                                  # zero off-diagonal
    awe = jnp.dot(sel, enc, preferred_element_type=f32)        # (B, E)
    awe = gate * awe

    # ---- LSTMCell: gates = awe @ w_ih + (h @ w_hh + b_ih + b_hh) [in gates_h]
    gates = (jnp.dot(awe.astype(bf16), w_ih_ref[...], preferred_element_type=f32)
             + gates_h)                                        # (B, 4D)
    i_g = jax.nn.sigmoid(gates[:, 0 * D:1 * D])
    f_g = jax.nn.sigmoid(gates[:, 1 * D:2 * D])
    g_g = jnp.tanh(gates[:, 2 * D:3 * D])
    o_g = jax.nn.sigmoid(gates[:, 3 * D:4 * D])
    c_new = f_g * c + i_g * g_g
    h_new = o_g * jnp.tanh(c_new)

    h_scr[...] = h_new
    c_scr[...] = c_new
    h_out_ref[0] = h_new


# ---------------------------------------------------------------------------
# wrapper: one pallas_call for the recurrence, one XLA matmul for fc
# ---------------------------------------------------------------------------
@jax.jit
def decoder_forward(enc_init, enc_outs, params):
    """enc_init: (B, P, E) encoder output used by init_hidden_state.
    enc_outs: (T, B, P, E) per-timestep encoder outputs.
    Returns predictions (B, T, V) and alphas (B, T, P)."""
    T, B, P, E = enc_outs.shape
    D, V = params["w_fc"].shape
    f32 = jnp.float32
    bf16 = jnp.bfloat16

    # init_hidden_state: tiny (B, E) @ (E, 2D) matmul -> plain XLA (keeps the
    # big init encoder block out of kernel VMEM entirely).
    mean_enc = jnp.mean(enc_init, axis=1).astype(bf16)
    hc0 = (jnp.dot(mean_enc, params["w_init"], preferred_element_type=f32)
           + params["b_init"])
    h0, c0 = hc0[:, :D], hc0[:, D:]

    enc = enc_outs.astype(bf16).reshape(T, B * P, E)
    mask = _block_diag_mask(B, P, bf16)

    in_specs = [
        pl.BlockSpec((1, B * P, E), lambda t: (t, 0, 0)),   # enc: streamed over T
        _vmem_resident(), _vmem_resident(),                 # h0, c0
        _vmem_resident(),                                   # block-diag mask
        _vmem_resident(), _vmem_resident(),                 # w_ea, b_ea
        _vmem_resident(), _vmem_resident(),                 # fused w_h, b_h
        _vmem_resident(),                                   # w_fa
        pl.BlockSpec(memory_space=pltpu.MemorySpace.SMEM),  # full_att bias (1,1)
        _vmem_resident(),                                   # w_ih
    ]
    out_specs = (
        pl.BlockSpec((1, B, D), lambda t: (t, 0, 0)),       # h_t
        pl.BlockSpec((1, B, P), lambda t: (t, 0, 0)),       # alpha_t
    )

    h_seq, alphas = pl.pallas_call(
        decoder_kernel,
        grid=(T,),
        in_specs=in_specs,
        out_specs=out_specs,
        out_shape=(jax.ShapeDtypeStruct((T, B, D), f32),
                   jax.ShapeDtypeStruct((T, B, P), f32)),
        scratch_shapes=[pltpu.VMEM((B, D), f32),            # h carry
                        pltpu.VMEM((B, D), f32)],           # c carry
        compiler_params=pltpu.CompilerParams(
            dimension_semantics=("arbitrary",),              # serial recurrence
            vmem_limit_bytes=32 * 1024 * 1024),
    )(enc, h0, c0, mask,
      params["w_ea"], params["b_ea"],
      params["w_h"], params["b_h"],
      params["w_fa"], params["b_fa"],
      params["w_ih"])

    # fc over the vocab: one (T*B, D) @ (D, V) matmul outside the kernel.
    # TODO(synk): nn.Dropout(p=0.5) is eval-mode identity here; train-mode
    # parity would need PRNG masking.
    preds = (jnp.dot(h_seq.reshape(T * B, D).astype(bf16), params["w_fc"],
                     preferred_element_type=f32) + params["b_fc"])
    preds = preds.reshape(T, B, V)
    return jnp.transpose(preds, (1, 0, 2)), jnp.transpose(alphas, (1, 0, 2))


# ---------------------------------------------------------------------------
# parameters (shapes per DecoderWithAttention.__init__), stored as (in, out)
# ---------------------------------------------------------------------------
def make_params(key, encoder_dim, decoder_dim, attention_dim, vocab_size):
    E, D, A, V = encoder_dim, decoder_dim, attention_dim, vocab_size
    ks = jax.random.split(key, 17)

    def lin(k, fan_in, shape):
        bound = 1.0 / jnp.sqrt(fan_in)
        return jax.random.uniform(k, shape, jnp.float32, -bound, bound)

    return {
        # Attention
        "w_ea": lin(ks[0], E, (E, A)), "b_ea": lin(ks[1], E, (1, A)),
        "w_da": lin(ks[2], D, (D, A)), "b_da": lin(ks[3], D, (1, A)),
        "w_fa": lin(ks[4], A, (1, A)), "b_fa": lin(ks[5], A, (1, 1)),
        # init_h / init_c
        "w_init_h": lin(ks[6], E, (E, D)), "b_init_h": lin(ks[7], E, (1, D)),
        "w_init_c": lin(ks[8], E, (E, D)), "b_init_c": lin(ks[9], E, (1, D)),
        # f_beta
        "w_fb": lin(ks[10], D, (D, E)), "b_fb": lin(ks[11], D, (1, E)),
        # LSTMCell(encoder_dim -> decoder_dim), stored transposed (in, 4D)
        "w_ih": lin(ks[12], D, (E, 4 * D)), "w_hh": lin(ks[13], D, (D, 4 * D)),
        "b_ih": lin(ks[14], D, (1, 4 * D)), "b_hh": lin(ks[15], D, (1, 4 * D)),
        # fc: uniform(-0.1, 0.1) weight, zero bias (init_weights)
        "w_fc": jax.random.uniform(ks[16], (D, V), jnp.float32, -0.1, 0.1),
        "b_fc": jnp.zeros((1, V), jnp.float32),
    }


def prepare_kernel_params(raw):
    """Fuse h-consuming weights / init weights, bf16 matmul operands."""
    bf = jnp.bfloat16
    return {
        "w_ea": raw["w_ea"].astype(bf), "b_ea": raw["b_ea"],
        "w_fa": raw["w_fa"], "b_fa": raw["b_fa"],
        # fused [decoder_att | f_beta | LSTM hidden half], bias includes b_lstm
        "w_h": jnp.concatenate([raw["w_da"], raw["w_fb"], raw["w_hh"]],
                               axis=1).astype(bf),
        "b_h": jnp.concatenate([raw["b_da"], raw["b_fb"],
                                raw["b_ih"] + raw["b_hh"]], axis=1),
        "w_ih": raw["w_ih"].astype(bf),
        # fused init_h | init_c
        "w_init": jnp.concatenate([raw["w_init_h"], raw["w_init_c"]],
                                  axis=1).astype(bf),
        "b_init": jnp.concatenate([raw["b_init_h"], raw["b_init_c"]], axis=1),
        "w_fc": raw["w_fc"].astype(bf), "b_fc": raw["b_fc"],
    }


# ---------------------------------------------------------------------------
# Pure-JAX reference (same bf16 matmul operands) for correctness checking
# ---------------------------------------------------------------------------
def init_state_ref(enc_init, raw):
    bf = jnp.bfloat16
    f32 = jnp.float32
    m_b = jnp.mean(enc_init, axis=1).astype(bf)
    h = jnp.dot(m_b, raw["w_init_h"].astype(bf),
                preferred_element_type=f32) + raw["b_init_h"]
    c = jnp.dot(m_b, raw["w_init_c"].astype(bf),
                preferred_element_type=f32) + raw["b_init_c"]
    return h, c


def decode_step_ref(enc_bf, h, c, raw):
    B, P, E = enc_bf.shape
    D = h.shape[-1]
    bf = jnp.bfloat16
    f32 = jnp.float32
    h_b = h.astype(bf)
    att1 = (jnp.dot(enc_bf.reshape(B * P, E), raw["w_ea"].astype(bf),
                    preferred_element_type=f32) + raw["b_ea"]).reshape(B, P, -1)
    att2 = jnp.dot(h_b, raw["w_da"].astype(bf),
                   preferred_element_type=f32) + raw["b_da"]
    act = jnp.maximum(att1 + att2[:, None, :], 0.0)
    scores = jnp.sum(act * raw["w_fa"][None, :, :], axis=-1) + raw["b_fa"][0, 0]
    alpha = jax.nn.softmax(scores, axis=-1)
    awe = jnp.einsum("bp,bpe->be",
                     alpha.astype(bf).astype(f32), enc_bf.astype(f32))
    gate = jax.nn.sigmoid(
        jnp.dot(h_b, raw["w_fb"].astype(bf), preferred_element_type=f32)
        + raw["b_fb"])
    awe = gate * awe
    x = jnp.concatenate([awe.astype(bf), h_b], axis=-1)
    w_lstm = jnp.concatenate([raw["w_ih"], raw["w_hh"]], axis=0).astype(bf)
    gates = (jnp.dot(x, w_lstm, preferred_element_type=f32)
             + raw["b_ih"] + raw["b_hh"])
    i_g = jax.nn.sigmoid(gates[:, 0 * D:1 * D])
    f_g = jax.nn.sigmoid(gates[:, 1 * D:2 * D])
    g_g = jnp.tanh(gates[:, 2 * D:3 * D])
    o_g = jax.nn.sigmoid(gates[:, 3 * D:4 * D])
    c_new = f_g * c + i_g * g_g
    h_new = o_g * jnp.tanh(c_new)
    preds = (jnp.dot(h_new.astype(bf), raw["w_fc"].astype(bf),
                     preferred_element_type=f32) + raw["b_fc"])
    return preds, alpha, h_new, c_new


# ---------------------------------------------------------------------------
if __name__ == "__main__":
    B = 8             # batch (multiple of 8 -> full sublanes)
    alpha_size = 16   # encoder spatial size -> num_pixels = 256 (lane aligned)
    P = alpha_size * alpha_size
    E = 128           # encoder_dim
    D = 128           # decoder_dim
    A = 128           # attention_dim
    V = 256           # vocab_size (lane aligned)
    T = 4             # time_steps

    key = jax.random.PRNGKey(0)
    k_par, k_enc0, k_enc = jax.random.split(key, 3)
    raw = make_params(k_par, E, D, A, V)
    params = prepare_kernel_params(raw)

    # Stand-ins for the external encoder(preprocessBatch(...)) outputs:
    # enc_init <- encoder output of the binary-mask image (init_hidden_state),
    # enc_outs <- encoder outputs of the blur/click images at each timestep.
    enc_init = jax.random.normal(k_enc0, (B, P, E), jnp.float32)
    enc_outs = jax.random.normal(k_enc, (T, B, P, E), jnp.float32)

    predictions, alphas = decoder_forward(enc_init, enc_outs, params)
    predictions = jax.block_until_ready(predictions)
    alphas = jax.block_until_ready(alphas)
    assert predictions.shape == (B, T, V)
    assert alphas.shape == (B, T, P)

    # Correctness check against the pure-JAX reference.
    enc_bf = enc_outs.astype(jnp.bfloat16)
    h_r, c_r = init_state_ref(enc_init, raw)
    preds_r, alpha_r = [], []
    for t in range(T):
        pr, al, h_r, c_r = decode_step_ref(enc_bf[t], h_r, c_r, raw)
        preds_r.append(pr)
        alpha_r.append(al)
    preds_r = jnp.stack(preds_r, axis=1)   # (B, T, V)
    alpha_r = jnp.stack(alpha_r, axis=1)   # (B, T, P)

    # Tolerances account for bf16 matmul operands (f32 accumulation).
    assert jnp.allclose(predictions, preds_r, atol=1e-2, rtol=1e-2), \
        float(jnp.max(jnp.abs(predictions - preds_r)))
    assert jnp.allclose(alphas, alpha_r, atol=1e-2, rtol=1e-2), \
        float(jnp.max(jnp.abs(alphas - alpha_r)))

    print("KERNEL_OK")
</pallas_src>

<mosaic_0001>
module attributes {stable_mosaic.version = 11 : i64} {
  func.func @decoder_kernel(%arg0: i32, %arg1: memref<1x2048x128xbf16, #tpu.memory_space<vmem>>, %arg2: memref<8x128xf32, #tpu.memory_space<vmem>>, %arg3: memref<8x128xf32, #tpu.memory_space<vmem>>, %arg4: memref<8x2048xbf16, #tpu.memory_space<vmem>>, %arg5: memref<128x128xbf16, #tpu.memory_space<vmem>>, %arg6: memref<1x128xf32, #tpu.memory_space<vmem>>, %arg7: memref<128x768xbf16, #tpu.memory_space<vmem>>, %arg8: memref<1x768xf32, #tpu.memory_space<vmem>>, %arg9: memref<1x128xf32, #tpu.memory_space<vmem>>, %arg10: memref<1x1xf32, #tpu.memory_space<smem>>, %arg11: memref<128x512xbf16, #tpu.memory_space<vmem>>, %arg12: memref<1x8x128xf32, #tpu.memory_space<vmem>>, %arg13: memref<1x8x256xf32, #tpu.memory_space<vmem>>, %arg14: memref<8x128xf32, #tpu.memory_space<vmem>>, %arg15: memref<8x128xf32, #tpu.memory_space<vmem>>) attributes {dimension_semantics = [#tpu.dimension_semantics<arbitrary>], iteration_bounds = array<i64: 4>, scalar_prefetch = 0 : i64, scratch_operands = 2 : i64, tpu.core_type = #tpu.core_type<tc>, window_params = [{transform_indices = @transform_0, window_bounds = array<i64: 1, 2048, 128>}, {pipeline_mode = #tpu.pipeline_mode<synchronous>, transform_indices = @transform_1, window_bounds = array<i64: 8, 128>}, {pipeline_mode = #tpu.pipeline_mode<synchronous>, transform_indices = @transform_2, window_bounds = array<i64: 8, 128>}, {pipeline_mode = #tpu.pipeline_mode<synchronous>, transform_indices = @transform_3, window_bounds = array<i64: 8, 2048>}, {pipeline_mode = #tpu.pipeline_mode<synchronous>, transform_indices = @transform_4, window_bounds = array<i64: 128, 128>}, {pipeline_mode = #tpu.pipeline_mode<synchronous>, transform_indices = @transform_5, window_bounds = array<i64: 1, 128>}, {pipeline_mode = #tpu.pipeline_mode<synchronous>, transform_indices = @transform_6, window_bounds = array<i64: 128, 768>}, {pipeline_mode = #tpu.pipeline_mode<synchronous>, transform_indices = @transform_7, window_bounds = array<i64: 1, 768>}, {pipeline_mode = #tpu.pipeline_mode<synchronous>, transform_indices = @transform_8, window_bounds = array<i64: 1, 128>}, {transform_indices = @transform_9, window_bounds = array<i64: 1, 1>}, {pipeline_mode = #tpu.pipeline_mode<synchronous>, transform_indices = @transform_10, window_bounds = array<i64: 128, 512>}, {transform_indices = @transform_11, window_bounds = array<i64: 1, 8, 128>}, {transform_indices = @transform_12, window_bounds = array<i64: 1, 8, 256>}]} {
    %c0_i32 = arith.constant 0 : i32
    %0 = arith.cmpi eq, %arg0, %c0_i32 : i32
    %1 = arith.extui %0 : i1 to i32
    %c0_i32_0 = arith.constant 0 : i32
    %2 = arith.cmpi ne, %1, %c0_i32_0 : i32
    scf.if %2 {
      %c0_44 = arith.constant 0 : index
      %c0_45 = arith.constant 0 : index
      %92 = vector.load %arg2[%c0_44, %c0_45] : memref<8x128xf32, #tpu.memory_space<vmem>>, vector<8x128xf32>
      %c0_46 = arith.constant 0 : index
      %c0_47 = arith.constant 0 : index
      %93 = vector.load %arg14[%c0_46, %c0_47] : memref<8x128xf32, #tpu.memory_space<vmem>>, vector<8x128xf32>
      tpu.vector_store %arg14[%c0_46, %c0_47], %92 {strides = array<i32>} : memref<8x128xf32, #tpu.memory_space<vmem>>, vector<8x128xf32>,
      %c0_48 = arith.constant 0 : index
      %c0_49 = arith.constant 0 : index
      %94 = vector.load %arg3[%c0_48, %c0_49] : memref<8x128xf32, #tpu.memory_space<vmem>>, vector<8x128xf32>
      %c0_50 = arith.constant 0 : index
      %c0_51 = arith.constant 0 : index
      %95 = vector.load %arg15[%c0_50, %c0_51] : memref<8x128xf32, #tpu.memory_space<vmem>>, vector<8x128xf32>
      tpu.vector_store %arg15[%c0_50, %c0_51], %94 {strides = array<i32>} : memref<8x128xf32, #tpu.memory_space<vmem>>, vector<8x128xf32>,
    } else {
    }
    %c0 = arith.constant 0 : index
    %c0_1 = arith.constant 0 : index
    %c0_2 = arith.constant 0 : index
    %3 = vector.load %arg1[%c0, %c0_1, %c0_2] : memref<1x2048x128xbf16, #tpu.memory_space<vmem>>, vector<1x2048x128xbf16>
    %4 = vector.shape_cast %3 : vector<1x2048x128xbf16> to vector<2048x128xbf16>
    %c0_3 = arith.constant 0 : index
    %c0_4 = arith.constant 0 : index
    %5 = vector.load %arg14[%c0_3, %c0_4] : memref<8x128xf32, #tpu.memory_space<vmem>>, vector<8x128xf32>
    %c0_5 = arith.constant 0 : index
    %c0_6 = arith.constant 0 : index
    %6 = vector.load %arg15[%c0_5, %c0_6] : memref<8x128xf32, #tpu.memory_space<vmem>>, vector<8x128xf32>
    %7 = arith.truncf %5 : vector<8x128xf32> to vector<8x128xbf16>
    %c0_7 = arith.constant 0 : index
    %c0_8 = arith.constant 0 : index
    %8 = vector.load %arg7[%c0_7, %c0_8] : memref<128x768xbf16, #tpu.memory_space<vmem>>, vector<128x768xbf16>
    %cst = arith.constant dense<0.000000e+00> : vector<8x768xf32>
    %9 = tpu.matmul %7, %8, %cst {dimension_numbers = #tpu.dot_dimension_numbers<[1], [0], [0], [1], [0, 0, 1, 1], [], []>} : vector<8x128xbf16>, vector<128x768xbf16>, vector<8x768xf32> -> vector<8x768xf32>
    %c0_9 = arith.constant 0 : index
    %c0_10 = arith.constant 0 : index
    %10 = vector.load %arg8[%c0_9, %c0_10] : memref<1x768xf32, #tpu.memory_space<vmem>>, vector<1x768xf32>
    %11 = vector.broadcast %10 : vector<1x768xf32> to vector<8x768xf32>
    %12 = arith.addf %9, %11 : vector<8x768xf32>
    %13 = vector.extract_strided_slice %12 {offsets = [0, 0], sizes = [8, 128], strides = [1, 1]} : vector<8x768xf32> to vector<8x128xf32>
    %14 = vector.extract_strided_slice %12 {offsets = [0, 128], sizes = [8, 128], strides = [1, 1]} : vector<8x768xf32> to vector<8x128xf32>
    %15 = arith.negf %14 : vector<8x128xf32>
    %16 = math.exp %15 : vector<8x128xf32>
    %cst_11 = arith.constant 1.000000e+00 : f32
    %17 = vector.broadcast %cst_11 : f32 to vector<8x128xf32>
    %18 = arith.addf %17, %16 : vector<8x128xf32>
    %19 = arith.divf %17, %18 : vector<8x128xf32>
    %20 = vector.extract_strided_slice %12 {offsets = [0, 256], sizes = [8, 512], strides = [1, 1]} : vector<8x768xf32> to vector<8x512xf32>
    %c0_12 = arith.constant 0 : index
    %c0_13 = arith.constant 0 : index
    %21 = vector.load %arg5[%c0_12, %c0_13] : memref<128x128xbf16, #tpu.memory_space<vmem>>, vector<128x128xbf16>
    %cst_14 = arith.constant dense<0.000000e+00> : vector<2048x128xf32>
    %22 = tpu.matmul %4, %21, %cst_14 {dimension_numbers = #tpu.dot_dimension_numbers<[1], [0], [0], [1], [0, 0, 1, 1], [], []>} : vector<2048x128xbf16>, vector<128x128xbf16>, vector<2048x128xf32> -> vector<2048x128xf32>
    %c0_15 = arith.constant 0 : index
    %c0_16 = arith.constant 0 : index
    %23 = vector.load %arg6[%c0_15, %c0_16] : memref<1x128xf32, #tpu.memory_space<vmem>>, vector<1x128xf32>
    %24 = vector.broadcast %23 : vector<1x128xf32> to vector<2048x128xf32>
    %25 = arith.addf %22, %24 : vector<2048x128xf32>
    %26 = vector.shape_cast %25 : vector<2048x128xf32> to vector<8x256x128xf32>
    %27 = vector.shape_cast %13 : vector<8x128xf32> to vector<8x1x128xf32>
    %28 = vector.broadcast %27 : vector<8x1x128xf32> to vector<8x256x128xf32>
    %29 = arith.addf %26, %28 : vector<8x256x128xf32>
    %cst_17 = arith.constant 0.000000e+00 : f32
    %30 = vector.broadcast %cst_17 : f32 to vector<8x256x128xf32>
    %31 = arith.maximumf %29, %30 : vector<8x256x128xf32>
    %c0_18 = arith.constant 0 : index
    %c0_19 = arith.constant 0 : index
    %32 = vector.load %arg9[%c0_18, %c0_19] : memref<1x128xf32, #tpu.memory_space<vmem>>, vector<1x128xf32>
    %33 = vector.shape_cast %32 : vector<1x128xf32> to vector<1x1x128xf32>
    %34 = vector.broadcast %33 : vector<1x1x128xf32> to vector<8x256x128xf32>
    %35 = arith.mulf %31, %34 : vector<8x256x128xf32>
    %cst_20 = arith.constant dense<0.000000e+00> : vector<8x256xf32>
    %36 = vector.multi_reduction <add>, %35, %cst_20 [2] : vector<8x256x128xf32> to vector<8x256xf32>
    %c0_21 = arith.constant 0 : index
    %c0_22 = arith.constant 0 : index
    %37 = memref.load %arg10[%c0_21, %c0_22] : memref<1x1xf32, #tpu.memory_space<smem>>
    %38 = vector.broadcast %37 : f32 to vector<8x256xf32>
    %39 = arith.addf %36, %38 : vector<8x256xf32>
    %cst_23 = arith.constant dense<0xFF800000> : vector<8xf32>
    %40 = vector.multi_reduction <maximumf>, %39, %cst_23 [1] : vector<8x256xf32> to vector<8xf32>
    %41 = vector.shape_cast %40 : vector<8xf32> to vector<8x1xf32>
    %42 = vector.broadcast %41 : vector<8x1xf32> to vector<8x256xf32>
    %43 = arith.subf %39, %42 : vector<8x256xf32>
    %44 = math.exp %43 : vector<8x256xf32>
    %cst_24 = arith.constant dense<0.000000e+00> : vector<8xf32>
    %45 = vector.multi_reduction <add>, %44, %cst_24 [1] : vector<8x256xf32> to vector<8xf32>
    %46 = vector.shape_cast %45 : vector<8xf32> to vector<8x1xf32>
    %47 = vector.broadcast %46 : vector<8x1xf32> to vector<8x256xf32>
    %48 = arith.divf %44, %47 : vector<8x256xf32>
    %c0_25 = arith.constant 0 : index
    %c0_26 = arith.constant 0 : index
    %c0_27 = arith.constant 0 : index
    %49 = vector.load %arg13[%c0_25, %c0_26, %c0_27] : memref<1x8x256xf32, #tpu.memory_space<vmem>>, vector<1x8x256xf32>
    %50 = vector.shape_cast %49 : vector<1x8x256xf32> to vector<8x256xf32>
    %51 = vector.shape_cast %48 : vector<8x256xf32> to vector<1x8x256xf32>
    tpu.vector_store %arg13[%c0_25, %c0_26, %c0_27], %51 {strides = array<i32>} : memref<1x8x256xf32, #tpu.memory_space<vmem>>, vector<1x8x256xf32>,
    %52 = arith.truncf %48 : vector<8x256xf32> to vector<8x256xbf16>
    %53 = tpu.concatenate %52, %52, %52, %52, %52, %52, %52, %52 in 1 : vector<8x256xbf16>, vector<8x256xbf16>, vector<8x256xbf16>, vector<8x256xbf16>, vector<8x256xbf16>, vector<8x256xbf16>, vector<8x256xbf16>, vector<8x256xbf16> -> vector<8x2048xbf16>
    %c0_28 = arith.constant 0 : index
    %c0_29 = arith.constant 0 : index
    %54 = vector.load %arg4[%c0_28, %c0_29] : memref<8x2048xbf16, #tpu.memory_space<vmem>>, vector<8x2048xbf16>
    %55 = arith.mulf %54, %53 : vector<8x2048xbf16>
    %cst_30 = arith.constant dense<0.000000e+00> : vector<8x128xf32>
    %56 = tpu.matmul %55, %4, %cst_30 {dimension_numbers = #tpu.dot_dimension_numbers<[1], [0], [0], [1], [0, 0, 1, 1], [], []>} : vector<8x2048xbf16>, vector<2048x128xbf16>, vector<8x128xf32> -> vector<8x128xf32>
    %57 = arith.mulf %19, %56 : vector<8x128xf32>
    %58 = arith.truncf %57 : vector<8x128xf32> to vector<8x128xbf16>
    %c0_31 = arith.constant 0 : index
    %c0_32 = arith.constant 0 : index
    %59 = vector.load %arg11[%c0_31, %c0_32] : memref<128x512xbf16, #tpu.memory_space<vmem>>, vector<128x512xbf16>
    %cst_33 = arith.constant dense<0.000000e+00> : vector<8x512xf32>
    %60 = tpu.matmul %58, %59, %cst_33 {dimension_numbers = #tpu.dot_dimension_numbers<[1], [0], [0], [1], [0, 0, 1, 1], [], []>} : vector<8x128xbf16>, vector<128x512xbf16>, vector<8x512xf32> -> vector<8x512xf32>
    %61 = arith.addf %60, %20 : vector<8x512xf32>
    %62 = vector.extract_strided_slice %61 {offsets = [0, 0], sizes = [8, 128], strides = [1, 1]} : vector<8x512xf32> to vector<8x128xf32>
    %63 = arith.negf %62 : vector<8x128xf32>
    %64 = math.exp %63 : vector<8x128xf32>
    %cst_34 = arith.constant 1.000000e+00 : f32
    %65 = vector.broadcast %cst_34 : f32 to vector<8x128xf32>
    %66 = arith.addf %65, %64 : vector<8x128xf32>
    %67 = arith.divf %65, %66 : vector<8x128xf32>
    %68 = vector.extract_strided_slice %61 {offsets = [0, 128], sizes = [8, 128], strides = [1, 1]} : vector<8x512xf32> to vector<8x128xf32>
    %69 = arith.negf %68 : vector<8x128xf32>
    %70 = math.exp %69 : vector<8x128xf32>
    %cst_35 = arith.constant 1.000000e+00 : f32
    %71 = vector.broadcast %cst_35 : f32 to vector<8x128xf32>
    %72 = arith.addf %71, %70 : vector<8x128xf32>
    %73 = arith.divf %71, %72 : vector<8x128xf32>
    %74 = vector.extract_strided_slice %61 {offsets = [0, 256], sizes = [8, 128], strides = [1, 1]} : vector<8x512xf32> to vector<8x128xf32>
    %75 = math.tanh %74 : vector<8x128xf32>
    %76 = vector.extract_strided_slice %61 {offsets = [0, 384], sizes = [8, 128], strides = [1, 1]} : vector<8x512xf32> to vector<8x128xf32>
    %77 = arith.negf %76 : vector<8x128xf32>
    %78 = math.exp %77 : vector<8x128xf32>
    %cst_36 = arith.constant 1.000000e+00 : f32
    %79 = vector.broadcast %cst_36 : f32 to vector<8x128xf32>
    %80 = arith.addf %79, %78 : vector<8x128xf32>
    %81 = arith.divf %79, %80 : vector<8x128xf32>
    %82 = arith.mulf %73, %6 : vector<8x128xf32>
    %83 = arith.mulf %67, %75 : vector<8x128xf32>
    %84 = arith.addf %82, %83 : vector<8x128xf32>
    %85 = math.tanh %84 : vector<8x128xf32>
    %86 = arith.mulf %81, %85 : vector<8x128xf32>
    %c0_37 = arith.constant 0 : index
    %c0_38 = arith.constant 0 : index
    %87 = vector.load %arg14[%c0_37, %c0_38] : memref<8x128xf32, #tpu.memory_space<vmem>>, vector<8x128xf32>
    tpu.vector_store %arg14[%c0_37, %c0_38], %86 {strides = array<i32>} : memref<8x128xf32, #tpu.memory_space<vmem>>, vector<8x128xf32>,
    %c0_39 = arith.constant 0 : index
    %c0_40 = arith.constant 0 : index
    %88 = vector.load %arg15[%c0_39, %c0_40] : memref<8x128xf32, #tpu.memory_space<vmem>>, vector<8x128xf32>
    tpu.vector_store %arg15[%c0_39, %c0_40], %84 {strides = array<i32>} : memref<8x128xf32, #tpu.memory_space<vmem>>, vector<8x128xf32>,
    %c0_41 = arith.constant 0 : index
    %c0_42 = arith.constant 0 : index
    %c0_43 = arith.constant 0 : index
    %89 = vector.load %arg12[%c0_41, %c0_42, %c0_43] : memref<1x8x128xf32, #tpu.memory_space<vmem>>, vector<1x8x128xf32>
    %90 = vector.shape_cast %89 : vector<1x8x128xf32> to vector<8x128xf32>
    %91 = vector.shape_cast %86 : vector<8x128xf32> to vector<1x8x128xf32>
    tpu.vector_store %arg12[%c0_41, %c0_42, %c0_43], %91 {strides = array<i32>} : memref<1x8x128xf32, #tpu.memory_space<vmem>>, vector<1x8x128xf32>,
    return
  }
  func.func @transform_0(%arg0: i32) -> (i32, i32, i32) {
    %c0_i32 = arith.constant 0 : i32
    %c0_i32_0 = arith.constant 0 : i32
    %c0_i32_1 = arith.constant 0 : i32
    return %arg0, %c0_i32, %c0_i32_0 : i32, i32, i32
  }
  func.func @transform_1(%arg0: i32) -> (i32, i32) {
    %c0_i32 = arith.constant 0 : i32
    %c0_i32_0 = arith.constant 0 : i32
    %c0_i32_1 = arith.constant 0 : i32
    return %c0_i32, %c0_i32_0 : i32, i32
  }
  func.func @transform_2(%arg0: i32) -> (i32, i32) {
    %c0_i32 = arith.constant 0 : i32
    %c0_i32_0 = arith.constant 0 : i32
    %c0_i32_1 = arith.constant 0 : i32
    return %c0_i32, %c0_i32_0 : i32, i32
  }
  func.func @transform_3(%arg0: i32) -> (i32, i32) {
    %c0_i32 = arith.constant 0 : i32
    %c0_i32_0 = arith.constant 0 : i32
    %c0_i32_1 = arith.constant 0 : i32
    return %c0_i32, %c0_i32_0 : i32, i32
  }
  func.func @transform_4(%arg0: i32) -> (i32, i32) {
    %c0_i32 = arith.constant 0 : i32
    %c0_i32_0 = arith.constant 0 : i32
    %c0_i32_1 = arith.constant 0 : i32
    return %c0_i32, %c0_i32_0 : i32, i32
  }
  func.func @transform_5(%arg0: i32) -> (i32, i32) {
    %c0_i32 = arith.constant 0 : i32
    %c0_i32_0 = arith.constant 0 : i32
    %c0_i32_1 = arith.constant 0 : i32
    return %c0_i32, %c0_i32_0 : i32, i32
  }
  func.func @transform_6(%arg0: i32) -> (i32, i32) {
    %c0_i32 = arith.constant 0 : i32
    %c0_i32_0 = arith.constant 0 : i32
    %c0_i32_1 = arith.constant 0 : i32
    return %c0_i32, %c0_i32_0 : i32, i32
  }
  func.func @transform_7(%arg0: i32) -> (i32, i32) {
    %c0_i32 = arith.constant 0 : i32
    %c0_i32_0 = arith.constant 0 : i32
    %c0_i32_1 = arith.constant 0 : i32
    return %c0_i32, %c0_i32_0 : i32, i32
  }
  func.func @transform_8(%arg0: i32) -> (i32, i32) {
    %c0_i32 = arith.constant 0 : i32
    %c0_i32_0 = arith.constant 0 : i32
    %c0_i32_1 = arith.constant 0 : i32
    return %c0_i32, %c0_i32_0 : i32, i32
  }
  func.func @transform_9(%arg0: i32) -> (i32, i32) {
    %c0_i32 = arith.constant 0 : i32
    %c0_i32_0 = arith.constant 0 : i32
    %c0_i32_1 = arith.constant 0 : i32
    return %c0_i32, %c0_i32_0 : i32, i32
  }
  func.func @transform_10(%arg0: i32) -> (i32, i32) {
    %c0_i32 = arith.constant 0 : i32
    %c0_i32_0 = arith.constant 0 : i32
    %c0_i32_1 = arith.constant 0 : i32
    return %c0_i32, %c0_i32_0 : i32, i32
  }
  func.func @transform_11(%arg0: i32) -> (i32, i32, i32) {
    %c0_i32 = arith.constant 0 : i32
    %c0_i32_0 = arith.constant 0 : i32
    %c0_i32_1 = arith.constant 0 : i32
    return %arg0, %c0_i32, %c0_i32_0 : i32, i32, i32
  }
  func.func @transform_12(%arg0: i32) -> (i32, i32, i32) {
    %c0_i32 = arith.constant 0 : i32
    %c0_i32_0 = arith.constant 0 : i32
    %c0_i32_1 = arith.constant 0 : i32
    return %arg0, %c0_i32, %c0_i32_0 : i32, i32, i32
  }
}

</mosaic_0001>

<llo_original>
// kernel: decoder_forward.1
$region0: #{decoder_forward.1}
  #allocation0 [shape = 'u32[]', space=smem, size = 0x4, offset = 0x4, fixed_abs, tag = 'smem constant byte address 0x4 - core index']
  #allocation1 [shape = 'u32[72,128]{1,0:T(1,128)}', space=vmem, size = 0x9000, scoped, tag = 'internal scratch']
  #allocation2 [shape = 'f32[8,128]{1,0:T(8,128)}', space=vmem, size = 0x1000, scoped, tag = 'scratch operand']
  #allocation3 [shape = 'f32[8,128]{1,0:T(8,128)}', space=vmem, size = 0x1000, scoped, tag = 'scratch operand']
  #allocation4 [shape = 'f32[1,1]{1,0:T(1,128)S(6)}', space=smem, size = 0x200, scoped, tag = 'scoped memory for decoder_forward.1']
  %s0 = inlined_call_operand.vmem [shape: bf16[4,2048,128], index: 0, kind: input, shape index: {}]
  %s1 = inlined_call_operand.vmem [shape: f32[8,128], index: 1, kind: input, shape index: {}]
  %s2 = inlined_call_operand.vmem [shape: f32[8,128], index: 2, kind: input, shape index: {}]
  %s3 = inlined_call_operand.vmem [shape: bf16[8,2048], index: 3, kind: input, shape index: {}]
  %s4 = inlined_call_operand.vmem [shape: bf16[128,128], index: 4, kind: input, shape index: {}]
  %s5 = inlined_call_operand.vmem [shape: f32[1,128], index: 5, kind: input, shape index: {}]
  %s6 = inlined_call_operand.vmem [shape: bf16[128,768], index: 6, kind: input, shape index: {}]
  %s7 = inlined_call_operand.vmem [shape: f32[1,768], index: 7, kind: input, shape index: {}]
  %s8 = inlined_call_operand.vmem [shape: f32[1,128], index: 8, kind: input, shape index: {}]
  %s9 = inlined_call_operand.<no memory space> [shape: f32[1,1], index: 9, kind: input, shape index: {}]
  %s10 = inlined_call_operand.vmem [shape: bf16[128,512], index: 10, kind: input, shape index: {}]
  %s11 = inlined_call_operand.vmem [shape: f32[4,8,128], index: 11, kind: output, shape index: {0}]
  %s12 = inlined_call_operand.vmem [shape: f32[4,8,256], index: 12, kind: output, shape index: {1}]
  %13 = xla_tuple %s11, %s12
  %s14 = sld [smem:[#allocation0]]
  $region89: #{decoder_forward.1} parent=0
    _
  %s16 = ssub.s32 1, %s14
  %s17 = scalar_select 0, %s16, %s14
  %18 = sst [smem:[#allocation4]] %s9
  loop: start=0, step=1, limit=6
  $region2: #{decoder_forward.1} parent=0 // loop_pre_header
    _
  $region3: #{decoder_forward.1} parent=0 // loop_header
    %s20 = sphi 0, %s24
    %p21 = scmp.ge.s32.totalorder %s20, 6
    %s30 = sphi 0, %s32
    %s33 = sphi 0, %s30
    %s34 = sphi 0, %s33
    %s50 = sphi 0, %s34
    %s54 = sphi 0, %s54
    %s56 = sphi 0, %s54
    %s57 = sphi 0, %s56
    %s71 = sphi 0, %s57
    %s75 = sphi 0, %s75
    %s77 = sphi 0, %s75
    %s78 = sphi 0, %s77
    %s92 = sphi 0, %s78
    %s96 = sphi 0, %s96
    %s98 = sphi 0, %s96
    %s99 = sphi 0, %s98
    %s113 = sphi 0, %s99
    %s117 = sphi 0, %s117
    %s119 = sphi 0, %s117
    %s120 = sphi 0, %s119
    %s134 = sphi 0, %s120
    %s138 = sphi 0, %s138
    %s140 = sphi 0, %s138
    %s141 = sphi 0, %s140
    %s155 = sphi 0, %s141
    %s159 = sphi 0, %s159
    %s161 = sphi 0, %s159
    %s162 = sphi 0, %s161
    %s176 = sphi 0, %s162
    %s180 = sphi 0, %s180
    %s182 = sphi 0, %s180
    %s183 = sphi 0, %s182
    %s197 = sphi 0, %s183
    %s201 = sphi 0, %s201
    %s203 = sphi 0, %s201
    %s204 = sphi 0, %s203
    %s218 = sphi 0, %s204
    %s222 = sphi 0, %s222
    %s224 = sphi 0, %s222
    %s225 = sphi 0, %s224
    %s239 = sphi 0, %s225
    %s243 = sphi 0, %s243
    %s245 = sphi 0, %s243
    %s246 = sphi 0, %s245
    %s260 = sphi 0, %s246
    %s266 = sphi 0, %s268
    %s269 = sphi 0, %s266
    %s270 = sphi 0, %s269
    %s286 = sphi 0, %s270
    %s292 = sphi 0, %s294
    %s295 = sphi 0, %s292
    %s296 = sphi 0, %s295
    %s312 = sphi 0, %s296
  $region4: #{decoder_forward.1} parent=0 // loop_header_branch
    %23 = sbr.rel (%p21) target = $region8
  $region5: #{decoder_forward.1} parent=0 // loop_body
    %s25 = ssub.s32 %s20, 1
    %s26 = ssub.s32 %s20, 2
    %s27 = sadd.s32 %s20, 1
    %s28 = ssub.s32 %s20, %s27
    %p29 = scmp.eq.s32.totalorder %s28, 0
    %s31 = sadd.s32 %s30, 1
    %s32 = scalar_select %p29, %s30, %s31
    %p35 = pneg %p29
    %p36 = scmp.eq.s32.totalorder %s20, 3
    %p37 = por %p35, %p36
    %p38 = scmp.ne.s32.totalorder %s30, %s33
    %p39 = scmp.eq.s32.totalorder %s20, 0
    %p40 = por %p38, %p39
    %p41 = scmp.ne.s32.totalorder %s30, %s33
    %p42 = scmp.eq.s32.totalorder %s25, 3
    %p43 = por %p41, %p42
    %p44 = scmp.ne.s32.totalorder %s33, %s34
    %p45 = scmp.eq.s32.totalorder %s25, 0
    %p46 = por %p44, %p45
    %p47 = scmp.ne.s32.totalorder %s33, %s34
    %p48 = scmp.eq.s32.totalorder %s26, 3
    %p49 = por %p47, %p48
    %p51 = scmp.ne.s32.totalorder %s34, %s50
    %p52 = scmp.eq.s32.totalorder %s26, 0
    %p53 = por %p51, %p52
    %s55 = sadd.s32 %s54, 1
    %p58 = scmp.eq.s32.totalorder %s20, 3
    %p59 = scmp.ne.s32.totalorder %s54, %s56
    %p60 = scmp.eq.s32.totalorder %s20, 0
    %p61 = por %p59, %p60
    %p62 = scmp.ne.s32.totalorder %s54, %s56
    %p63 = scmp.eq.s32.totalorder %s25, 3
    %p64 = por %p62, %p63
    %p65 = scmp.ne.s32.totalorder %s56, %s57
    %p66 = scmp.eq.s32.totalorder %s25, 0
    %p67 = por %p65, %p66
    %p68 = scmp.ne.s32.totalorder %s56, %s57
    %p69 = scmp.eq.s32.totalorder %s26, 3
    %p70 = por %p68, %p69
    %p72 = scmp.ne.s32.totalorder %s57, %s71
    %p73 = scmp.eq.s32.totalorder %s26, 0
    %p74 = por %p72, %p73
    %s76 = sadd.s32 %s75, 1
    %p79 = scmp.eq.s32.totalorder %s20, 3
    %p80 = scmp.ne.s32.totalorder %s75, %s77
    %p81 = scmp.eq.s32.totalorder %s20, 0
    %p82 = por %p80, %p81
    %p83 = scmp.ne.s32.totalorder %s75, %s77
    %p84 = scmp.eq.s32.totalorder %s25, 3
    %p85 = por %p83, %p84
    %p86 = scmp.ne.s32.totalorder %s77, %s78
    %p87 = scmp.eq.s32.totalorder %s25, 0
    %p88 = por %p86, %p87
    %p89 = scmp.ne.s32.totalorder %s77, %s78
    %p90 = scmp.eq.s32.totalorder %s26, 3
    %p91 = por %p89, %p90
    %p93 = scmp.ne.s32.totalorder %s78, %s92
    %p94 = scmp.eq.s32.totalorder %s26, 0
    %p95 = por %p93, %p94
    %s97 = sadd.s32 %s96, 1
    %p100 = scmp.eq.s32.totalorder %s20, 3
    %p101 = scmp.ne.s32.totalorder %s96, %s98
    %p102 = scmp.eq.s32.totalorder %s20, 0
    %p103 = por %p101, %p102
    %p104 = scmp.ne.s32.totalorder %s96, %s98
    %p105 = scmp.eq.s32.totalorder %s25, 3
    %p106 = por %p104, %p105
    %p107 = scmp.ne.s32.totalorder %s98, %s99
    %p108 = scmp.eq.s32.totalorder %s25, 0
    %p109 = por %p107, %p108
    %p110 = scmp.ne.s32.totalorder %s98, %s99
    %p111 = scmp.eq.s32.totalorder %s26, 3
    %p112 = por %p110, %p111
    %p114 = scmp.ne.s32.totalorder %s99, %s113
    %p115 = scmp.eq.s32.totalorder %s26, 0
    %p116 = por %p114, %p115
    %s118 = sadd.s32 %s117, 1
    %p121 = scmp.eq.s32.totalorder %s20, 3
    %p122 = scmp.ne.s32.totalorder %s117, %s119
    %p123 = scmp.eq.s32.totalorder %s20, 0
    %p124 = por %p122, %p123
    %p125 = scmp.ne.s32.totalorder %s117, %s119
    %p126 = scmp.eq.s32.totalorder %s25, 3
    %p127 = por %p125, %p126
    %p128 = scmp.ne.s32.totalorder %s119, %s120
    %p129 = scmp.eq.s32.totalorder %s25, 0
    %p130 = por %p128, %p129
    %p131 = scmp.ne.s32.totalorder %s119, %s120
    %p132 = scmp.eq.s32.totalorder %s26, 3
    %p133 = por %p131, %p132
    %p135 = scmp.ne.s32.totalorder %s120, %s134
    %p136 = scmp.eq.s32.totalorder %s26, 0
    %p137 = por %p135, %p136
    %s139 = sadd.s32 %s138, 1
    %p142 = scmp.eq.s32.totalorder %s20, 3
    %p143 = scmp.ne.s32.totalorder %s138, %s140
    %p144 = scmp.eq.s32.totalorder %s20, 0
    %p145 = por %p143, %p144
    %p146 = scmp.ne.s32.totalorder %s138, %s140
    %p147 = scmp.eq.s32.totalorder %s25, 3
    %p148 = por %p146, %p147
    %p149 = scmp.ne.s32.totalorder %s140, %s141
    %p150 = scmp.eq.s32.totalorder %s25, 0
    %p151 = por %p149, %p150
    %p152 = scmp.ne.s32.totalorder %s140, %s141
    %p153 = scmp.eq.s32.totalorder %s26, 3
    %p154 = por %p152, %p153
    %p156 = scmp.ne.s32.totalorder %s141, %s155
    %p157 = scmp.eq.s32.totalorder %s26, 0
    %p158 = por %p156, %p157
    %s160 = sadd.s32 %s159, 1
    %p163 = scmp.eq.s32.totalorder %s20, 3
    %p164 = scmp.ne.s32.totalorder %s159, %s161
    %p165 = scmp.eq.s32.totalorder %s20, 0
    %p166 = por %p164, %p165
    %p167 = scmp.ne.s32.totalorder %s159, %s161
    %p168 = scmp.eq.s32.totalorder %s25, 3
    %p169 = por %p167, %p168
    %p170 = scmp.ne.s32.totalorder %s161, %s162
    %p171 = scmp.eq.s32.totalorder %s25, 0
    %p172 = por %p170, %p171
    %p173 = scmp.ne.s32.totalorder %s161, %s162
    %p174 = scmp.eq.s32.totalorder %s26, 3
    %p175 = por %p173, %p174
    %p177 = scmp.ne.s32.totalorder %s162, %s176
    %p178 = scmp.eq.s32.totalorder %s26, 0
    %p179 = por %p177, %p178
    %s181 = sadd.s32 %s180, 1
    %p184 = scmp.eq.s32.totalorder %s20, 3
    %p185 = scmp.ne.s32.totalorder %s180, %s182
    %p186 = scmp.eq.s32.totalorder %s20, 0
    %p187 = por %p185, %p186
    %p188 = scmp.ne.s32.totalorder %s180, %s182
    %p189 = scmp.eq.s32.totalorder %s25, 3
    %p190 = por %p188, %p189
    %p191 = scmp.ne.s32.totalorder %s182, %s183
    %p192 = scmp.eq.s32.totalorder %s25, 0
    %p193 = por %p191, %p192
    %p194 = scmp.ne.s32.totalorder %s182, %s183
    %p195 = scmp.eq.s32.totalorder %s26, 3
    %p196 = por %p194, %p195
    %p198 = scmp.ne.s32.totalorder %s183, %s197
    %p199 = scmp.eq.s32.totalorder %s26, 0
    %p200 = por %p198, %p199
    %s202 = sadd.s32 %s201, 1
    %p205 = scmp.eq.s32.totalorder %s20, 3
    %p206 = scmp.ne.s32.totalorder %s201, %s203
    %p207 = scmp.eq.s32.totalorder %s20, 0
    %p208 = por %p206, %p207
    %p209 = scmp.ne.s32.totalorder %s201, %s203
    %p210 = scmp.eq.s32.totalorder %s25, 3
    %p211 = por %p209, %p210
    %p212 = scmp.ne.s32.totalorder %s203, %s204
    %p213 = scmp.eq.s32.totalorder %s25, 0
    %p214 = por %p212, %p213
    %p215 = scmp.ne.s32.totalorder %s203, %s204
    %p216 = scmp.eq.s32.totalorder %s26, 3
    %p217 = por %p215, %p216
    %p219 = scmp.ne.s32.totalorder %s204, %s218
    %p220 = scmp.eq.s32.totalorder %s26, 0
    %p221 = por %p219, %p220
    %s223 = sadd.s32 %s222, 1
    %p226 = scmp.eq.s32.totalorder %s20, 3
    %p227 = scmp.ne.s32.totalorder %s222, %s224
    %p228 = scmp.eq.s32.totalorder %s20, 0
    %p229 = por %p227, %p228
    %p230 = scmp.ne.s32.totalorder %s222, %s224
    %p231 = scmp.eq.s32.totalorder %s25, 3
    %p232 = por %p230, %p231
    %p233 = scmp.ne.s32.totalorder %s224, %s225
    %p234 = scmp.eq.s32.totalorder %s25, 0
    %p235 = por %p233, %p234
    %p236 = scmp.ne.s32.totalorder %s224, %s225
    %p237 = scmp.eq.s32.totalorder %s26, 3
    %p238 = por %p236, %p237
    %p240 = scmp.ne.s32.totalorder %s225, %s239
    %p241 = scmp.eq.s32.totalorder %s26, 0
    %p242 = por %p240, %p241
    %s244 = sadd.s32 %s243, 1
    %p247 = scmp.eq.s32.totalorder %s20, 3
    %p248 = scmp.ne.s32.totalorder %s243, %s245
    %p249 = scmp.eq.s32.totalorder %s20, 0
    %p250 = por %p248, %p249
    %p251 = scmp.ne.s32.totalorder %s243, %s245
    %p252 = scmp.eq.s32.totalorder %s25, 3
    %p253 = por %p251, %p252
    %p254 = scmp.ne.s32.totalorder %s245, %s246
    %p255 = scmp.eq.s32.totalorder %s25, 0
    %p256 = por %p254, %p255
    %p257 = scmp.ne.s32.totalorder %s245, %s246
    %p258 = scmp.eq.s32.totalorder %s26, 3
    %p259 = por %p257, %p258
    %p261 = scmp.ne.s32.totalorder %s246, %s260
    %p262 = scmp.eq.s32.totalorder %s26, 0
    %p263 = por %p261, %p262
    %s264 = ssub.s32 %s20, %s27
    %p265 = scmp.eq.s32.totalorder %s264, 0
    %s267 = sadd.s32 %s266, 1
    %s268 = scalar_select %p265, %s266, %s267
    %p271 = pneg %p265
    %p272 = scmp.eq.s32.totalorder %s20, 3
    %p273 = por %p271, %p272
    %p274 = scmp.ne.s32.totalorder %s266, %s269
    %p275 = scmp.eq.s32.totalorder %s20, 0
    %p276 = por %p274, %p275
    %p277 = scmp.ne.s32.totalorder %s266, %s269
    %p278 = scmp.eq.s32.totalorder %s25, 3
    %p279 = por %p277, %p278
    %p280 = scmp.ne.s32.totalorder %s269, %s270
    %p281 = scmp.eq.s32.totalorder %s25, 0
    %p282 = por %p280, %p281
    %p283 = scmp.ne.s32.totalorder %s269, %s270
    %p284 = scmp.eq.s32.totalorder %s26, 3
    %p285 = por %p283, %p284
    %p287 = scmp.ne.s32.totalorder %s270, %s286
    %p288 = scmp.eq.s32.totalorder %s26, 0
    %p289 = por %p287, %p288
    %s290 = ssub.s32 %s20, %s27
    %p291 = scmp.eq.s32.totalorder %s290, 0
    %s293 = sadd.s32 %s292, 1
    %s294 = scalar_select %p291, %s292, %s293
    %p297 = pneg %p291
    %p298 = scmp.eq.s32.totalorder %s20, 3
    %p299 = por %p297, %p298
    %p300 = scmp.ne.s32.totalorder %s292, %s295
    %p301 = scmp.eq.s32.totalorder %s20, 0
    %p302 = por %p300, %p301
    %p303 = scmp.ne.s32.totalorder %s292, %s295
    %p304 = scmp.eq.s32.totalorder %s25, 3
    %p305 = por %p303, %p304
    %p306 = scmp.ne.s32.totalorder %s295, %s296
    %p307 = scmp.eq.s32.totalorder %s25, 0
    %p308 = por %p306, %p307
    %p309 = scmp.ne.s32.totalorder %s295, %s296
    %p310 = scmp.eq.s32.totalorder %s26, 3
    %p311 = por %p309, %p310
    %p313 = scmp.ne.s32.totalorder %s296, %s312
    %p314 = scmp.eq.s32.totalorder %s26, 0
    %p315 = por %p313, %p314
    %p316 = scmp.le.s32.totalorder 1, %s20
    %p317 = scmp.lt.s32.totalorder %s20, 5
    %p318 = pnand %p316, %p317
    %p319 = pneg %p318
    // Predicated region
    $region9: #{decoder_forward.1} parent=5 // pred_check
      _
    $region10: #{decoder_forward.1} parent=5 // pred_check_branch
      %321 = sbr.rel (%p318) target = $region12
    $region11: #{decoder_forward.1} parent=5 // pred_region
      %s322 = ssub.s32 %s20, 1
      // Predicated region
      $region13: #{decoder_forward.1} parent=11 // pred_check
        %p323 = pneg %p67
      $region14: #{decoder_forward.1} parent=11 // pred_check_branch
        %325 = sbr.rel (%p323) target = $region16
      $region15: #{decoder_forward.1} parent=11 // pred_region
        _
      $region16: #{decoder_forward.1} parent=11 // pred_fallthru
        _
      // Predicated region
      $region17: #{decoder_forward.1} parent=11 // pred_check
        %p326 = pneg %p88
      $region18: #{decoder_forward.1} parent=11 // pred_check_branch
        %328 = sbr.rel (%p326) target = $region20
      $region19: #{decoder_forward.1} parent=11 // pred_region
        _
      $region20: #{decoder_forward.1} parent=11 // pred_fallthru
        _
      // Predicated region
      $region21: #{decoder_forward.1} parent=11 // pred_check
        %p329 = pneg %p109
      $region22: #{decoder_forward.1} parent=11 // pred_check_branch
        %331 = sbr.rel (%p329) target = $region24
      $region23: #{decoder_forward.1} parent=11 // pred_region
        _
      $region24: #{decoder_forward.1} parent=11 // pred_fallthru
        _
      // Predicated region
      $region25: #{decoder_forward.1} parent=11 // pred_check
        %p332 = pneg %p130
      $region26: #{decoder_forward.1} parent=11 // pred_check_branch
        %334 = sbr.rel (%p332) target = $region28
      $region27: #{decoder_forward.1} parent=11 // pred_region
        _
      $region28: #{decoder_forward.1} parent=11 // pred_fallthru
        _
      // Predicated region
      $region29: #{decoder_forward.1} parent=11 // pred_check
        %p335 = pneg %p151
      $region30: #{decoder_forward.1} parent=11 // pred_check_branch
        %337 = sbr.rel (%p335) target = $region32
      $region31: #{decoder_forward.1} parent=11 // pred_region
        _
      $region32: #{decoder_forward.1} parent=11 // pred_fallthru
        _
      // Predicated region
      $region33: #{decoder_forward.1} parent=11 // pred_check
        %p338 = pneg %p172
      $region34: #{decoder_forward.1} parent=11 // pred_check_branch
        %340 = sbr.rel (%p338) target = $region36
      $region35: #{decoder_forward.1} parent=11 // pred_region
        _
      $region36: #{decoder_forward.1} parent=11 // pred_fallthru
        _
      // Predicated region
      $region37: #{decoder_forward.1} parent=11 // pred_check
        %p341 = pneg %p193
      $region38: #{decoder_forward.1} parent=11 // pred_check_branch
        %343 = sbr.rel (%p341) target = $region40
      $region39: #{decoder_forward.1} parent=11 // pred_region
        _
      $region40: #{decoder_forward.1} parent=11 // pred_fallthru
        _
      // Predicated region
      $region41: #{decoder_forward.1} parent=11 // pred_check
        %p344 = pneg %p214
      $region42: #{decoder_forward.1} parent=11 // pred_check_branch
        %346 = sbr.rel (%p344) target = $region44
      $region43: #{decoder_forward.1} parent=11 // pred_region
        _
      $region44: #{decoder_forward.1} parent=11 // pred_fallthru
        _
      // Predicated region
      $region45: #{decoder_forward.1} parent=11 // pred_check
        %p347 = pneg %p235
      $region46: #{decoder_forward.1} parent=11 // pred_check_branch
        %349 = sbr.rel (%p347) target = $region48
      $region47: #{decoder_forward.1} parent=11 // pred_region
        _
      $region48: #{decoder_forward.1} parent=11 // pred_fallthru
        _
      // Predicated region
      $region49: #{decoder_forward.1} parent=11 // pred_check
        %p350 = pneg %p256
      $region50: #{decoder_forward.1} parent=11 // pred_check_branch
        %352 = sbr.rel (%p350) target = $region52
      $region51: #{decoder_forward.1} parent=11 // pred_region
        _
      $region52: #{decoder_forward.1} parent=11 // pred_fallthru
        _
    $region12: #{decoder_forward.1} parent=5 // pred_fallthru
      _
    %p353 = scmp.lt.s32.totalorder %s20, 4
    // Predicated region
    $region53: #{decoder_forward.1} parent=5 // pred_check
      %p354 = pneg %p353
    $region54: #{decoder_forward.1} parent=5 // pred_check_branch
      %356 = sbr.rel (%p354) target = $region56
    $region55: #{decoder_forward.1} parent=5 // pred_region
      // Predicated region
      $region57: #{decoder_forward.1} parent=55 // pred_check
        %p357 = pneg %p40
      $region58: #{decoder_forward.1} parent=55 // pred_check_branch
        %359 = sbr.rel (%p357) target = $region60
      $region59: #{decoder_forward.1} parent=55 // pred_region
        %p360 = scmp.lt.s32.totalorder %s20, 3
        %s361 = scalar_select %p360, %s20, 3
        %s362 = smul.addr %s361, 256
        %s363 = smul.addr %s362, 4
        %s364 = scalar_lea.vmem %s0, %s363
      $region60: #{decoder_forward.1} parent=55 // pred_fallthru
        _
    $region56: #{decoder_forward.1} parent=5 // pred_fallthru
      _
    %p365 = scmp.le.s32.totalorder 1, %s20
    %p366 = scmp.lt.s32.totalorder %s20, 5
    %p367 = pnand %p365, %p366
    %p368 = pneg %p367
    // Predicated region
    $region61: #{decoder_forward.1} parent=5 // pred_check
      _
    $region62: #{decoder_forward.1} parent=5 // pred_check_branch
      %370 = sbr.rel (%p367) target = $region64
    $region63: #{decoder_forward.1} parent=5 // pred_region
      %s371 = ssub.s32 %s20, 1
      %p372 = scmp.lt.s32.totalorder %s25, 3
      %s373 = scalar_select %p372, %s25, 3
      %s374 = smul.addr %s373, 256
      %s375 = smul.addr %s374, 4
      %s376 = scalar_lea.vmem %s0, %s375
      %p377 = pneg %p46
      %p378 = pneg %p43
      %p379 = pneg %p67
      %p380 = pneg %p64
      %p381 = pneg %p88
      %p382 = pneg %p85
      %p383 = pneg %p109
      %p384 = pneg %p106
      %p385 = pneg %p130
      %p386 = pneg %p127
      %p387 = pneg %p151
      %p388 = pneg %p148
      %p389 = pneg %p172
      %p390 = pneg %p169
      %p391 = pneg %p193
      %p392 = pneg %p190
      %p393 = pneg %p214
      %p394 = pneg %p211
      %p395 = pneg %p235
      %p396 = pneg %p232
      %p397 = pneg %p256
      %p398 = pneg %p253
      %p399 = pneg %p282
      %p400 = pneg %p279
      %p401 = scmp.lt.s32.totalorder %s25, 3
      %s402 = scalar_select %p401, %s25, 3
      %s403 = smul.addr %s402, 8
      %s404 = scalar_lea.vmem %s11, %s403
      %p405 = pneg %p308
      %p406 = pneg %p305
      %p407 = scmp.lt.s32.totalorder %s25, 3
      %s408 = scalar_select %p407, %s25, 3
      %s409 = smul.addr %s408, 2
      %s410 = smul.addr %s409, 8
      %s411 = scalar_lea.vmem %s12, %s410
      %p412 = scmp.lt.s32.totalorder %s25, 3
      %s413 = scalar_select %p412, %s25, 3
      %s414 = smul.addr %s413, 256
      %s415 = smul.addr %s414, 4
      %s416 = scalar_lea.vmem %s0, %s415
      %p417 = scmp.lt.s32.totalorder %s25, 3
      %s418 = scalar_select %p417, %s25, 3
      %s419 = smul.addr %s418, 8
      %s420 = scalar_lea.vmem %s11, %s419
      %p421 = scmp.lt.s32.totalorder %s25, 3
      %s422 = scalar_select %p421, %s25, 3
      %s423 = smul.addr %s422, 2
      %s424 = smul.addr %s423, 8
      %s425 = scalar_lea.vmem %s12, %s424
      %p426 = scmp.eq.s32.totalorder %s25, 0
      // Predicated region
      $region65: #{decoder_forward.1} parent=63 // pred_check
        %p427 = pneg %p426
      $region66: #{decoder_forward.1} parent=63 // pred_check_branch
        %429 = sbr.rel (%p427) target = $region68
      $region67: #{decoder_forward.1} parent=63 // pred_region
        %v430 = vld [vmem:[%s1] sm:$0xff]
        %431 = vst [vmem:[#allocation2] sm:$0xff] %v430
        %v432 = vld [vmem:[%s2] sm:$0xff]
        %433 = vst [vmem:[#allocation3] sm:$0xff] %v432
      $region68: #{decoder_forward.1} parent=63 // pred_fallthru
        _
      %v434 = vld [vmem:[%s416] sm:$0xf]
      %v435 = vld [vmem:[%s416 + $0x4] sm:$0xf]
      %v436 = vld [vmem:[%s416 + $0x8] sm:$0xf]
      %v437 = vld [vmem:[%s416 + $0xc] sm:$0xf]
      %v438 = vld [vmem:[%s416 + $0x10] sm:$0xf]
      %v439 = vld [vmem:[%s416 + $0x14] sm:$0xf]
      %v440 = vld [vmem:[%s416 + $0x18] sm:$0xf]
      %v441 = vld [vmem:[%s416 + $0x1c] sm:$0xf]
      %v442 = vld [vmem:[%s416 + $0x20] sm:$0xf]
      %v443 = vld [vmem:[%s416 + $0x24] sm:$0xf]
      %v444 = vld [vmem:[%s416 + $0x28] sm:$0xf]
      %v445 = vld [vmem:[%s416 + $0x2c] sm:$0xf]
      %v446 = vld [vmem:[%s416 + $0x30] sm:$0xf]
      %v447 = vld [vmem:[%s416 + $0x34] sm:$0xf]
      %v448 = vld [vmem:[%s416 + $0x38] sm:$0xf]
      %v449 = vld [vmem:[%s416 + $0x3c] sm:$0xf]
      %v450 = vld [vmem:[%s416 + $0x40] sm:$0xf]
      %v451 = vld [vmem:[%s416 + $0x44] sm:$0xf]
      %v452 = vld [vmem:[%s416 + $0x48] sm:$0xf]
      %v453 = vld [vmem:[%s416 + $0x4c] sm:$0xf]
      %v454 = vld [vmem:[%s416 + $0x50] sm:$0xf]
      %v455 = vld [vmem:[%s416 + $0x54] sm:$0xf]
      %v456 = vld [vmem:[%s416 + $0x58] sm:$0xf]
      %v457 = vld [vmem:[%s416 + $0x5c] sm:$0xf]
      %v458 = vld [vmem:[%s416 + $0x60] sm:$0xf]
      %v459 = vld [vmem:[%s416 + $0x64] sm:$0xf]
      %v460 = vld [vmem:[%s416 + $0x68] sm:$0xf]
      %v461 = vld [vmem:[%s416 + $0x6c] sm:$0xf]
      %v462 = vld [vmem:[%s416 + $0x70] sm:$0xf]
      %v463 = vld [vmem:[%s416 + $0x74] sm:$0xf]
      %v464 = vld [vmem:[%s416 + $0x78] sm:$0xf]
      %v465 = vld [vmem:[%s416 + $0x7c] sm:$0xf]
      %v466 = vld [vmem:[%s416 + $0x80] sm:$0xf]
      %v467 = vld [vmem:[%s416 + $0x84] sm:$0xf]
      %v468 = vld [vmem:[%s416 + $0x88] sm:$0xf]
      %v469 = vld [vmem:[%s416 + $0x8c] sm:$0xf]
      %v470 = vld [vmem:[%s416 + $0x90] sm:$0xf]
      %v471 = vld [vmem:[%s416 + $0x94] sm:$0xf]
      %v472 = vld [vmem:[%s416 + $0x98] sm:$0xf]
      %v473 = vld [vmem:[%s416 + $0x9c] sm:$0xf]
      %v474 = vld [vmem:[%s416 + $0xa0] sm:$0xf]
      %v475 = vld [vmem:[%s416 + $0xa4] sm:$0xf]
      %v476 = vld [vmem:[%s416 + $0xa8] sm:$0xf]
      %v477 = vld [vmem:[%s416 + $0xac] sm:$0xf]
      %v478 = vld [vmem:[%s416 + $0xb0] sm:$0xf]
      %v479 = vld [vmem:[%s416 + $0xb4] sm:$0xf]
      %v480 = vld [vmem:[%s416 + $0xb8] sm:$0xf]
      %v481 = vld [vmem:[%s416 + $0xbc] sm:$0xf]
      %v482 = vld [vmem:[%s416 + $0xc0] sm:$0xf]
      %v483 = vld [vmem:[%s416 + $0xc4] sm:$0xf]
      %v484 = vld [vmem:[%s416 + $0xc8] sm:$0xf]
      %v485 = vld [vmem:[%s416 + $0xcc] sm:$0xf]
      %v486 = vld [vmem:[%s416 + $0xd0] sm:$0xf]
      %v487 = vld [vmem:[%s416 + $0xd4] sm:$0xf]
      %v488 = vld [vmem:[%s416 + $0xd8] sm:$0xf]
      %v489 = vld [vmem:[%s416 + $0xdc] sm:$0xf]
      %v490 = vld [vmem:[%s416 + $0xe0] sm:$0xf]
      %v491 = vld [vmem:[%s416 + $0xe4] sm:$0xf]
      %v492 = vld [vmem:[%s416 + $0xe8] sm:$0xf]
      %v493 = vld [vmem:[%s416 + $0xec] sm:$0xf]
      %v494 = vld [vmem:[%s416 + $0xf0] sm:$0xf]
      %v495 = vld [vmem:[%s416 + $0xf4] sm:$0xf]
      %v496 = vld [vmem:[%s416 + $0xf8] sm:$0xf]
      %v497 = vld [vmem:[%s416 + $0xfc] sm:$0xf]
      %v498 = vld [vmem:[%s416 + $0x100] sm:$0xf]
      %v499 = vld [vmem:[%s416 + $0x104] sm:$0xf]
      %v500 = vld [vmem:[%s416 + $0x108] sm:$0xf]
      %v501 = vld [vmem:[%s416 + $0x10c] sm:$0xf]
      %v502 = vld [vmem:[%s416 + $0x110] sm:$0xf]
      %v503 = vld [vmem:[%s416 + $0x114] sm:$0xf]
      %v504 = vld [vmem:[%s416 + $0x118] sm:$0xf]
      %v505 = vld [vmem:[%s416 + $0x11c] sm:$0xf]
      %v506 = vld [vmem:[%s416 + $0x120] sm:$0xf]
      %v507 = vld [vmem:[%s416 + $0x124] sm:$0xf]
      %v508 = vld [vmem:[%s416 + $0x128] sm:$0xf]
      %v509 = vld [vmem:[%s416 + $0x12c] sm:$0xf]
      %v510 = vld [vmem:[%s416 + $0x130] sm:$0xf]
      %v511 = vld [vmem:[%s416 + $0x134] sm:$0xf]
      %v512 = vld [vmem:[%s416 + $0x138] sm:$0xf]
      %v513 = vld [vmem:[%s416 + $0x13c] sm:$0xf]
      %v514 = vld [vmem:[%s416 + $0x140] sm:$0xf]
      %v515 = vld [vmem:[%s416 + $0x144] sm:$0xf]
      %v516 = vld [vmem:[%s416 + $0x148] sm:$0xf]
      %v517 = vld [vmem:[%s416 + $0x14c] sm:$0xf]
      %v518 = vld [vmem:[%s416 + $0x150] sm:$0xf]
      %v519 = vld [vmem:[%s416 + $0x154] sm:$0xf]
      %v520 = vld [vmem:[%s416 + $0x158] sm:$0xf]
      %v521 = vld [vmem:[%s416 + $0x15c] sm:$0xf]
      %v522 = vld [vmem:[%s416 + $0x160] sm:$0xf]
      %v523 = vld [vmem:[%s416 + $0x164] sm:$0xf]
      %v524 = vld [vmem:[%s416 + $0x168] sm:$0xf]
      %v525 = vld [vmem:[%s416 + $0x16c] sm:$0xf]
      %v526 = vld [vmem:[%s416 + $0x170] sm:$0xf]
      %v527 = vld [vmem:[%s416 + $0x174] sm:$0xf]
      %v528 = vld [vmem:[%s416 + $0x178] sm:$0xf]
      %v529 = vld [vmem:[%s416 + $0x17c] sm:$0xf]
      %v530 = vld [vmem:[%s416 + $0x180] sm:$0xf]
      %v531 = vld [vmem:[%s416 + $0x184] sm:$0xf]
      %v532 = vld [vmem:[%s416 + $0x188] sm:$0xf]
      %v533 = vld [vmem:[%s416 + $0x18c] sm:$0xf]
      %v534 = vld [vmem:[%s416 + $0x190] sm:$0xf]
      %v535 = vld [vmem:[%s416 + $0x194] sm:$0xf]
      %v536 = vld [vmem:[%s416 + $0x198] sm:$0xf]
      %v537 = vld [vmem:[%s416 + $0x19c] sm:$0xf]
      %v538 = vld [vmem:[%s416 + $0x1a0] sm:$0xf]
      %v539 = vld [vmem:[%s416 + $0x1a4] sm:$0xf]
      %v540 = vld [vmem:[%s416 + $0x1a8] sm:$0xf]
      %v541 = vld [vmem:[%s416 + $0x1ac] sm:$0xf]
      %v542 = vld [vmem:[%s416 + $0x1b0] sm:$0xf]
      %v543 = vld [vmem:[%s416 + $0x1b4] sm:$0xf]
      %v544 = vld [vmem:[%s416 + $0x1b8] sm:$0xf]
      %v545 = vld [vmem:[%s416 + $0x1bc] sm:$0xf]
      %v546 = vld [vmem:[%s416 + $0x1c0] sm:$0xf]
      %v547 = vld [vmem:[%s416 + $0x1c4] sm:$0xf]
      %v548 = vld [vmem:[%s416 + $0x1c8] sm:$0xf]
      %v549 = vld [vmem:[%s416 + $0x1cc] sm:$0xf]
      %v550 = vld [vmem:[%s416 + $0x1d0] sm:$0xf]
      %v551 = vld [vmem:[%s416 + $0x1d4] sm:$0xf]
      %v552 = vld [vmem:[%s416 + $0x1d8] sm:$0xf]
      %v553 = vld [vmem:[%s416 + $0x1dc] sm:$0xf]
      %v554 = vld [vmem:[%s416 + $0x1e0] sm:$0xf]
      %v555 = vld [vmem:[%s416 + $0x1e4] sm:$0xf]
      %v556 = vld [vmem:[%s416 + $0x1e8] sm:$0xf]
      %v557 = vld [vmem:[%s416 + $0x1ec] sm:$0xf]
      %v558 = vld [vmem:[%s416 + $0x1f0] sm:$0xf]
      %v559 = vld [vmem:[%s416 + $0x1f4] sm:$0xf]
      %v560 = vld [vmem:[%s416 + $0x1f8] sm:$0xf]
      %v561 = vld [vmem:[%s416 + $0x1fc] sm:$0xf]
      %v562 = vld [vmem:[%s416 + $0x200] sm:$0xf]
      %v563 = vld [vmem:[%s416 + $0x204] sm:$0xf]
      %v564 = vld [vmem:[%s416 + $0x208] sm:$0xf]
      %v565 = vld [vmem:[%s416 + $0x20c] sm:$0xf]
      %v566 = vld [vmem:[%s416 + $0x210] sm:$0xf]
      %v567 = vld [vmem:[%s416 + $0x214] sm:$0xf]
      %v568 = vld [vmem:[%s416 + $0x218] sm:$0xf]
      %v569 = vld [vmem:[%s416 + $0x21c] sm:$0xf]
      %v570 = vld [vmem:[%s416 + $0x220] sm:$0xf]
      %v571 = vld [vmem:[%s416 + $0x224] sm:$0xf]
      %v572 = vld [vmem:[%s416 + $0x228] sm:$0xf]
      %v573 = vld [vmem:[%s416 + $0x22c] sm:$0xf]
      %v574 = vld [vmem:[%s416 + $0x230] sm:$0xf]
      %v575 = vld [vmem:[%s416 + $0x234] sm:$0xf]
      %v576 = vld [vmem:[%s416 + $0x238] sm:$0xf]
      %v577 = vld [vmem:[%s416 + $0x23c] sm:$0xf]
      %v578 = vld [vmem:[%s416 + $0x240] sm:$0xf]
      %v579 = vld [vmem:[%s416 + $0x244] sm:$0xf]
      %v580 = vld [vmem:[%s416 + $0x248] sm:$0xf]
      %v581 = vld [vmem:[%s416 + $0x24c] sm:$0xf]
      %v582 = vld [vmem:[%s416 + $0x250] sm:$0xf]
      %v583 = vld [vmem:[%s416 + $0x254] sm:$0xf]
      %v584 = vld [vmem:[%s416 + $0x258] sm:$0xf]
      %v585 = vld [vmem:[%s416 + $0x25c] sm:$0xf]
      %v586 = vld [vmem:[%s416 + $0x260] sm:$0xf]
      %v587 = vld [vmem:[%s416 + $0x264] sm:$0xf]
      %v588 = vld [vmem:[%s416 + $0x268] sm:$0xf]
      %v589 = vld [vmem:[%s416 + $0x26c] sm:$0xf]
      %v590 = vld [vmem:[%s416 + $0x270] sm:$0xf]
      %v591 = vld [vmem:[%s416 + $0x274] sm:$0xf]
      %v592 = vld [vmem:[%s416 + $0x278] sm:$0xf]
      %v593 = vld [vmem:[%s416 + $0x27c] sm:$0xf]
      %v594 = vld [vmem:[%s416 + $0x280] sm:$0xf]
      %v595 = vld [vmem:[%s416 + $0x284] sm:$0xf]
      %v596 = vld [vmem:[%s416 + $0x288] sm:$0xf]
      %v597 = vld [vmem:[%s416 + $0x28c] sm:$0xf]
      %v598 = vld [vmem:[%s416 + $0x290] sm:$0xf]
      %v599 = vld [vmem:[%s416 + $0x294] sm:$0xf]
      %v600 = vld [vmem:[%s416 + $0x298] sm:$0xf]
      %v601 = vld [vmem:[%s416 + $0x29c] sm:$0xf]
      %v602 = vld [vmem:[%s416 + $0x2a0] sm:$0xf]
      %v603 = vld [vmem:[%s416 + $0x2a4] sm:$0xf]
      %v604 = vld [vmem:[%s416 + $0x2a8] sm:$0xf]
      %v605 = vld [vmem:[%s416 + $0x2ac] sm:$0xf]
      %v606 = vld [vmem:[%s416 + $0x2b0] sm:$0xf]
      %v607 = vld [vmem:[%s416 + $0x2b4] sm:$0xf]
      %v608 = vld [vmem:[%s416 + $0x2b8] sm:$0xf]
      %v609 = vld [vmem:[%s416 + $0x2bc] sm:$0xf]
      %v610 = vld [vmem:[%s416 + $0x2c0] sm:$0xf]
      %v611 = vld [vmem:[%s416 + $0x2c4] sm:$0xf]
      %v612 = vld [vmem:[%s416 + $0x2c8] sm:$0xf]
      %v613 = vld [vmem:[%s416 + $0x2cc] sm:$0xf]
      %v614 = vld [vmem:[%s416 + $0x2d0] sm:$0xf]
      %v615 = vld [vmem:[%s416 + $0x2d4] sm:$0xf]
      %v616 = vld [vmem:[%s416 + $0x2d8] sm:$0xf]
      %v617 = vld [vmem:[%s416 + $0x2dc] sm:$0xf]
      %v618 = vld [vmem:[%s416 + $0x2e0] sm:$0xf]
      %v619 = vld [vmem:[%s416 + $0x2e4] sm:$0xf]
      %v620 = vld [vmem:[%s416 + $0x2e8] sm:$0xf]
      %v621 = vld [vmem:[%s416 + $0x2ec] sm:$0xf]
      %v622 = vld [vmem:[%s416 + $0x2f0] sm:$0xf]
      %v623 = vld [vmem:[%s416 + $0x2f4] sm:$0xf]
      %v624 = vld [vmem:[%s416 + $0x2f8] sm:$0xf]
      %v625 = vld [vmem:[%s416 + $0x2fc] sm:$0xf]
      %v626 = vld [vmem:[%s416 + $0x300] sm:$0xf]
      %v627 = vld [vmem:[%s416 + $0x304] sm:$0xf]
      %v628 = vld [vmem:[%s416 + $0x308] sm:$0xf]
      %v629 = vld [vmem:[%s416 + $0x30c] sm:$0xf]
      %v630 = vld [vmem:[%s416 + $0x310] sm:$0xf]
      %v631 = vld [vmem:[%s416 + $0x314] sm:$0xf]
      %v632 = vld [vmem:[%s416 + $0x318] sm:$0xf]
      %v633 = vld [vmem:[%s416 + $0x31c] sm:$0xf]
      %v634 = vld [vmem:[%s416 + $0x320] sm:$0xf]
      %v635 = vld [vmem:[%s416 + $0x324] sm:$0xf]
      %v636 = vld [vmem:[%s416 + $0x328] sm:$0xf]
      %v637 = vld [vmem:[%s416 + $0x32c] sm:$0xf]
      %v638 = vld [vmem:[%s416 + $0x330] sm:$0xf]
      %v639 = vld [vmem:[%s416 + $0x334] sm:$0xf]
      %v640 = vld [vmem:[%s416 + $0x338] sm:$0xf]
      %v641 = vld [vmem:[%s416 + $0x33c] sm:$0xf]
      %v642 = vld [vmem:[%s416 + $0x340] sm:$0xf]
      %v643 = vld [vmem:[%s416 + $0x344] sm:$0xf]
      %v644 = vld [vmem:[%s416 + $0x348] sm:$0xf]
      %v645 = vld [vmem:[%s416 + $0x34c] sm:$0xf]
      %v646 = vld [vmem:[%s416 + $0x350] sm:$0xf]
      %v647 = vld [vmem:[%s416 + $0x354] sm:$0xf]
      %v648 = vld [vmem:[%s416 + $0x358] sm:$0xf]
      %v649 = vld [vmem:[%s416 + $0x35c] sm:$0xf]
      %v650 = vld [vmem:[%s416 + $0x360] sm:$0xf]
      %v651 = vld [vmem:[%s416 + $0x364] sm:$0xf]
      %v652 = vld [vmem:[%s416 + $0x368] sm:$0xf]
      %v653 = vld [vmem:[%s416 + $0x36c] sm:$0xf]
      %v654 = vld [vmem:[%s416 + $0x370] sm:$0xf]
      %v655 = vld [vmem:[%s416 + $0x374] sm:$0xf]
      %v656 = vld [vmem:[%s416 + $0x378] sm:$0xf]
      %v657 = vld [vmem:[%s416 + $0x37c] sm:$0xf]
      %v658 = vld [vmem:[%s416 + $0x380] sm:$0xf]
      %v659 = vld [vmem:[%s416 + $0x384] sm:$0xf]
      %v660 = vld [vmem:[%s416 + $0x388] sm:$0xf]
      %v661 = vld [vmem:[%s416 + $0x38c] sm:$0xf]
      %v662 = vld [vmem:[%s416 + $0x390] sm:$0xf]
      %v663 = vld [vmem:[%s416 + $0x394] sm:$0xf]
      %v664 = vld [vmem:[%s416 + $0x398] sm:$0xf]
      %v665 = vld [vmem:[%s416 + $0x39c] sm:$0xf]
      %v666 = vld [vmem:[%s416 + $0x3a0] sm:$0xf]
      %v667 = vld [vmem:[%s416 + $0x3a4] sm:$0xf]
      %v668 = vld [vmem:[%s416 + $0x3a8] sm:$0xf]
      %v669 = vld [vmem:[%s416 + $0x3ac] sm:$0xf]
      %v670 = vld [vmem:[%s416 + $0x3b0] sm:$0xf]
      %v671 = vld [vmem:[%s416 + $0x3b4] sm:$0xf]
      %v672 = vld [vmem:[%s416 + $0x3b8] sm:$0xf]
      %v673 = vld [vmem:[%s416 + $0x3bc] sm:$0xf]
      %v674 = vld [vmem:[%s416 + $0x3c0] sm:$0xf]
      %v675 = vld [vmem:[%s416 + $0x3c4] sm:$0xf]
      %v676 = vld [vmem:[%s416 + $0x3c8] sm:$0xf]
      %v677 = vld [vmem:[%s416 + $0x3cc] sm:$0xf]
      %v678 = vld [vmem:[%s416 + $0x3d0] sm:$0xf]
      %v679 = vld [vmem:[%s416 + $0x3d4] sm:$0xf]
      %v680 = vld [vmem:[%s416 + $0x3d8] sm:$0xf]
      %v681 = vld [vmem:[%s416 + $0x3dc] sm:$0xf]
      %v682 = vld [vmem:[%s416 + $0x3e0] sm:$0xf]
      %v683 = vld [vmem:[%s416 + $0x3e4] sm:$0xf]
      %v684 = vld [vmem:[%s416 + $0x3e8] sm:$0xf]
      %v685 = vld [vmem:[%s416 + $0x3ec] sm:$0xf]
      %v686 = vld [vmem:[%s416 + $0x3f0] sm:$0xf]
      %v687 = vld [vmem:[%s416 + $0x3f4] sm:$0xf]
      %v688 = vld [vmem:[%s416 + $0x3f8] sm:$0xf]
      %v689 = vld [vmem:[%s416 + $0x3fc] sm:$0xf]
      %v690 = vld [vmem:[#allocation2] sm:$0xff]
      %v691 = vld [vmem:[#allocation3] sm:$0xff]
      %v692 = vpack.c.bf16 %v690, %v690
      %v693 = vld [vmem:[%s6] sm:$0xff]
      %v694 = vld [vmem:[%s6 + $0x8] sm:$0xff]
      %v695 = vld [vmem:[%s6 + $0x10] sm:$0xff]
      %v696 = vld [vmem:[%s6 + $0x18] sm:$0xff]
      %v697 = vld [vmem:[%s6 + $0x20] sm:$0xff]
      %v698 = vld [vmem:[%s6 + $0x28] sm:$0xff]
      %v699 = vld [vmem:[%s6 + $0x30] sm:$0xff]
      %v700 = vld [vmem:[%s6 + $0x38] sm:$0xff]
      %v701 = vld [vmem:[%s6 + $0x40] sm:$0xff]
      %v702 = vld [vmem:[%s6 + $0x48] sm:$0xff]
      %v703 = vld [vmem:[%s6 + $0x50] sm:$0xff]
      %v704 = vld [vmem:[%s6 + $0x58] sm:$0xff]
      %v705 = vld [vmem:[%s6 + $0x60] sm:$0xff]
      %v706 = vld [vmem:[%s6 + $0x68] sm:$0xff]
      %v707 = vld [vmem:[%s6 + $0x70] sm:$0xff]
      %v708 = vld [vmem:[%s6 + $0x78] sm:$0xff]
      %v709 = vld [vmem:[%s6 + $0x80] sm:$0xff]
      %v710 = vld [vmem:[%s6 + $0x88] sm:$0xff]
      %v711 = vld [vmem:[%s6 + $0x90] sm:$0xff]
      %v712 = vld [vmem:[%s6 + $0x98] sm:$0xff]
      %v713 = vld [vmem:[%s6 + $0xa0] sm:$0xff]
      %v714 = vld [vmem:[%s6 + $0xa8] sm:$0xff]
      %v715 = vld [vmem:[%s6 + $0xb0] sm:$0xff]
      %v716 = vld [vmem:[%s6 + $0xb8] sm:$0xff]
      %v717 = vld [vmem:[%s6 + $0xc0] sm:$0xff]
      %v718 = vld [vmem:[%s6 + $0xc8] sm:$0xff]
      %v719 = vld [vmem:[%s6 + $0xd0] sm:$0xff]
      %v720 = vld [vmem:[%s6 + $0xd8] sm:$0xff]
      %v721 = vld [vmem:[%s6 + $0xe0] sm:$0xff]
      %v722 = vld [vmem:[%s6 + $0xe8] sm:$0xff]
      %v723 = vld [vmem:[%s6 + $0xf0] sm:$0xff]
      %v724 = vld [vmem:[%s6 + $0xf8] sm:$0xff]
      %v725 = vld [vmem:[%s6 + $0x100] sm:$0xff]
      %v726 = vld [vmem:[%s6 + $0x108] sm:$0xff]
      %v727 = vld [vmem:[%s6 + $0x110] sm:$0xff]
      %v728 = vld [vmem:[%s6 + $0x118] sm:$0xff]
      %v729 = vld [vmem:[%s6 + $0x120] sm:$0xff]
      %v730 = vld [vmem:[%s6 + $0x128] sm:$0xff]
      %v731 = vld [vmem:[%s6 + $0x130] sm:$0xff]
      %v732 = vld [vmem:[%s6 + $0x138] sm:$0xff]
      %v733 = vld [vmem:[%s6 + $0x140] sm:$0xff]
      %v734 = vld [vmem:[%s6 + $0x148] sm:$0xff]
      %v735 = vld [vmem:[%s6 + $0x150] sm:$0xff]
      %v736 = vld [vmem:[%s6 + $0x158] sm:$0xff]
      %v737 = vld [vmem:[%s6 + $0x160] sm:$0xff]
      %v738 = vld [vmem:[%s6 + $0x168] sm:$0xff]
      %v739 = vld [vmem:[%s6 + $0x170] sm:$0xff]
      %v740 = vld [vmem:[%s6 + $0x178] sm:$0xff]
      %v741 = vld [vmem:[%s7] sm:$0x3f]
      %v743 = vperm.slane %v741, 0
      %v744 = vperm.slane %v741, 1
      %v745 = vperm.slane %v741, 2
      %v746 = vperm.slane %v741, 3
      %v747 = vperm.slane %v741, 4
      %v748 = vperm.slane %v741, 5
      %v803 = vunpack.c.l.b16 %v693
      %v804 = vunpack.c.h.b16 %v693
      %v805 = vunpack.c.l.b16 %v694
      %v806 = vunpack.c.h.b16 %v694
      %v807 = vunpack.c.l.b16 %v695
      %v808 = vunpack.c.h.b16 %v695
      %v809 = vunpack.c.l.b16 %v696
      %v810 = vunpack.c.h.b16 %v696
      %v811 = vunpack.c.l.b16 %v697
      %v812 = vunpack.c.h.b16 %v697
      %v813 = vunpack.c.l.b16 %v698
      %v814 = vunpack.c.h.b16 %v698
      %v815 = vunpack.c.l.b16 %v699
      %v816 = vunpack.c.h.b16 %v699
      %v817 = vunpack.c.l.b16 %v700
      %v818 = vunpack.c.h.b16 %v700
      %v819 = vunpack.c.l.b16 %v701
      %v820 = vunpack.c.h.b16 %v701
      %v821 = vunpack.c.l.b16 %v702
      %v822 = vunpack.c.h.b16 %v702
      %v823 = vunpack.c.l.b16 %v703
      %v824 = vunpack.c.h.b16 %v703
      %v825 = vunpack.c.l.b16 %v704
      %v826 = vunpack.c.h.b16 %v704
      %v827 = vunpack.c.l.b16 %v705
      %v828 = vunpack.c.h.b16 %v705
      %v829 = vunpack.c.l.b16 %v706
      %v830 = vunpack.c.h.b16 %v706
      %v831 = vunpack.c.l.b16 %v707
      %v832 = vunpack.c.h.b16 %v707
      %v833 = vunpack.c.l.b16 %v708
      %v834 = vunpack.c.h.b16 %v708
      %v835 = vunpack.c.l.b16 %v709
      %v836 = vunpack.c.h.b16 %v709
      %v837 = vunpack.c.l.b16 %v710
      %v838 = vunpack.c.h.b16 %v710
      %v839 = vunpack.c.l.b16 %v711
      %v840 = vunpack.c.h.b16 %v711
      %v841 = vunpack.c.l.b16 %v712
      %v842 = vunpack.c.h.b16 %v712
      %v843 = vunpack.c.l.b16 %v713
      %v844 = vunpack.c.h.b16 %v713
      %v845 = vunpack.c.l.b16 %v714
      %v846 = vunpack.c.h.b16 %v714
      %v847 = vunpack.c.l.b16 %v715
      %v848 = vunpack.c.h.b16 %v715
      %v849 = vunpack.c.l.b16 %v716
      %v850 = vunpack.c.h.b16 %v716
      %v851 = vunpack.c.l.b16 %v717
      %v852 = vunpack.c.h.b16 %v717
      %v853 = vunpack.c.l.b16 %v718
      %v854 = vunpack.c.h.b16 %v718
      %v855 = vunpack.c.l.b16 %v719
      %v856 = vunpack.c.h.b16 %v719
      %v857 = vunpack.c.l.b16 %v720
      %v858 = vunpack.c.h.b16 %v720
      %v859 = vunpack.c.l.b16 %v721
      %v860 = vunpack.c.h.b16 %v721
      %v861 = vunpack.c.l.b16 %v722
      %v862 = vunpack.c.h.b16 %v722
      %v863 = vunpack.c.l.b16 %v723
      %v864 = vunpack.c.h.b16 %v723
      %v865 = vunpack.c.l.b16 %v724
      %v866 = vunpack.c.h.b16 %v724
      %v867 = vunpack.c.l.b16 %v725
      %v868 = vunpack.c.h.b16 %v725
      %v869 = vunpack.c.l.b16 %v726
      %v870 = vunpack.c.h.b16 %v726
      %v871 = vunpack.c.l.b16 %v727
      %v872 = vunpack.c.h.b16 %v727
      %v873 = vunpack.c.l.b16 %v728
      %v874 = vunpack.c.h.b16 %v728
      %v875 = vunpack.c.l.b16 %v729
      %v876 = vunpack.c.h.b16 %v729
      %v877 = vunpack.c.l.b16 %v730
      %v878 = vunpack.c.h.b16 %v730
      %v879 = vunpack.c.l.b16 %v731
      %v880 = vunpack.c.h.b16 %v731
      %v881 = vunpack.c.l.b16 %v732
      %v882 = vunpack.c.h.b16 %v732
      %v883 = vunpack.c.l.b16 %v733
      %v884 = vunpack.c.h.b16 %v733
      %v885 = vunpack.c.l.b16 %v734
      %v886 = vunpack.c.h.b16 %v734
      %v887 = vunpack.c.l.b16 %v735
      %v888 = vunpack.c.h.b16 %v735
      %v889 = vunpack.c.l.b16 %v736
      %v890 = vunpack.c.h.b16 %v736
      %v891 = vunpack.c.l.b16 %v737
      %v892 = vunpack.c.h.b16 %v737
      %v893 = vunpack.c.l.b16 %v738
      %v894 = vunpack.c.h.b16 %v738
      %v895 = vunpack.c.l.b16 %v739
      %v896 = vunpack.c.h.b16 %v739
      %v897 = vunpack.c.l.b16 %v740
      %v898 = vunpack.c.h.b16 %v740
      %v899 = vpack.c.b16 %v809, %v803
      %v900 = vpack.c.b16 %v810, %v804
      %v901 = vpack.c.b16 %v811, %v805
      %v902 = vpack.c.b16 %v812, %v806
      %v903 = vpack.c.b16 %v813, %v807
      %v904 = vpack.c.b16 %v814, %v808
      %v905 = vpack.c.b16 %v821, %v815
      %v906 = vpack.c.b16 %v822, %v816
      %v907 = vpack.c.b16 %v823, %v817
      %v908 = vpack.c.b16 %v824, %v818
      %v909 = vpack.c.b16 %v825, %v819
      %v910 = vpack.c.b16 %v826, %v820
      %v911 = vpack.c.b16 %v833, %v827
      %v912 = vpack.c.b16 %v834, %v828
      %v913 = vpack.c.b16 %v835, %v829
      %v914 = vpack.c.b16 %v836, %v830
      %v915 = vpack.c.b16 %v837, %v831
      %v916 = vpack.c.b16 %v838, %v832
      %v917 = vpack.c.b16 %v845, %v839
      %v918 = vpack.c.b16 %v846, %v840
      %v919 = vpack.c.b16 %v847, %v841
      %v920 = vpack.c.b16 %v848, %v842
      %v921 = vpack.c.b16 %v849, %v843
      %v922 = vpack.c.b16 %v850, %v844
      %v923 = vpack.c.b16 %v857, %v851
      %v924 = vpack.c.b16 %v858, %v852
      %v925 = vpack.c.b16 %v859, %v853
      %v926 = vpack.c.b16 %v860, %v854
      %v927 = vpack.c.b16 %v861, %v855
      %v928 = vpack.c.b16 %v862, %v856
      %v929 = vpack.c.b16 %v869, %v863
      %v930 = vpack.c.b16 %v870, %v864
      %v931 = vpack.c.b16 %v871, %v865
      %v932 = vpack.c.b16 %v872, %v866
      %v933 = vpack.c.b16 %v873, %v867
      %v934 = vpack.c.b16 %v874, %v868
      %v935 = vpack.c.b16 %v881, %v875
      %v936 = vpack.c.b16 %v882, %v876
      %v937 = vpack.c.b16 %v883, %v877
      %v938 = vpack.c.b16 %v884, %v878
      %v939 = vpack.c.b16 %v885, %v879
      %v940 = vpack.c.b16 %v886, %v880
      %v941 = vpack.c.b16 %v893, %v887
      %v942 = vpack.c.b16 %v894, %v888
      %v943 = vpack.c.b16 %v895, %v889
      %v944 = vpack.c.b16 %v896, %v890
      %v945 = vpack.c.b16 %v897, %v891
      %v946 = vpack.c.b16 %v898, %v892
      %995 = vmatpush.bf16.msra.mxu0 %v941
      %996 = vmatpush.bf16.msra.mxu0 %v935
      %997 = vmatpush.bf16.msra.mxu0 %v929
      %998 = vmatpush.bf16.msra.mxu0 %v923
      %999 = vmatpush.bf16.msra.mxu0 %v917
      %1000 = vmatpush.bf16.msra.mxu0 %v911
      %1001 = vmatpush.bf16.msra.mxu0 %v905
      %1002 = vmatpush.bf16.msra.mxu0 %v899
      %1003 = vmatmul.bf16.gmra.mxu0 %v692
      %v1004 = vpop.f32.mrf.mxu0
      %v1005 = vadd.f32 %v743, %v1004
      %v1006 = vpop.f32.mrf.mxu0
      %1007 = vdwg.mxu0
      %1008 = vmatpush.bf16.msra.mxu0 %v942
      %1009 = vmatpush.bf16.msra.mxu0 %v936
      %1010 = vmatpush.bf16.msra.mxu0 %v930
      %1011 = vmatpush.bf16.msra.mxu0 %v924
      %1012 = vmatpush.bf16.msra.mxu0 %v918
      %1013 = vmatpush.bf16.msra.mxu0 %v912
      %1014 = vmatpush.bf16.msra.mxu0 %v906
      %1015 = vmatpush.bf16.msra.mxu0 %v900
      %1016 = vmatmul.bf16.gmra.mxu0 %v692
      %v1017 = vpop.f32.mrf.mxu0
      %v1018 = vadd.f32 %v744, %v1017
      %v1019 = vpop.f32.mrf.mxu0
      %1020 = vdwg.mxu0
      %1021 = vmatpush.bf16.msra.mxu0 %v943
      %1022 = vmatpush.bf16.msra.mxu0 %v937
      %1023 = vmatpush.bf16.msra.mxu0 %v931
      %1024 = vmatpush.bf16.msra.mxu0 %v925
      %1025 = vmatpush.bf16.msra.mxu0 %v919
      %1026 = vmatpush.bf16.msra.mxu0 %v913
      %1027 = vmatpush.bf16.msra.mxu0 %v907
      %1028 = vmatpush.bf16.msra.mxu0 %v901
      %1029 = vmatmul.bf16.gmra.mxu0 %v692
      %v1030 = vpop.f32.mrf.mxu0
      %v1031 = vadd.f32 %v745, %v1030
      %v1032 = vpop.f32.mrf.mxu0
      %1033 = vdwg.mxu0
      %1034 = vmatpush.bf16.msra.mxu0 %v944
      %1035 = vmatpush.bf16.msra.mxu0 %v938
      %1036 = vmatpush.bf16.msra.mxu0 %v932
      %1037 = vmatpush.bf16.msra.mxu0 %v926
      %1038 = vmatpush.bf16.msra.mxu0 %v920
      %1039 = vmatpush.bf16.msra.mxu0 %v914
      %1040 = vmatpush.bf16.msra.mxu0 %v908
      %1041 = vmatpush.bf16.msra.mxu0 %v902
      %1042 = vmatmul.bf16.gmra.mxu0 %v692
      %v1043 = vpop.f32.mrf.mxu0
      %v1044 = vadd.f32 %v746, %v1043
      %v1045 = vpop.f32.mrf.mxu0
      %1046 = vdwg.mxu0
      %1047 = vmatpush.bf16.msra.mxu0 %v945
      %1048 = vmatpush.bf16.msra.mxu0 %v939
      %1049 = vmatpush.bf16.msra.mxu0 %v933
      %1050 = vmatpush.bf16.msra.mxu0 %v927
      %1051 = vmatpush.bf16.msra.mxu0 %v921
      %1052 = vmatpush.bf16.msra.mxu0 %v915
      %1053 = vmatpush.bf16.msra.mxu0 %v909
      %1054 = vmatpush.bf16.msra.mxu0 %v903
      %1055 = vmatmul.bf16.gmra.mxu0 %v692
      %v1056 = vpop.f32.mrf.mxu0
      %v1057 = vadd.f32 %v747, %v1056
      %v1058 = vpop.f32.mrf.mxu0
      %1059 = vdwg.mxu0
      %1060 = vmatpush.bf16.msra.mxu0 %v946
      %1061 = vmatpush.bf16.msra.mxu0 %v940
      %1062 = vmatpush.bf16.msra.mxu0 %v934
      %1063 = vmatpush.bf16.msra.mxu0 %v928
      %1064 = vmatpush.bf16.msra.mxu0 %v922
      %1065 = vmatpush.bf16.msra.mxu0 %v916
      %1066 = vmatpush.bf16.msra.mxu0 %v910
      %1067 = vmatpush.bf16.msra.mxu0 %v904
      %1068 = vmatmul.bf16.gmra.mxu0 %v692
      %v1069 = vpop.f32.mrf.mxu0
      %v1070 = vadd.f32 %v748, %v1069
      %v1071 = vpop.f32.mrf.mxu0
      %1072 = vdwg.mxu0
      %v1073 = vxor.u32 %v1018, 2147483648
      %v1074 = vmul.f32 %v1073, 1.442695
      %v1075 = vpow.pop %v1074
      %v1076 = vadd.f32 %v1075, 1.0
      %v1077 = vrcp.pop %v1076
      %v1078 = vmul.f32 %v1076, %v1077
      %v1079 = vsub.f32 1.0, %v1078
      %v1080 = vmul.f32 %v1077, %v1079
      %v1081 = vadd.f32 %v1077, %v1080
      %vm1082 = vweird.f32 %v1076
      %vm1083 = vweird.f32 %v1077
      %vm1084 = vmor %vm1082, %vm1083
      %v1085 = vsel %vm1084, %v1077, %v1081
      %v1086 = vand.u32 2147483647, %v1076
      %vm1087 = vcmp.eq.f32.partialorder %v1086, 8.507059e+37
      %v1088 = vand.u32 %v1076, 2147483648
      %v1089 = vor.u32 1.1754944e-38, %v1088
      %v1090 = vsel %vm1087, %v1089, %v1085
      %v1091 = vmul.f32 1.0, %v1090
      %v1092 = vld [vmem:[%s4] sm:$0xf]
      %v1093 = vld [vmem:[%s4 + $0x4] sm:$0xf]
      %v1094 = vld [vmem:[%s4 + $0x8] sm:$0xf]
      %v1095 = vld [vmem:[%s4 + $0xc] sm:$0xf]
      %v1096 = vld [vmem:[%s4 + $0x10] sm:$0xf]
      %v1097 = vld [vmem:[%s4 + $0x14] sm:$0xf]
      %v1098 = vld [vmem:[%s4 + $0x18] sm:$0xf]
      %v1099 = vld [vmem:[%s4 + $0x1c] sm:$0xf]
      %v1100 = vld [vmem:[%s4 + $0x20] sm:$0xf]
      %v1101 = vld [vmem:[%s4 + $0x24] sm:$0xf]
      %v1102 = vld [vmem:[%s4 + $0x28] sm:$0xf]
      %v1103 = vld [vmem:[%s4 + $0x2c] sm:$0xf]
      %v1104 = vld [vmem:[%s4 + $0x30] sm:$0xf]
      %v1105 = vld [vmem:[%s4 + $0x34] sm:$0xf]
      %v1106 = vld [vmem:[%s4 + $0x38] sm:$0xf]
      %v1107 = vld [vmem:[%s4 + $0x3c] sm:$0xf]
      %v1108 = vld [vmem:[%s5] sm:$0x1]
      %v1110 = vperm.slane %v1108, 0
      %v1368 = vunpack.c.l.b16 %v434
      %v1369 = vunpack.c.l.b16 %v435
      %v1370 = vunpack.c.l.b16 %v436
      %v1371 = vunpack.c.l.b16 %v437
      %v1372 = vunpack.c.l.b16 %v438
      %v1373 = vunpack.c.l.b16 %v439
      %v1374 = vunpack.c.l.b16 %v440
      %v1375 = vunpack.c.l.b16 %v441
      %v1376 = vunpack.c.l.b16 %v442
      %v1377 = vunpack.c.l.b16 %v443
      %v1378 = vunpack.c.l.b16 %v444
      %v1379 = vunpack.c.l.b16 %v445
      %v1380 = vunpack.c.l.b16 %v446
      %v1381 = vunpack.c.l.b16 %v447
      %v1382 = vunpack.c.l.b16 %v448
      %v1383 = vunpack.c.l.b16 %v449
      %v1384 = vunpack.c.l.b16 %v450
      %v1385 = vunpack.c.l.b16 %v451
      %v1386 = vunpack.c.l.b16 %v452
      %v1387 = vunpack.c.l.b16 %v453
      %v1388 = vunpack.c.l.b16 %v454
      %v1389 = vunpack.c.l.b16 %v455
      %v1390 = vunpack.c.l.b16 %v456
      %v1391 = vunpack.c.l.b16 %v457
      %v1392 = vunpack.c.l.b16 %v458
      %v1393 = vunpack.c.l.b16 %v459
      %v1394 = vunpack.c.l.b16 %v460
      %v1395 = vunpack.c.l.b16 %v461
      %v1396 = vunpack.c.l.b16 %v462
      %v1397 = vunpack.c.l.b16 %v463
      %v1398 = vunpack.c.l.b16 %v464
      %v1399 = vunpack.c.l.b16 %v465
      %v1400 = vunpack.c.l.b16 %v466
      %v1401 = vunpack.c.l.b16 %v467
      %v1402 = vunpack.c.l.b16 %v468
      %v1403 = vunpack.c.l.b16 %v469
      %v1404 = vunpack.c.l.b16 %v470
      %v1405 = vunpack.c.l.b16 %v471
      %v1406 = vunpack.c.l.b16 %v472
      %v1407 = vunpack.c.l.b16 %v473
      %v1408 = vunpack.c.l.b16 %v474
      %v1409 = vunpack.c.l.b16 %v475
      %v1410 = vunpack.c.l.b16 %v476
      %v1411 = vunpack.c.l.b16 %v477
      %v1412 = vunpack.c.l.b16 %v478
      %v1413 = vunpack.c.l.b16 %v479
      %v1414 = vunpack.c.l.b16 %v480
      %v1415 = vunpack.c.l.b16 %v481
      %v1416 = vunpack.c.l.b16 %v482
      %v1417 = vunpack.c.l.b16 %v483
      %v1418 = vunpack.c.l.b16 %v484
      %v1419 = vunpack.c.l.b16 %v485
      %v1420 = vunpack.c.l.b16 %v486
      %v1421 = vunpack.c.l.b16 %v487
      %v1422 = vunpack.c.l.b16 %v488
      %v1423 = vunpack.c.l.b16 %v489
      %v1424 = vunpack.c.l.b16 %v490
      %v1425 = vunpack.c.l.b16 %v491
      %v1426 = vunpack.c.l.b16 %v492
      %v1427 = vunpack.c.l.b16 %v493
      %v1428 = vunpack.c.l.b16 %v494
      %v1429 = vunpack.c.l.b16 %v495
      %v1430 = vunpack.c.l.b16 %v496
      %v1431 = vunpack.c.l.b16 %v497
      %v1432 = vunpack.c.l.b16 %v498
      %v1433 = vunpack.c.l.b16 %v499
      %v1434 = vunpack.c.l.b16 %v500
      %v1435 = vunpack.c.l.b16 %v501
      %v1436 = vunpack.c.l.b16 %v502
      %v1437 = vunpack.c.l.b16 %v503
      %v1438 = vunpack.c.l.b16 %v504
      %v1439 = vunpack.c.l.b16 %v505
      %v1440 = vunpack.c.l.b16 %v506
      %v1441 = vunpack.c.l.b16 %v507
      %v1442 = vunpack.c.l.b16 %v508
      %v1443 = vunpack.c.l.b16 %v509
      %v1444 = vunpack.c.l.b16 %v510
      %v1445 = vunpack.c.l.b16 %v511
      %v1446 = vunpack.c.l.b16 %v512
      %v1447 = vunpack.c.l.b16 %v513
      %v1448 = vunpack.c.l.b16 %v514
      %v1449 = vunpack.c.l.b16 %v515
      %v1450 = vunpack.c.l.b16 %v516
      %v1451 = vunpack.c.l.b16 %v517
      %v1452 = vunpack.c.l.b16 %v518
      %v1453 = vunpack.c.l.b16 %v519
      %v1454 = vunpack.c.l.b16 %v520
      %v1455 = vunpack.c.l.b16 %v521
      %v1456 = vunpack.c.l.b16 %v522
      %v1457 = vunpack.c.l.b16 %v523
      %v1458 = vunpack.c.l.b16 %v524
      %v1459 = vunpack.c.l.b16 %v525
      %v1460 = vunpack.c.l.b16 %v526
      %v1461 = vunpack.c.l.b16 %v527
      %v1462 = vunpack.c.l.b16 %v528
      %v1463 = vunpack.c.l.b16 %v529
      %v1464 = vunpack.c.l.b16 %v530
      %v1465 = vunpack.c.l.b16 %v531
      %v1466 = vunpack.c.l.b16 %v532
      %v1467 = vunpack.c.l.b16 %v533
      %v1468 = vunpack.c.l.b16 %v534
      %v1469 = vunpack.c.l.b16 %v535
      %v1470 = vunpack.c.l.b16 %v536
      %v1471 = vunpack.c.l.b16 %v537
      %v1472 = vunpack.c.l.b16 %v538
      %v1473 = vunpack.c.l.b16 %v539
      %v1474 = vunpack.c.l.b16 %v540
      %v1475 = vunpack.c.l.b16 %v541
      %v1476 = vunpack.c.l.b16 %v542
      %v1477 = vunpack.c.l.b16 %v543
      %v1478 = vunpack.c.l.b16 %v544
      %v1479 = vunpack.c.l.b16 %v545
      %v1480 = vunpack.c.l.b16 %v546
      %v1481 = vunpack.c.l.b16 %v547
      %v1482 = vunpack.c.l.b16 %v548
      %v1483 = vunpack.c.l.b16 %v549
      %v1484 = vunpack.c.l.b16 %v550
      %v1485 = vunpack.c.l.b16 %v551
      %v1486 = vunpack.c.l.b16 %v552
      %v1487 = vunpack.c.l.b16 %v553
      %v1488 = vunpack.c.l.b16 %v554
      %v1489 = vunpack.c.l.b16 %v555
      %v1490 = vunpack.c.l.b16 %v556
      %v1491 = vunpack.c.l.b16 %v557
      %v1492 = vunpack.c.l.b16 %v558
      %v1493 = vunpack.c.l.b16 %v559
      %v1494 = vunpack.c.l.b16 %v560
      %v1495 = vunpack.c.l.b16 %v561
      %v1496 = vunpack.c.l.b16 %v562
      %v1497 = vunpack.c.l.b16 %v563
      %v1498 = vunpack.c.l.b16 %v564
      %v1499 = vunpack.c.l.b16 %v565
      %v1500 = vunpack.c.l.b16 %v566
      %v1501 = vunpack.c.l.b16 %v567
      %v1502 = vunpack.c.l.b16 %v568
      %v1503 = vunpack.c.l.b16 %v569
      %v1504 = vunpack.c.l.b16 %v570
      %v1505 = vunpack.c.l.b16 %v571
      %v1506 = vunpack.c.l.b16 %v572
      %v1507 = vunpack.c.l.b16 %v573
      %v1508 = vunpack.c.l.b16 %v574
      %v1509 = vunpack.c.l.b16 %v575
      %v1510 = vunpack.c.l.b16 %v576
      %v1511 = vunpack.c.l.b16 %v577
      %v1512 = vunpack.c.l.b16 %v578
      %v1513 = vunpack.c.l.b16 %v579
      %v1514 = vunpack.c.l.b16 %v580
      %v1515 = vunpack.c.l.b16 %v581
      %v1516 = vunpack.c.l.b16 %v582
      %v1517 = vunpack.c.l.b16 %v583
      %v1518 = vunpack.c.l.b16 %v584
      %v1519 = vunpack.c.l.b16 %v585
      %v1520 = vunpack.c.l.b16 %v586
      %v1521 = vunpack.c.l.b16 %v587
      %v1522 = vunpack.c.l.b16 %v588
      %v1523 = vunpack.c.l.b16 %v589
      %v1524 = vunpack.c.l.b16 %v590
      %v1525 = vunpack.c.l.b16 %v591
      %v1526 = vunpack.c.l.b16 %v592
      %v1527 = vunpack.c.l.b16 %v593
      %v1528 = vunpack.c.l.b16 %v594
      %v1529 = vunpack.c.l.b16 %v595
      %v1530 = vunpack.c.l.b16 %v596
      %v1531 = vunpack.c.l.b16 %v597
      %v1532 = vunpack.c.l.b16 %v598
      %v1533 = vunpack.c.l.b16 %v599
      %v1534 = vunpack.c.l.b16 %v600
      %v1535 = vunpack.c.l.b16 %v601
      %v1536 = vunpack.c.l.b16 %v602
      %v1537 = vunpack.c.l.b16 %v603
      %v1538 = vunpack.c.l.b16 %v604
      %v1539 = vunpack.c.l.b16 %v605
      %v1540 = vunpack.c.l.b16 %v606
      %v1541 = vunpack.c.l.b16 %v607
      %v1542 = vunpack.c.l.b16 %v608
      %v1543 = vunpack.c.l.b16 %v609
      %v1544 = vunpack.c.l.b16 %v610
      %v1545 = vunpack.c.l.b16 %v611
      %v1546 = vunpack.c.l.b16 %v612
      %v1547 = vunpack.c.l.b16 %v613
      %v1548 = vunpack.c.l.b16 %v614
      %v1549 = vunpack.c.l.b16 %v615
      %v1550 = vunpack.c.l.b16 %v616
      %v1551 = vunpack.c.l.b16 %v617
      %v1552 = vunpack.c.l.b16 %v618
      %v1553 = vunpack.c.l.b16 %v619
      %v1554 = vunpack.c.l.b16 %v620
      %v1555 = vunpack.c.l.b16 %v621
      %v1556 = vunpack.c.l.b16 %v622
      %v1557 = vunpack.c.l.b16 %v623
      %v1558 = vunpack.c.l.b16 %v624
      %v1559 = vunpack.c.l.b16 %v625
      %v1560 = vunpack.c.l.b16 %v626
      %v1561 = vunpack.c.l.b16 %v627
      %v1562 = vunpack.c.l.b16 %v628
      %v1563 = vunpack.c.l.b16 %v629
      %v1564 = vunpack.c.l.b16 %v630
      %v1565 = vunpack.c.l.b16 %v631
      %v1566 = vunpack.c.l.b16 %v632
      %v1567 = vunpack.c.l.b16 %v633
      %v1568 = vunpack.c.l.b16 %v634
      %v1569 = vunpack.c.l.b16 %v635
      %v1570 = vunpack.c.l.b16 %v636
      %v1571 = vunpack.c.l.b16 %v637
      %v1572 = vunpack.c.l.b16 %v638
      %v1573 = vunpack.c.l.b16 %v639
      %v1574 = vunpack.c.l.b16 %v640
      %v1575 = vunpack.c.l.b16 %v641
      %v1576 = vunpack.c.l.b16 %v642
      %v1577 = vunpack.c.l.b16 %v643
      %v1578 = vunpack.c.l.b16 %v644
      %v1579 = vunpack.c.l.b16 %v645
      %v1580 = vunpack.c.l.b16 %v646
      %v1581 = vunpack.c.l.b16 %v647
      %v1582 = vunpack.c.l.b16 %v648
      %v1583 = vunpack.c.l.b16 %v649
      %v1584 = vunpack.c.l.b16 %v650
      %v1585 = vunpack.c.l.b16 %v651
      %v1586 = vunpack.c.l.b16 %v652
      %v1587 = vunpack.c.l.b16 %v653
      %v1588 = vunpack.c.l.b16 %v654
      %v1589 = vunpack.c.l.b16 %v655
      %v1590 = vunpack.c.l.b16 %v656
      %v1591 = vunpack.c.l.b16 %v657
      %v1592 = vunpack.c.l.b16 %v658
      %v1593 = vunpack.c.l.b16 %v659
      %v1594 = vunpack.c.l.b16 %v660
      %v1595 = vunpack.c.l.b16 %v661
      %v1596 = vunpack.c.l.b16 %v662
      %v1597 = vunpack.c.l.b16 %v663
      %v1598 = vunpack.c.l.b16 %v664
      %v1599 = vunpack.c.l.b16 %v665
      %v1600 = vunpack.c.l.b16 %v666
      %v1601 = vunpack.c.l.b16 %v667
      %v1602 = vunpack.c.l.b16 %v668
      %v1603 = vunpack.c.l.b16 %v669
      %v1604 = vunpack.c.l.b16 %v670
      %v1605 = vunpack.c.l.b16 %v671
      %v1606 = vunpack.c.l.b16 %v672
      %v1607 = vunpack.c.l.b16 %v673
      %v1608 = vunpack.c.l.b16 %v674
      %v1609 = vunpack.c.l.b16 %v675
      %v1610 = vunpack.c.l.b16 %v676
      %v1611 = vunpack.c.l.b16 %v677
      %v1612 = vunpack.c.l.b16 %v678
      %v1613 = vunpack.c.l.b16 %v679
      %v1614 = vunpack.c.l.b16 %v680
      %v1615 = vunpack.c.l.b16 %v681
      %v1616 = vunpack.c.l.b16 %v682
      %v1617 = vunpack.c.l.b16 %v683
      %v1618 = vunpack.c.l.b16 %v684
      %v1619 = vunpack.c.l.b16 %v685
      %v1620 = vunpack.c.l.b16 %v686
      %v1621 = vunpack.c.l.b16 %v687
      %v1622 = vunpack.c.l.b16 %v688
      %v1623 = vunpack.c.l.b16 %v689
      %v1624 = vpack.c.b16 %v1369, %v1368
      %v1625 = vpack.c.b16 %v1371, %v1370
      %v1626 = vpack.c.b16 %v1373, %v1372
      %v1627 = vpack.c.b16 %v1375, %v1374
      %v1628 = vpack.c.b16 %v1377, %v1376
      %v1629 = vpack.c.b16 %v1379, %v1378
      %v1630 = vpack.c.b16 %v1381, %v1380
      %v1631 = vpack.c.b16 %v1383, %v1382
      %v1632 = vpack.c.b16 %v1385, %v1384
      %v1633 = vpack.c.b16 %v1387, %v1386
      %v1634 = vpack.c.b16 %v1389, %v1388
      %v1635 = vpack.c.b16 %v1391, %v1390
      %v1636 = vpack.c.b16 %v1393, %v1392
      %v1637 = vpack.c.b16 %v1395, %v1394
      %v1638 = vpack.c.b16 %v1397, %v1396
      %v1639 = vpack.c.b16 %v1399, %v1398
      %v1640 = vpack.c.b16 %v1401, %v1400
      %v1641 = vpack.c.b16 %v1403, %v1402
      %v1642 = vpack.c.b16 %v1405, %v1404
      %v1643 = vpack.c.b16 %v1407, %v1406
      %v1644 = vpack.c.b16 %v1409, %v1408
      %v1645 = vpack.c.b16 %v1411, %v1410
      %v1646 = vpack.c.b16 %v1413, %v1412
      %v1647 = vpack.c.b16 %v1415, %v1414
      %v1648 = vpack.c.b16 %v1417, %v1416
      %v1649 = vpack.c.b16 %v1419, %v1418
      %v1650 = vpack.c.b16 %v1421, %v1420
      %v1651 = vpack.c.b16 %v1423, %v1422
      %v1652 = vpack.c.b16 %v1425, %v1424
      %v1653 = vpack.c.b16 %v1427, %v1426
      %v1654 = vpack.c.b16 %v1429, %v1428
      %v1655 = vpack.c.b16 %v1431, %v1430
      %v1656 = vpack.c.b16 %v1433, %v1432
      %v1657 = vpack.c.b16 %v1435, %v1434
      %v1658 = vpack.c.b16 %v1437, %v1436
      %v1659 = vpack.c.b16 %v1439, %v1438
      %v1660 = vpack.c.b16 %v1441, %v1440
      %v1661 = vpack.c.b16 %v1443, %v1442
      %v1662 = vpack.c.b16 %v1445, %v1444
      %v1663 = vpack.c.b16 %v1447, %v1446
      %v1664 = vpack.c.b16 %v1449, %v1448
      %v1665 = vpack.c.b16 %v1451, %v1450
      %v1666 = vpack.c.b16 %v1453, %v1452
      %v1667 = vpack.c.b16 %v1455, %v1454
      %v1668 = vpack.c.b16 %v1457, %v1456
      %v1669 = vpack.c.b16 %v1459, %v1458
      %v1670 = vpack.c.b16 %v1461, %v1460
      %v1671 = vpack.c.b16 %v1463, %v1462
      %v1672 = vpack.c.b16 %v1465, %v1464
      %v1673 = vpack.c.b16 %v1467, %v1466
      %v1674 = vpack.c.b16 %v1469, %v1468
      %v1675 = vpack.c.b16 %v1471, %v1470
      %v1676 = vpack.c.b16 %v1473, %v1472
      %v1677 = vpack.c.b16 %v1475, %v1474
      %v1678 = vpack.c.b16 %v1477, %v1476
      %v1679 = vpack.c.b16 %v1479, %v1478
      %v1680 = vpack.c.b16 %v1481, %v1480
      %v1681 = vpack.c.b16 %v1483, %v1482
      %v1682 = vpack.c.b16 %v1485, %v1484
      %v1683 = vpack.c.b16 %v1487, %v1486
      %v1684 = vpack.c.b16 %v1489, %v1488
      %v1685 = vpack.c.b16 %v1491, %v1490
      %v1686 = vpack.c.b16 %v1493, %v1492
      %v1687 = vpack.c.b16 %v1495, %v1494
      %v1688 = vpack.c.b16 %v1497, %v1496
      %v1689 = vpack.c.b16 %v1499, %v1498
      %v1690 = vpack.c.b16 %v1501, %v1500
      %v1691 = vpack.c.b16 %v1503, %v1502
      %v1692 = vpack.c.b16 %v1505, %v1504
      %v1693 = vpack.c.b16 %v1507, %v1506
      %v1694 = vpack.c.b16 %v1509, %v1508
      %v1695 = vpack.c.b16 %v1511, %v1510
      %v1696 = vpack.c.b16 %v1513, %v1512
      %v1697 = vpack.c.b16 %v1515, %v1514
      %v1698 = vpack.c.b16 %v1517, %v1516
      %v1699 = vpack.c.b16 %v1519, %v1518
      %v1700 = vpack.c.b16 %v1521, %v1520
      %v1701 = vpack.c.b16 %v1523, %v1522
      %v1702 = vpack.c.b16 %v1525, %v1524
      %v1703 = vpack.c.b16 %v1527, %v1526
      %v1704 = vpack.c.b16 %v1529, %v1528
      %v1705 = vpack.c.b16 %v1531, %v1530
      %v1706 = vpack.c.b16 %v1533, %v1532
      %v1707 = vpack.c.b16 %v1535, %v1534
      %v1708 = vpack.c.b16 %v1537, %v1536
      %v1709 = vpack.c.b16 %v1539, %v1538
      %v1710 = vpack.c.b16 %v1541, %v1540
      %v1711 = vpack.c.b16 %v1543, %v1542
      %v1712 = vpack.c.b16 %v1545, %v1544
      %v1713 = vpack.c.b16 %v1547, %v1546
      %v1714 = vpack.c.b16 %v1549, %v1548
      %v1715 = vpack.c.b16 %v1551, %v1550
      %v1716 = vpack.c.b16 %v1553, %v1552
      %v1717 = vpack.c.b16 %v1555, %v1554
      %v1718 = vpack.c.b16 %v1557, %v1556
      %v1719 = vpack.c.b16 %v1559, %v1558
      %v1720 = vpack.c.b16 %v1561, %v1560
      %v1721 = vpack.c.b16 %v1563, %v1562
      %v1722 = vpack.c.b16 %v1565, %v1564
      %v1723 = vpack.c.b16 %v1567, %v1566
      %v1724 = vpack.c.b16 %v1569, %v1568
      %v1725 = vpack.c.b16 %v1571, %v1570
      %v1726 = vpack.c.b16 %v1573, %v1572
      %v1727 = vpack.c.b16 %v1575, %v1574
      %v1728 = vpack.c.b16 %v1577, %v1576
      %v1729 = vpack.c.b16 %v1579, %v1578
      %v1730 = vpack.c.b16 %v1581, %v1580
      %v1731 = vpack.c.b16 %v1583, %v1582
      %v1732 = vpack.c.b16 %v1585, %v1584
      %v1733 = vpack.c.b16 %v1587, %v1586
      %v1734 = vpack.c.b16 %v1589, %v1588
      %v1735 = vpack.c.b16 %v1591, %v1590
      %v1736 = vpack.c.b16 %v1593, %v1592
      %v1737 = vpack.c.b16 %v1595, %v1594
      %v1738 = vpack.c.b16 %v1597, %v1596
      %v1739 = vpack.c.b16 %v1599, %v1598
      %v1740 = vpack.c.b16 %v1601, %v1600
      %v1741 = vpack.c.b16 %v1603, %v1602
      %v1742 = vpack.c.b16 %v1605, %v1604
      %v1743 = vpack.c.b16 %v1607, %v1606
      %v1744 = vpack.c.b16 %v1609, %v1608
      %v1745 = vpack.c.b16 %v1611, %v1610
      %v1746 = vpack.c.b16 %v1613, %v1612
      %v1747 = vpack.c.b16 %v1615, %v1614
      %v1748 = vpack.c.b16 %v1617, %v1616
      %v1749 = vpack.c.b16 %v1619, %v1618
      %v1750 = vpack.c.b16 %v1621, %v1620
      %v1751 = vpack.c.b16 %v1623, %v1622
      %v1896 = vunpack.c.l.b16 %v1092
      %v1897 = vunpack.c.l.b16 %v1093
      %v1898 = vunpack.c.l.b16 %v1094
      %v1899 = vunpack.c.l.b16 %v1095
      %v1900 = vunpack.c.l.b16 %v1096
      %v1901 = vunpack.c.l.b16 %v1097
      %v1902 = vunpack.c.l.b16 %v1098
      %v1903 = vunpack.c.l.b16 %v1099
      %v1904 = vunpack.c.l.b16 %v1100
      %v1905 = vunpack.c.l.b16 %v1101
      %v1906 = vunpack.c.l.b16 %v1102
      %v1907 = vunpack.c.l.b16 %v1103
      %v1908 = vunpack.c.l.b16 %v1104
      %v1909 = vunpack.c.l.b16 %v1105
      %v1910 = vunpack.c.l.b16 %v1106
      %v1911 = vunpack.c.l.b16 %v1107
      %v1912 = vpack.c.b16 %v1897, %v1896
      %v1913 = vpack.c.b16 %v1899, %v1898
      %v1914 = vpack.c.b16 %v1901, %v1900
      %v1915 = vpack.c.b16 %v1903, %v1902
      %v1916 = vpack.c.b16 %v1905, %v1904
      %v1917 = vpack.c.b16 %v1907, %v1906
      %v1918 = vpack.c.b16 %v1909, %v1908
      %v1919 = vpack.c.b16 %v1911, %v1910
      %1928 = vmatpush.bf16.msra.mxu0 %v1919
      %1929 = vmatpush.bf16.msra.mxu0 %v1918
      %1930 = vmatpush.bf16.msra.mxu0 %v1917
      %1931 = vmatpush.bf16.msra.mxu0 %v1916
      %1932 = vmatpush.bf16.msra.mxu0 %v1915
      %1933 = vmatpush.bf16.msra.mxu0 %v1914
      %1934 = vmatpush.bf16.msra.mxu0 %v1913
      %1935 = vmatpush.bf16.msra.mxu0 %v1912
      %1936 = vmatmul.bf16.gmra.mxu0 %v1624
      %v1937 = vpop.f32.mrf.mxu0
      %v1938 = vadd.f32 %v1110, %v1937
      %v1939 = vpop.f32.mrf.mxu0
      %v1940 = vadd.f32 %v1110, %v1939
      %1941 = vmatmul.bf16.gmra.mxu0 %v1625
      %v1942 = vpop.f32.mrf.mxu0
      %v1943 = vadd.f32 %v1110, %v1942
      %v1944 = vpop.f32.mrf.mxu0
      %v1945 = vadd.f32 %v1110, %v1944
      %1946 = vmatmul.bf16.gmra.mxu0 %v1626
      %v1947 = vpop.f32.mrf.mxu0
      %v1948 = vadd.f32 %v1110, %v1947
      %v1949 = vpop.f32.mrf.mxu0
      %v1950 = vadd.f32 %v1110, %v1949
      %1951 = vmatmul.bf16.gmra.mxu0 %v1627
      %v1952 = vpop.f32.mrf.mxu0
      %v1953 = vadd.f32 %v1110, %v1952
      %v1954 = vpop.f32.mrf.mxu0
      %v1955 = vadd.f32 %v1110, %v1954
      %1956 = vmatmul.bf16.gmra.mxu0 %v1628
      %v1957 = vpop.f32.mrf.mxu0
      %v1958 = vadd.f32 %v1110, %v1957
      %v1959 = vpop.f32.mrf.mxu0
      %v1960 = vadd.f32 %v1110, %v1959
      %1961 = vmatmul.bf16.gmra.mxu0 %v1629
      %v1962 = vpop.f32.mrf.mxu0
      %v1963 = vadd.f32 %v1110, %v1962
      %v1964 = vpop.f32.mrf.mxu0
      %v1965 = vadd.f32 %v1110, %v1964
      %1966 = vmatmul.bf16.gmra.mxu0 %v1630
      %v1967 = vpop.f32.mrf.mxu0
      %v1968 = vadd.f32 %v1110, %v1967
      %v1969 = vpop.f32.mrf.mxu0
      %v1970 = vadd.f32 %v1110, %v1969
      %1971 = vmatmul.bf16.gmra.mxu0 %v1631
      %v1972 = vpop.f32.mrf.mxu0
      %v1973 = vadd.f32 %v1110, %v1972
      %v1974 = vpop.f32.mrf.mxu0
      %v1975 = vadd.f32 %v1110, %v1974
      %1976 = vmatmul.bf16.gmra.mxu0 %v1632
      %v1977 = vpop.f32.mrf.mxu0
      %v1978 = vadd.f32 %v1110, %v1977
      %v1979 = vpop.f32.mrf.mxu0
      %v1980 = vadd.f32 %v1110, %v1979
      %1981 = vmatmul.bf16.gmra.mxu0 %v1633
      %v1982 = vpop.f32.mrf.mxu0
      %v1983 = vadd.f32 %v1110, %v1982
      %v1984 = vpop.f32.mrf.mxu0
      %v1985 = vadd.f32 %v1110, %v1984
      %1986 = vmatmul.bf16.gmra.mxu0 %v1634
      %v1987 = vpop.f32.mrf.mxu0
      %v1988 = vadd.f32 %v1110, %v1987
      %v1989 = vpop.f32.mrf.mxu0
      %v1990 = vadd.f32 %v1110, %v1989
      %1991 = vmatmul.bf16.gmra.mxu0 %v1635
      %v1992 = vpop.f32.mrf.mxu0
      %v1993 = vadd.f32 %v1110, %v1992
      %v1994 = vpop.f32.mrf.mxu0
      %v1995 = vadd.f32 %v1110, %v1994
      %1996 = vmatmul.bf16.gmra.mxu0 %v1636
      %v1997 = vpop.f32.mrf.mxu0
      %v1998 = vadd.f32 %v1110, %v1997
      %v1999 = vpop.f32.mrf.mxu0
      %v2000 = vadd.f32 %v1110, %v1999
      %2001 = vmatmul.bf16.gmra.mxu0 %v1637
      %v2002 = vpop.f32.mrf.mxu0
      %v2003 = vadd.f32 %v1110, %v2002
      %v2004 = vpop.f32.mrf.mxu0
      %v2005 = vadd.f32 %v1110, %v2004
      %2006 = vmatmul.bf16.gmra.mxu0 %v1638
      %v2007 = vpop.f32.mrf.mxu0
      %v2008 = vadd.f32 %v1110, %v2007
      %v2009 = vpop.f32.mrf.mxu0
      %v2010 = vadd.f32 %v1110, %v2009
      %2011 = vmatmul.bf16.gmra.mxu0 %v1639
      %v2012 = vpop.f32.mrf.mxu0
      %v2013 = vadd.f32 %v1110, %v2012
      %v2014 = vpop.f32.mrf.mxu0
      %v2015 = vadd.f32 %v1110, %v2014
      %2016 = vmatmul.bf16.gmra.mxu0 %v1640
      %v2017 = vpop.f32.mrf.mxu0
      %v2018 = vadd.f32 %v1110, %v2017
      %v2019 = vpop.f32.mrf.mxu0
      %v2020 = vadd.f32 %v1110, %v2019
      %2021 = vmatmul.bf16.gmra.mxu0 %v1641
      %v2022 = vpop.f32.mrf.mxu0
      %v2023 = vadd.f32 %v1110, %v2022
      %v2024 = vpop.f32.mrf.mxu0
      %v2025 = vadd.f32 %v1110, %v2024
      %2026 = vmatmul.bf16.gmra.mxu0 %v1642
      %v2027 = vpop.f32.mrf.mxu0
      %v2028 = vadd.f32 %v1110, %v2027
      %v2029 = vpop.f32.mrf.mxu0
      %v2030 = vadd.f32 %v1110, %v2029
      %2031 = vmatmul.bf16.gmra.mxu0 %v1643
      %v2032 = vpop.f32.mrf.mxu0
      %v2033 = vadd.f32 %v1110, %v2032
      %v2034 = vpop.f32.mrf.mxu0
      %v2035 = vadd.f32 %v1110, %v2034
      %2036 = vmatmul.bf16.gmra.mxu0 %v1644
      %v2037 = vpop.f32.mrf.mxu0
      %v2038 = vadd.f32 %v1110, %v2037
      %v2039 = vpop.f32.mrf.mxu0
      %v2040 = vadd.f32 %v1110, %v2039
      %2041 = vmatmul.bf16.gmra.mxu0 %v1645
      %v2042 = vpop.f32.mrf.mxu0
      %v2043 = vadd.f32 %v1110, %v2042
      %v2044 = vpop.f32.mrf.mxu0
      %v2045 = vadd.f32 %v1110, %v2044
      %2046 = vmatmul.bf16.gmra.mxu0 %v1646
      %v2047 = vpop.f32.mrf.mxu0
      %v2048 = vadd.f32 %v1110, %v2047
      %v2049 = vpop.f32.mrf.mxu0
      %v2050 = vadd.f32 %v1110, %v2049
      %2051 = vmatmul.bf16.gmra.mxu0 %v1647
      %v2052 = vpop.f32.mrf.mxu0
      %v2053 = vadd.f32 %v1110, %v2052
      %v2054 = vpop.f32.mrf.mxu0
      %v2055 = vadd.f32 %v1110, %v2054
      %2056 = vmatmul.bf16.gmra.mxu0 %v1648
      %v2057 = vpop.f32.mrf.mxu0
      %v2058 = vadd.f32 %v1110, %v2057
      %v2059 = vpop.f32.mrf.mxu0
      %v2060 = vadd.f32 %v1110, %v2059
      %2061 = vmatmul.bf16.gmra.mxu0 %v1649
      %v2062 = vpop.f32.mrf.mxu0
      %v2063 = vadd.f32 %v1110, %v2062
      %v2064 = vpop.f32.mrf.mxu0
      %v2065 = vadd.f32 %v1110, %v2064
      %2066 = vmatmul.bf16.gmra.mxu0 %v1650
      %v2067 = vpop.f32.mrf.mxu0
      %v2068 = vadd.f32 %v1110, %v2067
      %v2069 = vpop.f32.mrf.mxu0
      %v2070 = vadd.f32 %v1110, %v2069
      %2071 = vmatmul.bf16.gmra.mxu0 %v1651
      %v2072 = vpop.f32.mrf.mxu0
      %v2073 = vadd.f32 %v1110, %v2072
      %v2074 = vpop.f32.mrf.mxu0
      %v2075 = vadd.f32 %v1110, %v2074
      %2076 = vmatmul.bf16.gmra.mxu0 %v1652
      %v2077 = vpop.f32.mrf.mxu0
      %v2078 = vadd.f32 %v1110, %v2077
      %v2079 = vpop.f32.mrf.mxu0
      %v2080 = vadd.f32 %v1110, %v2079
      %2081 = vmatmul.bf16.gmra.mxu0 %v1653
      %v2082 = vpop.f32.mrf.mxu0
      %v2083 = vadd.f32 %v1110, %v2082
      %v2084 = vpop.f32.mrf.mxu0
      %v2085 = vadd.f32 %v1110, %v2084
      %2086 = vmatmul.bf16.gmra.mxu0 %v1654
      %v2087 = vpop.f32.mrf.mxu0
      %v2088 = vadd.f32 %v1110, %v2087
      %v2089 = vpop.f32.mrf.mxu0
      %v2090 = vadd.f32 %v1110, %v2089
      %2091 = vmatmul.bf16.gmra.mxu0 %v1655
      %v2092 = vpop.f32.mrf.mxu0
      %v2093 = vadd.f32 %v1110, %v2092
      %v2094 = vpop.f32.mrf.mxu0
      %v2095 = vadd.f32 %v1110, %v2094
      %2096 = vmatmul.bf16.gmra.mxu0 %v1656
      %v2097 = vpop.f32.mrf.mxu0
      %v2098 = vadd.f32 %v1110, %v2097
      %v2099 = vpop.f32.mrf.mxu0
      %v2100 = vadd.f32 %v1110, %v2099
      %2101 = vmatmul.bf16.gmra.mxu0 %v1657
      %v2102 = vpop.f32.mrf.mxu0
      %v2103 = vadd.f32 %v1110, %v2102
      %v2104 = vpop.f32.mrf.mxu0
      %v2105 = vadd.f32 %v1110, %v2104
      %2106 = vmatmul.bf16.gmra.mxu0 %v1658
      %v2107 = vpop.f32.mrf.mxu0
      %v2108 = vadd.f32 %v1110, %v2107
      %v2109 = vpop.f32.mrf.mxu0
      %v2110 = vadd.f32 %v1110, %v2109
      %2111 = vmatmul.bf16.gmra.mxu0 %v1659
      %v2112 = vpop.f32.mrf.mxu0
      %v2113 = vadd.f32 %v1110, %v2112
      %v2114 = vpop.f32.mrf.mxu0
      %v2115 = vadd.f32 %v1110, %v2114
      %2116 = vmatmul.bf16.gmra.mxu0 %v1660
      %v2117 = vpop.f32.mrf.mxu0
      %v2118 = vadd.f32 %v1110, %v2117
      %v2119 = vpop.f32.mrf.mxu0
      %v2120 = vadd.f32 %v1110, %v2119
      %2121 = vmatmul.bf16.gmra.mxu0 %v1661
      %v2122 = vpop.f32.mrf.mxu0
      %v2123 = vadd.f32 %v1110, %v2122
      %v2124 = vpop.f32.mrf.mxu0
      %v2125 = vadd.f32 %v1110, %v2124
      %2126 = vmatmul.bf16.gmra.mxu0 %v1662
      %v2127 = vpop.f32.mrf.mxu0
      %v2128 = vadd.f32 %v1110, %v2127
      %v2129 = vpop.f32.mrf.mxu0
      %v2130 = vadd.f32 %v1110, %v2129
      %2131 = vmatmul.bf16.gmra.mxu0 %v1663
      %v2132 = vpop.f32.mrf.mxu0
      %v2133 = vadd.f32 %v1110, %v2132
      %v2134 = vpop.f32.mrf.mxu0
      %v2135 = vadd.f32 %v1110, %v2134
      %2136 = vmatmul.bf16.gmra.mxu0 %v1664
      %v2137 = vpop.f32.mrf.mxu0
      %v2138 = vadd.f32 %v1110, %v2137
      %v2139 = vpop.f32.mrf.mxu0
      %v2140 = vadd.f32 %v1110, %v2139
      %2141 = vmatmul.bf16.gmra.mxu0 %v1665
      %v2142 = vpop.f32.mrf.mxu0
      %v2143 = vadd.f32 %v1110, %v2142
      %v2144 = vpop.f32.mrf.mxu0
      %v2145 = vadd.f32 %v1110, %v2144
      %2146 = vmatmul.bf16.gmra.mxu0 %v1666
      %v2147 = vpop.f32.mrf.mxu0
      %v2148 = vadd.f32 %v1110, %v2147
      %v2149 = vpop.f32.mrf.mxu0
      %v2150 = vadd.f32 %v1110, %v2149
      %2151 = vmatmul.bf16.gmra.mxu0 %v1667
      %v2152 = vpop.f32.mrf.mxu0
      %v2153 = vadd.f32 %v1110, %v2152
      %v2154 = vpop.f32.mrf.mxu0
      %v2155 = vadd.f32 %v1110, %v2154
      %2156 = vmatmul.bf16.gmra.mxu0 %v1668
      %v2157 = vpop.f32.mrf.mxu0
      %v2158 = vadd.f32 %v1110, %v2157
      %v2159 = vpop.f32.mrf.mxu0
      %v2160 = vadd.f32 %v1110, %v2159
      %2161 = vmatmul.bf16.gmra.mxu0 %v1669
      %v2162 = vpop.f32.mrf.mxu0
      %v2163 = vadd.f32 %v1110, %v2162
      %v2164 = vpop.f32.mrf.mxu0
      %v2165 = vadd.f32 %v1110, %v2164
      %2166 = vmatmul.bf16.gmra.mxu0 %v1670
      %v2167 = vpop.f32.mrf.mxu0
      %v2168 = vadd.f32 %v1110, %v2167
      %v2169 = vpop.f32.mrf.mxu0
      %v2170 = vadd.f32 %v1110, %v2169
      %2171 = vmatmul.bf16.gmra.mxu0 %v1671
      %v2172 = vpop.f32.mrf.mxu0
      %v2173 = vadd.f32 %v1110, %v2172
      %v2174 = vpop.f32.mrf.mxu0
      %v2175 = vadd.f32 %v1110, %v2174
      %2176 = vmatmul.bf16.gmra.mxu0 %v1672
      %v2177 = vpop.f32.mrf.mxu0
      %v2178 = vadd.f32 %v1110, %v2177
      %v2179 = vpop.f32.mrf.mxu0
      %v2180 = vadd.f32 %v1110, %v2179
      %2181 = vmatmul.bf16.gmra.mxu0 %v1673
      %v2182 = vpop.f32.mrf.mxu0
      %v2183 = vadd.f32 %v1110, %v2182
      %v2184 = vpop.f32.mrf.mxu0
      %v2185 = vadd.f32 %v1110, %v2184
      %2186 = vmatmul.bf16.gmra.mxu0 %v1674
      %v2187 = vpop.f32.mrf.mxu0
      %v2188 = vadd.f32 %v1110, %v2187
      %v2189 = vpop.f32.mrf.mxu0
      %v2190 = vadd.f32 %v1110, %v2189
      %2191 = vmatmul.bf16.gmra.mxu0 %v1675
      %v2192 = vpop.f32.mrf.mxu0
      %v2193 = vadd.f32 %v1110, %v2192
      %v2194 = vpop.f32.mrf.mxu0
      %v2195 = vadd.f32 %v1110, %v2194
      %2196 = vmatmul.bf16.gmra.mxu0 %v1676
      %v2197 = vpop.f32.mrf.mxu0
      %v2198 = vadd.f32 %v1110, %v2197
      %v2199 = vpop.f32.mrf.mxu0
      %v2200 = vadd.f32 %v1110, %v2199
      %2201 = vmatmul.bf16.gmra.mxu0 %v1677
      %v2202 = vpop.f32.mrf.mxu0
      %v2203 = vadd.f32 %v1110, %v2202
      %v2204 = vpop.f32.mrf.mxu0
      %v2205 = vadd.f32 %v1110, %v2204
      %2206 = vmatmul.bf16.gmra.mxu0 %v1678
      %v2207 = vpop.f32.mrf.mxu0
      %v2208 = vadd.f32 %v1110, %v2207
      %v2209 = vpop.f32.mrf.mxu0
      %v2210 = vadd.f32 %v1110, %v2209
      %2211 = vmatmul.bf16.gmra.mxu0 %v1679
      %v2212 = vpop.f32.mrf.mxu0
      %v2213 = vadd.f32 %v1110, %v2212
      %v2214 = vpop.f32.mrf.mxu0
      %v2215 = vadd.f32 %v1110, %v2214
      %2216 = vmatmul.bf16.gmra.mxu0 %v1680
      %v2217 = vpop.f32.mrf.mxu0
      %v2218 = vadd.f32 %v1110, %v2217
      %v2219 = vpop.f32.mrf.mxu0
      %v2220 = vadd.f32 %v1110, %v2219
      %2221 = vmatmul.bf16.gmra.mxu0 %v1681
      %v2222 = vpop.f32.mrf.mxu0
      %v2223 = vadd.f32 %v1110, %v2222
      %v2224 = vpop.f32.mrf.mxu0
      %v2225 = vadd.f32 %v1110, %v2224
      %2226 = vmatmul.bf16.gmra.mxu0 %v1682
      %v2227 = vpop.f32.mrf.mxu0
      %v2228 = vadd.f32 %v1110, %v2227
      %v2229 = vpop.f32.mrf.mxu0
      %v2230 = vadd.f32 %v1110, %v2229
      %2231 = vmatmul.bf16.gmra.mxu0 %v1683
      %v2232 = vpop.f32.mrf.mxu0
      %v2233 = vadd.f32 %v1110, %v2232
      %v2234 = vpop.f32.mrf.mxu0
      %v2235 = vadd.f32 %v1110, %v2234
      %2236 = vmatmul.bf16.gmra.mxu0 %v1684
      %v2237 = vpop.f32.mrf.mxu0
      %v2238 = vadd.f32 %v1110, %v2237
      %v2239 = vpop.f32.mrf.mxu0
      %v2240 = vadd.f32 %v1110, %v2239
      %2241 = vmatmul.bf16.gmra.mxu0 %v1685
      %v2242 = vpop.f32.mrf.mxu0
      %v2243 = vadd.f32 %v1110, %v2242
      %v2244 = vpop.f32.mrf.mxu0
      %v2245 = vadd.f32 %v1110, %v2244
      %2246 = vmatmul.bf16.gmra.mxu0 %v1686
      %v2247 = vpop.f32.mrf.mxu0
      %v2248 = vadd.f32 %v1110, %v2247
      %v2249 = vpop.f32.mrf.mxu0
      %v2250 = vadd.f32 %v1110, %v2249
      %2251 = vmatmul.bf16.gmra.mxu0 %v1687
      %v2252 = vpop.f32.mrf.mxu0
      %v2253 = vadd.f32 %v1110, %v2252
      %v2254 = vpop.f32.mrf.mxu0
      %v2255 = vadd.f32 %v1110, %v2254
      %2256 = vmatmul.bf16.gmra.mxu0 %v1688
      %v2257 = vpop.f32.mrf.mxu0
      %v2258 = vadd.f32 %v1110, %v2257
      %v2259 = vpop.f32.mrf.mxu0
      %v2260 = vadd.f32 %v1110, %v2259
      %2261 = vmatmul.bf16.gmra.mxu0 %v1689
      %v2262 = vpop.f32.mrf.mxu0
      %v2263 = vadd.f32 %v1110, %v2262
      %v2264 = vpop.f32.mrf.mxu0
      %v2265 = vadd.f32 %v1110, %v2264
      %2266 = vmatmul.bf16.gmra.mxu0 %v1690
      %v2267 = vpop.f32.mrf.mxu0
      %v2268 = vadd.f32 %v1110, %v2267
      %v2269 = vpop.f32.mrf.mxu0
      %v2270 = vadd.f32 %v1110, %v2269
      %2271 = vmatmul.bf16.gmra.mxu0 %v1691
      %v2272 = vpop.f32.mrf.mxu0
      %v2273 = vadd.f32 %v1110, %v2272
      %v2274 = vpop.f32.mrf.mxu0
      %v2275 = vadd.f32 %v1110, %v2274
      %2276 = vmatmul.bf16.gmra.mxu0 %v1692
      %v2277 = vpop.f32.mrf.mxu0
      %v2278 = vadd.f32 %v1110, %v2277
      %v2279 = vpop.f32.mrf.mxu0
      %v2280 = vadd.f32 %v1110, %v2279
      %2281 = vmatmul.bf16.gmra.mxu0 %v1693
      %v2282 = vpop.f32.mrf.mxu0
      %v2283 = vadd.f32 %v1110, %v2282
      %v2284 = vpop.f32.mrf.mxu0
      %v2285 = vadd.f32 %v1110, %v2284
      %2286 = vmatmul.bf16.gmra.mxu0 %v1694
      %v2287 = vpop.f32.mrf.mxu0
      %v2288 = vadd.f32 %v1110, %v2287
      %v2289 = vpop.f32.mrf.mxu0
      %v2290 = vadd.f32 %v1110, %v2289
      %2291 = vmatmul.bf16.gmra.mxu0 %v1695
      %v2292 = vpop.f32.mrf.mxu0
      %v2293 = vadd.f32 %v1110, %v2292
      %v2294 = vpop.f32.mrf.mxu0
      %v2295 = vadd.f32 %v1110, %v2294
      %2296 = vmatmul.bf16.gmra.mxu0 %v1696
      %v2297 = vpop.f32.mrf.mxu0
      %v2298 = vadd.f32 %v1110, %v2297
      %v2299 = vpop.f32.mrf.mxu0
      %v2300 = vadd.f32 %v1110, %v2299
      %2301 = vmatmul.bf16.gmra.mxu0 %v1697
      %v2302 = vpop.f32.mrf.mxu0
      %v2303 = vadd.f32 %v1110, %v2302
      %v2304 = vpop.f32.mrf.mxu0
      %v2305 = vadd.f32 %v1110, %v2304
      %2306 = vmatmul.bf16.gmra.mxu0 %v1698
      %v2307 = vpop.f32.mrf.mxu0
      %v2308 = vadd.f32 %v1110, %v2307
      %v2309 = vpop.f32.mrf.mxu0
      %v2310 = vadd.f32 %v1110, %v2309
      %2311 = vmatmul.bf16.gmra.mxu0 %v1699
      %v2312 = vpop.f32.mrf.mxu0
      %v2313 = vadd.f32 %v1110, %v2312
      %v2314 = vpop.f32.mrf.mxu0
      %v2315 = vadd.f32 %v1110, %v2314
      %2316 = vmatmul.bf16.gmra.mxu0 %v1700
      %v2317 = vpop.f32.mrf.mxu0
      %v2318 = vadd.f32 %v1110, %v2317
      %v2319 = vpop.f32.mrf.mxu0
      %v2320 = vadd.f32 %v1110, %v2319
      %2321 = vmatmul.bf16.gmra.mxu0 %v1701
      %v2322 = vpop.f32.mrf.mxu0
      %v2323 = vadd.f32 %v1110, %v2322
      %v2324 = vpop.f32.mrf.mxu0
      %v2325 = vadd.f32 %v1110, %v2324
      %2326 = vmatmul.bf16.gmra.mxu0 %v1702
      %v2327 = vpop.f32.mrf.mxu0
      %v2328 = vadd.f32 %v1110, %v2327
      %v2329 = vpop.f32.mrf.mxu0
      %v2330 = vadd.f32 %v1110, %v2329
      %2331 = vmatmul.bf16.gmra.mxu0 %v1703
      %v2332 = vpop.f32.mrf.mxu0
      %v2333 = vadd.f32 %v1110, %v2332
      %v2334 = vpop.f32.mrf.mxu0
      %v2335 = vadd.f32 %v1110, %v2334
      %2336 = vmatmul.bf16.gmra.mxu0 %v1704
      %v2337 = vpop.f32.mrf.mxu0
      %v2338 = vadd.f32 %v1110, %v2337
      %v2339 = vpop.f32.mrf.mxu0
      %v2340 = vadd.f32 %v1110, %v2339
      %2341 = vmatmul.bf16.gmra.mxu0 %v1705
      %v2342 = vpop.f32.mrf.mxu0
      %v2343 = vadd.f32 %v1110, %v2342
      %v2344 = vpop.f32.mrf.mxu0
      %v2345 = vadd.f32 %v1110, %v2344
      %2346 = vmatmul.bf16.gmra.mxu0 %v1706
      %v2347 = vpop.f32.mrf.mxu0
      %v2348 = vadd.f32 %v1110, %v2347
      %v2349 = vpop.f32.mrf.mxu0
      %v2350 = vadd.f32 %v1110, %v2349
      %2351 = vmatmul.bf16.gmra.mxu0 %v1707
      %v2352 = vpop.f32.mrf.mxu0
      %v2353 = vadd.f32 %v1110, %v2352
      %v2354 = vpop.f32.mrf.mxu0
      %v2355 = vadd.f32 %v1110, %v2354
      %2356 = vmatmul.bf16.gmra.mxu0 %v1708
      %v2357 = vpop.f32.mrf.mxu0
      %v2358 = vadd.f32 %v1110, %v2357
      %v2359 = vpop.f32.mrf.mxu0
      %v2360 = vadd.f32 %v1110, %v2359
      %2361 = vmatmul.bf16.gmra.mxu0 %v1709
      %v2362 = vpop.f32.mrf.mxu0
      %v2363 = vadd.f32 %v1110, %v2362
      %v2364 = vpop.f32.mrf.mxu0
      %v2365 = vadd.f32 %v1110, %v2364
      %2366 = vmatmul.bf16.gmra.mxu0 %v1710
      %v2367 = vpop.f32.mrf.mxu0
      %v2368 = vadd.f32 %v1110, %v2367
      %v2369 = vpop.f32.mrf.mxu0
      %v2370 = vadd.f32 %v1110, %v2369
      %2371 = vmatmul.bf16.gmra.mxu0 %v1711
      %v2372 = vpop.f32.mrf.mxu0
      %v2373 = vadd.f32 %v1110, %v2372
      %v2374 = vpop.f32.mrf.mxu0
      %v2375 = vadd.f32 %v1110, %v2374
      %2376 = vmatmul.bf16.gmra.mxu0 %v1712
      %v2377 = vpop.f32.mrf.mxu0
      %v2378 = vadd.f32 %v1110, %v2377
      %v2379 = vpop.f32.mrf.mxu0
      %v2380 = vadd.f32 %v1110, %v2379
      %2381 = vmatmul.bf16.gmra.mxu0 %v1713
      %v2382 = vpop.f32.mrf.mxu0
      %v2383 = vadd.f32 %v1110, %v2382
      %v2384 = vpop.f32.mrf.mxu0
      %v2385 = vadd.f32 %v1110, %v2384
      %2386 = vmatmul.bf16.gmra.mxu0 %v1714
      %v2387 = vpop.f32.mrf.mxu0
      %v2388 = vadd.f32 %v1110, %v2387
      %v2389 = vpop.f32.mrf.mxu0
      %v2390 = vadd.f32 %v1110, %v2389
      %2391 = vmatmul.bf16.gmra.mxu0 %v1715
      %v2392 = vpop.f32.mrf.mxu0
      %v2393 = vadd.f32 %v1110, %v2392
      %v2394 = vpop.f32.mrf.mxu0
      %v2395 = vadd.f32 %v1110, %v2394
      %2396 = vmatmul.bf16.gmra.mxu0 %v1716
      %v2397 = vpop.f32.mrf.mxu0
      %v2398 = vadd.f32 %v1110, %v2397
      %v2399 = vpop.f32.mrf.mxu0
      %v2400 = vadd.f32 %v1110, %v2399
      %2401 = vmatmul.bf16.gmra.mxu0 %v1717
      %v2402 = vpop.f32.mrf.mxu0
      %v2403 = vadd.f32 %v1110, %v2402
      %v2404 = vpop.f32.mrf.mxu0
      %v2405 = vadd.f32 %v1110, %v2404
      %2406 = vmatmul.bf16.gmra.mxu0 %v1718
      %v2407 = vpop.f32.mrf.mxu0
      %v2408 = vadd.f32 %v1110, %v2407
      %v2409 = vpop.f32.mrf.mxu0
      %v2410 = vadd.f32 %v1110, %v2409
      %2411 = vmatmul.bf16.gmra.mxu0 %v1719
      %v2412 = vpop.f32.mrf.mxu0
      %v2413 = vadd.f32 %v1110, %v2412
      %v2414 = vpop.f32.mrf.mxu0
      %v2415 = vadd.f32 %v1110, %v2414
      %2416 = vmatmul.bf16.gmra.mxu0 %v1720
      %v2417 = vpop.f32.mrf.mxu0
      %v2418 = vadd.f32 %v1110, %v2417
      %v2419 = vpop.f32.mrf.mxu0
      %v2420 = vadd.f32 %v1110, %v2419
      %2421 = vmatmul.bf16.gmra.mxu0 %v1721
      %v2422 = vpop.f32.mrf.mxu0
      %v2423 = vadd.f32 %v1110, %v2422
      %v2424 = vpop.f32.mrf.mxu0
      %v2425 = vadd.f32 %v1110, %v2424
      %2426 = vmatmul.bf16.gmra.mxu0 %v1722
      %v2427 = vpop.f32.mrf.mxu0
      %v2428 = vadd.f32 %v1110, %v2427
      %v2429 = vpop.f32.mrf.mxu0
      %v2430 = vadd.f32 %v1110, %v2429
      %2431 = vmatmul.bf16.gmra.mxu0 %v1723
      %v2432 = vpop.f32.mrf.mxu0
      %v2433 = vadd.f32 %v1110, %v2432
      %v2434 = vpop.f32.mrf.mxu0
      %v2435 = vadd.f32 %v1110, %v2434
      %2436 = vmatmul.bf16.gmra.mxu0 %v1724
      %v2437 = vpop.f32.mrf.mxu0
      %v2438 = vadd.f32 %v1110, %v2437
      %v2439 = vpop.f32.mrf.mxu0
      %v2440 = vadd.f32 %v1110, %v2439
      %2441 = vmatmul.bf16.gmra.mxu0 %v1725
      %v2442 = vpop.f32.mrf.mxu0
      %v2443 = vadd.f32 %v1110, %v2442
      %v2444 = vpop.f32.mrf.mxu0
      %v2445 = vadd.f32 %v1110, %v2444
      %2446 = vmatmul.bf16.gmra.mxu0 %v1726
      %v2447 = vpop.f32.mrf.mxu0
      %v2448 = vadd.f32 %v1110, %v2447
      %v2449 = vpop.f32.mrf.mxu0
      %v2450 = vadd.f32 %v1110, %v2449
      %2451 = vmatmul.bf16.gmra.mxu0 %v1727
      %v2452 = vpop.f32.mrf.mxu0
      %v2453 = vadd.f32 %v1110, %v2452
      %v2454 = vpop.f32.mrf.mxu0
      %v2455 = vadd.f32 %v1110, %v2454
      %2456 = vmatmul.bf16.gmra.mxu0 %v1728
      %v2457 = vpop.f32.mrf.mxu0
      %v2458 = vadd.f32 %v1110, %v2457
      %v2459 = vpop.f32.mrf.mxu0
      %v2460 = vadd.f32 %v1110, %v2459
      %2461 = vmatmul.bf16.gmra.mxu0 %v1729
      %v2462 = vpop.f32.mrf.mxu0
      %v2463 = vadd.f32 %v1110, %v2462
      %v2464 = vpop.f32.mrf.mxu0
      %v2465 = vadd.f32 %v1110, %v2464
      %2466 = vmatmul.bf16.gmra.mxu0 %v1730
      %v2467 = vpop.f32.mrf.mxu0
      %v2468 = vadd.f32 %v1110, %v2467
      %v2469 = vpop.f32.mrf.mxu0
      %v2470 = vadd.f32 %v1110, %v2469
      %2471 = vmatmul.bf16.gmra.mxu0 %v1731
      %v2472 = vpop.f32.mrf.mxu0
      %v2473 = vadd.f32 %v1110, %v2472
      %v2474 = vpop.f32.mrf.mxu0
      %v2475 = vadd.f32 %v1110, %v2474
      %2476 = vmatmul.bf16.gmra.mxu0 %v1732
      %v2477 = vpop.f32.mrf.mxu0
      %v2478 = vadd.f32 %v1110, %v2477
      %v2479 = vpop.f32.mrf.mxu0
      %v2480 = vadd.f32 %v1110, %v2479
      %2481 = vmatmul.bf16.gmra.mxu0 %v1733
      %v2482 = vpop.f32.mrf.mxu0
      %v2483 = vadd.f32 %v1110, %v2482
      %v2484 = vpop.f32.mrf.mxu0
      %v2485 = vadd.f32 %v1110, %v2484
      %2486 = vmatmul.bf16.gmra.mxu0 %v1734
      %v2487 = vpop.f32.mrf.mxu0
      %v2488 = vadd.f32 %v1110, %v2487
      %v2489 = vpop.f32.mrf.mxu0
      %v2490 = vadd.f32 %v1110, %v2489
      %2491 = vmatmul.bf16.gmra.mxu0 %v1735
      %v2492 = vpop.f32.mrf.mxu0
      %v2493 = vadd.f32 %v1110, %v2492
      %v2494 = vpop.f32.mrf.mxu0
      %v2495 = vadd.f32 %v1110, %v2494
      %2496 = vmatmul.bf16.gmra.mxu0 %v1736
      %v2497 = vpop.f32.mrf.mxu0
      %v2498 = vadd.f32 %v1110, %v2497
      %v2499 = vpop.f32.mrf.mxu0
      %v2500 = vadd.f32 %v1110, %v2499
      %2501 = vmatmul.bf16.gmra.mxu0 %v1737
      %v2502 = vpop.f32.mrf.mxu0
      %v2503 = vadd.f32 %v1110, %v2502
      %v2504 = vpop.f32.mrf.mxu0
      %v2505 = vadd.f32 %v1110, %v2504
      %2506 = vmatmul.bf16.gmra.mxu0 %v1738
      %v2507 = vpop.f32.mrf.mxu0
      %v2508 = vadd.f32 %v1110, %v2507
      %v2509 = vpop.f32.mrf.mxu0
      %v2510 = vadd.f32 %v1110, %v2509
      %2511 = vmatmul.bf16.gmra.mxu0 %v1739
      %v2512 = vpop.f32.mrf.mxu0
      %v2513 = vadd.f32 %v1110, %v2512
      %v2514 = vpop.f32.mrf.mxu0
      %v2515 = vadd.f32 %v1110, %v2514
      %2516 = vmatmul.bf16.gmra.mxu0 %v1740
      %v2517 = vpop.f32.mrf.mxu0
      %v2518 = vadd.f32 %v1110, %v2517
      %v2519 = vpop.f32.mrf.mxu0
      %v2520 = vadd.f32 %v1110, %v2519
      %2521 = vmatmul.bf16.gmra.mxu0 %v1741
      %v2522 = vpop.f32.mrf.mxu0
      %v2523 = vadd.f32 %v1110, %v2522
      %v2524 = vpop.f32.mrf.mxu0
      %v2525 = vadd.f32 %v1110, %v2524
      %2526 = vmatmul.bf16.gmra.mxu0 %v1742
      %v2527 = vpop.f32.mrf.mxu0
      %v2528 = vadd.f32 %v1110, %v2527
      %v2529 = vpop.f32.mrf.mxu0
      %v2530 = vadd.f32 %v1110, %v2529
      %2531 = vmatmul.bf16.gmra.mxu0 %v1743
      %v2532 = vpop.f32.mrf.mxu0
      %v2533 = vadd.f32 %v1110, %v2532
      %v2534 = vpop.f32.mrf.mxu0
      %v2535 = vadd.f32 %v1110, %v2534
      %2536 = vmatmul.bf16.gmra.mxu0 %v1744
      %v2537 = vpop.f32.mrf.mxu0
      %v2538 = vadd.f32 %v1110, %v2537
      %v2539 = vpop.f32.mrf.mxu0
      %v2540 = vadd.f32 %v1110, %v2539
      %2541 = vmatmul.bf16.gmra.mxu0 %v1745
      %v2542 = vpop.f32.mrf.mxu0
      %v2543 = vadd.f32 %v1110, %v2542
      %v2544 = vpop.f32.mrf.mxu0
      %v2545 = vadd.f32 %v1110, %v2544
      %2546 = vmatmul.bf16.gmra.mxu0 %v1746
      %v2547 = vpop.f32.mrf.mxu0
      %v2548 = vadd.f32 %v1110, %v2547
      %v2549 = vpop.f32.mrf.mxu0
      %v2550 = vadd.f32 %v1110, %v2549
      %2551 = vmatmul.bf16.gmra.mxu0 %v1747
      %v2552 = vpop.f32.mrf.mxu0
      %v2553 = vadd.f32 %v1110, %v2552
      %v2554 = vpop.f32.mrf.mxu0
      %v2555 = vadd.f32 %v1110, %v2554
      %2556 = vmatmul.bf16.gmra.mxu0 %v1748
      %v2557 = vpop.f32.mrf.mxu0
      %v2558 = vadd.f32 %v1110, %v2557
      %v2559 = vpop.f32.mrf.mxu0
      %v2560 = vadd.f32 %v1110, %v2559
      %2561 = vmatmul.bf16.gmra.mxu0 %v1749
      %v2562 = vpop.f32.mrf.mxu0
      %v2563 = vadd.f32 %v1110, %v2562
      %v2564 = vpop.f32.mrf.mxu0
      %v2565 = vadd.f32 %v1110, %v2564
      %2566 = vmatmul.bf16.gmra.mxu0 %v1750
      %v2567 = vpop.f32.mrf.mxu0
      %v2568 = vadd.f32 %v1110, %v2567
      %v2569 = vpop.f32.mrf.mxu0
      %v2570 = vadd.f32 %v1110, %v2569
      %2571 = vmatmul.bf16.gmra.mxu0 %v1751
      %v2572 = vpop.f32.mrf.mxu0
      %v2573 = vadd.f32 %v1110, %v2572
      %v2574 = vpop.f32.mrf.mxu0
      %v2575 = vadd.f32 %v1110, %v2574
      %2576 = vdwg.mxu0
      %v2578 = vrot.slane %v1005, 1
      %v2579 = vrot.slane %v1005, 2
      %v2580 = vrot.slane %v1005, 3
      %v2581 = vrot.slane %v1005, 4
      %v2582 = vrot.slane %v1005, 5
      %v2583 = vrot.slane %v1005, 6
      %v2584 = vrot.slane %v1005, 7
      %v2585 = vperm.slane %v1005, 0
      %v2586 = vperm.slane %v2578, 0
      %v2587 = vperm.slane %v2579, 0
      %v2588 = vperm.slane %v2580, 0
      %v2589 = vperm.slane %v2581, 0
      %v2590 = vperm.slane %v2582, 0
      %v2591 = vperm.slane %v2583, 0
      %v2592 = vperm.slane %v2584, 0
      %v2601 = vadd.f32 %v1938, %v2585
      %v2602 = vadd.f32 %v1940, %v2585
      %v2603 = vadd.f32 %v1943, %v2585
      %v2604 = vadd.f32 %v1945, %v2585
      %v2605 = vadd.f32 %v1948, %v2585
      %v2606 = vadd.f32 %v1950, %v2585
      %v2607 = vadd.f32 %v1953, %v2585
      %v2608 = vadd.f32 %v1955, %v2585
      %v2609 = vadd.f32 %v1958, %v2585
      %v2610 = vadd.f32 %v1960, %v2585
      %v2611 = vadd.f32 %v1963, %v2585
      %v2612 = vadd.f32 %v1965, %v2585
      %v2613 = vadd.f32 %v1968, %v2585
      %v2614 = vadd.f32 %v1970, %v2585
      %v2615 = vadd.f32 %v1973, %v2585
      %v2616 = vadd.f32 %v1975, %v2585
      %v2617 = vadd.f32 %v1978, %v2585
      %v2618 = vadd.f32 %v1980, %v2585
      %v2619 = vadd.f32 %v1983, %v2585
      %v2620 = vadd.f32 %v1985, %v2585
      %v2621 = vadd.f32 %v1988, %v2585
      %v2622 = vadd.f32 %v1990, %v2585
      %v2623 = vadd.f32 %v1993, %v2585
      %v2624 = vadd.f32 %v1995, %v2585
      %v2625 = vadd.f32 %v1998, %v2585
      %v2626 = vadd.f32 %v2000, %v2585
      %v2627 = vadd.f32 %v2003, %v2585
      %v2628 = vadd.f32 %v2005, %v2585
      %v2629 = vadd.f32 %v2008, %v2585
      %v2630 = vadd.f32 %v2010, %v2585
      %v2631 = vadd.f32 %v2013, %v2585
      %v2632 = vadd.f32 %v2015, %v2585
      %v2633 = vadd.f32 %v2018, %v2586
      %v2634 = vadd.f32 %v2020, %v2586
      %v2635 = vadd.f32 %v2023, %v2586
      %v2636 = vadd.f32 %v2025, %v2586
      %v2637 = vadd.f32 %v2028, %v2586
      %v2638 = vadd.f32 %v2030, %v2586
      %v2639 = vadd.f32 %v2033, %v2586
      %v2640 = vadd.f32 %v2035, %v2586
      %v2641 = vadd.f32 %v2038, %v2586
      %v2642 = vadd.f32 %v2040, %v2586
      %v2643 = vadd.f32 %v2043, %v2586
      %v2644 = vadd.f32 %v2045, %v2586
      %v2645 = vadd.f32 %v2048, %v2586
      %v2646 = vadd.f32 %v2050, %v2586
      %v2647 = vadd.f32 %v2053, %v2586
      %v2648 = vadd.f32 %v2055, %v2586
      %v2649 = vadd.f32 %v2058, %v2586
      %v2650 = vadd.f32 %v2060, %v2586
      %v2651 = vadd.f32 %v2063, %v2586
      %v2652 = vadd.f32 %v2065, %v2586
      %v2653 = vadd.f32 %v2068, %v2586
      %v2654 = vadd.f32 %v2070, %v2586
      %v2655 = vadd.f32 %v2073, %v2586
      %v2656 = vadd.f32 %v2075, %v2586
      %v2657 = vadd.f32 %v2078, %v2586
      %v2658 = vadd.f32 %v2080, %v2586
      %v2659 = vadd.f32 %v2083, %v2586
      %v2660 = vadd.f32 %v2085, %v2586
      %v2661 = vadd.f32 %v2088, %v2586
      %v2662 = vadd.f32 %v2090, %v2586
      %v2663 = vadd.f32 %v2093, %v2586
      %v2664 = vadd.f32 %v2095, %v2586
      %v2665 = vadd.f32 %v2098, %v2587
      %v2666 = vadd.f32 %v2100, %v2587
      %v2667 = vadd.f32 %v2103, %v2587
      %v2668 = vadd.f32 %v2105, %v2587
      %v2669 = vadd.f32 %v2108, %v2587
      %v2670 = vadd.f32 %v2110, %v2587
      %v2671 = vadd.f32 %v2113, %v2587
      %v2672 = vadd.f32 %v2115, %v2587
      %v2673 = vadd.f32 %v2118, %v2587
      %v2674 = vadd.f32 %v2120, %v2587
      %v2675 = vadd.f32 %v2123, %v2587
      %v2676 = vadd.f32 %v2125, %v2587
      %v2677 = vadd.f32 %v2128, %v2587
      %v2678 = vadd.f32 %v2130, %v2587
      %v2679 = vadd.f32 %v2133, %v2587
      %v2680 = vadd.f32 %v2135, %v2587
      %v2681 = vadd.f32 %v2138, %v2587
      %v2682 = vadd.f32 %v2140, %v2587
      %v2683 = vadd.f32 %v2143, %v2587
      %v2684 = vadd.f32 %v2145, %v2587
      %v2685 = vadd.f32 %v2148, %v2587
      %v2686 = vadd.f32 %v2150, %v2587
      %v2687 = vadd.f32 %v2153, %v2587
      %v2688 = vadd.f32 %v2155, %v2587
      %v2689 = vadd.f32 %v2158, %v2587
      %v2690 = vadd.f32 %v2160, %v2587
      %v2691 = vadd.f32 %v2163, %v2587
      %v2692 = vadd.f32 %v2165, %v2587
      %v2693 = vadd.f32 %v2168, %v2587
      %v2694 = vadd.f32 %v2170, %v2587
      %v2695 = vadd.f32 %v2173, %v2587
      %v2696 = vadd.f32 %v2175, %v2587
      %v2697 = vadd.f32 %v2178, %v2588
      %v2698 = vadd.f32 %v2180, %v2588
      %v2699 = vadd.f32 %v2183, %v2588
      %v2700 = vadd.f32 %v2185, %v2588
      %v2701 = vadd.f32 %v2188, %v2588
      %v2702 = vadd.f32 %v2190, %v2588
      %v2703 = vadd.f32 %v2193, %v2588
      %v2704 = vadd.f32 %v2195, %v2588
      %v2705 = vadd.f32 %v2198, %v2588
      %v2706 = vadd.f32 %v2200, %v2588
      %v2707 = vadd.f32 %v2203, %v2588
      %v2708 = vadd.f32 %v2205, %v2588
      %v2709 = vadd.f32 %v2208, %v2588
      %v2710 = vadd.f32 %v2210, %v2588
      %v2711 = vadd.f32 %v2213, %v2588
      %v2712 = vadd.f32 %v2215, %v2588
      %v2713 = vadd.f32 %v2218, %v2588
      %v2714 = vadd.f32 %v2220, %v2588
      %v2715 = vadd.f32 %v2223, %v2588
      %v2716 = vadd.f32 %v2225, %v2588
      %v2717 = vadd.f32 %v2228, %v2588
      %v2718 = vadd.f32 %v2230, %v2588
      %v2719 = vadd.f32 %v2233, %v2588
      %v2720 = vadd.f32 %v2235, %v2588
      %v2721 = vadd.f32 %v2238, %v2588
      %v2722 = vadd.f32 %v2240, %v2588
      %v2723 = vadd.f32 %v2243, %v2588
      %v2724 = vadd.f32 %v2245, %v2588
      %v2725 = vadd.f32 %v2248, %v2588
      %v2726 = vadd.f32 %v2250, %v2588
      %v2727 = vadd.f32 %v2253, %v2588
      %v2728 = vadd.f32 %v2255, %v2588
      %v2729 = vadd.f32 %v2258, %v2589
      %v2730 = vadd.f32 %v2260, %v2589
      %v2731 = vadd.f32 %v2263, %v2589
      %v2732 = vadd.f32 %v2265, %v2589
      %v2733 = vadd.f32 %v2268, %v2589
      %v2734 = vadd.f32 %v2270, %v2589
      %v2735 = vadd.f32 %v2273, %v2589
      %v2736 = vadd.f32 %v2275, %v2589
      %v2737 = vadd.f32 %v2278, %v2589
      %v2738 = vadd.f32 %v2280, %v2589
      %v2739 = vadd.f32 %v2283, %v2589
      %v2740 = vadd.f32 %v2285, %v2589
      %v2741 = vadd.f32 %v2288, %v2589
      %v2742 = vadd.f32 %v2290, %v2589
      %v2743 = vadd.f32 %v2293, %v2589
      %v2744 = vadd.f32 %v2295, %v2589
      %v2745 = vadd.f32 %v2298, %v2589
      %v2746 = vadd.f32 %v2300, %v2589
      %v2747 = vadd.f32 %v2303, %v2589
      %v2748 = vadd.f32 %v2305, %v2589
      %v2749 = vadd.f32 %v2308, %v2589
      %v2750 = vadd.f32 %v2310, %v2589
      %v2751 = vadd.f32 %v2313, %v2589
      %v2752 = vadd.f32 %v2315, %v2589
      %v2753 = vadd.f32 %v2318, %v2589
      %v2754 = vadd.f32 %v2320, %v2589
      %v2755 = vadd.f32 %v2323, %v2589
      %v2756 = vadd.f32 %v2325, %v2589
      %v2757 = vadd.f32 %v2328, %v2589
      %v2758 = vadd.f32 %v2330, %v2589
      %v2759 = vadd.f32 %v2333, %v2589
      %v2760 = vadd.f32 %v2335, %v2589
      %v2761 = vadd.f32 %v2338, %v2590
      %v2762 = vadd.f32 %v2340, %v2590
      %v2763 = vadd.f32 %v2343, %v2590
      %v2764 = vadd.f32 %v2345, %v2590
      %v2765 = vadd.f32 %v2348, %v2590
      %v2766 = vadd.f32 %v2350, %v2590
      %v2767 = vadd.f32 %v2353, %v2590
      %v2768 = vadd.f32 %v2355, %v2590
      %v2769 = vadd.f32 %v2358, %v2590
      %v2770 = vadd.f32 %v2360, %v2590
      %v2771 = vadd.f32 %v2363, %v2590
      %v2772 = vadd.f32 %v2365, %v2590
      %v2773 = vadd.f32 %v2368, %v2590
      %v2774 = vadd.f32 %v2370, %v2590
      %v2775 = vadd.f32 %v2373, %v2590
      %v2776 = vadd.f32 %v2375, %v2590
      %v2777 = vadd.f32 %v2378, %v2590
      %v2778 = vadd.f32 %v2380, %v2590
      %v2779 = vadd.f32 %v2383, %v2590
      %v2780 = vadd.f32 %v2385, %v2590
      %v2781 = vadd.f32 %v2388, %v2590
      %v2782 = vadd.f32 %v2390, %v2590
      %v2783 = vadd.f32 %v2393, %v2590
      %v2784 = vadd.f32 %v2395, %v2590
      %v2785 = vadd.f32 %v2398, %v2590
      %v2786 = vadd.f32 %v2400, %v2590
      %v2787 = vadd.f32 %v2403, %v2590
      %v2788 = vadd.f32 %v2405, %v2590
      %v2789 = vadd.f32 %v2408, %v2590
      %v2790 = vadd.f32 %v2410, %v2590
      %v2791 = vadd.f32 %v2413, %v2590
      %v2792 = vadd.f32 %v2415, %v2590
      %v2793 = vadd.f32 %v2418, %v2591
      %v2794 = vadd.f32 %v2420, %v2591
      %v2795 = vadd.f32 %v2423, %v2591
      %v2796 = vadd.f32 %v2425, %v2591
      %v2797 = vadd.f32 %v2428, %v2591
      %v2798 = vadd.f32 %v2430, %v2591
      %v2799 = vadd.f32 %v2433, %v2591
      %v2800 = vadd.f32 %v2435, %v2591
      %v2801 = vadd.f32 %v2438, %v2591
      %v2802 = vadd.f32 %v2440, %v2591
      %v2803 = vadd.f32 %v2443, %v2591
      %v2804 = vadd.f32 %v2445, %v2591
      %v2805 = vadd.f32 %v2448, %v2591
      %v2806 = vadd.f32 %v2450, %v2591
      %v2807 = vadd.f32 %v2453, %v2591
      %v2808 = vadd.f32 %v2455, %v2591
      %v2809 = vadd.f32 %v2458, %v2591
      %v2810 = vadd.f32 %v2460, %v2591
      %v2811 = vadd.f32 %v2463, %v2591
      %v2812 = vadd.f32 %v2465, %v2591
      %v2813 = vadd.f32 %v2468, %v2591
      %v2814 = vadd.f32 %v2470, %v2591
      %v2815 = vadd.f32 %v2473, %v2591
      %v2816 = vadd.f32 %v2475, %v2591
      %v2817 = vadd.f32 %v2478, %v2591
      %v2818 = vadd.f32 %v2480, %v2591
      %v2819 = vadd.f32 %v2483, %v2591
      %v2820 = vadd.f32 %v2485, %v2591
      %v2821 = vadd.f32 %v2488, %v2591
      %v2822 = vadd.f32 %v2490, %v2591
      %v2823 = vadd.f32 %v2493, %v2591
      %v2824 = vadd.f32 %v2495, %v2591
      %v2825 = vadd.f32 %v2498, %v2592
      %v2826 = vadd.f32 %v2500, %v2592
      %v2827 = vadd.f32 %v2503, %v2592
      %v2828 = vadd.f32 %v2505, %v2592
      %v2829 = vadd.f32 %v2508, %v2592
      %v2830 = vadd.f32 %v2510, %v2592
      %v2831 = vadd.f32 %v2513, %v2592
      %v2832 = vadd.f32 %v2515, %v2592
      %v2833 = vadd.f32 %v2518, %v2592
      %v2834 = vadd.f32 %v2520, %v2592
      %v2835 = vadd.f32 %v2523, %v2592
      %v2836 = vadd.f32 %v2525, %v2592
      %v2837 = vadd.f32 %v2528, %v2592
      %v2838 = vadd.f32 %v2530, %v2592
      %v2839 = vadd.f32 %v2533, %v2592
      %v2840 = vadd.f32 %v2535, %v2592
      %v2841 = vadd.f32 %v2538, %v2592
      %v2842 = vadd.f32 %v2540, %v2592
      %v2843 = vadd.f32 %v2543, %v2592
      %v2844 = vadd.f32 %v2545, %v2592
      %v2845 = vadd.f32 %v2548, %v2592
      %v2846 = vadd.f32 %v2550, %v2592
      %v2847 = vadd.f32 %v2553, %v2592
      %v2848 = vadd.f32 %v2555, %v2592
      %v2849 = vadd.f32 %v2558, %v2592
      %v2850 = vadd.f32 %v2560, %v2592
      %v2851 = vadd.f32 %v2563, %v2592
      %v2852 = vadd.f32 %v2565, %v2592
      %v2853 = vadd.f32 %v2568, %v2592
      %v2854 = vadd.f32 %v2570, %v2592
      %v2855 = vadd.f32 %v2573, %v2592
      %v2856 = vadd.f32 %v2575, %v2592
      %v2857 = vmax.f32 %v2601, 0.0
      %v2858 = vmax.f32 %v2602, 0.0
      %v2859 = vmax.f32 %v2603, 0.0
      %v2860 = vmax.f32 %v2604, 0.0
      %v2861 = vmax.f32 %v2605, 0.0
      %v2862 = vmax.f32 %v2606, 0.0
      %v2863 = vmax.f32 %v2607, 0.0
      %v2864 = vmax.f32 %v2608, 0.0
      %v2865 = vmax.f32 %v2609, 0.0
      %v2866 = vmax.f32 %v2610, 0.0
      %v2867 = vmax.f32 %v2611, 0.0
      %v2868 = vmax.f32 %v2612, 0.0
      %v2869 = vmax.f32 %v2613, 0.0
      %v2870 = vmax.f32 %v2614, 0.0
      %v2871 = vmax.f32 %v2615, 0.0
      %v2872 = vmax.f32 %v2616, 0.0
      %v2873 = vmax.f32 %v2617, 0.0
      %v2874 = vmax.f32 %v2618, 0.0
      %v2875 = vmax.f32 %v2619, 0.0
      %v2876 = vmax.f32 %v2620, 0.0
      %v2877 = vmax.f32 %v2621, 0.0
      %v2878 = vmax.f32 %v2622, 0.0
      %v2879 = vmax.f32 %v2623, 0.0
      %v2880 = vmax.f32 %v2624, 0.0
      %v2881 = vmax.f32 %v2625, 0.0
      %v2882 = vmax.f32 %v2626, 0.0
      %v2883 = vmax.f32 %v2627, 0.0
      %v2884 = vmax.f32 %v2628, 0.0
      %v2885 = vmax.f32 %v2629, 0.0
      %v2886 = vmax.f32 %v2630, 0.0
      %v2887 = vmax.f32 %v2631, 0.0
      %v2888 = vmax.f32 %v2632, 0.0
      %v2889 = vmax.f32 %v2633, 0.0
      %v2890 = vmax.f32 %v2634, 0.0
      %v2891 = vmax.f32 %v2635, 0.0
      %v2892 = vmax.f32 %v2636, 0.0
      %v2893 = vmax.f32 %v2637, 0.0
      %v2894 = vmax.f32 %v2638, 0.0
      %v2895 = vmax.f32 %v2639, 0.0
      %v2896 = vmax.f32 %v2640, 0.0
      %v2897 = vmax.f32 %v2641, 0.0
      %v2898 = vmax.f32 %v2642, 0.0
      %v2899 = vmax.f32 %v2643, 0.0
      %v2900 = vmax.f32 %v2644, 0.0
      %v2901 = vmax.f32 %v2645, 0.0
      %v2902 = vmax.f32 %v2646, 0.0
      %v2903 = vmax.f32 %v2647, 0.0
      %v2904 = vmax.f32 %v2648, 0.0
      %v2905 = vmax.f32 %v2649, 0.0
      %v2906 = vmax.f32 %v2650, 0.0
      %v2907 = vmax.f32 %v2651, 0.0
      %v2908 = vmax.f32 %v2652, 0.0
      %v2909 = vmax.f32 %v2653, 0.0
      %v2910 = vmax.f32 %v2654, 0.0
      %v2911 = vmax.f32 %v2655, 0.0
      %v2912 = vmax.f32 %v2656, 0.0
      %v2913 = vmax.f32 %v2657, 0.0
      %v2914 = vmax.f32 %v2658, 0.0
      %v2915 = vmax.f32 %v2659, 0.0
      %v2916 = vmax.f32 %v2660, 0.0
      %v2917 = vmax.f32 %v2661, 0.0
      %v2918 = vmax.f32 %v2662, 0.0
      %v2919 = vmax.f32 %v2663, 0.0
      %v2920 = vmax.f32 %v2664, 0.0
      %v2921 = vmax.f32 %v2665, 0.0
      %v2922 = vmax.f32 %v2666, 0.0
      %v2923 = vmax.f32 %v2667, 0.0
      %v2924 = vmax.f32 %v2668, 0.0
      %v2925 = vmax.f32 %v2669, 0.0
      %v2926 = vmax.f32 %v2670, 0.0
      %v2927 = vmax.f32 %v2671, 0.0
      %v2928 = vmax.f32 %v2672, 0.0
      %v2929 = vmax.f32 %v2673, 0.0
      %v2930 = vmax.f32 %v2674, 0.0
      %v2931 = vmax.f32 %v2675, 0.0
      %v2932 = vmax.f32 %v2676, 0.0
      %v2933 = vmax.f32 %v2677, 0.0
      %v2934 = vmax.f32 %v2678, 0.0
      %v2935 = vmax.f32 %v2679, 0.0
      %v2936 = vmax.f32 %v2680, 0.0
      %v2937 = vmax.f32 %v2681, 0.0
      %v2938 = vmax.f32 %v2682, 0.0
      %v2939 = vmax.f32 %v2683, 0.0
      %v2940 = vmax.f32 %v2684, 0.0
      %v2941 = vmax.f32 %v2685, 0.0
      %v2942 = vmax.f32 %v2686, 0.0
      %v2943 = vmax.f32 %v2687, 0.0
      %v2944 = vmax.f32 %v2688, 0.0
      %v2945 = vmax.f32 %v2689, 0.0
      %v2946 = vmax.f32 %v2690, 0.0
      %v2947 = vmax.f32 %v2691, 0.0
      %v2948 = vmax.f32 %v2692, 0.0
      %v2949 = vmax.f32 %v2693, 0.0
      %v2950 = vmax.f32 %v2694, 0.0
      %v2951 = vmax.f32 %v2695, 0.0
      %v2952 = vmax.f32 %v2696, 0.0
      %v2953 = vmax.f32 %v2697, 0.0
      %v2954 = vmax.f32 %v2698, 0.0
      %v2955 = vmax.f32 %v2699, 0.0
      %v2956 = vmax.f32 %v2700, 0.0
      %v2957 = vmax.f32 %v2701, 0.0
      %v2958 = vmax.f32 %v2702, 0.0
      %v2959 = vmax.f32 %v2703, 0.0
      %v2960 = vmax.f32 %v2704, 0.0
      %v2961 = vmax.f32 %v2705, 0.0
      %v2962 = vmax.f32 %v2706, 0.0
      %v2963 = vmax.f32 %v2707, 0.0
      %v2964 = vmax.f32 %v2708, 0.0
      %v2965 = vmax.f32 %v2709, 0.0
      %v2966 = vmax.f32 %v2710, 0.0
      %v2967 = vmax.f32 %v2711, 0.0
      %v2968 = vmax.f32 %v2712, 0.0
      %v2969 = vmax.f32 %v2713, 0.0
      %v2970 = vmax.f32 %v2714, 0.0
      %v2971 = vmax.f32 %v2715, 0.0
      %v2972 = vmax.f32 %v2716, 0.0
      %v2973 = vmax.f32 %v2717, 0.0
      %v2974 = vmax.f32 %v2718, 0.0
      %v2975 = vmax.f32 %v2719, 0.0
      %v2976 = vmax.f32 %v2720, 0.0
      %v2977 = vmax.f32 %v2721, 0.0
      %v2978 = vmax.f32 %v2722, 0.0
      %v2979 = vmax.f32 %v2723, 0.0
      %v2980 = vmax.f32 %v2724, 0.0
      %v2981 = vmax.f32 %v2725, 0.0
      %v2982 = vmax.f32 %v2726, 0.0
      %v2983 = vmax.f32 %v2727, 0.0
      %v2984 = vmax.f32 %v2728, 0.0
      %v2985 = vmax.f32 %v2729, 0.0
      %v2986 = vmax.f32 %v2730, 0.0
      %v2987 = vmax.f32 %v2731, 0.0
      %v2988 = vmax.f32 %v2732, 0.0
      %v2989 = vmax.f32 %v2733, 0.0
      %v2990 = vmax.f32 %v2734, 0.0
      %v2991 = vmax.f32 %v2735, 0.0
      %v2992 = vmax.f32 %v2736, 0.0
      %v2993 = vmax.f32 %v2737, 0.0
      %v2994 = vmax.f32 %v2738, 0.0
      %v2995 = vmax.f32 %v2739, 0.0
      %v2996 = vmax.f32 %v2740, 0.0
      %v2997 = vmax.f32 %v2741, 0.0
      %v2998 = vmax.f32 %v2742, 0.0
      %v2999 = vmax.f32 %v2743, 0.0
      %v3000 = vmax.f32 %v2744, 0.0
      %v3001 = vmax.f32 %v2745, 0.0
      %v3002 = vmax.f32 %v2746, 0.0
      %v3003 = vmax.f32 %v2747, 0.0
      %v3004 = vmax.f32 %v2748, 0.0
      %v3005 = vmax.f32 %v2749, 0.0
      %v3006 = vmax.f32 %v2750, 0.0
      %v3007 = vmax.f32 %v2751, 0.0
      %v3008 = vmax.f32 %v2752, 0.0
      %v3009 = vmax.f32 %v2753, 0.0
      %v3010 = vmax.f32 %v2754, 0.0
      %v3011 = vmax.f32 %v2755, 0.0
      %v3012 = vmax.f32 %v2756, 0.0
      %v3013 = vmax.f32 %v2757, 0.0
      %v3014 = vmax.f32 %v2758, 0.0
      %v3015 = vmax.f32 %v2759, 0.0
      %v3016 = vmax.f32 %v2760, 0.0
      %v3017 = vmax.f32 %v2761, 0.0
      %v3018 = vmax.f32 %v2762, 0.0
      %v3019 = vmax.f32 %v2763, 0.0
      %v3020 = vmax.f32 %v2764, 0.0
      %v3021 = vmax.f32 %v2765, 0.0
      %v3022 = vmax.f32 %v2766, 0.0
      %v3023 = vmax.f32 %v2767, 0.0
      %v3024 = vmax.f32 %v2768, 0.0
      %v3025 = vmax.f32 %v2769, 0.0
      %v3026 = vmax.f32 %v2770, 0.0
      %v3027 = vmax.f32 %v2771, 0.0
      %v3028 = vmax.f32 %v2772, 0.0
      %v3029 = vmax.f32 %v2773, 0.0
      %v3030 = vmax.f32 %v2774, 0.0
      %v3031 = vmax.f32 %v2775, 0.0
      %v3032 = vmax.f32 %v2776, 0.0
      %v3033 = vmax.f32 %v2777, 0.0
      %v3034 = vmax.f32 %v2778, 0.0
      %v3035 = vmax.f32 %v2779, 0.0
      %v3036 = vmax.f32 %v2780, 0.0
      %v3037 = vmax.f32 %v2781, 0.0
      %v3038 = vmax.f32 %v2782, 0.0
      %v3039 = vmax.f32 %v2783, 0.0
      %v3040 = vmax.f32 %v2784, 0.0
      %v3041 = vmax.f32 %v2785, 0.0
      %v3042 = vmax.f32 %v2786, 0.0
      %v3043 = vmax.f32 %v2787, 0.0
      %v3044 = vmax.f32 %v2788, 0.0
      %v3045 = vmax.f32 %v2789, 0.0
      %v3046 = vmax.f32 %v2790, 0.0
      %v3047 = vmax.f32 %v2791, 0.0
      %v3048 = vmax.f32 %v2792, 0.0
      %v3049 = vmax.f32 %v2793, 0.0
      %v3050 = vmax.f32 %v2794, 0.0
      %v3051 = vmax.f32 %v2795, 0.0
      %v3052 = vmax.f32 %v2796, 0.0
      %v3053 = vmax.f32 %v2797, 0.0
      %v3054 = vmax.f32 %v2798, 0.0
      %v3055 = vmax.f32 %v2799, 0.0
      %v3056 = vmax.f32 %v2800, 0.0
      %v3057 = vmax.f32 %v2801, 0.0
      %v3058 = vmax.f32 %v2802, 0.0
      %v3059 = vmax.f32 %v2803, 0.0
      %v3060 = vmax.f32 %v2804, 0.0
      %v3061 = vmax.f32 %v2805, 0.0
      %v3062 = vmax.f32 %v2806, 0.0
      %v3063 = vmax.f32 %v2807, 0.0
      %v3064 = vmax.f32 %v2808, 0.0
      %v3065 = vmax.f32 %v2809, 0.0
      %v3066 = vmax.f32 %v2810, 0.0
      %v3067 = vmax.f32 %v2811, 0.0
      %v3068 = vmax.f32 %v2812, 0.0
      %v3069 = vmax.f32 %v2813, 0.0
      %v3070 = vmax.f32 %v2814, 0.0
      %v3071 = vmax.f32 %v2815, 0.0
      %v3072 = vmax.f32 %v2816, 0.0
      %v3073 = vmax.f32 %v2817, 0.0
      %v3074 = vmax.f32 %v2818, 0.0
      %v3075 = vmax.f32 %v2819, 0.0
      %v3076 = vmax.f32 %v2820, 0.0
      %v3077 = vmax.f32 %v2821, 0.0
      %v3078 = vmax.f32 %v2822, 0.0
      %v3079 = vmax.f32 %v2823, 0.0
      %v3080 = vmax.f32 %v2824, 0.0
      %v3081 = vmax.f32 %v2825, 0.0
      %v3082 = vmax.f32 %v2826, 0.0
      %v3083 = vmax.f32 %v2827, 0.0
      %v3084 = vmax.f32 %v2828, 0.0
      %v3085 = vmax.f32 %v2829, 0.0
      %v3086 = vmax.f32 %v2830, 0.0
      %v3087 = vmax.f32 %v2831, 0.0
      %v3088 = vmax.f32 %v2832, 0.0
      %v3089 = vmax.f32 %v2833, 0.0
      %v3090 = vmax.f32 %v2834, 0.0
      %v3091 = vmax.f32 %v2835, 0.0
      %v3092 = vmax.f32 %v2836, 0.0
      %v3093 = vmax.f32 %v2837, 0.0
      %v3094 = vmax.f32 %v2838, 0.0
      %v3095 = vmax.f32 %v2839, 0.0
      %v3096 = vmax.f32 %v2840, 0.0
      %v3097 = vmax.f32 %v2841, 0.0
      %v3098 = vmax.f32 %v2842, 0.0
      %v3099 = vmax.f32 %v2843, 0.0
      %v3100 = vmax.f32 %v2844, 0.0
      %v3101 = vmax.f32 %v2845, 0.0
      %v3102 = vmax.f32 %v2846, 0.0
      %v3103 = vmax.f32 %v2847, 0.0
      %v3104 = vmax.f32 %v2848, 0.0
      %v3105 = vmax.f32 %v2849, 0.0
      %v3106 = vmax.f32 %v2850, 0.0
      %v3107 = vmax.f32 %v2851, 0.0
      %v3108 = vmax.f32 %v2852, 0.0
      %v3109 = vmax.f32 %v2853, 0.0
      %v3110 = vmax.f32 %v2854, 0.0
      %v3111 = vmax.f32 %v2855, 0.0
      %v3112 = vmax.f32 %v2856, 0.0
      %v3113 = vld [vmem:[%s8] sm:$0x1]
      %v3115 = vperm.slane %v3113, 0
      %v3117 = vmul.f32 %v2857, %v3115
      %v3118 = vmul.f32 %v2858, %v3115
      %v3119 = vmul.f32 %v2859, %v3115
      %v3120 = vmul.f32 %v2860, %v3115
      %v3121 = vmul.f32 %v2861, %v3115
      %v3122 = vmul.f32 %v2862, %v3115
      %v3123 = vmul.f32 %v2863, %v3115
      %v3124 = vmul.f32 %v2864, %v3115
      %v3125 = vmul.f32 %v2865, %v3115
      %v3126 = vmul.f32 %v2866, %v3115
      %v3127 = vmul.f32 %v2867, %v3115
      %v3128 = vmul.f32 %v2868, %v3115
      %v3129 = vmul.f32 %v2869, %v3115
      %v3130 = vmul.f32 %v2870, %v3115
      %v3131 = vmul.f32 %v2871, %v3115
      %v3132 = vmul.f32 %v2872, %v3115
      %v3133 = vmul.f32 %v2873, %v3115
      %v3134 = vmul.f32 %v2874, %v3115
      %v3135 = vmul.f32 %v2875, %v3115
      %v3136 = vmul.f32 %v2876, %v3115
      %v3137 = vmul.f32 %v2877, %v3115
      %v3138 = vmul.f32 %v2878, %v3115
      %v3139 = vmul.f32 %v2879, %v3115
      %v3140 = vmul.f32 %v2880, %v3115
      %v3141 = vmul.f32 %v2881, %v3115
      %v3142 = vmul.f32 %v2882, %v3115
      %v3143 = vmul.f32 %v2883, %v3115
      %v3144 = vmul.f32 %v2884, %v3115
      %v3145 = vmul.f32 %v2885, %v3115
      %v3146 = vmul.f32 %v2886, %v3115
      %v3147 = vmul.f32 %v2887, %v3115
      %v3148 = vmul.f32 %v2888, %v3115
      %v3149 = vmul.f32 %v2889, %v3115
      %v3150 = vmul.f32 %v2890, %v3115
      %v3151 = vmul.f32 %v2891, %v3115
      %v3152 = vmul.f32 %v2892, %v3115
      %v3153 = vmul.f32 %v2893, %v3115
      %v3154 = vmul.f32 %v2894, %v3115
      %v3155 = vmul.f32 %v2895, %v3115
      %v3156 = vmul.f32 %v2896, %v3115
      %v3157 = vmul.f32 %v2897, %v3115
      %v3158 = vmul.f32 %v2898, %v3115
      %v3159 = vmul.f32 %v2899, %v3115
      %v3160 = vmul.f32 %v2900, %v3115
      %v3161 = vmul.f32 %v2901, %v3115
      %v3162 = vmul.f32 %v2902, %v3115
      %v3163 = vmul.f32 %v2903, %v3115
      %v3164 = vmul.f32 %v2904, %v3115
      %v3165 = vmul.f32 %v2905, %v3115
      %v3166 = vmul.f32 %v2906, %v3115
      %v3167 = vmul.f32 %v2907, %v3115
      %v3168 = vmul.f32 %v2908, %v3115
      %v3169 = vmul.f32 %v2909, %v3115
      %v3170 = vmul.f32 %v2910, %v3115
      %v3171 = vmul.f32 %v2911, %v3115
      %v3172 = vmul.f32 %v2912, %v3115
      %v3173 = vmul.f32 %v2913, %v3115
      %v3174 = vmul.f32 %v2914, %v3115
      %v3175 = vmul.f32 %v2915, %v3115
      %v3176 = vmul.f32 %v2916, %v3115
      %v3177 = vmul.f32 %v2917, %v3115
      %v3178 = vmul.f32 %v2918, %v3115
      %v3179 = vmul.f32 %v2919, %v3115
      %v3180 = vmul.f32 %v2920, %v3115
      %v3181 = vmul.f32 %v2921, %v3115
      %v3182 = vmul.f32 %v2922, %v3115
      %v3183 = vmul.f32 %v2923, %v3115
      %v3184 = vmul.f32 %v2924, %v3115
      %v3185 = vmul.f32 %v2925, %v3115
      %v3186 = vmul.f32 %v2926, %v3115
      %v3187 = vmul.f32 %v2927, %v3115
      %v3188 = vmul.f32 %v2928, %v3115
      %v3189 = vmul.f32 %v2929, %v3115
      %v3190 = vmul.f32 %v2930, %v3115
      %v3191 = vmul.f32 %v2931, %v3115
      %v3192 = vmul.f32 %v2932, %v3115
      %v3193 = vmul.f32 %v2933, %v3115
      %v3194 = vmul.f32 %v2934, %v3115
      %v3195 = vmul.f32 %v2935, %v3115
      %v3196 = vmul.f32 %v2936, %v3115
      %v3197 = vmul.f32 %v2937, %v3115
      %v3198 = vmul.f32 %v2938, %v3115
      %v3199 = vmul.f32 %v2939, %v3115
      %v3200 = vmul.f32 %v2940, %v3115
      %v3201 = vmul.f32 %v2941, %v3115
      %v3202 = vmul.f32 %v2942, %v3115
      %v3203 = vmul.f32 %v2943, %v3115
      %v3204 = vmul.f32 %v2944, %v3115
      %v3205 = vmul.f32 %v2945, %v3115
      %v3206 = vmul.f32 %v2946, %v3115
      %v3207 = vmul.f32 %v2947, %v3115
      %v3208 = vmul.f32 %v2948, %v3115
      %v3209 = vmul.f32 %v2949, %v3115
      %v3210 = vmul.f32 %v2950, %v3115
      %v3211 = vmul.f32 %v2951, %v3115
      %v3212 = vmul.f32 %v2952, %v3115
      %v3213 = vmul.f32 %v2953, %v3115
      %v3214 = vmul.f32 %v2954, %v3115
      %v3215 = vmul.f32 %v2955, %v3115
      %v3216 = vmul.f32 %v2956, %v3115
      %v3217 = vmul.f32 %v2957, %v3115
      %v3218 = vmul.f32 %v2958, %v3115
      %v3219 = vmul.f32 %v2959, %v3115
      %v3220 = vmul.f32 %v2960, %v3115
      %v3221 = vmul.f32 %v2961, %v3115
      %v3222 = vmul.f32 %v2962, %v3115
      %v3223 = vmul.f32 %v2963, %v3115
      %v3224 = vmul.f32 %v2964, %v3115
      %v3225 = vmul.f32 %v2965, %v3115
      %v3226 = vmul.f32 %v2966, %v3115
      %v3227 = vmul.f32 %v2967, %v3115
      %v3228 = vmul.f32 %v2968, %v3115
      %v3229 = vmul.f32 %v2969, %v3115
      %v3230 = vmul.f32 %v2970, %v3115
      %v3231 = vmul.f32 %v2971, %v3115
      %v3232 = vmul.f32 %v2972, %v3115
      %v3233 = vmul.f32 %v2973, %v3115
      %v3234 = vmul.f32 %v2974, %v3115
      %v3235 = vmul.f32 %v2975, %v3115
      %v3236 = vmul.f32 %v2976, %v3115
      %v3237 = vmul.f32 %v2977, %v3115
      %v3238 = vmul.f32 %v2978, %v3115
      %v3239 = vmul.f32 %v2979, %v3115
      %v3240 = vmul.f32 %v2980, %v3115
      %v3241 = vmul.f32 %v2981, %v3115
      %v3242 = vmul.f32 %v2982, %v3115
      %v3243 = vmul.f32 %v2983, %v3115
      %v3244 = vmul.f32 %v2984, %v3115
      %v3245 = vmul.f32 %v2985, %v3115
      %v3246 = vmul.f32 %v2986, %v3115
      %v3247 = vmul.f32 %v2987, %v3115
      %v3248 = vmul.f32 %v2988, %v3115
      %v3249 = vmul.f32 %v2989, %v3115
      %v3250 = vmul.f32 %v2990, %v3115
      %v3251 = vmul.f32 %v2991, %v3115
      %v3252 = vmul.f32 %v2992, %v3115
      %v3253 = vmul.f32 %v2993, %v3115
      %v3254 = vmul.f32 %v2994, %v3115
      %v3255 = vmul.f32 %v2995, %v3115
      %v3256 = vmul.f32 %v2996, %v3115
      %v3257 = vmul.f32 %v2997, %v3115
      %v3258 = vmul.f32 %v2998, %v3115
      %v3259 = vmul.f32 %v2999, %v3115
      %v3260 = vmul.f32 %v3000, %v3115
      %v3261 = vmul.f32 %v3001, %v3115
      %v3262 = vmul.f32 %v3002, %v3115
      %v3263 = vmul.f32 %v3003, %v3115
      %v3264 = vmul.f32 %v3004, %v3115
      %v3265 = vmul.f32 %v3005, %v3115
      %v3266 = vmul.f32 %v3006, %v3115
      %v3267 = vmul.f32 %v3007, %v3115
      %v3268 = vmul.f32 %v3008, %v3115
      %v3269 = vmul.f32 %v3009, %v3115
      %v3270 = vmul.f32 %v3010, %v3115
      %v3271 = vmul.f32 %v3011, %v3115
      %v3272 = vmul.f32 %v3012, %v3115
      %v3273 = vmul.f32 %v3013, %v3115
      %v3274 = vmul.f32 %v3014, %v3115
      %v3275 = vmul.f32 %v3015, %v3115
      %v3276 = vmul.f32 %v3016, %v3115
      %v3277 = vmul.f32 %v3017, %v3115
      %v3278 = vmul.f32 %v3018, %v3115
      %v3279 = vmul.f32 %v3019, %v3115
      %v3280 = vmul.f32 %v3020, %v3115
      %v3281 = vmul.f32 %v3021, %v3115
      %v3282 = vmul.f32 %v3022, %v3115
      %v3283 = vmul.f32 %v3023, %v3115
      %v3284 = vmul.f32 %v3024, %v3115
      %v3285 = vmul.f32 %v3025, %v3115
      %v3286 = vmul.f32 %v3026, %v3115
      %v3287 = vmul.f32 %v3027, %v3115
      %v3288 = vmul.f32 %v3028, %v3115
      %v3289 = vmul.f32 %v3029, %v3115
      %v3290 = vmul.f32 %v3030, %v3115
      %v3291 = vmul.f32 %v3031, %v3115
      %v3292 = vmul.f32 %v3032, %v3115
      %v3293 = vmul.f32 %v3033, %v3115
      %v3294 = vmul.f32 %v3034, %v3115
      %v3295 = vmul.f32 %v3035, %v3115
      %v3296 = vmul.f32 %v3036, %v3115
      %v3297 = vmul.f32 %v3037, %v3115
      %v3298 = vmul.f32 %v3038, %v3115
      %v3299 = vmul.f32 %v3039, %v3115
      %v3300 = vmul.f32 %v3040, %v3115
      %v3301 = vmul.f32 %v3041, %v3115
      %v3302 = vmul.f32 %v3042, %v3115
      %v3303 = vmul.f32 %v3043, %v3115
      %v3304 = vmul.f32 %v3044, %v3115
      %v3305 = vmul.f32 %v3045, %v3115
      %v3306 = vmul.f32 %v3046, %v3115
      %v3307 = vmul.f32 %v3047, %v3115
      %v3308 = vmul.f32 %v3048, %v3115
      %v3309 = vmul.f32 %v3049, %v3115
      %v3310 = vmul.f32 %v3050, %v3115
      %v3311 = vmul.f32 %v3051, %v3115
      %v3312 = vmul.f32 %v3052, %v3115
      %v3313 = vmul.f32 %v3053, %v3115
      %v3314 = vmul.f32 %v3054, %v3115
      %v3315 = vmul.f32 %v3055, %v3115
      %v3316 = vmul.f32 %v3056, %v3115
      %v3317 = vmul.f32 %v3057, %v3115
      %v3318 = vmul.f32 %v3058, %v3115
      %v3319 = vmul.f32 %v3059, %v3115
      %v3320 = vmul.f32 %v3060, %v3115
      %v3321 = vmul.f32 %v3061, %v3115
      %v3322 = vmul.f32 %v3062, %v3115
      %v3323 = vmul.f32 %v3063, %v3115
      %v3324 = vmul.f32 %v3064, %v3115
      %v3325 = vmul.f32 %v3065, %v3115
      %v3326 = vmul.f32 %v3066, %v3115
      %v3327 = vmul.f32 %v3067, %v3115
      %v3328 = vmul.f32 %v3068, %v3115
      %v3329 = vmul.f32 %v3069, %v3115
      %v3330 = vmul.f32 %v3070, %v3115
      %v3331 = vmul.f32 %v3071, %v3115
      %v3332 = vmul.f32 %v3072, %v3115
      %v3333 = vmul.f32 %v3073, %v3115
      %v3334 = vmul.f32 %v3074, %v3115
      %v3335 = vmul.f32 %v3075, %v3115
      %v3336 = vmul.f32 %v3076, %v3115
      %v3337 = vmul.f32 %v3077, %v3115
      %v3338 = vmul.f32 %v3078, %v3115
      %v3339 = vmul.f32 %v3079, %v3115
      %v3340 = vmul.f32 %v3080, %v3115
      %v3341 = vmul.f32 %v3081, %v3115
      %v3342 = vmul.f32 %v3082, %v3115
      %v3343 = vmul.f32 %v3083, %v3115
      %v3344 = vmul.f32 %v3084, %v3115
      %v3345 = vmul.f32 %v3085, %v3115
      %v3346 = vmul.f32 %v3086, %v3115
      %v3347 = vmul.f32 %v3087, %v3115
      %v3348 = vmul.f32 %v3088, %v3115
      %v3349 = vmul.f32 %v3089, %v3115
      %v3350 = vmul.f32 %v3090, %v3115
      %v3351 = vmul.f32 %v3091, %v3115
      %v3352 = vmul.f32 %v3092, %v3115
      %v3353 = vmul.f32 %v3093, %v3115
      %v3354 = vmul.f32 %v3094, %v3115
      %v3355 = vmul.f32 %v3095, %v3115
      %v3356 = vmul.f32 %v3096, %v3115
      %v3357 = vmul.f32 %v3097, %v3115
      %v3358 = vmul.f32 %v3098, %v3115
      %v3359 = vmul.f32 %v3099, %v3115
      %v3360 = vmul.f32 %v3100, %v3115
      %v3361 = vmul.f32 %v3101, %v3115
      %v3362 = vmul.f32 %v3102, %v3115
      %v3363 = vmul.f32 %v3103, %v3115
      %v3364 = vmul.f32 %v3104, %v3115
      %v3365 = vmul.f32 %v3105, %v3115
      %v3366 = vmul.f32 %v3106, %v3115
      %v3367 = vmul.f32 %v3107, %v3115
      %v3368 = vmul.f32 %v3108, %v3115
      %v3369 = vmul.f32 %v3109, %v3115
      %v3370 = vmul.f32 %v3110, %v3115
      %v3371 = vmul.f32 %v3111, %v3115
      %v3372 = vmul.f32 %v3112, %v3115
      %3373 = vadd.xlane.f32.xlu0 %v3117
      %v3374 = vpop.xlane.xlu0 %3373
      %3375 = vadd.xlane.f32.xlu0 %v3118
      %v3376 = vpop.xlane.xlu0 %3375
      %3377 = vadd.xlane.f32.xlu0 %v3119
      %v3378 = vpop.xlane.xlu0 %3377
      %3379 = vadd.xlane.f32.xlu0 %v3120
      %v3380 = vpop.xlane.xlu0 %3379
      %3381 = vadd.xlane.f32.xlu0 %v3121
      %v3382 = vpop.xlane.xlu0 %3381
      %3383 = vadd.xlane.f32.xlu0 %v3122
      %v3384 = vpop.xlane.xlu0 %3383
      %3385 = vadd.xlane.f32.xlu0 %v3123
      %v3386 = vpop.xlane.xlu0 %3385
      %3387 = vadd.xlane.f32.xlu0 %v3124
      %v3388 = vpop.xlane.xlu0 %3387
      %3389 = vadd.xlane.f32.xlu0 %v3125
      %v3390 = vpop.xlane.xlu0 %3389
      %3391 = vadd.xlane.f32.xlu0 %v3126
      %v3392 = vpop.xlane.xlu0 %3391
      %3393 = vadd.xlane.f32.xlu0 %v3127
      %v3394 = vpop.xlane.xlu0 %3393
      %3395 = vadd.xlane.f32.xlu0 %v3128
      %v3396 = vpop.xlane.xlu0 %3395
      %3397 = vadd.xlane.f32.xlu0 %v3129
      %v3398 = vpop.xlane.xlu0 %3397
      %3399 = vadd.xlane.f32.xlu0 %v3130
      %v3400 = vpop.xlane.xlu0 %3399
      %3401 = vadd.xlane.f32.xlu0 %v3131
      %v3402 = vpop.xlane.xlu0 %3401
      %3403 = vadd.xlane.f32.xlu0 %v3132
      %v3404 = vpop.xlane.xlu0 %3403
      %3405 = vadd.xlane.f32.xlu0 %v3133
      %v3406 = vpop.xlane.xlu0 %3405
      %3407 = vadd.xlane.f32.xlu0 %v3134
      %v3408 = vpop.xlane.xlu0 %3407
      %3409 = vadd.xlane.f32.xlu0 %v3135
      %v3410 = vpop.xlane.xlu0 %3409
      %3411 = vadd.xlane.f32.xlu0 %v3136
      %v3412 = vpop.xlane.xlu0 %3411
      %3413 = vadd.xlane.f32.xlu0 %v3137
      %v3414 = vpop.xlane.xlu0 %3413
      %3415 = vadd.xlane.f32.xlu0 %v3138
      %v3416 = vpop.xlane.xlu0 %3415
      %3417 = vadd.xlane.f32.xlu0 %v3139
      %v3418 = vpop.xlane.xlu0 %3417
      %3419 = vadd.xlane.f32.xlu0 %v3140
      %v3420 = vpop.xlane.xlu0 %3419
      %3421 = vadd.xlane.f32.xlu0 %v3141
      %v3422 = vpop.xlane.xlu0 %3421
      %3423 = vadd.xlane.f32.xlu0 %v3142
      %v3424 = vpop.xlane.xlu0 %3423
      %3425 = vadd.xlane.f32.xlu0 %v3143
      %v3426 = vpop.xlane.xlu0 %3425
      %3427 = vadd.xlane.f32.xlu0 %v3144
      %v3428 = vpop.xlane.xlu0 %3427
      %3429 = vadd.xlane.f32.xlu0 %v3145
      %v3430 = vpop.xlane.xlu0 %3429
      %3431 = vadd.xlane.f32.xlu0 %v3146
      %v3432 = vpop.xlane.xlu0 %3431
      %3433 = vadd.xlane.f32.xlu0 %v3147
      %v3434 = vpop.xlane.xlu0 %3433
      %3435 = vadd.xlane.f32.xlu0 %v3148
      %v3436 = vpop.xlane.xlu0 %3435
      %3437 = vadd.xlane.f32.xlu0 %v3149
      %v3438 = vpop.xlane.xlu0 %3437
      %3439 = vadd.xlane.f32.xlu0 %v3150
      %v3440 = vpop.xlane.xlu0 %3439
      %3441 = vadd.xlane.f32.xlu0 %v3151
      %v3442 = vpop.xlane.xlu0 %3441
      %3443 = vadd.xlane.f32.xlu0 %v3152
      %v3444 = vpop.xlane.xlu0 %3443
      %3445 = vadd.xlane.f32.xlu0 %v3153
      %v3446 = vpop.xlane.xlu0 %3445
      %3447 = vadd.xlane.f32.xlu0 %v3154
      %v3448 = vpop.xlane.xlu0 %3447
      %3449 = vadd.xlane.f32.xlu0 %v3155
      %v3450 = vpop.xlane.xlu0 %3449
      %3451 = vadd.xlane.f32.xlu0 %v3156
      %v3452 = vpop.xlane.xlu0 %3451
      %3453 = vadd.xlane.f32.xlu0 %v3157
      %v3454 = vpop.xlane.xlu0 %3453
      %3455 = vadd.xlane.f32.xlu0 %v3158
      %v3456 = vpop.xlane.xlu0 %3455
      %3457 = vadd.xlane.f32.xlu0 %v3159
      %v3458 = vpop.xlane.xlu0 %3457
      %3459 = vadd.xlane.f32.xlu0 %v3160
      %v3460 = vpop.xlane.xlu0 %3459
      %3461 = vadd.xlane.f32.xlu0 %v3161
      %v3462 = vpop.xlane.xlu0 %3461
      %3463 = vadd.xlane.f32.xlu0 %v3162
      %v3464 = vpop.xlane.xlu0 %3463
      %3465 = vadd.xlane.f32.xlu0 %v3163
      %v3466 = vpop.xlane.xlu0 %3465
      %3467 = vadd.xlane.f32.xlu0 %v3164
      %v3468 = vpop.xlane.xlu0 %3467
      %3469 = vadd.xlane.f32.xlu0 %v3165
      %v3470 = vpop.xlane.xlu0 %3469
      %3471 = vadd.xlane.f32.xlu0 %v3166
      %v3472 = vpop.xlane.xlu0 %3471
      %3473 = vadd.xlane.f32.xlu0 %v3167
      %v3474 = vpop.xlane.xlu0 %3473
      %3475 = vadd.xlane.f32.xlu0 %v3168
      %v3476 = vpop.xlane.xlu0 %3475
      %3477 = vadd.xlane.f32.xlu0 %v3169
      %v3478 = vpop.xlane.xlu0 %3477
      %3479 = vadd.xlane.f32.xlu0 %v3170
      %v3480 = vpop.xlane.xlu0 %3479
      %3481 = vadd.xlane.f32.xlu0 %v3171
      %v3482 = vpop.xlane.xlu0 %3481
      %3483 = vadd.xlane.f32.xlu0 %v3172
      %v3484 = vpop.xlane.xlu0 %3483
      %3485 = vadd.xlane.f32.xlu0 %v3173
      %v3486 = vpop.xlane.xlu0 %3485
      %3487 = vadd.xlane.f32.xlu0 %v3174
      %v3488 = vpop.xlane.xlu0 %3487
      %3489 = vadd.xlane.f32.xlu0 %v3175
      %v3490 = vpop.xlane.xlu0 %3489
      %3491 = vadd.xlane.f32.xlu0 %v3176
      %v3492 = vpop.xlane.xlu0 %3491
      %3493 = vadd.xlane.f32.xlu0 %v3177
      %v3494 = vpop.xlane.xlu0 %3493
      %3495 = vadd.xlane.f32.xlu0 %v3178
      %v3496 = vpop.xlane.xlu0 %3495
      %3497 = vadd.xlane.f32.xlu0 %v3179
      %v3498 = vpop.xlane.xlu0 %3497
      %3499 = vadd.xlane.f32.xlu0 %v3180
      %v3500 = vpop.xlane.xlu0 %3499
      %3501 = vadd.xlane.f32.xlu0 %v3181
      %v3502 = vpop.xlane.xlu0 %3501
      %3503 = vadd.xlane.f32.xlu0 %v3182
      %v3504 = vpop.xlane.xlu0 %3503
      %3505 = vadd.xlane.f32.xlu0 %v3183
      %v3506 = vpop.xlane.xlu0 %3505
      %3507 = vadd.xlane.f32.xlu0 %v3184
      %v3508 = vpop.xlane.xlu0 %3507
      %3509 = vadd.xlane.f32.xlu0 %v3185
      %v3510 = vpop.xlane.xlu0 %3509
      %3511 = vadd.xlane.f32.xlu0 %v3186
      %v3512 = vpop.xlane.xlu0 %3511
      %3513 = vadd.xlane.f32.xlu0 %v3187
      %v3514 = vpop.xlane.xlu0 %3513
      %3515 = vadd.xlane.f32.xlu0 %v3188
      %v3516 = vpop.xlane.xlu0 %3515
      %3517 = vadd.xlane.f32.xlu0 %v3189
      %v3518 = vpop.xlane.xlu0 %3517
      %3519 = vadd.xlane.f32.xlu0 %v3190
      %v3520 = vpop.xlane.xlu0 %3519
      %3521 = vadd.xlane.f32.xlu0 %v3191
      %v3522 = vpop.xlane.xlu0 %3521
      %3523 = vadd.xlane.f32.xlu0 %v3192
      %v3524 = vpop.xlane.xlu0 %3523
      %3525 = vadd.xlane.f32.xlu0 %v3193
      %v3526 = vpop.xlane.xlu0 %3525
      %3527 = vadd.xlane.f32.xlu0 %v3194
      %v3528 = vpop.xlane.xlu0 %3527
      %3529 = vadd.xlane.f32.xlu0 %v3195
      %v3530 = vpop.xlane.xlu0 %3529
      %3531 = vadd.xlane.f32.xlu0 %v3196
      %v3532 = vpop.xlane.xlu0 %3531
      %3533 = vadd.xlane.f32.xlu0 %v3197
      %v3534 = vpop.xlane.xlu0 %3533
      %3535 = vadd.xlane.f32.xlu0 %v3198
      %v3536 = vpop.xlane.xlu0 %3535
      %3537 = vadd.xlane.f32.xlu0 %v3199
      %v3538 = vpop.xlane.xlu0 %3537
      %3539 = vadd.xlane.f32.xlu0 %v3200
      %v3540 = vpop.xlane.xlu0 %3539
      %3541 = vadd.xlane.f32.xlu0 %v3201
      %v3542 = vpop.xlane.xlu0 %3541
      %3543 = vadd.xlane.f32.xlu0 %v3202
      %v3544 = vpop.xlane.xlu0 %3543
      %3545 = vadd.xlane.f32.xlu0 %v3203
      %v3546 = vpop.xlane.xlu0 %3545
      %3547 = vadd.xlane.f32.xlu0 %v3204
      %v3548 = vpop.xlane.xlu0 %3547
      %3549 = vadd.xlane.f32.xlu0 %v3205
      %v3550 = vpop.xlane.xlu0 %3549
      %3551 = vadd.xlane.f32.xlu0 %v3206
      %v3552 = vpop.xlane.xlu0 %3551
      %3553 = vadd.xlane.f32.xlu0 %v3207
      %v3554 = vpop.xlane.xlu0 %3553
      %3555 = vadd.xlane.f32.xlu0 %v3208
      %v3556 = vpop.xlane.xlu0 %3555
      %3557 = vadd.xlane.f32.xlu0 %v3209
      %v3558 = vpop.xlane.xlu0 %3557
      %3559 = vadd.xlane.f32.xlu0 %v3210
      %v3560 = vpop.xlane.xlu0 %3559
      %3561 = vadd.xlane.f32.xlu0 %v3211
      %v3562 = vpop.xlane.xlu0 %3561
      %3563 = vadd.xlane.f32.xlu0 %v3212
      %v3564 = vpop.xlane.xlu0 %3563
      %3565 = vadd.xlane.f32.xlu0 %v3213
      %v3566 = vpop.xlane.xlu0 %3565
      %3567 = vadd.xlane.f32.xlu0 %v3214
      %v3568 = vpop.xlane.xlu0 %3567
      %3569 = vadd.xlane.f32.xlu0 %v3215
      %v3570 = vpop.xlane.xlu0 %3569
      %3571 = vadd.xlane.f32.xlu0 %v3216
      %v3572 = vpop.xlane.xlu0 %3571
      %3573 = vadd.xlane.f32.xlu0 %v3217
      %v3574 = vpop.xlane.xlu0 %3573
      %3575 = vadd.xlane.f32.xlu0 %v3218
      %v3576 = vpop.xlane.xlu0 %3575
      %3577 = vadd.xlane.f32.xlu0 %v3219
      %v3578 = vpop.xlane.xlu0 %3577
      %3579 = vadd.xlane.f32.xlu0 %v3220
      %v3580 = vpop.xlane.xlu0 %3579
      %3581 = vadd.xlane.f32.xlu0 %v3221
      %v3582 = vpop.xlane.xlu0 %3581
      %3583 = vadd.xlane.f32.xlu0 %v3222
      %v3584 = vpop.xlane.xlu0 %3583
      %3585 = vadd.xlane.f32.xlu0 %v3223
      %v3586 = vpop.xlane.xlu0 %3585
      %3587 = vadd.xlane.f32.xlu0 %v3224
      %v3588 = vpop.xlane.xlu0 %3587
      %3589 = vadd.xlane.f32.xlu0 %v3225
      %v3590 = vpop.xlane.xlu0 %3589
      %3591 = vadd.xlane.f32.xlu0 %v3226
      %v3592 = vpop.xlane.xlu0 %3591
      %3593 = vadd.xlane.f32.xlu0 %v3227
      %v3594 = vpop.xlane.xlu0 %3593
      %3595 = vadd.xlane.f32.xlu0 %v3228
      %v3596 = vpop.xlane.xlu0 %3595
      %3597 = vadd.xlane.f32.xlu0 %v3229
      %v3598 = vpop.xlane.xlu0 %3597
      %3599 = vadd.xlane.f32.xlu0 %v3230
      %v3600 = vpop.xlane.xlu0 %3599
      %3601 = vadd.xlane.f32.xlu0 %v3231
      %v3602 = vpop.xlane.xlu0 %3601
      %3603 = vadd.xlane.f32.xlu0 %v3232
      %v3604 = vpop.xlane.xlu0 %3603
      %3605 = vadd.xlane.f32.xlu0 %v3233
      %v3606 = vpop.xlane.xlu0 %3605
      %3607 = vadd.xlane.f32.xlu0 %v3234
      %v3608 = vpop.xlane.xlu0 %3607
      %3609 = vadd.xlane.f32.xlu0 %v3235
      %v3610 = vpop.xlane.xlu0 %3609
      %3611 = vadd.xlane.f32.xlu0 %v3236
      %v3612 = vpop.xlane.xlu0 %3611
      %3613 = vadd.xlane.f32.xlu0 %v3237
      %v3614 = vpop.xlane.xlu0 %3613
      %3615 = vadd.xlane.f32.xlu0 %v3238
      %v3616 = vpop.xlane.xlu0 %3615
      %3617 = vadd.xlane.f32.xlu0 %v3239
      %v3618 = vpop.xlane.xlu0 %3617
      %3619 = vadd.xlane.f32.xlu0 %v3240
      %v3620 = vpop.xlane.xlu0 %3619
      %3621 = vadd.xlane.f32.xlu0 %v3241
      %v3622 = vpop.xlane.xlu0 %3621
      %3623 = vadd.xlane.f32.xlu0 %v3242
      %v3624 = vpop.xlane.xlu0 %3623
      %3625 = vadd.xlane.f32.xlu0 %v3243
      %v3626 = vpop.xlane.xlu0 %3625
      %3627 = vadd.xlane.f32.xlu0 %v3244
      %v3628 = vpop.xlane.xlu0 %3627
      %3629 = vadd.xlane.f32.xlu0 %v3245
      %v3630 = vpop.xlane.xlu0 %3629
      %3631 = vadd.xlane.f32.xlu0 %v3246
      %v3632 = vpop.xlane.xlu0 %3631
      %3633 = vadd.xlane.f32.xlu0 %v3247
      %v3634 = vpop.xlane.xlu0 %3633
      %3635 = vadd.xlane.f32.xlu0 %v3248
      %v3636 = vpop.xlane.xlu0 %3635
      %3637 = vadd.xlane.f32.xlu0 %v3249
      %v3638 = vpop.xlane.xlu0 %3637
      %3639 = vadd.xlane.f32.xlu0 %v3250
      %v3640 = vpop.xlane.xlu0 %3639
      %3641 = vadd.xlane.f32.xlu0 %v3251
      %v3642 = vpop.xlane.xlu0 %3641
      %3643 = vadd.xlane.f32.xlu0 %v3252
      %v3644 = vpop.xlane.xlu0 %3643
      %3645 = vadd.xlane.f32.xlu0 %v3253
      %v3646 = vpop.xlane.xlu0 %3645
      %3647 = vadd.xlane.f32.xlu0 %v3254
      %v3648 = vpop.xlane.xlu0 %3647
      %3649 = vadd.xlane.f32.xlu0 %v3255
      %v3650 = vpop.xlane.xlu0 %3649
      %3651 = vadd.xlane.f32.xlu0 %v3256
      %v3652 = vpop.xlane.xlu0 %3651
      %3653 = vadd.xlane.f32.xlu0 %v3257
      %v3654 = vpop.xlane.xlu0 %3653
      %3655 = vadd.xlane.f32.xlu0 %v3258
      %v3656 = vpop.xlane.xlu0 %3655
      %3657 = vadd.xlane.f32.xlu0 %v3259
      %v3658 = vpop.xlane.xlu0 %3657
      %3659 = vadd.xlane.f32.xlu0 %v3260
      %v3660 = vpop.xlane.xlu0 %3659
      %3661 = vadd.xlane.f32.xlu0 %v3261
      %v3662 = vpop.xlane.xlu0 %3661
      %3663 = vadd.xlane.f32.xlu0 %v3262
      %v3664 = vpop.xlane.xlu0 %3663
      %3665 = vadd.xlane.f32.xlu0 %v3263
      %v3666 = vpop.xlane.xlu0 %3665
      %3667 = vadd.xlane.f32.xlu0 %v3264
      %v3668 = vpop.xlane.xlu0 %3667
      %3669 = vadd.xlane.f32.xlu0 %v3265
      %v3670 = vpop.xlane.xlu0 %3669
      %3671 = vadd.xlane.f32.xlu0 %v3266
      %v3672 = vpop.xlane.xlu0 %3671
      %3673 = vadd.xlane.f32.xlu0 %v3267
      %v3674 = vpop.xlane.xlu0 %3673
      %3675 = vadd.xlane.f32.xlu0 %v3268
      %v3676 = vpop.xlane.xlu0 %3675
      %3677 = vadd.xlane.f32.xlu0 %v3269
      %v3678 = vpop.xlane.xlu0 %3677
      %3679 = vadd.xlane.f32.xlu0 %v3270
      %v3680 = vpop.xlane.xlu0 %3679
      %3681 = vadd.xlane.f32.xlu0 %v3271
      %v3682 = vpop.xlane.xlu0 %3681
      %3683 = vadd.xlane.f32.xlu0 %v3272
      %v3684 = vpop.xlane.xlu0 %3683
      %3685 = vadd.xlane.f32.xlu0 %v3273
      %v3686 = vpop.xlane.xlu0 %3685
      %3687 = vadd.xlane.f32.xlu0 %v3274
      %v3688 = vpop.xlane.xlu0 %3687
      %3689 = vadd.xlane.f32.xlu0 %v3275
      %v3690 = vpop.xlane.xlu0 %3689
      %3691 = vadd.xlane.f32.xlu0 %v3276
      %v3692 = vpop.xlane.xlu0 %3691
      %3693 = vadd.xlane.f32.xlu0 %v3277
      %v3694 = vpop.xlane.xlu0 %3693
      %3695 = vadd.xlane.f32.xlu0 %v3278
      %v3696 = vpop.xlane.xlu0 %3695
      %3697 = vadd.xlane.f32.xlu0 %v3279
      %v3698 = vpop.xlane.xlu0 %3697
      %3699 = vadd.xlane.f32.xlu0 %v3280
      %v3700 = vpop.xlane.xlu0 %3699
      %3701 = vadd.xlane.f32.xlu0 %v3281
      %v3702 = vpop.xlane.xlu0 %3701
      %3703 = vadd.xlane.f32.xlu0 %v3282
      %v3704 = vpop.xlane.xlu0 %3703
      %3705 = vadd.xlane.f32.xlu0 %v3283
      %v3706 = vpop.xlane.xlu0 %3705
      %3707 = vadd.xlane.f32.xlu0 %v3284
      %v3708 = vpop.xlane.xlu0 %3707
      %3709 = vadd.xlane.f32.xlu0 %v3285
      %v3710 = vpop.xlane.xlu0 %3709
      %3711 = vadd.xlane.f32.xlu0 %v3286
      %v3712 = vpop.xlane.xlu0 %3711
      %3713 = vadd.xlane.f32.xlu0 %v3287
      %v3714 = vpop.xlane.xlu0 %3713
      %3715 = vadd.xlane.f32.xlu0 %v3288
      %v3716 = vpop.xlane.xlu0 %3715
      %3717 = vadd.xlane.f32.xlu0 %v3289
      %v3718 = vpop.xlane.xlu0 %3717
      %3719 = vadd.xlane.f32.xlu0 %v3290
      %v3720 = vpop.xlane.xlu0 %3719
      %3721 = vadd.xlane.f32.xlu0 %v3291
      %v3722 = vpop.xlane.xlu0 %3721
      %3723 = vadd.xlane.f32.xlu0 %v3292
      %v3724 = vpop.xlane.xlu0 %3723
      %3725 = vadd.xlane.f32.xlu0 %v3293
      %v3726 = vpop.xlane.xlu0 %3725
      %3727 = vadd.xlane.f32.xlu0 %v3294
      %v3728 = vpop.xlane.xlu0 %3727
      %3729 = vadd.xlane.f32.xlu0 %v3295
      %v3730 = vpop.xlane.xlu0 %3729
      %3731 = vadd.xlane.f32.xlu0 %v3296
      %v3732 = vpop.xlane.xlu0 %3731
      %3733 = vadd.xlane.f32.xlu0 %v3297
      %v3734 = vpop.xlane.xlu0 %3733
      %3735 = vadd.xlane.f32.xlu0 %v3298
      %v3736 = vpop.xlane.xlu0 %3735
      %3737 = vadd.xlane.f32.xlu0 %v3299
      %v3738 = vpop.xlane.xlu0 %3737
      %3739 = vadd.xlane.f32.xlu0 %v3300
      %v3740 = vpop.xlane.xlu0 %3739
      %3741 = vadd.xlane.f32.xlu0 %v3301
      %v3742 = vpop.xlane.xlu0 %3741
      %3743 = vadd.xlane.f32.xlu0 %v3302
      %v3744 = vpop.xlane.xlu0 %3743
      %3745 = vadd.xlane.f32.xlu0 %v3303
      %v3746 = vpop.xlane.xlu0 %3745
      %3747 = vadd.xlane.f32.xlu0 %v3304
      %v3748 = vpop.xlane.xlu0 %3747
      %3749 = vadd.xlane.f32.xlu0 %v3305
      %v3750 = vpop.xlane.xlu0 %3749
      %3751 = vadd.xlane.f32.xlu0 %v3306
      %v3752 = vpop.xlane.xlu0 %3751
      %3753 = vadd.xlane.f32.xlu0 %v3307
      %v3754 = vpop.xlane.xlu0 %3753
      %3755 = vadd.xlane.f32.xlu0 %v3308
      %v3756 = vpop.xlane.xlu0 %3755
      %3757 = vadd.xlane.f32.xlu0 %v3309
      %v3758 = vpop.xlane.xlu0 %3757
      %3759 = vadd.xlane.f32.xlu0 %v3310
      %v3760 = vpop.xlane.xlu0 %3759
      %3761 = vadd.xlane.f32.xlu0 %v3311
      %v3762 = vpop.xlane.xlu0 %3761
      %3763 = vadd.xlane.f32.xlu0 %v3312
      %v3764 = vpop.xlane.xlu0 %3763
      %3765 = vadd.xlane.f32.xlu0 %v3313
      %v3766 = vpop.xlane.xlu0 %3765
      %3767 = vadd.xlane.f32.xlu0 %v3314
      %v3768 = vpop.xlane.xlu0 %3767
      %3769 = vadd.xlane.f32.xlu0 %v3315
      %v3770 = vpop.xlane.xlu0 %3769
      %3771 = vadd.xlane.f32.xlu0 %v3316
      %v3772 = vpop.xlane.xlu0 %3771
      %3773 = vadd.xlane.f32.xlu0 %v3317
      %v3774 = vpop.xlane.xlu0 %3773
      %3775 = vadd.xlane.f32.xlu0 %v3318
      %v3776 = vpop.xlane.xlu0 %3775
      %3777 = vadd.xlane.f32.xlu0 %v3319
      %v3778 = vpop.xlane.xlu0 %3777
      %3779 = vadd.xlane.f32.xlu0 %v3320
      %v3780 = vpop.xlane.xlu0 %3779
      %3781 = vadd.xlane.f32.xlu0 %v3321
      %v3782 = vpop.xlane.xlu0 %3781
      %3783 = vadd.xlane.f32.xlu0 %v3322
      %v3784 = vpop.xlane.xlu0 %3783
      %3785 = vadd.xlane.f32.xlu0 %v3323
      %v3786 = vpop.xlane.xlu0 %3785
      %3787 = vadd.xlane.f32.xlu0 %v3324
      %v3788 = vpop.xlane.xlu0 %3787
      %3789 = vadd.xlane.f32.xlu0 %v3325
      %v3790 = vpop.xlane.xlu0 %3789
      %3791 = vadd.xlane.f32.xlu0 %v3326
      %v3792 = vpop.xlane.xlu0 %3791
      %3793 = vadd.xlane.f32.xlu0 %v3327
      %v3794 = vpop.xlane.xlu0 %3793
      %3795 = vadd.xlane.f32.xlu0 %v3328
      %v3796 = vpop.xlane.xlu0 %3795
      %3797 = vadd.xlane.f32.xlu0 %v3329
      %v3798 = vpop.xlane.xlu0 %3797
      %3799 = vadd.xlane.f32.xlu0 %v3330
      %v3800 = vpop.xlane.xlu0 %3799
      %3801 = vadd.xlane.f32.xlu0 %v3331
      %v3802 = vpop.xlane.xlu0 %3801
      %3803 = vadd.xlane.f32.xlu0 %v3332
      %v3804 = vpop.xlane.xlu0 %3803
      %3805 = vadd.xlane.f32.xlu0 %v3333
      %v3806 = vpop.xlane.xlu0 %3805
      %3807 = vadd.xlane.f32.xlu0 %v3334
      %v3808 = vpop.xlane.xlu0 %3807
      %3809 = vadd.xlane.f32.xlu0 %v3335
      %v3810 = vpop.xlane.xlu0 %3809
      %3811 = vadd.xlane.f32.xlu0 %v3336
      %v3812 = vpop.xlane.xlu0 %3811
      %3813 = vadd.xlane.f32.xlu0 %v3337
      %v3814 = vpop.xlane.xlu0 %3813
      %3815 = vadd.xlane.f32.xlu0 %v3338
      %v3816 = vpop.xlane.xlu0 %3815
      %3817 = vadd.xlane.f32.xlu0 %v3339
      %v3818 = vpop.xlane.xlu0 %3817
      %3819 = vadd.xlane.f32.xlu0 %v3340
      %v3820 = vpop.xlane.xlu0 %3819
      %3821 = vadd.xlane.f32.xlu0 %v3341
      %v3822 = vpop.xlane.xlu0 %3821
      %3823 = vadd.xlane.f32.xlu0 %v3342
      %v3824 = vpop.xlane.xlu0 %3823
      %3825 = vadd.xlane.f32.xlu0 %v3343
      %v3826 = vpop.xlane.xlu0 %3825
      %3827 = vadd.xlane.f32.xlu0 %v3344
      %v3828 = vpop.xlane.xlu0 %3827
      %3829 = vadd.xlane.f32.xlu0 %v3345
      %v3830 = vpop.xlane.xlu0 %3829
      %3831 = vadd.xlane.f32.xlu0 %v3346
      %v3832 = vpop.xlane.xlu0 %3831
      %3833 = vadd.xlane.f32.xlu0 %v3347
      %v3834 = vpop.xlane.xlu0 %3833
      %3835 = vadd.xlane.f32.xlu0 %v3348
      %v3836 = vpop.xlane.xlu0 %3835
      %3837 = vadd.xlane.f32.xlu0 %v3349
      %v3838 = vpop.xlane.xlu0 %3837
      %3839 = vadd.xlane.f32.xlu0 %v3350
      %v3840 = vpop.xlane.xlu0 %3839
      %3841 = vadd.xlane.f32.xlu0 %v3351
      %v3842 = vpop.xlane.xlu0 %3841
      %3843 = vadd.xlane.f32.xlu0 %v3352
      %v3844 = vpop.xlane.xlu0 %3843
      %3845 = vadd.xlane.f32.xlu0 %v3353
      %v3846 = vpop.xlane.xlu0 %3845
      %3847 = vadd.xlane.f32.xlu0 %v3354
      %v3848 = vpop.xlane.xlu0 %3847
      %3849 = vadd.xlane.f32.xlu0 %v3355
      %v3850 = vpop.xlane.xlu0 %3849
      %3851 = vadd.xlane.f32.xlu0 %v3356
      %v3852 = vpop.xlane.xlu0 %3851
      %3853 = vadd.xlane.f32.xlu0 %v3357
      %v3854 = vpop.xlane.xlu0 %3853
      %3855 = vadd.xlane.f32.xlu0 %v3358
      %v3856 = vpop.xlane.xlu0 %3855
      %3857 = vadd.xlane.f32.xlu0 %v3359
      %v3858 = vpop.xlane.xlu0 %3857
      %3859 = vadd.xlane.f32.xlu0 %v3360
      %v3860 = vpop.xlane.xlu0 %3859
      %3861 = vadd.xlane.f32.xlu0 %v3361
      %v3862 = vpop.xlane.xlu0 %3861
      %3863 = vadd.xlane.f32.xlu0 %v3362
      %v3864 = vpop.xlane.xlu0 %3863
      %3865 = vadd.xlane.f32.xlu0 %v3363
      %v3866 = vpop.xlane.xlu0 %3865
      %3867 = vadd.xlane.f32.xlu0 %v3364
      %v3868 = vpop.xlane.xlu0 %3867
      %3869 = vadd.xlane.f32.xlu0 %v3365
      %v3870 = vpop.xlane.xlu0 %3869
      %3871 = vadd.xlane.f32.xlu0 %v3366
      %v3872 = vpop.xlane.xlu0 %3871
      %3873 = vadd.xlane.f32.xlu0 %v3367
      %v3874 = vpop.xlane.xlu0 %3873
      %3875 = vadd.xlane.f32.xlu0 %v3368
      %v3876 = vpop.xlane.xlu0 %3875
      %3877 = vadd.xlane.f32.xlu0 %v3369
      %v3878 = vpop.xlane.xlu0 %3877
      %3879 = vadd.xlane.f32.xlu0 %v3370
      %v3880 = vpop.xlane.xlu0 %3879
      %3881 = vadd.xlane.f32.xlu0 %v3371
      %v3882 = vpop.xlane.xlu0 %3881
      %3883 = vadd.xlane.f32.xlu0 %v3372
      %v3884 = vpop.xlane.xlu0 %3883
      %s3885 = sld [smem:[#allocation4]]
      %v3886 = vstv %s3885
      %v3887 = vadd.f32 %v3374, %v3886
      %v3888 = vadd.f32 %v3376, %v3886
      %v3889 = vadd.f32 %v3378, %v3886
      %v3890 = vadd.f32 %v3380, %v3886
      %v3891 = vadd.f32 %v3382, %v3886
      %v3892 = vadd.f32 %v3384, %v3886
      %v3893 = vadd.f32 %v3386, %v3886
      %v3894 = vadd.f32 %v3388, %v3886
      %v3895 = vadd.f32 %v3390, %v3886
      %v3896 = vadd.f32 %v3392, %v3886
      %v3897 = vadd.f32 %v3394, %v3886
      %v3898 = vadd.f32 %v3396, %v3886
      %v3899 = vadd.f32 %v3398, %v3886
      %v3900 = vadd.f32 %v3400, %v3886
      %v3901 = vadd.f32 %v3402, %v3886
      %v3902 = vadd.f32 %v3404, %v3886
      %v3903 = vadd.f32 %v3406, %v3886
      %v3904 = vadd.f32 %v3408, %v3886
      %v3905 = vadd.f32 %v3410, %v3886
      %v3906 = vadd.f32 %v3412, %v3886
      %v3907 = vadd.f32 %v3414, %v3886
      %v3908 = vadd.f32 %v3416, %v3886
      %v3909 = vadd.f32 %v3418, %v3886
      %v3910 = vadd.f32 %v3420, %v3886
      %v3911 = vadd.f32 %v3422, %v3886
      %v3912 = vadd.f32 %v3424, %v3886
      %v3913 = vadd.f32 %v3426, %v3886
      %v3914 = vadd.f32 %v3428, %v3886
      %v3915 = vadd.f32 %v3430, %v3886
      %v3916 = vadd.f32 %v3432, %v3886
      %v3917 = vadd.f32 %v3434, %v3886
      %v3918 = vadd.f32 %v3436, %v3886
      %v3919 = vadd.f32 %v3438, %v3886
      %v3920 = vadd.f32 %v3440, %v3886
      %v3921 = vadd.f32 %v3442, %v3886
      %v3922 = vadd.f32 %v3444, %v3886
      %v3923 = vadd.f32 %v3446, %v3886
      %v3924 = vadd.f32 %v3448, %v3886
      %v3925 = vadd.f32 %v3450, %v3886
      %v3926 = vadd.f32 %v3452, %v3886
      %v3927 = vadd.f32 %v3454, %v3886
      %v3928 = vadd.f32 %v3456, %v3886
      %v3929 = vadd.f32 %v3458, %v3886
      %v3930 = vadd.f32 %v3460, %v3886
      %v3931 = vadd.f32 %v3462, %v3886
      %v3932 = vadd.f32 %v3464, %v3886
      %v3933 = vadd.f32 %v3466, %v3886
      %v3934 = vadd.f32 %v3468, %v3886
      %v3935 = vadd.f32 %v3470, %v3886
      %v3936 = vadd.f32 %v3472, %v3886
      %v3937 = vadd.f32 %v3474, %v3886
      %v3938 = vadd.f32 %v3476, %v3886
      %v3939 = vadd.f32 %v3478, %v3886
      %v3940 = vadd.f32 %v3480, %v3886
      %v3941 = vadd.f32 %v3482, %v3886
      %v3942 = vadd.f32 %v3484, %v3886
      %v3943 = vadd.f32 %v3486, %v3886
      %v3944 = vadd.f32 %v3488, %v3886
      %v3945 = vadd.f32 %v3490, %v3886
      %v3946 = vadd.f32 %v3492, %v3886
      %v3947 = vadd.f32 %v3494, %v3886
      %v3948 = vadd.f32 %v3496, %v3886
      %v3949 = vadd.f32 %v3498, %v3886
      %v3950 = vadd.f32 %v3500, %v3886
      %v3951 = vadd.f32 %v3502, %v3886
      %v3952 = vadd.f32 %v3504, %v3886
      %v3953 = vadd.f32 %v3506, %v3886
      %v3954 = vadd.f32 %v3508, %v3886
      %v3955 = vadd.f32 %v3510, %v3886
      %v3956 = vadd.f32 %v3512, %v3886
      %v3957 = vadd.f32 %v3514, %v3886
      %v3958 = vadd.f32 %v3516, %v3886
      %v3959 = vadd.f32 %v3518, %v3886
      %v3960 = vadd.f32 %v3520, %v3886
      %v3961 = vadd.f32 %v3522, %v3886
      %v3962 = vadd.f32 %v3524, %v3886
      %v3963 = vadd.f32 %v3526, %v3886
      %v3964 = vadd.f32 %v3528, %v3886
      %v3965 = vadd.f32 %v3530, %v3886
      %v3966 = vadd.f32 %v3532, %v3886
      %v3967 = vadd.f32 %v3534, %v3886
      %v3968 = vadd.f32 %v3536, %v3886
      %v3969 = vadd.f32 %v3538, %v3886
      %v3970 = vadd.f32 %v3540, %v3886
      %v3971 = vadd.f32 %v3542, %v3886
      %v3972 = vadd.f32 %v3544, %v3886
      %v3973 = vadd.f32 %v3546, %v3886
      %v3974 = vadd.f32 %v3548, %v3886
      %v3975 = vadd.f32 %v3550, %v3886
      %v3976 = vadd.f32 %v3552, %v3886
      %v3977 = vadd.f32 %v3554, %v3886
      %v3978 = vadd.f32 %v3556, %v3886
      %v3979 = vadd.f32 %v3558, %v3886
      %v3980 = vadd.f32 %v3560, %v3886
      %v3981 = vadd.f32 %v3562, %v3886
      %v3982 = vadd.f32 %v3564, %v3886
      %v3983 = vadd.f32 %v3566, %v3886
      %v3984 = vadd.f32 %v3568, %v3886
      %v3985 = vadd.f32 %v3570, %v3886
      %v3986 = vadd.f32 %v3572, %v3886
      %v3987 = vadd.f32 %v3574, %v3886
      %v3988 = vadd.f32 %v3576, %v3886
      %v3989 = vadd.f32 %v3578, %v3886
      %v3990 = vadd.f32 %v3580, %v3886
      %v3991 = vadd.f32 %v3582, %v3886
      %v3992 = vadd.f32 %v3584, %v3886
      %v3993 = vadd.f32 %v3586, %v3886
      %v3994 = vadd.f32 %v3588, %v3886
      %v3995 = vadd.f32 %v3590, %v3886
      %v3996 = vadd.f32 %v3592, %v3886
      %v3997 = vadd.f32 %v3594, %v3886
      %v3998 = vadd.f32 %v3596, %v3886
      %v3999 = vadd.f32 %v3598, %v3886
      %v4000 = vadd.f32 %v3600, %v3886
      %v4001 = vadd.f32 %v3602, %v3886
      %v4002 = vadd.f32 %v3604, %v3886
      %v4003 = vadd.f32 %v3606, %v3886
      %v4004 = vadd.f32 %v3608, %v3886
      %v4005 = vadd.f32 %v3610, %v3886
      %v4006 = vadd.f32 %v3612, %v3886
      %v4007 = vadd.f32 %v3614, %v3886
      %v4008 = vadd.f32 %v3616, %v3886
      %v4009 = vadd.f32 %v3618, %v3886
      %v4010 = vadd.f32 %v3620, %v3886
      %v4011 = vadd.f32 %v3622, %v3886
      %v4012 = vadd.f32 %v3624, %v3886
      %v4013 = vadd.f32 %v3626, %v3886
      %v4014 = vadd.f32 %v3628, %v3886
      %v4015 = vadd.f32 %v3630, %v3886
      %v4016 = vadd.f32 %v3632, %v3886
      %v4017 = vadd.f32 %v3634, %v3886
      %v4018 = vadd.f32 %v3636, %v3886
      %v4019 = vadd.f32 %v3638, %v3886
      %v4020 = vadd.f32 %v3640, %v3886
      %v4021 = vadd.f32 %v3642, %v3886
      %v4022 = vadd.f32 %v3644, %v3886
      %v4023 = vadd.f32 %v3646, %v3886
      %v4024 = vadd.f32 %v3648, %v3886
      %v4025 = vadd.f32 %v3650, %v3886
      %v4026 = vadd.f32 %v3652, %v3886
      %v4027 = vadd.f32 %v3654, %v3886
      %v4028 = vadd.f32 %v3656, %v3886
      %v4029 = vadd.f32 %v3658, %v3886
      %v4030 = vadd.f32 %v3660, %v3886
      %v4031 = vadd.f32 %v3662, %v3886
      %v4032 = vadd.f32 %v3664, %v3886
      %v4033 = vadd.f32 %v3666, %v3886
      %v4034 = vadd.f32 %v3668, %v3886
      %v4035 = vadd.f32 %v3670, %v3886
      %v4036 = vadd.f32 %v3672, %v3886
      %v4037 = vadd.f32 %v3674, %v3886
      %v4038 = vadd.f32 %v3676, %v3886
      %v4039 = vadd.f32 %v3678, %v3886
      %v4040 = vadd.f32 %v3680, %v3886
      %v4041 = vadd.f32 %v3682, %v3886
      %v4042 = vadd.f32 %v3684, %v3886
      %v4043 = vadd.f32 %v3686, %v3886
      %v4044 = vadd.f32 %v3688, %v3886
      %v4045 = vadd.f32 %v3690, %v3886
      %v4046 = vadd.f32 %v3692, %v3886
      %v4047 = vadd.f32 %v3694, %v3886
      %v4048 = vadd.f32 %v3696, %v3886
      %v4049 = vadd.f32 %v3698, %v3886
      %v4050 = vadd.f32 %v3700, %v3886
      %v4051 = vadd.f32 %v3702, %v3886
      %v4052 = vadd.f32 %v3704, %v3886
      %v4053 = vadd.f32 %v3706, %v3886
      %v4054 = vadd.f32 %v3708, %v3886
      %v4055 = vadd.f32 %v3710, %v3886
      %v4056 = vadd.f32 %v3712, %v3886
      %v4057 = vadd.f32 %v3714, %v3886
      %v4058 = vadd.f32 %v3716, %v3886
      %v4059 = vadd.f32 %v3718, %v3886
      %v4060 = vadd.f32 %v3720, %v3886
      %v4061 = vadd.f32 %v3722, %v3886
      %v4062 = vadd.f32 %v3724, %v3886
      %v4063 = vadd.f32 %v3726, %v3886
      %v4064 = vadd.f32 %v3728, %v3886
      %v4065 = vadd.f32 %v3730, %v3886
      %v4066 = vadd.f32 %v3732, %v3886
      %v4067 = vadd.f32 %v3734, %v3886
      %v4068 = vadd.f32 %v3736, %v3886
      %v4069 = vadd.f32 %v3738, %v3886
      %v4070 = vadd.f32 %v3740, %v3886
      %v4071 = vadd.f32 %v3742, %v3886
      %v4072 = vadd.f32 %v3744, %v3886
      %v4073 = vadd.f32 %v3746, %v3886
      %v4074 = vadd.f32 %v3748, %v3886
      %v4075 = vadd.f32 %v3750, %v3886
      %v4076 = vadd.f32 %v3752, %v3886
      %v4077 = vadd.f32 %v3754, %v3886
      %v4078 = vadd.f32 %v3756, %v3886
      %v4079 = vadd.f32 %v3758, %v3886
      %v4080 = vadd.f32 %v3760, %v3886
      %v4081 = vadd.f32 %v3762, %v3886
      %v4082 = vadd.f32 %v3764, %v3886
      %v4083 = vadd.f32 %v3766, %v3886
      %v4084 = vadd.f32 %v3768, %v3886
      %v4085 = vadd.f32 %v3770, %v3886
      %v4086 = vadd.f32 %v3772, %v3886
      %v4087 = vadd.f32 %v3774, %v3886
      %v4088 = vadd.f32 %v3776, %v3886
      %v4089 = vadd.f32 %v3778, %v3886
      %v4090 = vadd.f32 %v3780, %v3886
      %v4091 = vadd.f32 %v3782, %v3886
      %v4092 = vadd.f32 %v3784, %v3886
      %v4093 = vadd.f32 %v3786, %v3886
      %v4094 = vadd.f32 %v3788, %v3886
      %v4095 = vadd.f32 %v3790, %v3886
      %v4096 = vadd.f32 %v3792, %v3886
      %v4097 = vadd.f32 %v3794, %v3886
      %v4098 = vadd.f32 %v3796, %v3886
      %v4099 = vadd.f32 %v3798, %v3886
      %v4100 = vadd.f32 %v3800, %v3886
      %v4101 = vadd.f32 %v3802, %v3886
      %v4102 = vadd.f32 %v3804, %v3886
      %v4103 = vadd.f32 %v3806, %v3886
      %v4104 = vadd.f32 %v3808, %v3886
      %v4105 = vadd.f32 %v3810, %v3886
      %v4106 = vadd.f32 %v3812, %v3886
      %v4107 = vadd.f32 %v3814, %v3886
      %v4108 = vadd.f32 %v3816, %v3886
      %v4109 = vadd.f32 %v3818, %v3886
      %v4110 = vadd.f32 %v3820, %v3886
      %v4111 = vadd.f32 %v3822, %v3886
      %v4112 = vadd.f32 %v3824, %v3886
      %v4113 = vadd.f32 %v3826, %v3886
      %v4114 = vadd.f32 %v3828, %v3886
      %v4115 = vadd.f32 %v3830, %v3886
      %v4116 = vadd.f32 %v3832, %v3886
      %v4117 = vadd.f32 %v3834, %v3886
      %v4118 = vadd.f32 %v3836, %v3886
      %v4119 = vadd.f32 %v3838, %v3886
      %v4120 = vadd.f32 %v3840, %v3886
      %v4121 = vadd.f32 %v3842, %v3886
      %v4122 = vadd.f32 %v3844, %v3886
      %v4123 = vadd.f32 %v3846, %v3886
      %v4124 = vadd.f32 %v3848, %v3886
      %v4125 = vadd.f32 %v3850, %v3886
      %v4126 = vadd.f32 %v3852, %v3886
      %v4127 = vadd.f32 %v3854, %v3886
      %v4128 = vadd.f32 %v3856, %v3886
      %v4129 = vadd.f32 %v3858, %v3886
      %v4130 = vadd.f32 %v3860, %v3886
      %v4131 = vadd.f32 %v3862, %v3886
      %v4132 = vadd.f32 %v3864, %v3886
      %v4133 = vadd.f32 %v3866, %v3886
      %v4134 = vadd.f32 %v3868, %v3886
      %v4135 = vadd.f32 %v3870, %v3886
      %v4136 = vadd.f32 %v3872, %v3886
      %v4137 = vadd.f32 %v3874, %v3886
      %v4138 = vadd.f32 %v3876, %v3886
      %v4139 = vadd.f32 %v3878, %v3886
      %v4140 = vadd.f32 %v3880, %v3886
      %v4141 = vadd.f32 %v3882, %v3886
      %v4142 = vadd.f32 %v3884, %v3886
      %v4399 = vlaneseq
      %v4400 = vand.u32 %v4399, 127
      %v4401 = vperm.slane %v3887, %v4400
      %v4402 = vadd.s32 %v4400, 4294967288
      %v4403 = vperm.slane %v3888, %v4402
      %vm4404 = vcmask 130112
      %v4405 = vsel %vm4404, %v4403, %v4401
      %v4406 = vadd.s32 %v4400, 4294967280
      %v4407 = vperm.slane %v3889, %v4406
      %vm4408 = vcmask 195712
      %v4409 = vsel %vm4408, %v4407, %v4405
      %v4410 = vadd.s32 %v4400, 4294967272
      %v4411 = vperm.slane %v3890, %v4410
      %vm4412 = vcmask 261312
      %v4413 = vsel %vm4412, %v4411, %v4409
      %v4414 = vadd.s32 %v4400, 4294967264
      %v4415 = vperm.slane %v3891, %v4414
      %vm4416 = vcmask 326912
      %v4417 = vsel %vm4416, %v4415, %v4413
      %v4418 = vadd.s32 %v4400, 4294967256
      %v4419 = vperm.slane %v3892, %v4418
      %vm4420 = vcmask 392512
      %v4421 = vsel %vm4420, %v4419, %v4417
      %v4422 = vadd.s32 %v4400, 4294967248
      %v4423 = vperm.slane %v3893, %v4422
      %vm4424 = vcmask 458112
      %v4425 = vsel %vm4424, %v4423, %v4421
      %v4426 = vadd.s32 %v4400, 4294967240
      %v4427 = vperm.slane %v3894, %v4426
      %vm4428 = vcmask 523712
      %v4429 = vsel %vm4428, %v4427, %v4425
      %v4430 = vadd.s32 %v4400, 4294967232
      %v4431 = vperm.slane %v3895, %v4430
      %vm4432 = vcmask 589312
      %v4433 = vsel %vm4432, %v4431, %v4429
      %v4434 = vadd.s32 %v4400, 4294967224
      %v4435 = vperm.slane %v3896, %v4434
      %vm4436 = vcmask 654912
      %v4437 = vsel %vm4436, %v4435, %v4433
      %v4438 = vadd.s32 %v4400, 4294967216
      %v4439 = vperm.slane %v3897, %v4438
      %vm4440 = vcmask 720512
      %v4441 = vsel %vm4440, %v4439, %v4437
      %v4442 = vadd.s32 %v4400, 4294967208
      %v4443 = vperm.slane %v3898, %v4442
      %vm4444 = vcmask 786112
      %v4445 = vsel %vm4444, %v4443, %v4441
      %v4446 = vadd.s32 %v4400, 4294967200
      %v4447 = vperm.slane %v3899, %v4446
      %vm4448 = vcmask 851712
      %v4449 = vsel %vm4448, %v4447, %v4445
      %v4450 = vadd.s32 %v4400, 4294967192
      %v4451 = vperm.slane %v3900, %v4450
      %vm4452 = vcmask 917312
      %v4453 = vsel %vm4452, %v4451, %v4449
      %v4454 = vadd.s32 %v4400, 4294967184
      %v4455 = vperm.slane %v3901, %v4454
      %vm4456 = vcmask 982912
      %v4457 = vsel %vm4456, %v4455, %v4453
      %v4458 = vadd.s32 %v4400, 4294967176
      %v4459 = vperm.slane %v3902, %v4458
      %vm4460 = vcmask 1048512
      %v4461 = vsel %vm4460, %v4459, %v4457
      %v4462 = vperm.slane %v3903, %v4400
      %v4463 = vperm.slane %v3904, %v4402
      %v4464 = vsel %vm4404, %v4463, %v4462
      %v4465 = vperm.slane %v3905, %v4406
      %v4466 = vsel %vm4408, %v4465, %v4464
      %v4467 = vperm.slane %v3906, %v4410
      %v4468 = vsel %vm4412, %v4467, %v4466
      %v4469 = vperm.slane %v3907, %v4414
      %v4470 = vsel %vm4416, %v4469, %v4468
      %v4471 = vperm.slane %v3908, %v4418
      %v4472 = vsel %vm4420, %v4471, %v4470
      %v4473 = vperm.slane %v3909, %v4422
      %v4474 = vsel %vm4424, %v4473, %v4472
      %v4475 = vperm.slane %v3910, %v4426
      %v4476 = vsel %vm4428, %v4475, %v4474
      %v4477 = vperm.slane %v3911, %v4430
      %v4478 = vsel %vm4432, %v4477, %v4476
      %v4479 = vperm.slane %v3912, %v4434
      %v4480 = vsel %vm4436, %v4479, %v4478
      %v4481 = vperm.slane %v3913, %v4438
      %v4482 = vsel %vm4440, %v4481, %v4480
      %v4483 = vperm.slane %v3914, %v4442
      %v4484 = vsel %vm4444, %v4483, %v4482
      %v4485 = vperm.slane %v3915, %v4446
      %v4486 = vsel %vm4448, %v4485, %v4484
      %v4487 = vperm.slane %v3916, %v4450
      %v4488 = vsel %vm4452, %v4487, %v4486
      %v4489 = vperm.slane %v3917, %v4454
      %v4490 = vsel %vm4456, %v4489, %v4488
      %v4491 = vperm.slane %v3918, %v4458
      %v4492 = vsel %vm4460, %v4491, %v4490
      %v4493 = vperm.slane %v3919, %v4400
      %v4494 = vperm.slane %v3920, %v4402
      %v4495 = vsel %vm4404, %v4494, %v4493
      %v4496 = vperm.slane %v3921, %v4406
      %v4497 = vsel %vm4408, %v4496, %v4495
      %v4498 = vperm.slane %v3922, %v4410
      %v4499 = vsel %vm4412, %v4498, %v4497
      %v4500 = vperm.slane %v3923, %v4414
      %v4501 = vsel %vm4416, %v4500, %v4499
      %v4502 = vperm.slane %v3924, %v4418
      %v4503 = vsel %vm4420, %v4502, %v4501
      %v4504 = vperm.slane %v3925, %v4422
      %v4505 = vsel %vm4424, %v4504, %v4503
      %v4506 = vperm.slane %v3926, %v4426
      %v4507 = vsel %vm4428, %v4506, %v4505
      %v4508 = vperm.slane %v3927, %v4430
      %v4509 = vsel %vm4432, %v4508, %v4507
      %v4510 = vperm.slane %v3928, %v4434
      %v4511 = vsel %vm4436, %v4510, %v4509
      %v4512 = vperm.slane %v3929, %v4438
      %v4513 = vsel %vm4440, %v4512, %v4511
      %v4514 = vperm.slane %v3930, %v4442
      %v4515 = vsel %vm4444, %v4514, %v4513
      %v4516 = vperm.slane %v3931, %v4446
      %v4517 = vsel %vm4448, %v4516, %v4515
      %v4518 = vperm.slane %v3932, %v4450
      %v4519 = vsel %vm4452, %v4518, %v4517
      %v4520 = vperm.slane %v3933, %v4454
      %v4521 = vsel %vm4456, %v4520, %v4519
      %v4522 = vperm.slane %v3934, %v4458
      %v4523 = vsel %vm4460, %v4522, %v4521
      %v4524 = vperm.slane %v3935, %v4400
      %v4525 = vperm.slane %v3936, %v4402
      %v4526 = vsel %vm4404, %v4525, %v4524
      %v4527 = vperm.slane %v3937, %v4406
      %v4528 = vsel %vm4408, %v4527, %v4526
      %v4529 = vperm.slane %v3938, %v4410
      %v4530 = vsel %vm4412, %v4529, %v4528
      %v4531 = vperm.slane %v3939, %v4414
      %v4532 = vsel %vm4416, %v4531, %v4530
      %v4533 = vperm.slane %v3940, %v4418
      %v4534 = vsel %vm4420, %v4533, %v4532
      %v4535 = vperm.slane %v3941, %v4422
      %v4536 = vsel %vm4424, %v4535, %v4534
      %v4537 = vperm.slane %v3942, %v4426
      %v4538 = vsel %vm4428, %v4537, %v4536
      %v4539 = vperm.slane %v3943, %v4430
      %v4540 = vsel %vm4432, %v4539, %v4538
      %v4541 = vperm.slane %v3944, %v4434
      %v4542 = vsel %vm4436, %v4541, %v4540
      %v4543 = vperm.slane %v3945, %v4438
      %v4544 = vsel %vm4440, %v4543, %v4542
      %v4545 = vperm.slane %v3946, %v4442
      %v4546 = vsel %vm4444, %v4545, %v4544
      %v4547 = vperm.slane %v3947, %v4446
      %v4548 = vsel %vm4448, %v4547, %v4546
      %v4549 = vperm.slane %v3948, %v4450
      %v4550 = vsel %vm4452, %v4549, %v4548
      %v4551 = vperm.slane %v3949, %v4454
      %v4552 = vsel %vm4456, %v4551, %v4550
      %v4553 = vperm.slane %v3950, %v4458
      %v4554 = vsel %vm4460, %v4553, %v4552
      %v4555 = vperm.slane %v3951, %v4400
      %v4556 = vperm.slane %v3952, %v4402
      %v4557 = vsel %vm4404, %v4556, %v4555
      %v4558 = vperm.slane %v3953, %v4406
      %v4559 = vsel %vm4408, %v4558, %v4557
      %v4560 = vperm.slane %v3954, %v4410
      %v4561 = vsel %vm4412, %v4560, %v4559
      %v4562 = vperm.slane %v3955, %v4414
      %v4563 = vsel %vm4416, %v4562, %v4561
      %v4564 = vperm.slane %v3956, %v4418
      %v4565 = vsel %vm4420, %v4564, %v4563
      %v4566 = vperm.slane %v3957, %v4422
      %v4567 = vsel %vm4424, %v4566, %v4565
      %v4568 = vperm.slane %v3958, %v4426
      %v4569 = vsel %vm4428, %v4568, %v4567
      %v4570 = vperm.slane %v3959, %v4430
      %v4571 = vsel %vm4432, %v4570, %v4569
      %v4572 = vperm.slane %v3960, %v4434
      %v4573 = vsel %vm4436, %v4572, %v4571
      %v4574 = vperm.slane %v3961, %v4438
      %v4575 = vsel %vm4440, %v4574, %v4573
      %v4576 = vperm.slane %v3962, %v4442
      %v4577 = vsel %vm4444, %v4576, %v4575
      %v4578 = vperm.slane %v3963, %v4446
      %v4579 = vsel %vm4448, %v4578, %v4577
      %v4580 = vperm.slane %v3964, %v4450
      %v4581 = vsel %vm4452, %v4580, %v4579
      %v4582 = vperm.slane %v3965, %v4454
      %v4583 = vsel %vm4456, %v4582, %v4581
      %v4584 = vperm.slane %v3966, %v4458
      %v4585 = vsel %vm4460, %v4584, %v4583
      %v4586 = vperm.slane %v3967, %v4400
      %v4587 = vperm.slane %v3968, %v4402
      %v4588 = vsel %vm4404, %v4587, %v4586
      %v4589 = vperm.slane %v3969, %v4406
      %v4590 = vsel %vm4408, %v4589, %v4588
      %v4591 = vperm.slane %v3970, %v4410
      %v4592 = vsel %vm4412, %v4591, %v4590
      %v4593 = vperm.slane %v3971, %v4414
      %v4594 = vsel %vm4416, %v4593, %v4592
      %v4595 = vperm.slane %v3972, %v4418
      %v4596 = vsel %vm4420, %v4595, %v4594
      %v4597 = vperm.slane %v3973, %v4422
      %v4598 = vsel %vm4424, %v4597, %v4596
      %v4599 = vperm.slane %v3974, %v4426
      %v4600 = vsel %vm4428, %v4599, %v4598
      %v4601 = vperm.slane %v3975, %v4430
      %v4602 = vsel %vm4432, %v4601, %v4600
      %v4603 = vperm.slane %v3976, %v4434
      %v4604 = vsel %vm4436, %v4603, %v4602
      %v4605 = vperm.slane %v3977, %v4438
      %v4606 = vsel %vm4440, %v4605, %v4604
      %v4607 = vperm.slane %v3978, %v4442
      %v4608 = vsel %vm4444, %v4607, %v4606
      %v4609 = vperm.slane %v3979, %v4446
      %v4610 = vsel %vm4448, %v4609, %v4608
      %v4611 = vperm.slane %v3980, %v4450
      %v4612 = vsel %vm4452, %v4611, %v4610
      %v4613 = vperm.slane %v3981, %v4454
      %v4614 = vsel %vm4456, %v4613, %v4612
      %v4615 = vperm.slane %v3982, %v4458
      %v4616 = vsel %vm4460, %v4615, %v4614
      %v4617 = vperm.slane %v3983, %v4400
      %v4618 = vperm.slane %v3984, %v4402
      %v4619 = vsel %vm4404, %v4618, %v4617
      %v4620 = vperm.slane %v3985, %v4406
      %v4621 = vsel %vm4408, %v4620, %v4619
      %v4622 = vperm.slane %v3986, %v4410
      %v4623 = vsel %vm4412, %v4622, %v4621
      %v4624 = vperm.slane %v3987, %v4414
      %v4625 = vsel %vm4416, %v4624, %v4623
      %v4626 = vperm.slane %v3988, %v4418
      %v4627 = vsel %vm4420, %v4626, %v4625
      %v4628 = vperm.slane %v3989, %v4422
      %v4629 = vsel %vm4424, %v4628, %v4627
      %v4630 = vperm.slane %v3990, %v4426
      %v4631 = vsel %vm4428, %v4630, %v4629
      %v4632 = vperm.slane %v3991, %v4430
      %v4633 = vsel %vm4432, %v4632, %v4631
      %v4634 = vperm.slane %v3992, %v4434
      %v4635 = vsel %vm4436, %v4634, %v4633
      %v4636 = vperm.slane %v3993, %v4438
      %v4637 = vsel %vm4440, %v4636, %v4635
      %v4638 = vperm.slane %v3994, %v4442
      %v4639 = vsel %vm4444, %v4638, %v4637
      %v4640 = vperm.slane %v3995, %v4446
      %v4641 = vsel %vm4448, %v4640, %v4639
      %v4642 = vperm.slane %v3996, %v4450
      %v4643 = vsel %vm4452, %v4642, %v4641
      %v4644 = vperm.slane %v3997, %v4454
      %v4645 = vsel %vm4456, %v4644, %v4643
      %v4646 = vperm.slane %v3998, %v4458
      %v4647 = vsel %vm4460, %v4646, %v4645
      %v4648 = vperm.slane %v3999, %v4400
      %v4649 = vperm.slane %v4000, %v4402
      %v4650 = vsel %vm4404, %v4649, %v4648
      %v4651 = vperm.slane %v4001, %v4406
      %v4652 = vsel %vm4408, %v4651, %v4650
      %v4653 = vperm.slane %v4002, %v4410
      %v4654 = vsel %vm4412, %v4653, %v4652
      %v4655 = vperm.slane %v4003, %v4414
      %v4656 = vsel %vm4416, %v4655, %v4654
      %v4657 = vperm.slane %v4004, %v4418
      %v4658 = vsel %vm4420, %v4657, %v4656
      %v4659 = vperm.slane %v4005, %v4422
      %v4660 = vsel %vm4424, %v4659, %v4658
      %v4661 = vperm.slane %v4006, %v4426
      %v4662 = vsel %vm4428, %v4661, %v4660
      %v4663 = vperm.slane %v4007, %v4430
      %v4664 = vsel %vm4432, %v4663, %v4662
      %v4665 = vperm.slane %v4008, %v4434
      %v4666 = vsel %vm4436, %v4665, %v4664
      %v4667 = vperm.slane %v4009, %v4438
      %v4668 = vsel %vm4440, %v4667, %v4666
      %v4669 = vperm.slane %v4010, %v4442
      %v4670 = vsel %vm4444, %v4669, %v4668
      %v4671 = vperm.slane %v4011, %v4446
      %v4672 = vsel %vm4448, %v4671, %v4670
      %v4673 = vperm.slane %v4012, %v4450
      %v4674 = vsel %vm4452, %v4673, %v4672
      %v4675 = vperm.slane %v4013, %v4454
      %v4676 = vsel %vm4456, %v4675, %v4674
      %v4677 = vperm.slane %v4014, %v4458
      %v4678 = vsel %vm4460, %v4677, %v4676
      %v4679 = vperm.slane %v4015, %v4400
      %v4680 = vperm.slane %v4016, %v4402
      %v4681 = vsel %vm4404, %v4680, %v4679
      %v4682 = vperm.slane %v4017, %v4406
      %v4683 = vsel %vm4408, %v4682, %v4681
      %v4684 = vperm.slane %v4018, %v4410
      %v4685 = vsel %vm4412, %v4684, %v4683
      %v4686 = vperm.slane %v4019, %v4414
      %v4687 = vsel %vm4416, %v4686, %v4685
      %v4688 = vperm.slane %v4020, %v4418
      %v4689 = vsel %vm4420, %v4688, %v4687
      %v4690 = vperm.slane %v4021, %v4422
      %v4691 = vsel %vm4424, %v4690, %v4689
      %v4692 = vperm.slane %v4022, %v4426
      %v4693 = vsel %vm4428, %v4692, %v4691
      %v4694 = vperm.slane %v4023, %v4430
      %v4695 = vsel %vm4432, %v4694, %v4693
      %v4696 = vperm.slane %v4024, %v4434
      %v4697 = vsel %vm4436, %v4696, %v4695
      %v4698 = vperm.slane %v4025, %v4438
      %v4699 = vsel %vm4440, %v4698, %v4697
      %v4700 = vperm.slane %v4026, %v4442
      %v4701 = vsel %vm4444, %v4700, %v4699
      %v4702 = vperm.slane %v4027, %v4446
      %v4703 = vsel %vm4448, %v4702, %v4701
      %v4704 = vperm.slane %v4028, %v4450
      %v4705 = vsel %vm4452, %v4704, %v4703
      %v4706 = vperm.slane %v4029, %v4454
      %v4707 = vsel %vm4456, %v4706, %v4705
      %v4708 = vperm.slane %v4030, %v4458
      %v4709 = vsel %vm4460, %v4708, %v4707
      %v4710 = vperm.slane %v4031, %v4400
      %v4711 = vperm.slane %v4032, %v4402
      %v4712 = vsel %vm4404, %v4711, %v4710
      %v4713 = vperm.slane %v4033, %v4406
      %v4714 = vsel %vm4408, %v4713, %v4712
      %v4715 = vperm.slane %v4034, %v4410
      %v4716 = vsel %vm4412, %v4715, %v4714
      %v4717 = vperm.slane %v4035, %v4414
      %v4718 = vsel %vm4416, %v4717, %v4716
      %v4719 = vperm.slane %v4036, %v4418
      %v4720 = vsel %vm4420, %v4719, %v4718
      %v4721 = vperm.slane %v4037, %v4422
      %v4722 = vsel %vm4424, %v4721, %v4720
      %v4723 = vperm.slane %v4038, %v4426
      %v4724 = vsel %vm4428, %v4723, %v4722
      %v4725 = vperm.slane %v4039, %v4430
      %v4726 = vsel %vm4432, %v4725, %v4724
      %v4727 = vperm.slane %v4040, %v4434
      %v4728 = vsel %vm4436, %v4727, %v4726
      %v4729 = vperm.slane %v4041, %v4438
      %v4730 = vsel %vm4440, %v4729, %v4728
      %v4731 = vperm.slane %v4042, %v4442
      %v4732 = vsel %vm4444, %v4731, %v4730
      %v4733 = vperm.slane %v4043, %v4446
      %v4734 = vsel %vm4448, %v4733, %v4732
      %v4735 = vperm.slane %v4044, %v4450
      %v4736 = vsel %vm4452, %v4735, %v4734
      %v4737 = vperm.slane %v4045, %v4454
      %v4738 = vsel %vm4456, %v4737, %v4736
      %v4739 = vperm.slane %v4046, %v4458
      %v4740 = vsel %vm4460, %v4739, %v4738
      %v4741 = vperm.slane %v4047, %v4400
      %v4742 = vperm.slane %v4048, %v4402
      %v4743 = vsel %vm4404, %v4742, %v4741
      %v4744 = vperm.slane %v4049, %v4406
      %v4745 = vsel %vm4408, %v4744, %v4743
      %v4746 = vperm.slane %v4050, %v4410
      %v4747 = vsel %vm4412, %v4746, %v4745
      %v4748 = vperm.slane %v4051, %v4414
      %v4749 = vsel %vm4416, %v4748, %v4747
      %v4750 = vperm.slane %v4052, %v4418
      %v4751 = vsel %vm4420, %v4750, %v4749
      %v4752 = vperm.slane %v4053, %v4422
      %v4753 = vsel %vm4424, %v4752, %v4751
      %v4754 = vperm.slane %v4054, %v4426
      %v4755 = vsel %vm4428, %v4754, %v4753
      %v4756 = vperm.slane %v4055, %v4430
      %v4757 = vsel %vm4432, %v4756, %v4755
      %v4758 = vperm.slane %v4056, %v4434
      %v4759 = vsel %vm4436, %v4758, %v4757
      %v4760 = vperm.slane %v4057, %v4438
      %v4761 = vsel %vm4440, %v4760, %v4759
      %v4762 = vperm.slane %v4058, %v4442
      %v4763 = vsel %vm4444, %v4762, %v4761
      %v4764 = vperm.slane %v4059, %v4446
      %v4765 = vsel %vm4448, %v4764, %v4763
      %v4766 = vperm.slane %v4060, %v4450
      %v4767 = vsel %vm4452, %v4766, %v4765
      %v4768 = vperm.slane %v4061, %v4454
      %v4769 = vsel %vm4456, %v4768, %v4767
      %v4770 = vperm.slane %v4062, %v4458
      %v4771 = vsel %vm4460, %v4770, %v4769
      %v4772 = vperm.slane %v4063, %v4400
      %v4773 = vperm.slane %v4064, %v4402
      %v4774 = vsel %vm4404, %v4773, %v4772
      %v4775 = vperm.slane %v4065, %v4406
      %v4776 = vsel %vm4408, %v4775, %v4774
      %v4777 = vperm.slane %v4066, %v4410
      %v4778 = vsel %vm4412, %v4777, %v4776
      %v4779 = vperm.slane %v4067, %v4414
      %v4780 = vsel %vm4416, %v4779, %v4778
      %v4781 = vperm.slane %v4068, %v4418
      %v4782 = vsel %vm4420, %v4781, %v4780
      %v4783 = vperm.slane %v4069, %v4422
      %v4784 = vsel %vm4424, %v4783, %v4782
      %v4785 = vperm.slane %v4070, %v4426
      %v4786 = vsel %vm4428, %v4785, %v4784
      %v4787 = vperm.slane %v4071, %v4430
      %v4788 = vsel %vm4432, %v4787, %v4786
      %v4789 = vperm.slane %v4072, %v4434
      %v4790 = vsel %vm4436, %v4789, %v4788
      %v4791 = vperm.slane %v4073, %v4438
      %v4792 = vsel %vm4440, %v4791, %v4790
      %v4793 = vperm.slane %v4074, %v4442
      %v4794 = vsel %vm4444, %v4793, %v4792
      %v4795 = vperm.slane %v4075, %v4446
      %v4796 = vsel %vm4448, %v4795, %v4794
      %v4797 = vperm.slane %v4076, %v4450
      %v4798 = vsel %vm4452, %v4797, %v4796
      %v4799 = vperm.slane %v4077, %v4454
      %v4800 = vsel %vm4456, %v4799, %v4798
      %v4801 = vperm.slane %v4078, %v4458
      %v4802 = vsel %vm4460, %v4801, %v4800
      %v4803 = vperm.slane %v4079, %v4400
      %v4804 = vperm.slane %v4080, %v4402
      %v4805 = vsel %vm4404, %v4804, %v4803
      %v4806 = vperm.slane %v4081, %v4406
      %v4807 = vsel %vm4408, %v4806, %v4805
      %v4808 = vperm.slane %v4082, %v4410
      %v4809 = vsel %vm4412, %v4808, %v4807
      %v4810 = vperm.slane %v4083, %v4414
      %v4811 = vsel %vm4416, %v4810, %v4809
      %v4812 = vperm.slane %v4084, %v4418
      %v4813 = vsel %vm4420, %v4812, %v4811
      %v4814 = vperm.slane %v4085, %v4422
      %v4815 = vsel %vm4424, %v4814, %v4813
      %v4816 = vperm.slane %v4086, %v4426
      %v4817 = vsel %vm4428, %v4816, %v4815
      %v4818 = vperm.slane %v4087, %v4430
      %v4819 = vsel %vm4432, %v4818, %v4817
      %v4820 = vperm.slane %v4088, %v4434
      %v4821 = vsel %vm4436, %v4820, %v4819
      %v4822 = vperm.slane %v4089, %v4438
      %v4823 = vsel %vm4440, %v4822, %v4821
      %v4824 = vperm.slane %v4090, %v4442
      %v4825 = vsel %vm4444, %v4824, %v4823
      %v4826 = vperm.slane %v4091, %v4446
      %v4827 = vsel %vm4448, %v4826, %v4825
      %v4828 = vperm.slane %v4092, %v4450
      %v4829 = vsel %vm4452, %v4828, %v4827
      %v4830 = vperm.slane %v4093, %v4454
      %v4831 = vsel %vm4456, %v4830, %v4829
      %v4832 = vperm.slane %v4094, %v4458
      %v4833 = vsel %vm4460, %v4832, %v4831
      %v4834 = vperm.slane %v4095, %v4400
      %v4835 = vperm.slane %v4096, %v4402
      %v4836 = vsel %vm4404, %v4835, %v4834
      %v4837 = vperm.slane %v4097, %v4406
      %v4838 = vsel %vm4408, %v4837, %v4836
      %v4839 = vperm.slane %v4098, %v4410
      %v4840 = vsel %vm4412, %v4839, %v4838
      %v4841 = vperm.slane %v4099, %v4414
      %v4842 = vsel %vm4416, %v4841, %v4840
      %v4843 = vperm.slane %v4100, %v4418
      %v4844 = vsel %vm4420, %v4843, %v4842
      %v4845 = vperm.slane %v4101, %v4422
      %v4846 = vsel %vm4424, %v4845, %v4844
      %v4847 = vperm.slane %v4102, %v4426
      %v4848 = vsel %vm4428, %v4847, %v4846
      %v4849 = vperm.slane %v4103, %v4430
      %v4850 = vsel %vm4432, %v4849, %v4848
      %v4851 = vperm.slane %v4104, %v4434
      %v4852 = vsel %vm4436, %v4851, %v4850
      %v4853 = vperm.slane %v4105, %v4438
      %v4854 = vsel %vm4440, %v4853, %v4852
      %v4855 = vperm.slane %v4106, %v4442
      %v4856 = vsel %vm4444, %v4855, %v4854
      %v4857 = vperm.slane %v4107, %v4446
      %v4858 = vsel %vm4448, %v4857, %v4856
      %v4859 = vperm.slane %v4108, %v4450
      %v4860 = vsel %vm4452, %v4859, %v4858
      %v4861 = vperm.slane %v4109, %v4454
      %v4862 = vsel %vm4456, %v4861, %v4860
      %v4863 = vperm.slane %v4110, %v4458
      %v4864 = vsel %vm4460, %v4863, %v4862
      %v4865 = vperm.slane %v4111, %v4400
      %v4866 = vperm.slane %v4112, %v4402
      %v4867 = vsel %vm4404, %v4866, %v4865
      %v4868 = vperm.slane %v4113, %v4406
      %v4869 = vsel %vm4408, %v4868, %v4867
      %v4870 = vperm.slane %v4114, %v4410
      %v4871 = vsel %vm4412, %v4870, %v4869
      %v4872 = vperm.slane %v4115, %v4414
      %v4873 = vsel %vm4416, %v4872, %v4871
      %v4874 = vperm.slane %v4116, %v4418
      %v4875 = vsel %vm4420, %v4874, %v4873
      %v4876 = vperm.slane %v4117, %v4422
      %v4877 = vsel %vm4424, %v4876, %v4875
      %v4878 = vperm.slane %v4118, %v4426
      %v4879 = vsel %vm4428, %v4878, %v4877
      %v4880 = vperm.slane %v4119, %v4430
      %v4881 = vsel %vm4432, %v4880, %v4879
      %v4882 = vperm.slane %v4120, %v4434
      %v4883 = vsel %vm4436, %v4882, %v4881
      %v4884 = vperm.slane %v4121, %v4438
      %v4885 = vsel %vm4440, %v4884, %v4883
      %v4886 = vperm.slane %v4122, %v4442
      %v4887 = vsel %vm4444, %v4886, %v4885
      %v4888 = vperm.slane %v4123, %v4446
      %v4889 = vsel %vm4448, %v4888, %v4887
      %v4890 = vperm.slane %v4124, %v4450
      %v4891 = vsel %vm4452, %v4890, %v4889
      %v4892 = vperm.slane %v4125, %v4454
      %v4893 = vsel %vm4456, %v4892, %v4891
      %v4894 = vperm.slane %v4126, %v4458
      %v4895 = vsel %vm4460, %v4894, %v4893
      %v4896 = vperm.slane %v4127, %v4400
      %v4897 = vperm.slane %v4128, %v4402
      %v4898 = vsel %vm4404, %v4897, %v4896
      %v4899 = vperm.slane %v4129, %v4406
      %v4900 = vsel %vm4408, %v4899, %v4898
      %v4901 = vperm.slane %v4130, %v4410
      %v4902 = vsel %vm4412, %v4901, %v4900
      %v4903 = vperm.slane %v4131, %v4414
      %v4904 = vsel %vm4416, %v4903, %v4902
      %v4905 = vperm.slane %v4132, %v4418
      %v4906 = vsel %vm4420, %v4905, %v4904
      %v4907 = vperm.slane %v4133, %v4422
      %v4908 = vsel %vm4424, %v4907, %v4906
      %v4909 = vperm.slane %v4134, %v4426
      %v4910 = vsel %vm4428, %v4909, %v4908
      %v4911 = vperm.slane %v4135, %v4430
      %v4912 = vsel %vm4432, %v4911, %v4910
      %v4913 = vperm.slane %v4136, %v4434
      %v4914 = vsel %vm4436, %v4913, %v4912
      %v4915 = vperm.slane %v4137, %v4438
      %v4916 = vsel %vm4440, %v4915, %v4914
      %v4917 = vperm.slane %v4138, %v4442
      %v4918 = vsel %vm4444, %v4917, %v4916
      %v4919 = vperm.slane %v4139, %v4446
      %v4920 = vsel %vm4448, %v4919, %v4918
      %v4921 = vperm.slane %v4140, %v4450
      %v4922 = vsel %vm4452, %v4921, %v4920
      %v4923 = vperm.slane %v4141, %v4454
      %v4924 = vsel %vm4456, %v4923, %v4922
      %v4925 = vperm.slane %v4142, %v4458
      %v4926 = vsel %vm4460, %v4925, %v4924
      %vm4927 = vcmask 1041409
      %v4928 = vsel %vm4927, %v4523, %v4461
      %vm4929 = vcmask 1042434
      %v4930 = vsel %vm4929, %v4585, %v4928
      %vm4931 = vcmask 1043459
      %v4932 = vsel %vm4931, %v4647, %v4930
      %vm4933 = vcmask 1044484
      %v4934 = vsel %vm4933, %v4709, %v4932
      %vm4935 = vcmask 1045509
      %v4936 = vsel %vm4935, %v4771, %v4934
      %vm4937 = vcmask 1046534
      %v4938 = vsel %vm4937, %v4833, %v4936
      %vm4939 = vcmask 1047559
      %v4940 = vsel %vm4939, %v4895, %v4938
      %v4941 = vsel %vm4927, %v4554, %v4492
      %v4942 = vsel %vm4929, %v4616, %v4941
      %v4943 = vsel %vm4931, %v4678, %v4942
      %v4944 = vsel %vm4933, %v4740, %v4943
      %v4945 = vsel %vm4935, %v4802, %v4944
      %v4946 = vsel %vm4937, %v4864, %v4945
      %v4947 = vsel %vm4939, %v4926, %v4946
      %v4950 = vmax.f32 %v4940, %v4947
      %4951 = vmax.xlane.f32.xlu0 %v4950
      %v4952 = vpop.xlane.xlu0 %4951
      %v4954 = vperm.slane %v4952, 0
      %v4955 = vperm.slane %v4952, 1
      %v4956 = vperm.slane %v4952, 2
      %v4957 = vperm.slane %v4952, 3
      %v4958 = vperm.slane %v4952, 4
      %v4959 = vperm.slane %v4952, 5
      %v4960 = vperm.slane %v4952, 6
      %v4961 = vperm.slane %v4952, 7
      %v4970 = vsub.f32 %v3887, %v4954
      %v4971 = vsub.f32 %v3888, %v4954
      %v4972 = vsub.f32 %v3889, %v4954
      %v4973 = vsub.f32 %v3890, %v4954
      %v4974 = vsub.f32 %v3891, %v4954
      %v4975 = vsub.f32 %v3892, %v4954
      %v4976 = vsub.f32 %v3893, %v4954
      %v4977 = vsub.f32 %v3894, %v4954
      %v4978 = vsub.f32 %v3895, %v4954
      %v4979 = vsub.f32 %v3896, %v4954
      %v4980 = vsub.f32 %v3897, %v4954
      %v4981 = vsub.f32 %v3898, %v4954
      %v4982 = vsub.f32 %v3899, %v4954
      %v4983 = vsub.f32 %v3900, %v4954
      %v4984 = vsub.f32 %v3901, %v4954
      %v4985 = vsub.f32 %v3902, %v4954
      %v4986 = vsub.f32 %v3903, %v4954
      %v4987 = vsub.f32 %v3904, %v4954
      %v4988 = vsub.f32 %v3905, %v4954
      %v4989 = vsub.f32 %v3906, %v4954
      %v4990 = vsub.f32 %v3907, %v4954
      %v4991 = vsub.f32 %v3908, %v4954
      %v4992 = vsub.f32 %v3909, %v4954
      %v4993 = vsub.f32 %v3910, %v4954
      %v4994 = vsub.f32 %v3911, %v4954
      %v4995 = vsub.f32 %v3912, %v4954
      %v4996 = vsub.f32 %v3913, %v4954
      %v4997 = vsub.f32 %v3914, %v4954
      %v4998 = vsub.f32 %v3915, %v4954
      %v4999 = vsub.f32 %v3916, %v4954
      %v5000 = vsub.f32 %v3917, %v4954
      %v5001 = vsub.f32 %v3918, %v4954
      %v5002 = vsub.f32 %v3919, %v4955
      %v5003 = vsub.f32 %v3920, %v4955
      %v5004 = vsub.f32 %v3921, %v4955
      %v5005 = vsub.f32 %v3922, %v4955
      %v5006 = vsub.f32 %v3923, %v4955
      %v5007 = vsub.f32 %v3924, %v4955
      %v5008 = vsub.f32 %v3925, %v4955
      %v5009 = vsub.f32 %v3926, %v4955
      %v5010 = vsub.f32 %v3927, %v4955
      %v5011 = vsub.f32 %v3928, %v4955
      %v5012 = vsub.f32 %v3929, %v4955
      %v5013 = vsub.f32 %v3930, %v4955
      %v5014 = vsub.f32 %v3931, %v4955
      %v5015 = vsub.f32 %v3932, %v4955
      %v5016 = vsub.f32 %v3933, %v4955
      %v5017 = vsub.f32 %v3934, %v4955
      %v5018 = vsub.f32 %v3935, %v4955
      %v5019 = vsub.f32 %v3936, %v4955
      %v5020 = vsub.f32 %v3937, %v4955
      %v5021 = vsub.f32 %v3938, %v4955
      %v5022 = vsub.f32 %v3939, %v4955
      %v5023 = vsub.f32 %v3940, %v4955
      %v5024 = vsub.f32 %v3941, %v4955
      %v5025 = vsub.f32 %v3942, %v4955
      %v5026 = vsub.f32 %v3943, %v4955
      %v5027 = vsub.f32 %v3944, %v4955
      %v5028 = vsub.f32 %v3945, %v4955
      %v5029 = vsub.f32 %v3946, %v4955
      %v5030 = vsub.f32 %v3947, %v4955
      %v5031 = vsub.f32 %v3948, %v4955
      %v5032 = vsub.f32 %v3949, %v4955
      %v5033 = vsub.f32 %v3950, %v4955
      %v5034 = vsub.f32 %v3951, %v4956
      %v5035 = vsub.f32 %v3952, %v4956
      %v5036 = vsub.f32 %v3953, %v4956
      %v5037 = vsub.f32 %v3954, %v4956
      %v5038 = vsub.f32 %v3955, %v4956
      %v5039 = vsub.f32 %v3956, %v4956
      %v5040 = vsub.f32 %v3957, %v4956
      %v5041 = vsub.f32 %v3958, %v4956
      %v5042 = vsub.f32 %v3959, %v4956
      %v5043 = vsub.f32 %v3960, %v4956
      %v5044 = vsub.f32 %v3961, %v4956
      %v5045 = vsub.f32 %v3962, %v4956
      %v5046 = vsub.f32 %v3963, %v4956
      %v5047 = vsub.f32 %v3964, %v4956
      %v5048 = vsub.f32 %v3965, %v4956
      %v5049 = vsub.f32 %v3966, %v4956
      %v5050 = vsub.f32 %v3967, %v4956
      %v5051 = vsub.f32 %v3968, %v4956
      %v5052 = vsub.f32 %v3969, %v4956
      %v5053 = vsub.f32 %v3970, %v4956
      %v5054 = vsub.f32 %v3971, %v4956
      %v5055 = vsub.f32 %v3972, %v4956
      %v5056 = vsub.f32 %v3973, %v4956
      %v5057 = vsub.f32 %v3974, %v4956
      %v5058 = vsub.f32 %v3975, %v4956
      %v5059 = vsub.f32 %v3976, %v4956
      %v5060 = vsub.f32 %v3977, %v4956
      %v5061 = vsub.f32 %v3978, %v4956
      %v5062 = vsub.f32 %v3979, %v4956
      %v5063 = vsub.f32 %v3980, %v4956
      %v5064 = vsub.f32 %v3981, %v4956
      %v5065 = vsub.f32 %v3982, %v4956
      %v5066 = vsub.f32 %v3983, %v4957
      %v5067 = vsub.f32 %v3984, %v4957
      %v5068 = vsub.f32 %v3985, %v4957
      %v5069 = vsub.f32 %v3986, %v4957
      %v5070 = vsub.f32 %v3987, %v4957
      %v5071 = vsub.f32 %v3988, %v4957
      %v5072 = vsub.f32 %v3989, %v4957
      %v5073 = vsub.f32 %v3990, %v4957
      %v5074 = vsub.f32 %v3991, %v4957
      %v5075 = vsub.f32 %v3992, %v4957
      %v5076 = vsub.f32 %v3993, %v4957
      %v5077 = vsub.f32 %v3994, %v4957
      %v5078 = vsub.f32 %v3995, %v4957
      %v5079 = vsub.f32 %v3996, %v4957
      %v5080 = vsub.f32 %v3997, %v4957
      %v5081 = vsub.f32 %v3998, %v4957
      %v5082 = vsub.f32 %v3999, %v4957
      %v5083 = vsub.f32 %v4000, %v4957
      %v5084 = vsub.f32 %v4001, %v4957
      %v5085 = vsub.f32 %v4002, %v4957
      %v5086 = vsub.f32 %v4003, %v4957
      %v5087 = vsub.f32 %v4004, %v4957
      %v5088 = vsub.f32 %v4005, %v4957
      %v5089 = vsub.f32 %v4006, %v4957
      %v5090 = vsub.f32 %v4007, %v4957
      %v5091 = vsub.f32 %v4008, %v4957
      %v5092 = vsub.f32 %v4009, %v4957
      %v5093 = vsub.f32 %v4010, %v4957
      %v5094 = vsub.f32 %v4011, %v4957
      %v5095 = vsub.f32 %v4012, %v4957
      %v5096 = vsub.f32 %v4013, %v4957
      %v5097 = vsub.f32 %v4014, %v4957
      %v5098 = vsub.f32 %v4015, %v4958
      %v5099 = vsub.f32 %v4016, %v4958
      %v5100 = vsub.f32 %v4017, %v4958
      %v5101 = vsub.f32 %v4018, %v4958
      %v5102 = vsub.f32 %v4019, %v4958
      %v5103 = vsub.f32 %v4020, %v4958
      %v5104 = vsub.f32 %v4021, %v4958
      %v5105 = vsub.f32 %v4022, %v4958
      %v5106 = vsub.f32 %v4023, %v4958
      %v5107 = vsub.f32 %v4024, %v4958
      %v5108 = vsub.f32 %v4025, %v4958
      %v5109 = vsub.f32 %v4026, %v4958
      %v5110 = vsub.f32 %v4027, %v4958
      %v5111 = vsub.f32 %v4028, %v4958
      %v5112 = vsub.f32 %v4029, %v4958
      %v5113 = vsub.f32 %v4030, %v4958
      %v5114 = vsub.f32 %v4031, %v4958
      %v5115 = vsub.f32 %v4032, %v4958
      %v5116 = vsub.f32 %v4033, %v4958
      %v5117 = vsub.f32 %v4034, %v4958
      %v5118 = vsub.f32 %v4035, %v4958
      %v5119 = vsub.f32 %v4036, %v4958
      %v5120 = vsub.f32 %v4037, %v4958
      %v5121 = vsub.f32 %v4038, %v4958
      %v5122 = vsub.f32 %v4039, %v4958
      %v5123 = vsub.f32 %v4040, %v4958
      %v5124 = vsub.f32 %v4041, %v4958
      %v5125 = vsub.f32 %v4042, %v4958
      %v5126 = vsub.f32 %v4043, %v4958
      %v5127 = vsub.f32 %v4044, %v4958
      %v5128 = vsub.f32 %v4045, %v4958
      %v5129 = vsub.f32 %v4046, %v4958
      %v5130 = vsub.f32 %v4047, %v4959
      %v5131 = vsub.f32 %v4048, %v4959
      %v5132 = vsub.f32 %v4049, %v4959
      %v5133 = vsub.f32 %v4050, %v4959
      %v5134 = vsub.f32 %v4051, %v4959
      %v5135 = vsub.f32 %v4052, %v4959
      %v5136 = vsub.f32 %v4053, %v4959
      %v5137 = vsub.f32 %v4054, %v4959
      %v5138 = vsub.f32 %v4055, %v4959
      %v5139 = vsub.f32 %v4056, %v4959
      %v5140 = vsub.f32 %v4057, %v4959
      %v5141 = vsub.f32 %v4058, %v4959
      %v5142 = vsub.f32 %v4059, %v4959
      %v5143 = vsub.f32 %v4060, %v4959
      %v5144 = vsub.f32 %v4061, %v4959
      %v5145 = vsub.f32 %v4062, %v4959
      %v5146 = vsub.f32 %v4063, %v4959
      %v5147 = vsub.f32 %v4064, %v4959
      %v5148 = vsub.f32 %v4065, %v4959
      %v5149 = vsub.f32 %v4066, %v4959
      %v5150 = vsub.f32 %v4067, %v4959
      %v5151 = vsub.f32 %v4068, %v4959
      %v5152 = vsub.f32 %v4069, %v4959
      %v5153 = vsub.f32 %v4070, %v4959
      %v5154 = vsub.f32 %v4071, %v4959
      %v5155 = vsub.f32 %v4072, %v4959
      %v5156 = vsub.f32 %v4073, %v4959
      %v5157 = vsub.f32 %v4074, %v4959
      %v5158 = vsub.f32 %v4075, %v4959
      %v5159 = vsub.f32 %v4076, %v4959
      %v5160 = vsub.f32 %v4077, %v4959
      %v5161 = vsub.f32 %v4078, %v4959
      %v5162 = vsub.f32 %v4079, %v4960
      %v5163 = vsub.f32 %v4080, %v4960
      %v5164 = vsub.f32 %v4081, %v4960
      %v5165 = vsub.f32 %v4082, %v4960
      %v5166 = vsub.f32 %v4083, %v4960
      %v5167 = vsub.f32 %v4084, %v4960
      %v5168 = vsub.f32 %v4085, %v4960
      %v5169 = vsub.f32 %v4086, %v4960
      %v5170 = vsub.f32 %v4087, %v4960
      %v5171 = vsub.f32 %v4088, %v4960
      %v5172 = vsub.f32 %v4089, %v4960
      %v5173 = vsub.f32 %v4090, %v4960
      %v5174 = vsub.f32 %v4091, %v4960
      %v5175 = vsub.f32 %v4092, %v4960
      %v5176 = vsub.f32 %v4093, %v4960
      %v5177 = vsub.f32 %v4094, %v4960
      %v5178 = vsub.f32 %v4095, %v4960
      %v5179 = vsub.f32 %v4096, %v4960
      %v5180 = vsub.f32 %v4097, %v4960
      %v5181 = vsub.f32 %v4098, %v4960
      %v5182 = vsub.f32 %v4099, %v4960
      %v5183 = vsub.f32 %v4100, %v4960
      %v5184 = vsub.f32 %v4101, %v4960
      %v5185 = vsub.f32 %v4102, %v4960
      %v5186 = vsub.f32 %v4103, %v4960
      %v5187 = vsub.f32 %v4104, %v4960
      %v5188 = vsub.f32 %v4105, %v4960
      %v5189 = vsub.f32 %v4106, %v4960
      %v5190 = vsub.f32 %v4107, %v4960
      %v5191 = vsub.f32 %v4108, %v4960
      %v5192 = vsub.f32 %v4109, %v4960
      %v5193 = vsub.f32 %v4110, %v4960
      %v5194 = vsub.f32 %v4111, %v4961
      %v5195 = vsub.f32 %v4112, %v4961
      %v5196 = vsub.f32 %v4113, %v4961
      %v5197 = vsub.f32 %v4114, %v4961
      %v5198 = vsub.f32 %v4115, %v4961
      %v5199 = vsub.f32 %v4116, %v4961
      %v5200 = vsub.f32 %v4117, %v4961
      %v5201 = vsub.f32 %v4118, %v4961
      %v5202 = vsub.f32 %v4119, %v4961
      %v5203 = vsub.f32 %v4120, %v4961
      %v5204 = vsub.f32 %v4121, %v4961
      %v5205 = vsub.f32 %v4122, %v4961
      %v5206 = vsub.f32 %v4123, %v4961
      %v5207 = vsub.f32 %v4124, %v4961
      %v5208 = vsub.f32 %v4125, %v4961
      %v5209 = vsub.f32 %v4126, %v4961
      %v5210 = vsub.f32 %v4127, %v4961
      %v5211 = vsub.f32 %v4128, %v4961
      %v5212 = vsub.f32 %v4129, %v4961
      %v5213 = vsub.f32 %v4130, %v4961
      %v5214 = vsub.f32 %v4131, %v4961
      %v5215 = vsub.f32 %v4132, %v4961
      %v5216 = vsub.f32 %v4133, %v4961
      %v5217 = vsub.f32 %v4134, %v4961
      %v5218 = vsub.f32 %v4135, %v4961
      %v5219 = vsub.f32 %v4136, %v4961
      %v5220 = vsub.f32 %v4137, %v4961
      %v5221 = vsub.f32 %v4138, %v4961
      %v5222 = vsub.f32 %v4139, %v4961
      %v5223 = vsub.f32 %v4140, %v4961
      %v5224 = vsub.f32 %v4141, %v4961
      %v5225 = vsub.f32 %v4142, %v4961
      %v5226 = vmul.f32 %v4970, 1.442695
      %v5227 = vpow.pop %v5226
      %v5228 = vmul.f32 %v4971, 1.442695
      %v5229 = vpow.pop %v5228
      %v5230 = vmul.f32 %v4972, 1.442695
      %v5231 = vpow.pop %v5230
      %v5232 = vmul.f32 %v4973, 1.442695
      %v5233 = vpow.pop %v5232
      %v5234 = vmul.f32 %v4974, 1.442695
      %v5235 = vpow.pop %v5234
      %v5236 = vmul.f32 %v4975, 1.442695
      %v5237 = vpow.pop %v5236
      %v5238 = vmul.f32 %v4976, 1.442695
      %v5239 = vpow.pop %v5238
      %v5240 = vmul.f32 %v4977, 1.442695
      %v5241 = vpow.pop %v5240
      %v5242 = vmul.f32 %v4978, 1.442695
      %v5243 = vpow.pop %v5242
      %v5244 = vmul.f32 %v4979, 1.442695
      %v5245 = vpow.pop %v5244
      %v5246 = vmul.f32 %v4980, 1.442695
      %v5247 = vpow.pop %v5246
      %v5248 = vmul.f32 %v4981, 1.442695
      %v5249 = vpow.pop %v5248
      %v5250 = vmul.f32 %v4982, 1.442695
      %v5251 = vpow.pop %v5250
      %v5252 = vmul.f32 %v4983, 1.442695
      %v5253 = vpow.pop %v5252
      %v5254 = vmul.f32 %v4984, 1.442695
      %v5255 = vpow.pop %v5254
      %v5256 = vmul.f32 %v4985, 1.442695
      %v5257 = vpow.pop %v5256
      %v5258 = vmul.f32 %v4986, 1.442695
      %v5259 = vpow.pop %v5258
      %v5260 = vmul.f32 %v4987, 1.442695
      %v5261 = vpow.pop %v5260
      %v5262 = vmul.f32 %v4988, 1.442695
      %v5263 = vpow.pop %v5262
      %v5264 = vmul.f32 %v4989, 1.442695
      %v5265 = vpow.pop %v5264
      %v5266 = vmul.f32 %v4990, 1.442695
      %v5267 = vpow.pop %v5266
      %v5268 = vmul.f32 %v4991, 1.442695
      %v5269 = vpow.pop %v5268
      %v5270 = vmul.f32 %v4992, 1.442695
      %v5271 = vpow.pop %v5270
      %v5272 = vmul.f32 %v4993, 1.442695
      %v5273 = vpow.pop %v5272
      %v5274 = vmul.f32 %v4994, 1.442695
      %v5275 = vpow.pop %v5274
      %v5276 = vmul.f32 %v4995, 1.442695
      %v5277 = vpow.pop %v5276
      %v5278 = vmul.f32 %v4996, 1.442695
      %v5279 = vpow.pop %v5278
      %v5280 = vmul.f32 %v4997, 1.442695
      %v5281 = vpow.pop %v5280
      %v5282 = vmul.f32 %v4998, 1.442695
      %v5283 = vpow.pop %v5282
      %v5284 = vmul.f32 %v4999, 1.442695
      %v5285 = vpow.pop %v5284
      %v5286 = vmul.f32 %v5000, 1.442695
      %v5287 = vpow.pop %v5286
      %v5288 = vmul.f32 %v5001, 1.442695
      %v5289 = vpow.pop %v5288
      %v5290 = vmul.f32 %v5002, 1.442695
      %v5291 = vpow.pop %v5290
      %v5292 = vmul.f32 %v5003, 1.442695
      %v5293 = vpow.pop %v5292
      %v5294 = vmul.f32 %v5004, 1.442695
      %v5295 = vpow.pop %v5294
      %v5296 = vmul.f32 %v5005, 1.442695
      %v5297 = vpow.pop %v5296
      %v5298 = vmul.f32 %v5006, 1.442695
      %v5299 = vpow.pop %v5298
      %v5300 = vmul.f32 %v5007, 1.442695
      %v5301 = vpow.pop %v5300
      %v5302 = vmul.f32 %v5008, 1.442695
      %v5303 = vpow.pop %v5302
      %v5304 = vmul.f32 %v5009, 1.442695
      %v5305 = vpow.pop %v5304
      %v5306 = vmul.f32 %v5010, 1.442695
      %v5307 = vpow.pop %v5306
      %v5308 = vmul.f32 %v5011, 1.442695
      %v5309 = vpow.pop %v5308
      %v5310 = vmul.f32 %v5012, 1.442695
      %v5311 = vpow.pop %v5310
      %v5312 = vmul.f32 %v5013, 1.442695
      %v5313 = vpow.pop %v5312
      %v5314 = vmul.f32 %v5014, 1.442695
      %v5315 = vpow.pop %v5314
      %v5316 = vmul.f32 %v5015, 1.442695
      %v5317 = vpow.pop %v5316
      %v5318 = vmul.f32 %v5016, 1.442695
      %v5319 = vpow.pop %v5318
      %v5320 = vmul.f32 %v5017, 1.442695
      %v5321 = vpow.pop %v5320
      %v5322 = vmul.f32 %v5018, 1.442695
      %v5323 = vpow.pop %v5322
      %v5324 = vmul.f32 %v5019, 1.442695
      %v5325 = vpow.pop %v5324
      %v5326 = vmul.f32 %v5020, 1.442695
      %v5327 = vpow.pop %v5326
      %v5328 = vmul.f32 %v5021, 1.442695
      %v5329 = vpow.pop %v5328
      %v5330 = vmul.f32 %v5022, 1.442695
      %v5331 = vpow.pop %v5330
      %v5332 = vmul.f32 %v5023, 1.442695
      %v5333 = vpow.pop %v5332
      %v5334 = vmul.f32 %v5024, 1.442695
      %v5335 = vpow.pop %v5334
      %v5336 = vmul.f32 %v5025, 1.442695
      %v5337 = vpow.pop %v5336
      %v5338 = vmul.f32 %v5026, 1.442695
      %v5339 = vpow.pop %v5338
      %v5340 = vmul.f32 %v5027, 1.442695
      %v5341 = vpow.pop %v5340
      %v5342 = vmul.f32 %v5028, 1.442695
      %v5343 = vpow.pop %v5342
      %v5344 = vmul.f32 %v5029, 1.442695
      %v5345 = vpow.pop %v5344
      %v5346 = vmul.f32 %v5030, 1.442695
      %v5347 = vpow.pop %v5346
      %v5348 = vmul.f32 %v5031, 1.442695
      %v5349 = vpow.pop %v5348
      %v5350 = vmul.f32 %v5032, 1.442695
      %v5351 = vpow.pop %v5350
      %v5352 = vmul.f32 %v5033, 1.442695
      %v5353 = vpow.pop %v5352
      %v5354 = vmul.f32 %v5034, 1.442695
      %v5355 = vpow.pop %v5354
      %v5356 = vmul.f32 %v5035, 1.442695
      %v5357 = vpow.pop %v5356
      %v5358 = vmul.f32 %v5036, 1.442695
      %v5359 = vpow.pop %v5358
      %v5360 = vmul.f32 %v5037, 1.442695
      %v5361 = vpow.pop %v5360
      %v5362 = vmul.f32 %v5038, 1.442695
      %v5363 = vpow.pop %v5362
      %v5364 = vmul.f32 %v5039, 1.442695
      %v5365 = vpow.pop %v5364
      %v5366 = vmul.f32 %v5040, 1.442695
      %v5367 = vpow.pop %v5366
      %v5368 = vmul.f32 %v5041, 1.442695
      %v5369 = vpow.pop %v5368
      %v5370 = vmul.f32 %v5042, 1.442695
      %v5371 = vpow.pop %v5370
      %v5372 = vmul.f32 %v5043, 1.442695
      %v5373 = vpow.pop %v5372
      %v5374 = vmul.f32 %v5044, 1.442695
      %v5375 = vpow.pop %v5374
      %v5376 = vmul.f32 %v5045, 1.442695
      %v5377 = vpow.pop %v5376
      %v5378 = vmul.f32 %v5046, 1.442695
      %v5379 = vpow.pop %v5378
      %v5380 = vmul.f32 %v5047, 1.442695
      %v5381 = vpow.pop %v5380
      %v5382 = vmul.f32 %v5048, 1.442695
      %v5383 = vpow.pop %v5382
      %v5384 = vmul.f32 %v5049, 1.442695
      %v5385 = vpow.pop %v5384
      %v5386 = vmul.f32 %v5050, 1.442695
      %v5387 = vpow.pop %v5386
      %v5388 = vmul.f32 %v5051, 1.442695
      %v5389 = vpow.pop %v5388
      %v5390 = vmul.f32 %v5052, 1.442695
      %v5391 = vpow.pop %v5390
      %v5392 = vmul.f32 %v5053, 1.442695
      %v5393 = vpow.pop %v5392
      %v5394 = vmul.f32 %v5054, 1.442695
      %v5395 = vpow.pop %v5394
      %v5396 = vmul.f32 %v5055, 1.442695
      %v5397 = vpow.pop %v5396
      %v5398 = vmul.f32 %v5056, 1.442695
      %v5399 = vpow.pop %v5398
      %v5400 = vmul.f32 %v5057, 1.442695
      %v5401 = vpow.pop %v5400
      %v5402 = vmul.f32 %v5058, 1.442695
      %v5403 = vpow.pop %v5402
      %v5404 = vmul.f32 %v5059, 1.442695
      %v5405 = vpow.pop %v5404
      %v5406 = vmul.f32 %v5060, 1.442695
      %v5407 = vpow.pop %v5406
      %v5408 = vmul.f32 %v5061, 1.442695
      %v5409 = vpow.pop %v5408
      %v5410 = vmul.f32 %v5062, 1.442695
      %v5411 = vpow.pop %v5410
      %v5412 = vmul.f32 %v5063, 1.442695
      %v5413 = vpow.pop %v5412
      %v5414 = vmul.f32 %v5064, 1.442695
      %v5415 = vpow.pop %v5414
      %v5416 = vmul.f32 %v5065, 1.442695
      %v5417 = vpow.pop %v5416
      %v5418 = vmul.f32 %v5066, 1.442695
      %v5419 = vpow.pop %v5418
      %v5420 = vmul.f32 %v5067, 1.442695
      %v5421 = vpow.pop %v5420
      %v5422 = vmul.f32 %v5068, 1.442695
      %v5423 = vpow.pop %v5422
      %v5424 = vmul.f32 %v5069, 1.442695
      %v5425 = vpow.pop %v5424
      %v5426 = vmul.f32 %v5070, 1.442695
      %v5427 = vpow.pop %v5426
      %v5428 = vmul.f32 %v5071, 1.442695
      %v5429 = vpow.pop %v5428
      %v5430 = vmul.f32 %v5072, 1.442695
      %v5431 = vpow.pop %v5430
      %v5432 = vmul.f32 %v5073, 1.442695
      %v5433 = vpow.pop %v5432
      %v5434 = vmul.f32 %v5074, 1.442695
      %v5435 = vpow.pop %v5434
      %v5436 = vmul.f32 %v5075, 1.442695
      %v5437 = vpow.pop %v5436
      %v5438 = vmul.f32 %v5076, 1.442695
      %v5439 = vpow.pop %v5438
      %v5440 = vmul.f32 %v5077, 1.442695
      %v5441 = vpow.pop %v5440
      %v5442 = vmul.f32 %v5078, 1.442695
      %v5443 = vpow.pop %v5442
      %v5444 = vmul.f32 %v5079, 1.442695
      %v5445 = vpow.pop %v5444
      %v5446 = vmul.f32 %v5080, 1.442695
      %v5447 = vpow.pop %v5446
      %v5448 = vmul.f32 %v5081, 1.442695
      %v5449 = vpow.pop %v5448
      %v5450 = vmul.f32 %v5082, 1.442695
      %v5451 = vpow.pop %v5450
      %v5452 = vmul.f32 %v5083, 1.442695
      %v5453 = vpow.pop %v5452
      %v5454 = vmul.f32 %v5084, 1.442695
      %v5455 = vpow.pop %v5454
      %v5456 = vmul.f32 %v5085, 1.442695
      %v5457 = vpow.pop %v5456
      %v5458 = vmul.f32 %v5086, 1.442695
      %v5459 = vpow.pop %v5458
      %v5460 = vmul.f32 %v5087, 1.442695
      %v5461 = vpow.pop %v5460
      %v5462 = vmul.f32 %v5088, 1.442695
      %v5463 = vpow.pop %v5462
      %v5464 = vmul.f32 %v5089, 1.442695
      %v5465 = vpow.pop %v5464
      %v5466 = vmul.f32 %v5090, 1.442695
      %v5467 = vpow.pop %v5466
      %v5468 = vmul.f32 %v5091, 1.442695
      %v5469 = vpow.pop %v5468
      %v5470 = vmul.f32 %v5092, 1.442695
      %v5471 = vpow.pop %v5470
      %v5472 = vmul.f32 %v5093, 1.442695
      %v5473 = vpow.pop %v5472
      %v5474 = vmul.f32 %v5094, 1.442695
      %v5475 = vpow.pop %v5474
      %v5476 = vmul.f32 %v5095, 1.442695
      %v5477 = vpow.pop %v5476
      %v5478 = vmul.f32 %v5096, 1.442695
      %v5479 = vpow.pop %v5478
      %v5480 = vmul.f32 %v5097, 1.442695
      %v5481 = vpow.pop %v5480
      %v5482 = vmul.f32 %v5098, 1.442695
      %v5483 = vpow.pop %v5482
      %v5484 = vmul.f32 %v5099, 1.442695
      %v5485 = vpow.pop %v5484
      %v5486 = vmul.f32 %v5100, 1.442695
      %v5487 = vpow.pop %v5486
      %v5488 = vmul.f32 %v5101, 1.442695
      %v5489 = vpow.pop %v5488
      %v5490 = vmul.f32 %v5102, 1.442695
      %v5491 = vpow.pop %v5490
      %v5492 = vmul.f32 %v5103, 1.442695
      %v5493 = vpow.pop %v5492
      %v5494 = vmul.f32 %v5104, 1.442695
      %v5495 = vpow.pop %v5494
      %v5496 = vmul.f32 %v5105, 1.442695
      %v5497 = vpow.pop %v5496
      %v5498 = vmul.f32 %v5106, 1.442695
      %v5499 = vpow.pop %v5498
      %v5500 = vmul.f32 %v5107, 1.442695
      %v5501 = vpow.pop %v5500
      %v5502 = vmul.f32 %v5108, 1.442695
      %v5503 = vpow.pop %v5502
      %v5504 = vmul.f32 %v5109, 1.442695
      %v5505 = vpow.pop %v5504
      %v5506 = vmul.f32 %v5110, 1.442695
      %v5507 = vpow.pop %v5506
      %v5508 = vmul.f32 %v5111, 1.442695
      %v5509 = vpow.pop %v5508
      %v5510 = vmul.f32 %v5112, 1.442695
      %v5511 = vpow.pop %v5510
      %v5512 = vmul.f32 %v5113, 1.442695
      %v5513 = vpow.pop %v5512
      %v5514 = vmul.f32 %v5114, 1.442695
      %v5515 = vpow.pop %v5514
      %v5516 = vmul.f32 %v5115, 1.442695
      %v5517 = vpow.pop %v5516
      %v5518 = vmul.f32 %v5116, 1.442695
      %v5519 = vpow.pop %v5518
      %v5520 = vmul.f32 %v5117, 1.442695
      %v5521 = vpow.pop %v5520
      %v5522 = vmul.f32 %v5118, 1.442695
      %v5523 = vpow.pop %v5522
      %v5524 = vmul.f32 %v5119, 1.442695
      %v5525 = vpow.pop %v5524
      %v5526 = vmul.f32 %v5120, 1.442695
      %v5527 = vpow.pop %v5526
      %v5528 = vmul.f32 %v5121, 1.442695
      %v5529 = vpow.pop %v5528
      %v5530 = vmul.f32 %v5122, 1.442695
      %v5531 = vpow.pop %v5530
      %v5532 = vmul.f32 %v5123, 1.442695
      %v5533 = vpow.pop %v5532
      %v5534 = vmul.f32 %v5124, 1.442695
      %v5535 = vpow.pop %v5534
      %v5536 = vmul.f32 %v5125, 1.442695
      %v5537 = vpow.pop %v5536
      %v5538 = vmul.f32 %v5126, 1.442695
      %v5539 = vpow.pop %v5538
      %v5540 = vmul.f32 %v5127, 1.442695
      %v5541 = vpow.pop %v5540
      %v5542 = vmul.f32 %v5128, 1.442695
      %v5543 = vpow.pop %v5542
      %v5544 = vmul.f32 %v5129, 1.442695
      %v5545 = vpow.pop %v5544
      %v5546 = vmul.f32 %v5130, 1.442695
      %v5547 = vpow.pop %v5546
      %v5548 = vmul.f32 %v5131, 1.442695
      %v5549 = vpow.pop %v5548
      %v5550 = vmul.f32 %v5132, 1.442695
      %v5551 = vpow.pop %v5550
      %v5552 = vmul.f32 %v5133, 1.442695
      %v5553 = vpow.pop %v5552
      %v5554 = vmul.f32 %v5134, 1.442695
      %v5555 = vpow.pop %v5554
      %v5556 = vmul.f32 %v5135, 1.442695
      %v5557 = vpow.pop %v5556
      %v5558 = vmul.f32 %v5136, 1.442695
      %v5559 = vpow.pop %v5558
      %v5560 = vmul.f32 %v5137, 1.442695
      %v5561 = vpow.pop %v5560
      %v5562 = vmul.f32 %v5138, 1.442695
      %v5563 = vpow.pop %v5562
      %v5564 = vmul.f32 %v5139, 1.442695
      %v5565 = vpow.pop %v5564
      %v5566 = vmul.f32 %v5140, 1.442695
      %v5567 = vpow.pop %v5566
      %v5568 = vmul.f32 %v5141, 1.442695
      %v5569 = vpow.pop %v5568
      %v5570 = vmul.f32 %v5142, 1.442695
      %v5571 = vpow.pop %v5570
      %v5572 = vmul.f32 %v5143, 1.442695
      %v5573 = vpow.pop %v5572
      %v5574 = vmul.f32 %v5144, 1.442695
      %v5575 = vpow.pop %v5574
      %v5576 = vmul.f32 %v5145, 1.442695
      %v5577 = vpow.pop %v5576
      %v5578 = vmul.f32 %v5146, 1.442695
      %v5579 = vpow.pop %v5578
      %v5580 = vmul.f32 %v5147, 1.442695
      %v5581 = vpow.pop %v5580
      %v5582 = vmul.f32 %v5148, 1.442695
      %v5583 = vpow.pop %v5582
      %v5584 = vmul.f32 %v5149, 1.442695
      %v5585 = vpow.pop %v5584
      %v5586 = vmul.f32 %v5150, 1.442695
      %v5587 = vpow.pop %v5586
      %v5588 = vmul.f32 %v5151, 1.442695
      %v5589 = vpow.pop %v5588
      %v5590 = vmul.f32 %v5152, 1.442695
      %v5591 = vpow.pop %v5590
      %v5592 = vmul.f32 %v5153, 1.442695
      %v5593 = vpow.pop %v5592
      %v5594 = vmul.f32 %v5154, 1.442695
      %v5595 = vpow.pop %v5594
      %v5596 = vmul.f32 %v5155, 1.442695
      %v5597 = vpow.pop %v5596
      %v5598 = vmul.f32 %v5156, 1.442695
      %v5599 = vpow.pop %v5598
      %v5600 = vmul.f32 %v5157, 1.442695
      %v5601 = vpow.pop %v5600
      %v5602 = vmul.f32 %v5158, 1.442695
      %v5603 = vpow.pop %v5602
      %v5604 = vmul.f32 %v5159, 1.442695
      %v5605 = vpow.pop %v5604
      %v5606 = vmul.f32 %v5160, 1.442695
      %v5607 = vpow.pop %v5606
      %v5608 = vmul.f32 %v5161, 1.442695
      %v5609 = vpow.pop %v5608
      %v5610 = vmul.f32 %v5162, 1.442695
      %v5611 = vpow.pop %v5610
      %v5612 = vmul.f32 %v5163, 1.442695
      %v5613 = vpow.pop %v5612
      %v5614 = vmul.f32 %v5164, 1.442695
      %v5615 = vpow.pop %v5614
      %v5616 = vmul.f32 %v5165, 1.442695
      %v5617 = vpow.pop %v5616
      %v5618 = vmul.f32 %v5166, 1.442695
      %v5619 = vpow.pop %v5618
      %v5620 = vmul.f32 %v5167, 1.442695
      %v5621 = vpow.pop %v5620
      %v5622 = vmul.f32 %v5168, 1.442695
      %v5623 = vpow.pop %v5622
      %v5624 = vmul.f32 %v5169, 1.442695
      %v5625 = vpow.pop %v5624
      %v5626 = vmul.f32 %v5170, 1.442695
      %v5627 = vpow.pop %v5626
      %v5628 = vmul.f32 %v5171, 1.442695
      %v5629 = vpow.pop %v5628
      %v5630 = vmul.f32 %v5172, 1.442695
      %v5631 = vpow.pop %v5630
      %v5632 = vmul.f32 %v5173, 1.442695
      %v5633 = vpow.pop %v5632
      %v5634 = vmul.f32 %v5174, 1.442695
      %v5635 = vpow.pop %v5634
      %v5636 = vmul.f32 %v5175, 1.442695
      %v5637 = vpow.pop %v5636
      %v5638 = vmul.f32 %v5176, 1.442695
      %v5639 = vpow.pop %v5638
      %v5640 = vmul.f32 %v5177, 1.442695
      %v5641 = vpow.pop %v5640
      %v5642 = vmul.f32 %v5178, 1.442695
      %v5643 = vpow.pop %v5642
      %v5644 = vmul.f32 %v5179, 1.442695
      %v5645 = vpow.pop %v5644
      %v5646 = vmul.f32 %v5180, 1.442695
      %v5647 = vpow.pop %v5646
      %v5648 = vmul.f32 %v5181, 1.442695
      %v5649 = vpow.pop %v5648
      %v5650 = vmul.f32 %v5182, 1.442695
      %v5651 = vpow.pop %v5650
      %v5652 = vmul.f32 %v5183, 1.442695
      %v5653 = vpow.pop %v5652
      %v5654 = vmul.f32 %v5184, 1.442695
      %v5655 = vpow.pop %v5654
      %v5656 = vmul.f32 %v5185, 1.442695
      %v5657 = vpow.pop %v5656
      %v5658 = vmul.f32 %v5186, 1.442695
      %v5659 = vpow.pop %v5658
      %v5660 = vmul.f32 %v5187, 1.442695
      %v5661 = vpow.pop %v5660
      %v5662 = vmul.f32 %v5188, 1.442695
      %v5663 = vpow.pop %v5662
      %v5664 = vmul.f32 %v5189, 1.442695
      %v5665 = vpow.pop %v5664
      %v5666 = vmul.f32 %v5190, 1.442695
      %v5667 = vpow.pop %v5666
      %v5668 = vmul.f32 %v5191, 1.442695
      %v5669 = vpow.pop %v5668
      %v5670 = vmul.f32 %v5192, 1.442695
      %v5671 = vpow.pop %v5670
      %v5672 = vmul.f32 %v5193, 1.442695
      %v5673 = vpow.pop %v5672
      %v5674 = vmul.f32 %v5194, 1.442695
      %v5675 = vpow.pop %v5674
      %v5676 = vmul.f32 %v5195, 1.442695
      %v5677 = vpow.pop %v5676
      %v5678 = vmul.f32 %v5196, 1.442695
      %v5679 = vpow.pop %v5678
      %v5680 = vmul.f32 %v5197, 1.442695
      %v5681 = vpow.pop %v5680
      %v5682 = vmul.f32 %v5198, 1.442695
      %v5683 = vpow.pop %v5682
      %v5684 = vmul.f32 %v5199, 1.442695
      %v5685 = vpow.pop %v5684
      %v5686 = vmul.f32 %v5200, 1.442695
      %v5687 = vpow.pop %v5686
      %v5688 = vmul.f32 %v5201, 1.442695
      %v5689 = vpow.pop %v5688
      %v5690 = vmul.f32 %v5202, 1.442695
      %v5691 = vpow.pop %v5690
      %v5692 = vmul.f32 %v5203, 1.442695
      %v5693 = vpow.pop %v5692
      %v5694 = vmul.f32 %v5204, 1.442695
      %v5695 = vpow.pop %v5694
      %v5696 = vmul.f32 %v5205, 1.442695
      %v5697 = vpow.pop %v5696
      %v5698 = vmul.f32 %v5206, 1.442695
      %v5699 = vpow.pop %v5698
      %v5700 = vmul.f32 %v5207, 1.442695
      %v5701 = vpow.pop %v5700
      %v5702 = vmul.f32 %v5208, 1.442695
      %v5703 = vpow.pop %v5702
      %v5704 = vmul.f32 %v5209, 1.442695
      %v5705 = vpow.pop %v5704
      %v5706 = vmul.f32 %v5210, 1.442695
      %v5707 = vpow.pop %v5706
      %v5708 = vmul.f32 %v5211, 1.442695
      %v5709 = vpow.pop %v5708
      %v5710 = vmul.f32 %v5212, 1.442695
      %v5711 = vpow.pop %v5710
      %v5712 = vmul.f32 %v5213, 1.442695
      %v5713 = vpow.pop %v5712
      %v5714 = vmul.f32 %v5214, 1.442695
      %v5715 = vpow.pop %v5714
      %v5716 = vmul.f32 %v5215, 1.442695
      %v5717 = vpow.pop %v5716
      %v5718 = vmul.f32 %v5216, 1.442695
      %v5719 = vpow.pop %v5718
      %v5720 = vmul.f32 %v5217, 1.442695
      %v5721 = vpow.pop %v5720
      %v5722 = vmul.f32 %v5218, 1.442695
      %v5723 = vpow.pop %v5722
      %v5724 = vmul.f32 %v5219, 1.442695
      %v5725 = vpow.pop %v5724
      %v5726 = vmul.f32 %v5220, 1.442695
      %v5727 = vpow.pop %v5726
      %v5728 = vmul.f32 %v5221, 1.442695
      %v5729 = vpow.pop %v5728
      %v5730 = vmul.f32 %v5222, 1.442695
      %v5731 = vpow.pop %v5730
      %v5732 = vmul.f32 %v5223, 1.442695
      %v5733 = vpow.pop %v5732
      %v5734 = vmul.f32 %v5224, 1.442695
      %v5735 = vpow.pop %v5734
      %v5736 = vmul.f32 %v5225, 1.442695
      %v5737 = vpow.pop %v5736
      %5994 = vset.pattern.permute.xlu0 0
      %5995 = vperm.xlu0 %5994, %v5227
      %v5996 = vpop.permute.xlu0 %5995
      %5997 = vset.pattern.permute.xlu0 0
      %5998 = vperm.xlu0 %5997, %v5229
      %v5999 = vpop.permute.xlu0 %5998
      %6000 = vset.pattern.permute.xlu0 0
      %6001 = vperm.xlu0 %6000, %v5231
      %v6002 = vpop.permute.xlu0 %6001
      %6003 = vset.pattern.permute.xlu0 0
      %6004 = vperm.xlu0 %6003, %v5233
      %v6005 = vpop.permute.xlu0 %6004
      %6006 = vset.pattern.permute.xlu0 0
      %6007 = vperm.xlu0 %6006, %v5235
      %v6008 = vpop.permute.xlu0 %6007
      %6009 = vset.pattern.permute.xlu0 0
      %6010 = vperm.xlu0 %6009, %v5237
      %v6011 = vpop.permute.xlu0 %6010
      %6012 = vset.pattern.permute.xlu0 0
      %6013 = vperm.xlu0 %6012, %v5239
      %v6014 = vpop.permute.xlu0 %6013
      %6015 = vset.pattern.permute.xlu0 0
      %6016 = vperm.xlu0 %6015, %v5241
      %v6017 = vpop.permute.xlu0 %6016
      %6018 = vset.pattern.permute.xlu0 0
      %6019 = vperm.xlu0 %6018, %v5243
      %v6020 = vpop.permute.xlu0 %6019
      %6021 = vset.pattern.permute.xlu0 0
      %6022 = vperm.xlu0 %6021, %v5245
      %v6023 = vpop.permute.xlu0 %6022
      %6024 = vset.pattern.permute.xlu0 0
      %6025 = vperm.xlu0 %6024, %v5247
      %v6026 = vpop.permute.xlu0 %6025
      %6027 = vset.pattern.permute.xlu0 0
      %6028 = vperm.xlu0 %6027, %v5249
      %v6029 = vpop.permute.xlu0 %6028
      %6030 = vset.pattern.permute.xlu0 0
      %6031 = vperm.xlu0 %6030, %v5251
      %v6032 = vpop.permute.xlu0 %6031
      %6033 = vset.pattern.permute.xlu0 0
      %6034 = vperm.xlu0 %6033, %v5253
      %v6035 = vpop.permute.xlu0 %6034
      %6036 = vset.pattern.permute.xlu0 0
      %6037 = vperm.xlu0 %6036, %v5255
      %v6038 = vpop.permute.xlu0 %6037
      %6039 = vset.pattern.permute.xlu0 0
      %6040 = vperm.xlu0 %6039, %v5257
      %v6041 = vpop.permute.xlu0 %6040
      %6042 = vset.pattern.permute.xlu0 0
      %6043 = vperm.xlu0 %6042, %v5259
      %v6044 = vpop.permute.xlu0 %6043
      %6045 = vset.pattern.permute.xlu0 0
      %6046 = vperm.xlu0 %6045, %v5261
      %v6047 = vpop.permute.xlu0 %6046
      %6048 = vset.pattern.permute.xlu0 0
      %6049 = vperm.xlu0 %6048, %v5263
      %v6050 = vpop.permute.xlu0 %6049
      %6051 = vset.pattern.permute.xlu0 0
      %6052 = vperm.xlu0 %6051, %v5265
      %v6053 = vpop.permute.xlu0 %6052
      %6054 = vset.pattern.permute.xlu0 0
      %6055 = vperm.xlu0 %6054, %v5267
      %v6056 = vpop.permute.xlu0 %6055
      %6057 = vset.pattern.permute.xlu0 0
      %6058 = vperm.xlu0 %6057, %v5269
      %v6059 = vpop.permute.xlu0 %6058
      %6060 = vset.pattern.permute.xlu0 0
      %6061 = vperm.xlu0 %6060, %v5271
      %v6062 = vpop.permute.xlu0 %6061
      %6063 = vset.pattern.permute.xlu0 0
      %6064 = vperm.xlu0 %6063, %v5273
      %v6065 = vpop.permute.xlu0 %6064
      %6066 = vset.pattern.permute.xlu0 0
      %6067 = vperm.xlu0 %6066, %v5275
      %v6068 = vpop.permute.xlu0 %6067
      %6069 = vset.pattern.permute.xlu0 0
      %6070 = vperm.xlu0 %6069, %v5277
      %v6071 = vpop.permute.xlu0 %6070
      %6072 = vset.pattern.permute.xlu0 0
      %6073 = vperm.xlu0 %6072, %v5279
      %v6074 = vpop.permute.xlu0 %6073
      %6075 = vset.pattern.permute.xlu0 0
      %6076 = vperm.xlu0 %6075, %v5281
      %v6077 = vpop.permute.xlu0 %6076
      %6078 = vset.pattern.permute.xlu0 0
      %6079 = vperm.xlu0 %6078, %v5283
      %v6080 = vpop.permute.xlu0 %6079
      %6081 = vset.pattern.permute.xlu0 0
      %6082 = vperm.xlu0 %6081, %v5285
      %v6083 = vpop.permute.xlu0 %6082
      %6084 = vset.pattern.permute.xlu0 0
      %6085 = vperm.xlu0 %6084, %v5287
      %v6086 = vpop.permute.xlu0 %6085
      %6087 = vset.pattern.permute.xlu0 0
      %6088 = vperm.xlu0 %6087, %v5289
      %v6089 = vpop.permute.xlu0 %6088
      %6090 = vset.pattern.permute.xlu0 0
      %6091 = vperm.xlu0 %6090, %v5291
      %v6092 = vpop.permute.xlu0 %6091
      %6093 = vset.pattern.permute.xlu0 0
      %6094 = vperm.xlu0 %6093, %v5293
      %v6095 = vpop.permute.xlu0 %6094
      %6096 = vset.pattern.permute.xlu0 0
      %6097 = vperm.xlu0 %6096, %v5295
      %v6098 = vpop.permute.xlu0 %6097
      %6099 = vset.pattern.permute.xlu0 0
      %6100 = vperm.xlu0 %6099, %v5297
      %v6101 = vpop.permute.xlu0 %6100
      %6102 = vset.pattern.permute.xlu0 0
      %6103 = vperm.xlu0 %6102, %v5299
      %v6104 = vpop.permute.xlu0 %6103
      %6105 = vset.pattern.permute.xlu0 0
      %6106 = vperm.xlu0 %6105, %v5301
      %v6107 = vpop.permute.xlu0 %6106
      %6108 = vset.pattern.permute.xlu0 0
      %6109 = vperm.xlu0 %6108, %v5303
      %v6110 = vpop.permute.xlu0 %6109
      %6111 = vset.pattern.permute.xlu0 0
      %6112 = vperm.xlu0 %6111, %v5305
      %v6113 = vpop.permute.xlu0 %6112
      %6114 = vset.pattern.permute.xlu0 0
      %6115 = vperm.xlu0 %6114, %v5307
      %v6116 = vpop.permute.xlu0 %6115
      %6117 = vset.pattern.permute.xlu0 0
      %6118 = vperm.xlu0 %6117, %v5309
      %v6119 = vpop.permute.xlu0 %6118
      %6120 = vset.pattern.permute.xlu0 0
      %6121 = vperm.xlu0 %6120, %v5311
      %v6122 = vpop.permute.xlu0 %6121
      %6123 = vset.pattern.permute.xlu0 0
      %6124 = vperm.xlu0 %6123, %v5313
      %v6125 = vpop.permute.xlu0 %6124
      %6126 = vset.pattern.permute.xlu0 0
      %6127 = vperm.xlu0 %6126, %v5315
      %v6128 = vpop.permute.xlu0 %6127
      %6129 = vset.pattern.permute.xlu0 0
      %6130 = vperm.xlu0 %6129, %v5317
      %v6131 = vpop.permute.xlu0 %6130
      %6132 = vset.pattern.permute.xlu0 0
      %6133 = vperm.xlu0 %6132, %v5319
      %v6134 = vpop.permute.xlu0 %6133
      %6135 = vset.pattern.permute.xlu0 0
      %6136 = vperm.xlu0 %6135, %v5321
      %v6137 = vpop.permute.xlu0 %6136
      %6138 = vset.pattern.permute.xlu0 0
      %6139 = vperm.xlu0 %6138, %v5323
      %v6140 = vpop.permute.xlu0 %6139
      %6141 = vset.pattern.permute.xlu0 0
      %6142 = vperm.xlu0 %6141, %v5325
      %v6143 = vpop.permute.xlu0 %6142
      %6144 = vset.pattern.permute.xlu0 0
      %6145 = vperm.xlu0 %6144, %v5327
      %v6146 = vpop.permute.xlu0 %6145
      %6147 = vset.pattern.permute.xlu0 0
      %6148 = vperm.xlu0 %6147, %v5329
      %v6149 = vpop.permute.xlu0 %6148
      %6150 = vset.pattern.permute.xlu0 0
      %6151 = vperm.xlu0 %6150, %v5331
      %v6152 = vpop.permute.xlu0 %6151
      %6153 = vset.pattern.permute.xlu0 0
      %6154 = vperm.xlu0 %6153, %v5333
      %v6155 = vpop.permute.xlu0 %6154
      %6156 = vset.pattern.permute.xlu0 0
      %6157 = vperm.xlu0 %6156, %v5335
      %v6158 = vpop.permute.xlu0 %6157
      %6159 = vset.pattern.permute.xlu0 0
      %6160 = vperm.xlu0 %6159, %v5337
      %v6161 = vpop.permute.xlu0 %6160
      %6162 = vset.pattern.permute.xlu0 0
      %6163 = vperm.xlu0 %6162, %v5339
      %v6164 = vpop.permute.xlu0 %6163
      %6165 = vset.pattern.permute.xlu0 0
      %6166 = vperm.xlu0 %6165, %v5341
      %v6167 = vpop.permute.xlu0 %6166
      %6168 = vset.pattern.permute.xlu0 0
      %6169 = vperm.xlu0 %6168, %v5343
      %v6170 = vpop.permute.xlu0 %6169
      %6171 = vset.pattern.permute.xlu0 0
      %6172 = vperm.xlu0 %6171, %v5345
      %v6173 = vpop.permute.xlu0 %6172
      %6174 = vset.pattern.permute.xlu0 0
      %6175 = vperm.xlu0 %6174, %v5347
      %v6176 = vpop.permute.xlu0 %6175
      %6177 = vset.pattern.permute.xlu0 0
      %6178 = vperm.xlu0 %6177, %v5349
      %v6179 = vpop.permute.xlu0 %6178
      %6180 = vset.pattern.permute.xlu0 0
      %6181 = vperm.xlu0 %6180, %v5351
      %v6182 = vpop.permute.xlu0 %6181
      %6183 = vset.pattern.permute.xlu0 0
      %6184 = vperm.xlu0 %6183, %v5353
      %v6185 = vpop.permute.xlu0 %6184
      %6186 = vset.pattern.permute.xlu0 0
      %6187 = vperm.xlu0 %6186, %v5355
      %v6188 = vpop.permute.xlu0 %6187
      %6189 = vset.pattern.permute.xlu0 0
      %6190 = vperm.xlu0 %6189, %v5357
      %v6191 = vpop.permute.xlu0 %6190
      %6192 = vset.pattern.permute.xlu0 0
      %6193 = vperm.xlu0 %6192, %v5359
      %v6194 = vpop.permute.xlu0 %6193
      %6195 = vset.pattern.permute.xlu0 0
      %6196 = vperm.xlu0 %6195, %v5361
      %v6197 = vpop.permute.xlu0 %6196
      %6198 = vset.pattern.permute.xlu0 0
      %6199 = vperm.xlu0 %6198, %v5363
      %v6200 = vpop.permute.xlu0 %6199
      %6201 = vset.pattern.permute.xlu0 0
      %6202 = vperm.xlu0 %6201, %v5365
      %v6203 = vpop.permute.xlu0 %6202
      %6204 = vset.pattern.permute.xlu0 0
      %6205 = vperm.xlu0 %6204, %v5367
      %v6206 = vpop.permute.xlu0 %6205
      %6207 = vset.pattern.permute.xlu0 0
      %6208 = vperm.xlu0 %6207, %v5369
      %v6209 = vpop.permute.xlu0 %6208
      %6210 = vset.pattern.permute.xlu0 0
      %6211 = vperm.xlu0 %6210, %v5371
      %v6212 = vpop.permute.xlu0 %6211
      %6213 = vset.pattern.permute.xlu0 0
      %6214 = vperm.xlu0 %6213, %v5373
      %v6215 = vpop.permute.xlu0 %6214
      %6216 = vset.pattern.permute.xlu0 0
      %6217 = vperm.xlu0 %6216, %v5375
      %v6218 = vpop.permute.xlu0 %6217
      %6219 = vset.pattern.permute.xlu0 0
      %6220 = vperm.xlu0 %6219, %v5377
      %v6221 = vpop.permute.xlu0 %6220
      %6222 = vset.pattern.permute.xlu0 0
      %6223 = vperm.xlu0 %6222, %v5379
      %v6224 = vpop.permute.xlu0 %6223
      %6225 = vset.pattern.permute.xlu0 0
      %6226 = vperm.xlu0 %6225, %v5381
      %v6227 = vpop.permute.xlu0 %6226
      %6228 = vset.pattern.permute.xlu0 0
      %6229 = vperm.xlu0 %6228, %v5383
      %v6230 = vpop.permute.xlu0 %6229
      %6231 = vset.pattern.permute.xlu0 0
      %6232 = vperm.xlu0 %6231, %v5385
      %v6233 = vpop.permute.xlu0 %6232
      %6234 = vset.pattern.permute.xlu0 0
      %6235 = vperm.xlu0 %6234, %v5387
      %v6236 = vpop.permute.xlu0 %6235
      %6237 = vset.pattern.permute.xlu0 0
      %6238 = vperm.xlu0 %6237, %v5389
      %v6239 = vpop.permute.xlu0 %6238
      %6240 = vset.pattern.permute.xlu0 0
      %6241 = vperm.xlu0 %6240, %v5391
      %v6242 = vpop.permute.xlu0 %6241
      %6243 = vset.pattern.permute.xlu0 0
      %6244 = vperm.xlu0 %6243, %v5393
      %v6245 = vpop.permute.xlu0 %6244
      %6246 = vset.pattern.permute.xlu0 0
      %6247 = vperm.xlu0 %6246, %v5395
      %v6248 = vpop.permute.xlu0 %6247
      %6249 = vset.pattern.permute.xlu0 0
      %6250 = vperm.xlu0 %6249, %v5397
      %v6251 = vpop.permute.xlu0 %6250
      %6252 = vset.pattern.permute.xlu0 0
      %6253 = vperm.xlu0 %6252, %v5399
      %v6254 = vpop.permute.xlu0 %6253
      %6255 = vset.pattern.permute.xlu0 0
      %6256 = vperm.xlu0 %6255, %v5401
      %v6257 = vpop.permute.xlu0 %6256
      %6258 = vset.pattern.permute.xlu0 0
      %6259 = vperm.xlu0 %6258, %v5403
      %v6260 = vpop.permute.xlu0 %6259
      %6261 = vset.pattern.permute.xlu0 0
      %6262 = vperm.xlu0 %6261, %v5405
      %v6263 = vpop.permute.xlu0 %6262
      %6264 = vset.pattern.permute.xlu0 0
      %6265 = vperm.xlu0 %6264, %v5407
      %v6266 = vpop.permute.xlu0 %6265
      %6267 = vset.pattern.permute.xlu0 0
      %6268 = vperm.xlu0 %6267, %v5409
      %v6269 = vpop.permute.xlu0 %6268
      %6270 = vset.pattern.permute.xlu0 0
      %6271 = vperm.xlu0 %6270, %v5411
      %v6272 = vpop.permute.xlu0 %6271
      %6273 = vset.pattern.permute.xlu0 0
      %6274 = vperm.xlu0 %6273, %v5413
      %v6275 = vpop.permute.xlu0 %6274
      %6276 = vset.pattern.permute.xlu0 0
      %6277 = vperm.xlu0 %6276, %v5415
      %v6278 = vpop.permute.xlu0 %6277
      %6279 = vset.pattern.permute.xlu0 0
      %6280 = vperm.xlu0 %6279, %v5417
      %v6281 = vpop.permute.xlu0 %6280
      %6282 = vset.pattern.permute.xlu0 0
      %6283 = vperm.xlu0 %6282, %v5419
      %v6284 = vpop.permute.xlu0 %6283
      %6285 = vset.pattern.permute.xlu0 0
      %6286 = vperm.xlu0 %6285, %v5421
      %v6287 = vpop.permute.xlu0 %6286
      %6288 = vset.pattern.permute.xlu0 0
      %6289 = vperm.xlu0 %6288, %v5423
      %v6290 = vpop.permute.xlu0 %6289
      %6291 = vset.pattern.permute.xlu0 0
      %6292 = vperm.xlu0 %6291, %v5425
      %v6293 = vpop.permute.xlu0 %6292
      %6294 = vset.pattern.permute.xlu0 0
      %6295 = vperm.xlu0 %6294, %v5427
      %v6296 = vpop.permute.xlu0 %6295
      %6297 = vset.pattern.permute.xlu0 0
      %6298 = vperm.xlu0 %6297, %v5429
      %v6299 = vpop.permute.xlu0 %6298
      %6300 = vset.pattern.permute.xlu0 0
      %6301 = vperm.xlu0 %6300, %v5431
      %v6302 = vpop.permute.xlu0 %6301
      %6303 = vset.pattern.permute.xlu0 0
      %6304 = vperm.xlu0 %6303, %v5433
      %v6305 = vpop.permute.xlu0 %6304
      %6306 = vset.pattern.permute.xlu0 0
      %6307 = vperm.xlu0 %6306, %v5435
      %v6308 = vpop.permute.xlu0 %6307
      %6309 = vset.pattern.permute.xlu0 0
      %6310 = vperm.xlu0 %6309, %v5437
      %v6311 = vpop.permute.xlu0 %6310
      %6312 = vset.pattern.permute.xlu0 0
      %6313 = vperm.xlu0 %6312, %v5439
      %v6314 = vpop.permute.xlu0 %6313
      %6315 = vset.pattern.permute.xlu0 0
      %6316 = vperm.xlu0 %6315, %v5441
      %v6317 = vpop.permute.xlu0 %6316
      %6318 = vset.pattern.permute.xlu0 0
      %6319 = vperm.xlu0 %6318, %v5443
      %v6320 = vpop.permute.xlu0 %6319
      %6321 = vset.pattern.permute.xlu0 0
      %6322 = vperm.xlu0 %6321, %v5445
      %v6323 = vpop.permute.xlu0 %6322
      %6324 = vset.pattern.permute.xlu0 0
      %6325 = vperm.xlu0 %6324, %v5447
      %v6326 = vpop.permute.xlu0 %6325
      %6327 = vset.pattern.permute.xlu0 0
      %6328 = vperm.xlu0 %6327, %v5449
      %v6329 = vpop.permute.xlu0 %6328
      %6330 = vset.pattern.permute.xlu0 0
      %6331 = vperm.xlu0 %6330, %v5451
      %v6332 = vpop.permute.xlu0 %6331
      %6333 = vset.pattern.permute.xlu0 0
      %6334 = vperm.xlu0 %6333, %v5453
      %v6335 = vpop.permute.xlu0 %6334
      %6336 = vset.pattern.permute.xlu0 0
      %6337 = vperm.xlu0 %6336, %v5455
      %v6338 = vpop.permute.xlu0 %6337
      %6339 = vset.pattern.permute.xlu0 0
      %6340 = vperm.xlu0 %6339, %v5457
      %v6341 = vpop.permute.xlu0 %6340
      %6342 = vset.pattern.permute.xlu0 0
      %6343 = vperm.xlu0 %6342, %v5459
      %v6344 = vpop.permute.xlu0 %6343
      %6345 = vset.pattern.permute.xlu0 0
      %6346 = vperm.xlu0 %6345, %v5461
      %v6347 = vpop.permute.xlu0 %6346
      %6348 = vset.pattern.permute.xlu0 0
      %6349 = vperm.xlu0 %6348, %v5463
      %v6350 = vpop.permute.xlu0 %6349
      %6351 = vset.pattern.permute.xlu0 0
      %6352 = vperm.xlu0 %6351, %v5465
      %v6353 = vpop.permute.xlu0 %6352
      %6354 = vset.pattern.permute.xlu0 0
      %6355 = vperm.xlu0 %6354, %v5467
      %v6356 = vpop.permute.xlu0 %6355
      %6357 = vset.pattern.permute.xlu0 0
      %6358 = vperm.xlu0 %6357, %v5469
      %v6359 = vpop.permute.xlu0 %6358
      %6360 = vset.pattern.permute.xlu0 0
      %6361 = vperm.xlu0 %6360, %v5471
      %v6362 = vpop.permute.xlu0 %6361
      %6363 = vset.pattern.permute.xlu0 0
      %6364 = vperm.xlu0 %6363, %v5473
      %v6365 = vpop.permute.xlu0 %6364
      %6366 = vset.pattern.permute.xlu0 0
      %6367 = vperm.xlu0 %6366, %v5475
      %v6368 = vpop.permute.xlu0 %6367
      %6369 = vset.pattern.permute.xlu0 0
      %6370 = vperm.xlu0 %6369, %v5477
      %v6371 = vpop.permute.xlu0 %6370
      %6372 = vset.pattern.permute.xlu0 0
      %6373 = vperm.xlu0 %6372, %v5479
      %v6374 = vpop.permute.xlu0 %6373
      %6375 = vset.pattern.permute.xlu0 0
      %6376 = vperm.xlu0 %6375, %v5481
      %v6377 = vpop.permute.xlu0 %6376
      %6378 = vset.pattern.permute.xlu0 0
      %6379 = vperm.xlu0 %6378, %v5483
      %v6380 = vpop.permute.xlu0 %6379
      %6381 = vset.pattern.permute.xlu0 0
      %6382 = vperm.xlu0 %6381, %v5485
      %v6383 = vpop.permute.xlu0 %6382
      %6384 = vset.pattern.permute.xlu0 0
      %6385 = vperm.xlu0 %6384, %v5487
      %v6386 = vpop.permute.xlu0 %6385
      %6387 = vset.pattern.permute.xlu0 0
      %6388 = vperm.xlu0 %6387, %v5489
      %v6389 = vpop.permute.xlu0 %6388
      %6390 = vset.pattern.permute.xlu0 0
      %6391 = vperm.xlu0 %6390, %v5491
      %v6392 = vpop.permute.xlu0 %6391
      %6393 = vset.pattern.permute.xlu0 0
      %6394 = vperm.xlu0 %6393, %v5493
      %v6395 = vpop.permute.xlu0 %6394
      %6396 = vset.pattern.permute.xlu0 0
      %6397 = vperm.xlu0 %6396, %v5495
      %v6398 = vpop.permute.xlu0 %6397
      %6399 = vset.pattern.permute.xlu0 0
      %6400 = vperm.xlu0 %6399, %v5497
      %v6401 = vpop.permute.xlu0 %6400
      %6402 = vset.pattern.permute.xlu0 0
      %6403 = vperm.xlu0 %6402, %v5499
      %v6404 = vpop.permute.xlu0 %6403
      %6405 = vset.pattern.permute.xlu0 0
      %6406 = vperm.xlu0 %6405, %v5501
      %v6407 = vpop.permute.xlu0 %6406
      %6408 = vset.pattern.permute.xlu0 0
      %6409 = vperm.xlu0 %6408, %v5503
      %v6410 = vpop.permute.xlu0 %6409
      %6411 = vset.pattern.permute.xlu0 0
      %6412 = vperm.xlu0 %6411, %v5505
      %v6413 = vpop.permute.xlu0 %6412
      %6414 = vset.pattern.permute.xlu0 0
      %6415 = vperm.xlu0 %6414, %v5507
      %v6416 = vpop.permute.xlu0 %6415
      %6417 = vset.pattern.permute.xlu0 0
      %6418 = vperm.xlu0 %6417, %v5509
      %v6419 = vpop.permute.xlu0 %6418
      %6420 = vset.pattern.permute.xlu0 0
      %6421 = vperm.xlu0 %6420, %v5511
      %v6422 = vpop.permute.xlu0 %6421
      %6423 = vset.pattern.permute.xlu0 0
      %6424 = vperm.xlu0 %6423, %v5513
      %v6425 = vpop.permute.xlu0 %6424
      %6426 = vset.pattern.permute.xlu0 0
      %6427 = vperm.xlu0 %6426, %v5515
      %v6428 = vpop.permute.xlu0 %6427
      %6429 = vset.pattern.permute.xlu0 0
      %6430 = vperm.xlu0 %6429, %v5517
      %v6431 = vpop.permute.xlu0 %6430
      %6432 = vset.pattern.permute.xlu0 0
      %6433 = vperm.xlu0 %6432, %v5519
      %v6434 = vpop.permute.xlu0 %6433
      %6435 = vset.pattern.permute.xlu0 0
      %6436 = vperm.xlu0 %6435, %v5521
      %v6437 = vpop.permute.xlu0 %6436
      %6438 = vset.pattern.permute.xlu0 0
      %6439 = vperm.xlu0 %6438, %v5523
      %v6440 = vpop.permute.xlu0 %6439
      %6441 = vset.pattern.permute.xlu0 0
      %6442 = vperm.xlu0 %6441, %v5525
      %v6443 = vpop.permute.xlu0 %6442
      %6444 = vset.pattern.permute.xlu0 0
      %6445 = vperm.xlu0 %6444, %v5527
      %v6446 = vpop.permute.xlu0 %6445
      %6447 = vset.pattern.permute.xlu0 0
      %6448 = vperm.xlu0 %6447, %v5529
      %v6449 = vpop.permute.xlu0 %6448
      %6450 = vset.pattern.permute.xlu0 0
      %6451 = vperm.xlu0 %6450, %v5531
      %v6452 = vpop.permute.xlu0 %6451
      %6453 = vset.pattern.permute.xlu0 0
      %6454 = vperm.xlu0 %6453, %v5533
      %v6455 = vpop.permute.xlu0 %6454
      %6456 = vset.pattern.permute.xlu0 0
      %6457 = vperm.xlu0 %6456, %v5535
      %v6458 = vpop.permute.xlu0 %6457
      %6459 = vset.pattern.permute.xlu0 0
      %6460 = vperm.xlu0 %6459, %v5537
      %v6461 = vpop.permute.xlu0 %6460
      %6462 = vset.pattern.permute.xlu0 0
      %6463 = vperm.xlu0 %6462, %v5539
      %v6464 = vpop.permute.xlu0 %6463
      %6465 = vset.pattern.permute.xlu0 0
      %6466 = vperm.xlu0 %6465, %v5541
      %v6467 = vpop.permute.xlu0 %6466
      %6468 = vset.pattern.permute.xlu0 0
      %6469 = vperm.xlu0 %6468, %v5543
      %v6470 = vpop.permute.xlu0 %6469
      %6471 = vset.pattern.permute.xlu0 0
      %6472 = vperm.xlu0 %6471, %v5545
      %v6473 = vpop.permute.xlu0 %6472
      %6474 = vset.pattern.permute.xlu0 0
      %6475 = vperm.xlu0 %6474, %v5547
      %v6476 = vpop.permute.xlu0 %6475
      %6477 = vset.pattern.permute.xlu0 0
      %6478 = vperm.xlu0 %6477, %v5549
      %v6479 = vpop.permute.xlu0 %6478
      %6480 = vset.pattern.permute.xlu0 0
      %6481 = vperm.xlu0 %6480, %v5551
      %v6482 = vpop.permute.xlu0 %6481
      %6483 = vset.pattern.permute.xlu0 0
      %6484 = vperm.xlu0 %6483, %v5553
      %v6485 = vpop.permute.xlu0 %6484
      %6486 = vset.pattern.permute.xlu0 0
      %6487 = vperm.xlu0 %6486, %v5555
      %v6488 = vpop.permute.xlu0 %6487
      %6489 = vset.pattern.permute.xlu0 0
      %6490 = vperm.xlu0 %6489, %v5557
      %v6491 = vpop.permute.xlu0 %6490
      %6492 = vset.pattern.permute.xlu0 0
      %6493 = vperm.xlu0 %6492, %v5559
      %v6494 = vpop.permute.xlu0 %6493
      %6495 = vset.pattern.permute.xlu0 0
      %6496 = vperm.xlu0 %6495, %v5561
      %v6497 = vpop.permute.xlu0 %6496
      %6498 = vset.pattern.permute.xlu0 0
      %6499 = vperm.xlu0 %6498, %v5563
      %v6500 = vpop.permute.xlu0 %6499
      %6501 = vset.pattern.permute.xlu0 0
      %6502 = vperm.xlu0 %6501, %v5565
      %v6503 = vpop.permute.xlu0 %6502
      %6504 = vset.pattern.permute.xlu0 0
      %6505 = vperm.xlu0 %6504, %v5567
      %v6506 = vpop.permute.xlu0 %6505
      %6507 = vset.pattern.permute.xlu0 0
      %6508 = vperm.xlu0 %6507, %v5569
      %v6509 = vpop.permute.xlu0 %6508
      %6510 = vset.pattern.permute.xlu0 0
      %6511 = vperm.xlu0 %6510, %v5571
      %v6512 = vpop.permute.xlu0 %6511
      %6513 = vset.pattern.permute.xlu0 0
      %6514 = vperm.xlu0 %6513, %v5573
      %v6515 = vpop.permute.xlu0 %6514
      %6516 = vset.pattern.permute.xlu0 0
      %6517 = vperm.xlu0 %6516, %v5575
      %v6518 = vpop.permute.xlu0 %6517
      %6519 = vset.pattern.permute.xlu0 0
      %6520 = vperm.xlu0 %6519, %v5577
      %v6521 = vpop.permute.xlu0 %6520
      %6522 = vset.pattern.permute.xlu0 0
      %6523 = vperm.xlu0 %6522, %v5579
      %v6524 = vpop.permute.xlu0 %6523
      %6525 = vset.pattern.permute.xlu0 0
      %6526 = vperm.xlu0 %6525, %v5581
      %v6527 = vpop.permute.xlu0 %6526
      %6528 = vset.pattern.permute.xlu0 0
      %6529 = vperm.xlu0 %6528, %v5583
      %v6530 = vpop.permute.xlu0 %6529
      %6531 = vset.pattern.permute.xlu0 0
      %6532 = vperm.xlu0 %6531, %v5585
      %v6533 = vpop.permute.xlu0 %6532
      %6534 = vset.pattern.permute.xlu0 0
      %6535 = vperm.xlu0 %6534, %v5587
      %v6536 = vpop.permute.xlu0 %6535
      %6537 = vset.pattern.permute.xlu0 0
      %6538 = vperm.xlu0 %6537, %v5589
      %v6539 = vpop.permute.xlu0 %6538
      %6540 = vset.pattern.permute.xlu0 0
      %6541 = vperm.xlu0 %6540, %v5591
      %v6542 = vpop.permute.xlu0 %6541
      %6543 = vset.pattern.permute.xlu0 0
      %6544 = vperm.xlu0 %6543, %v5593
      %v6545 = vpop.permute.xlu0 %6544
      %6546 = vset.pattern.permute.xlu0 0
      %6547 = vperm.xlu0 %6546, %v5595
      %v6548 = vpop.permute.xlu0 %6547
      %6549 = vset.pattern.permute.xlu0 0
      %6550 = vperm.xlu0 %6549, %v5597
      %v6551 = vpop.permute.xlu0 %6550
      %6552 = vset.pattern.permute.xlu0 0
      %6553 = vperm.xlu0 %6552, %v5599
      %v6554 = vpop.permute.xlu0 %6553
      %6555 = vset.pattern.permute.xlu0 0
      %6556 = vperm.xlu0 %6555, %v5601
      %v6557 = vpop.permute.xlu0 %6556
      %6558 = vset.pattern.permute.xlu0 0
      %6559 = vperm.xlu0 %6558, %v5603
      %v6560 = vpop.permute.xlu0 %6559
      %6561 = vset.pattern.permute.xlu0 0
      %6562 = vperm.xlu0 %6561, %v5605
      %v6563 = vpop.permute.xlu0 %6562
      %6564 = vset.pattern.permute.xlu0 0
      %6565 = vperm.xlu0 %6564, %v5607
      %v6566 = vpop.permute.xlu0 %6565
      %6567 = vset.pattern.permute.xlu0 0
      %6568 = vperm.xlu0 %6567, %v5609
      %v6569 = vpop.permute.xlu0 %6568
      %6570 = vset.pattern.permute.xlu0 0
      %6571 = vperm.xlu0 %6570, %v5611
      %v6572 = vpop.permute.xlu0 %6571
      %6573 = vset.pattern.permute.xlu0 0
      %6574 = vperm.xlu0 %6573, %v5613
      %v6575 = vpop.permute.xlu0 %6574
      %6576 = vset.pattern.permute.xlu0 0
      %6577 = vperm.xlu0 %6576, %v5615
      %v6578 = vpop.permute.xlu0 %6577
      %6579 = vset.pattern.permute.xlu0 0
      %6580 = vperm.xlu0 %6579, %v5617
      %v6581 = vpop.permute.xlu0 %6580
      %6582 = vset.pattern.permute.xlu0 0
      %6583 = vperm.xlu0 %6582, %v5619
      %v6584 = vpop.permute.xlu0 %6583
      %6585 = vset.pattern.permute.xlu0 0
      %6586 = vperm.xlu0 %6585, %v5621
      %v6587 = vpop.permute.xlu0 %6586
      %6588 = vset.pattern.permute.xlu0 0
      %6589 = vperm.xlu0 %6588, %v5623
      %v6590 = vpop.permute.xlu0 %6589
      %6591 = vset.pattern.permute.xlu0 0
      %6592 = vperm.xlu0 %6591, %v5625
      %v6593 = vpop.permute.xlu0 %6592
      %6594 = vset.pattern.permute.xlu0 0
      %6595 = vperm.xlu0 %6594, %v5627
      %v6596 = vpop.permute.xlu0 %6595
      %6597 = vset.pattern.permute.xlu0 0
      %6598 = vperm.xlu0 %6597, %v5629
      %v6599 = vpop.permute.xlu0 %6598
      %6600 = vset.pattern.permute.xlu0 0
      %6601 = vperm.xlu0 %6600, %v5631
      %v6602 = vpop.permute.xlu0 %6601
      %6603 = vset.pattern.permute.xlu0 0
      %6604 = vperm.xlu0 %6603, %v5633
      %v6605 = vpop.permute.xlu0 %6604
      %6606 = vset.pattern.permute.xlu0 0
      %6607 = vperm.xlu0 %6606, %v5635
      %v6608 = vpop.permute.xlu0 %6607
      %6609 = vset.pattern.permute.xlu0 0
      %6610 = vperm.xlu0 %6609, %v5637
      %v6611 = vpop.permute.xlu0 %6610
      %6612 = vset.pattern.permute.xlu0 0
      %6613 = vperm.xlu0 %6612, %v5639
      %v6614 = vpop.permute.xlu0 %6613
      %6615 = vset.pattern.permute.xlu0 0
      %6616 = vperm.xlu0 %6615, %v5641
      %v6617 = vpop.permute.xlu0 %6616
      %6618 = vset.pattern.permute.xlu0 0
      %6619 = vperm.xlu0 %6618, %v5643
      %v6620 = vpop.permute.xlu0 %6619
      %6621 = vset.pattern.permute.xlu0 0
      %6622 = vperm.xlu0 %6621, %v5645
      %v6623 = vpop.permute.xlu0 %6622
      %6624 = vset.pattern.permute.xlu0 0
      %6625 = vperm.xlu0 %6624, %v5647
      %v6626 = vpop.permute.xlu0 %6625
      %6627 = vset.pattern.permute.xlu0 0
      %6628 = vperm.xlu0 %6627, %v5649
      %v6629 = vpop.permute.xlu0 %6628
      %6630 = vset.pattern.permute.xlu0 0
      %6631 = vperm.xlu0 %6630, %v5651
      %v6632 = vpop.permute.xlu0 %6631
      %6633 = vset.pattern.permute.xlu0 0
      %6634 = vperm.xlu0 %6633, %v5653
      %v6635 = vpop.permute.xlu0 %6634
      %6636 = vset.pattern.permute.xlu0 0
      %6637 = vperm.xlu0 %6636, %v5655
      %v6638 = vpop.permute.xlu0 %6637
      %6639 = vset.pattern.permute.xlu0 0
      %6640 = vperm.xlu0 %6639, %v5657
      %v6641 = vpop.permute.xlu0 %6640
      %6642 = vset.pattern.permute.xlu0 0
      %6643 = vperm.xlu0 %6642, %v5659
      %v6644 = vpop.permute.xlu0 %6643
      %6645 = vset.pattern.permute.xlu0 0
      %6646 = vperm.xlu0 %6645, %v5661
      %v6647 = vpop.permute.xlu0 %6646
      %6648 = vset.pattern.permute.xlu0 0
      %6649 = vperm.xlu0 %6648, %v5663
      %v6650 = vpop.permute.xlu0 %6649
      %6651 = vset.pattern.permute.xlu0 0
      %6652 = vperm.xlu0 %6651, %v5665
      %v6653 = vpop.permute.xlu0 %6652
      %6654 = vset.pattern.permute.xlu0 0
      %6655 = vperm.xlu0 %6654, %v5667
      %v6656 = vpop.permute.xlu0 %6655
      %6657 = vset.pattern.permute.xlu0 0
      %6658 = vperm.xlu0 %6657, %v5669
      %v6659 = vpop.permute.xlu0 %6658
      %6660 = vset.pattern.permute.xlu0 0
      %6661 = vperm.xlu0 %6660, %v5671
      %v6662 = vpop.permute.xlu0 %6661
      %6663 = vset.pattern.permute.xlu0 0
      %6664 = vperm.xlu0 %6663, %v5673
      %v6665 = vpop.permute.xlu0 %6664
      %6666 = vset.pattern.permute.xlu0 0
      %6667 = vperm.xlu0 %6666, %v5675
      %v6668 = vpop.permute.xlu0 %6667
      %6669 = vset.pattern.permute.xlu0 0
      %6670 = vperm.xlu0 %6669, %v5677
      %v6671 = vpop.permute.xlu0 %6670
      %6672 = vset.pattern.permute.xlu0 0
      %6673 = vperm.xlu0 %6672, %v5679
      %v6674 = vpop.permute.xlu0 %6673
      %6675 = vset.pattern.permute.xlu0 0
      %6676 = vperm.xlu0 %6675, %v5681
      %v6677 = vpop.permute.xlu0 %6676
      %6678 = vset.pattern.permute.xlu0 0
      %6679 = vperm.xlu0 %6678, %v5683
      %v6680 = vpop.permute.xlu0 %6679
      %6681 = vset.pattern.permute.xlu0 0
      %6682 = vperm.xlu0 %6681, %v5685
      %v6683 = vpop.permute.xlu0 %6682
      %6684 = vset.pattern.permute.xlu0 0
      %6685 = vperm.xlu0 %6684, %v5687
      %v6686 = vpop.permute.xlu0 %6685
      %6687 = vset.pattern.permute.xlu0 0
      %6688 = vperm.xlu0 %6687, %v5689
      %v6689 = vpop.permute.xlu0 %6688
      %6690 = vset.pattern.permute.xlu0 0
      %6691 = vperm.xlu0 %6690, %v5691
      %v6692 = vpop.permute.xlu0 %6691
      %6693 = vset.pattern.permute.xlu0 0
      %6694 = vperm.xlu0 %6693, %v5693
      %v6695 = vpop.permute.xlu0 %6694
      %6696 = vset.pattern.permute.xlu0 0
      %6697 = vperm.xlu0 %6696, %v5695
      %v6698 = vpop.permute.xlu0 %6697
      %6699 = vset.pattern.permute.xlu0 0
      %6700 = vperm.xlu0 %6699, %v5697
      %v6701 = vpop.permute.xlu0 %6700
      %6702 = vset.pattern.permute.xlu0 0
      %6703 = vperm.xlu0 %6702, %v5699
      %v6704 = vpop.permute.xlu0 %6703
      %6705 = vset.pattern.permute.xlu0 0
      %6706 = vperm.xlu0 %6705, %v5701
      %v6707 = vpop.permute.xlu0 %6706
      %6708 = vset.pattern.permute.xlu0 0
      %6709 = vperm.xlu0 %6708, %v5703
      %v6710 = vpop.permute.xlu0 %6709
      %6711 = vset.pattern.permute.xlu0 0
      %6712 = vperm.xlu0 %6711, %v5705
      %v6713 = vpop.permute.xlu0 %6712
      %6714 = vset.pattern.permute.xlu0 0
      %6715 = vperm.xlu0 %6714, %v5707
      %v6716 = vpop.permute.xlu0 %6715
      %6717 = vset.pattern.permute.xlu0 0
      %6718 = vperm.xlu0 %6717, %v5709
      %v6719 = vpop.permute.xlu0 %6718
      %6720 = vset.pattern.permute.xlu0 0
      %6721 = vperm.xlu0 %6720, %v5711
      %v6722 = vpop.permute.xlu0 %6721
      %6723 = vset.pattern.permute.xlu0 0
      %6724 = vperm.xlu0 %6723, %v5713
      %v6725 = vpop.permute.xlu0 %6724
      %6726 = vset.pattern.permute.xlu0 0
      %6727 = vperm.xlu0 %6726, %v5715
      %v6728 = vpop.permute.xlu0 %6727
      %6729 = vset.pattern.permute.xlu0 0
      %6730 = vperm.xlu0 %6729, %v5717
      %v6731 = vpop.permute.xlu0 %6730
      %6732 = vset.pattern.permute.xlu0 0
      %6733 = vperm.xlu0 %6732, %v5719
      %v6734 = vpop.permute.xlu0 %6733
      %6735 = vset.pattern.permute.xlu0 0
      %6736 = vperm.xlu0 %6735, %v5721
      %v6737 = vpop.permute.xlu0 %6736
      %6738 = vset.pattern.permute.xlu0 0
      %6739 = vperm.xlu0 %6738, %v5723
      %v6740 = vpop.permute.xlu0 %6739
      %6741 = vset.pattern.permute.xlu0 0
      %6742 = vperm.xlu0 %6741, %v5725
      %v6743 = vpop.permute.xlu0 %6742
      %6744 = vset.pattern.permute.xlu0 0
      %6745 = vperm.xlu0 %6744, %v5727
      %v6746 = vpop.permute.xlu0 %6745
      %6747 = vset.pattern.permute.xlu0 0
      %6748 = vperm.xlu0 %6747, %v5729
      %v6749 = vpop.permute.xlu0 %6748
      %6750 = vset.pattern.permute.xlu0 0
      %6751 = vperm.xlu0 %6750, %v5731
      %v6752 = vpop.permute.xlu0 %6751
      %6753 = vset.pattern.permute.xlu0 0
      %6754 = vperm.xlu0 %6753, %v5733
      %v6755 = vpop.permute.xlu0 %6754
      %6756 = vset.pattern.permute.xlu0 0
      %6757 = vperm.xlu0 %6756, %v5735
      %v6758 = vpop.permute.xlu0 %6757
      %6759 = vset.pattern.permute.xlu0 0
      %6760 = vperm.xlu0 %6759, %v5737
      %v6761 = vpop.permute.xlu0 %6760
      %v6762 = vperm.slane %v5996, %v4400
      %v6763 = vperm.slane %v5999, %v4402
      %v6764 = vsel %vm4404, %v6763, %v6762
      %v6765 = vperm.slane %v6002, %v4406
      %v6766 = vsel %vm4408, %v6765, %v6764
      %v6767 = vperm.slane %v6005, %v4410
      %v6768 = vsel %vm4412, %v6767, %v6766
      %v6769 = vperm.slane %v6008, %v4414
      %v6770 = vsel %vm4416, %v6769, %v6768
      %v6771 = vperm.slane %v6011, %v4418
      %v6772 = vsel %vm4420, %v6771, %v6770
      %v6773 = vperm.slane %v6014, %v4422
      %v6774 = vsel %vm4424, %v6773, %v6772
      %v6775 = vperm.slane %v6017, %v4426
      %v6776 = vsel %vm4428, %v6775, %v6774
      %v6777 = vperm.slane %v6020, %v4430
      %v6778 = vsel %vm4432, %v6777, %v6776
      %v6779 = vperm.slane %v6023, %v4434
      %v6780 = vsel %vm4436, %v6779, %v6778
      %v6781 = vperm.slane %v6026, %v4438
      %v6782 = vsel %vm4440, %v6781, %v6780
      %v6783 = vperm.slane %v6029, %v4442
      %v6784 = vsel %vm4444, %v6783, %v6782
      %v6785 = vperm.slane %v6032, %v4446
      %v6786 = vsel %vm4448, %v6785, %v6784
      %v6787 = vperm.slane %v6035, %v4450
      %v6788 = vsel %vm4452, %v6787, %v6786
      %v6789 = vperm.slane %v6038, %v4454
      %v6790 = vsel %vm4456, %v6789, %v6788
      %v6791 = vperm.slane %v6041, %v4458
      %v6792 = vsel %vm4460, %v6791, %v6790
      %v6793 = vperm.slane %v6044, %v4400
      %v6794 = vperm.slane %v6047, %v4402
      %v6795 = vsel %vm4404, %v6794, %v6793
      %v6796 = vperm.slane %v6050, %v4406
      %v6797 = vsel %vm4408, %v6796, %v6795
      %v6798 = vperm.slane %v6053, %v4410
      %v6799 = vsel %vm4412, %v6798, %v6797
      %v6800 = vperm.slane %v6056, %v4414
      %v6801 = vsel %vm4416, %v6800, %v6799
      %v6802 = vperm.slane %v6059, %v4418
      %v6803 = vsel %vm4420, %v6802, %v6801
      %v6804 = vperm.slane %v6062, %v4422
      %v6805 = vsel %vm4424, %v6804, %v6803
      %v6806 = vperm.slane %v6065, %v4426
      %v6807 = vsel %vm4428, %v6806, %v6805
      %v6808 = vperm.slane %v6068, %v4430
      %v6809 = vsel %vm4432, %v6808, %v6807
      %v6810 = vperm.slane %v6071, %v4434
      %v6811 = vsel %vm4436, %v6810, %v6809
      %v6812 = vperm.slane %v6074, %v4438
      %v6813 = vsel %vm4440, %v6812, %v6811
      %v6814 = vperm.slane %v6077, %v4442
      %v6815 = vsel %vm4444, %v6814, %v6813
      %v6816 = vperm.slane %v6080, %v4446
      %v6817 = vsel %vm4448, %v6816, %v6815
      %v6818 = vperm.slane %v6083, %v4450
      %v6819 = vsel %vm4452, %v6818, %v6817
      %v6820 = vperm.slane %v6086, %v4454
      %v6821 = vsel %vm4456, %v6820, %v6819
      %v6822 = vperm.slane %v6089, %v4458
      %v6823 = vsel %vm4460, %v6822, %v6821
      %v6824 = vperm.slane %v6092, %v4400
      %v6825 = vperm.slane %v6095, %v4402
      %v6826 = vsel %vm4404, %v6825, %v6824
      %v6827 = vperm.slane %v6098, %v4406
      %v6828 = vsel %vm4408, %v6827, %v6826
      %v6829 = vperm.slane %v6101, %v4410
      %v6830 = vsel %vm4412, %v6829, %v6828
      %v6831 = vperm.slane %v6104, %v4414
      %v6832 = vsel %vm4416, %v6831, %v6830
      %v6833 = vperm.slane %v6107, %v4418
      %v6834 = vsel %vm4420, %v6833, %v6832
      %v6835 = vperm.slane %v6110, %v4422
      %v6836 = vsel %vm4424, %v6835, %v6834
      %v6837 = vperm.slane %v6113, %v4426
      %v6838 = vsel %vm4428, %v6837, %v6836
      %v6839 = vperm.slane %v6116, %v4430
      %v6840 = vsel %vm4432, %v6839, %v6838
      %v6841 = vperm.slane %v6119, %v4434
      %v6842 = vsel %vm4436, %v6841, %v6840
      %v6843 = vperm.slane %v6122, %v4438
      %v6844 = vsel %vm4440, %v6843, %v6842
      %v6845 = vperm.slane %v6125, %v4442
      %v6846 = vsel %vm4444, %v6845, %v6844
      %v6847 = vperm.slane %v6128, %v4446
      %v6848 = vsel %vm4448, %v6847, %v6846
      %v6849 = vperm.slane %v6131, %v4450
      %v6850 = vsel %vm4452, %v6849, %v6848
      %v6851 = vperm.slane %v6134, %v4454
      %v6852 = vsel %vm4456, %v6851, %v6850
      %v6853 = vperm.slane %v6137, %v4458
      %v6854 = vsel %vm4460, %v6853, %v6852
      %v6855 = vperm.slane %v6140, %v4400
      %v6856 = vperm.slane %v6143, %v4402
      %v6857 = vsel %vm4404, %v6856, %v6855
      %v6858 = vperm.slane %v6146, %v4406
      %v6859 = vsel %vm4408, %v6858, %v6857
      %v6860 = vperm.slane %v6149, %v4410
      %v6861 = vsel %vm4412, %v6860, %v6859
      %v6862 = vperm.slane %v6152, %v4414
      %v6863 = vsel %vm4416, %v6862, %v6861
      %v6864 = vperm.slane %v6155, %v4418
      %v6865 = vsel %vm4420, %v6864, %v6863
      %v6866 = vperm.slane %v6158, %v4422
      %v6867 = vsel %vm4424, %v6866, %v6865
      %v6868 = vperm.slane %v6161, %v4426
      %v6869 = vsel %vm4428, %v6868, %v6867
      %v6870 = vperm.slane %v6164, %v4430
      %v6871 = vsel %vm4432, %v6870, %v6869
      %v6872 = vperm.slane %v6167, %v4434
      %v6873 = vsel %vm4436, %v6872, %v6871
      %v6874 = vperm.slane %v6170, %v4438
      %v6875 = vsel %vm4440, %v6874, %v6873
      %v6876 = vperm.slane %v6173, %v4442
      %v6877 = vsel %vm4444, %v6876, %v6875
      %v6878 = vperm.slane %v6176, %v4446
      %v6879 = vsel %vm4448, %v6878, %v6877
      %v6880 = vperm.slane %v6179, %v4450
      %v6881 = vsel %vm4452, %v6880, %v6879
      %v6882 = vperm.slane %v6182, %v4454
      %v6883 = vsel %vm4456, %v6882, %v6881
      %v6884 = vperm.slane %v6185, %v4458
      %v6885 = vsel %vm4460, %v6884, %v6883
      %v6886 = vperm.slane %v6188, %v4400
      %v6887 = vperm.slane %v6191, %v4402
      %v6888 = vsel %vm4404, %v6887, %v6886
      %v6889 = vperm.slane %v6194, %v4406
      %v6890 = vsel %vm4408, %v6889, %v6888
      %v6891 = vperm.slane %v6197, %v4410
      %v6892 = vsel %vm4412, %v6891, %v6890
      %v6893 = vperm.slane %v6200, %v4414
      %v6894 = vsel %vm4416, %v6893, %v6892
      %v6895 = vperm.slane %v6203, %v4418
      %v6896 = vsel %vm4420, %v6895, %v6894
      %v6897 = vperm.slane %v6206, %v4422
      %v6898 = vsel %vm4424, %v6897, %v6896
      %v6899 = vperm.slane %v6209, %v4426
      %v6900 = vsel %vm4428, %v6899, %v6898
      %v6901 = vperm.slane %v6212, %v4430
      %v6902 = vsel %vm4432, %v6901, %v6900
      %v6903 = vperm.slane %v6215, %v4434
      %v6904 = vsel %vm4436, %v6903, %v6902
      %v6905 = vperm.slane %v6218, %v4438
      %v6906 = vsel %vm4440, %v6905, %v6904
      %v6907 = vperm.slane %v6221, %v4442
      %v6908 = vsel %vm4444, %v6907, %v6906
      %v6909 = vperm.slane %v6224, %v4446
      %v6910 = vsel %vm4448, %v6909, %v6908
      %v6911 = vperm.slane %v6227, %v4450
      %v6912 = vsel %vm4452, %v6911, %v6910
      %v6913 = vperm.slane %v6230, %v4454
      %v6914 = vsel %vm4456, %v6913, %v6912
      %v6915 = vperm.slane %v6233, %v4458
      %v6916 = vsel %vm4460, %v6915, %v6914
      %v6917 = vperm.slane %v6236, %v4400
      %v6918 = vperm.slane %v6239, %v4402
      %v6919 = vsel %vm4404, %v6918, %v6917
      %v6920 = vperm.slane %v6242, %v4406
      %v6921 = vsel %vm4408, %v6920, %v6919
      %v6922 = vperm.slane %v6245, %v4410
      %v6923 = vsel %vm4412, %v6922, %v6921
      %v6924 = vperm.slane %v6248, %v4414
      %v6925 = vsel %vm4416, %v6924, %v6923
      %v6926 = vperm.slane %v6251, %v4418
      %v6927 = vsel %vm4420, %v6926, %v6925
      %v6928 = vperm.slane %v6254, %v4422
      %v6929 = vsel %vm4424, %v6928, %v6927
      %v6930 = vperm.slane %v6257, %v4426
      %v6931 = vsel %vm4428, %v6930, %v6929
      %v6932 = vperm.slane %v6260, %v4430
      %v6933 = vsel %vm4432, %v6932, %v6931
      %v6934 = vperm.slane %v6263, %v4434
      %v6935 = vsel %vm4436, %v6934, %v6933
      %v6936 = vperm.slane %v6266, %v4438
      %v6937 = vsel %vm4440, %v6936, %v6935
      %v6938 = vperm.slane %v6269, %v4442
      %v6939 = vsel %vm4444, %v6938, %v6937
      %v6940 = vperm.slane %v6272, %v4446
      %v6941 = vsel %vm4448, %v6940, %v6939
      %v6942 = vperm.slane %v6275, %v4450
      %v6943 = vsel %vm4452, %v6942, %v6941
      %v6944 = vperm.slane %v6278, %v4454
      %v6945 = vsel %vm4456, %v6944, %v6943
      %v6946 = vperm.slane %v6281, %v4458
      %v6947 = vsel %vm4460, %v6946, %v6945
      %v6948 = vperm.slane %v6284, %v4400
      %v6949 = vperm.slane %v6287, %v4402
      %v6950 = vsel %vm4404, %v6949, %v6948
      %v6951 = vperm.slane %v6290, %v4406
      %v6952 = vsel %vm4408, %v6951, %v6950
      %v6953 = vperm.slane %v6293, %v4410
      %v6954 = vsel %vm4412, %v6953, %v6952
      %v6955 = vperm.slane %v6296, %v4414
      %v6956 = vsel %vm4416, %v6955, %v6954
      %v6957 = vperm.slane %v6299, %v4418
      %v6958 = vsel %vm4420, %v6957, %v6956
      %v6959 = vperm.slane %v6302, %v4422
      %v6960 = vsel %vm4424, %v6959, %v6958
      %v6961 = vperm.slane %v6305, %v4426
      %v6962 = vsel %vm4428, %v6961, %v6960
      %v6963 = vperm.slane %v6308, %v4430
      %v6964 = vsel %vm4432, %v6963, %v6962
      %v6965 = vperm.slane %v6311, %v4434
      %v6966 = vsel %vm4436, %v6965, %v6964
      %v6967 = vperm.slane %v6314, %v4438
      %v6968 = vsel %vm4440, %v6967, %v6966
      %v6969 = vperm.slane %v6317, %v4442
      %v6970 = vsel %vm4444, %v6969, %v6968
      %v6971 = vperm.slane %v6320, %v4446
      %v6972 = vsel %vm4448, %v6971, %v6970
      %v6973 = vperm.slane %v6323, %v4450
      %v6974 = vsel %vm4452, %v6973, %v6972
      %v6975 = vperm.slane %v6326, %v4454
      %v6976 = vsel %vm4456, %v6975, %v6974
      %v6977 = vperm.slane %v6329, %v4458
      %v6978 = vsel %vm4460, %v6977, %v6976
      %v6979 = vperm.slane %v6332, %v4400
      %v6980 = vperm.slane %v6335, %v4402
      %v6981 = vsel %vm4404, %v6980, %v6979
      %v6982 = vperm.slane %v6338, %v4406
      %v6983 = vsel %vm4408, %v6982, %v6981
      %v6984 = vperm.slane %v6341, %v4410
      %v6985 = vsel %vm4412, %v6984, %v6983
      %v6986 = vperm.slane %v6344, %v4414
      %v6987 = vsel %vm4416, %v6986, %v6985
      %v6988 = vperm.slane %v6347, %v4418
      %v6989 = vsel %vm4420, %v6988, %v6987
      %v6990 = vperm.slane %v6350, %v4422
      %v6991 = vsel %vm4424, %v6990, %v6989
      %v6992 = vperm.slane %v6353, %v4426
      %v6993 = vsel %vm4428, %v6992, %v6991
      %v6994 = vperm.slane %v6356, %v4430
      %v6995 = vsel %vm4432, %v6994, %v6993
      %v6996 = vperm.slane %v6359, %v4434
      %v6997 = vsel %vm4436, %v6996, %v6995
      %v6998 = vperm.slane %v6362, %v4438
      %v6999 = vsel %vm4440, %v6998, %v6997
      %v7000 = vperm.slane %v6365, %v4442
      %v7001 = vsel %vm4444, %v7000, %v6999
      %v7002 = vperm.slane %v6368, %v4446
      %v7003 = vsel %vm4448, %v7002, %v7001
      %v7004 = vperm.slane %v6371, %v4450
      %v7005 = vsel %vm4452, %v7004, %v7003
      %v7006 = vperm.slane %v6374, %v4454
      %v7007 = vsel %vm4456, %v7006, %v7005
      %v7008 = vperm.slane %v6377, %v4458
      %v7009 = vsel %vm4460, %v7008, %v7007
      %v7010 = vperm.slane %v6380, %v4400
      %v7011 = vperm.slane %v6383, %v4402
      %v7012 = vsel %vm4404, %v7011, %v7010
      %v7013 = vperm.slane %v6386, %v4406
      %v7014 = vsel %vm4408, %v7013, %v7012
      %v7015 = vperm.slane %v6389, %v4410
      %v7016 = vsel %vm4412, %v7015, %v7014
      %v7017 = vperm.slane %v6392, %v4414
      %v7018 = vsel %vm4416, %v7017, %v7016
      %v7019 = vperm.slane %v6395, %v4418
      %v7020 = vsel %vm4420, %v7019, %v7018
      %v7021 = vperm.slane %v6398, %v4422
      %v7022 = vsel %vm4424, %v7021, %v7020
      %v7023 = vperm.slane %v6401, %v4426
      %v7024 = vsel %vm4428, %v7023, %v7022
      %v7025 = vperm.slane %v6404, %v4430
      %v7026 = vsel %vm4432, %v7025, %v7024
      %v7027 = vperm.slane %v6407, %v4434
      %v7028 = vsel %vm4436, %v7027, %v7026
      %v7029 = vperm.slane %v6410, %v4438
      %v7030 = vsel %vm4440, %v7029, %v7028
      %v7031 = vperm.slane %v6413, %v4442
      %v7032 = vsel %vm4444, %v7031, %v7030
      %v7033 = vperm.slane %v6416, %v4446
      %v7034 = vsel %vm4448, %v7033, %v7032
      %v7035 = vperm.slane %v6419, %v4450
      %v7036 = vsel %vm4452, %v7035, %v7034
      %v7037 = vperm.slane %v6422, %v4454
      %v7038 = vsel %vm4456, %v7037, %v7036
      %v7039 = vperm.slane %v6425, %v4458
      %v7040 = vsel %vm4460, %v7039, %v7038
      %v7041 = vperm.slane %v6428, %v4400
      %v7042 = vperm.slane %v6431, %v4402
      %v7043 = vsel %vm4404, %v7042, %v7041
      %v7044 = vperm.slane %v6434, %v4406
      %v7045 = vsel %vm4408, %v7044, %v7043
      %v7046 = vperm.slane %v6437, %v4410
      %v7047 = vsel %vm4412, %v7046, %v7045
      %v7048 = vperm.slane %v6440, %v4414
      %v7049 = vsel %vm4416, %v7048, %v7047
      %v7050 = vperm.slane %v6443, %v4418
      %v7051 = vsel %vm4420, %v7050, %v7049
      %v7052 = vperm.slane %v6446, %v4422
      %v7053 = vsel %vm4424, %v7052, %v7051
      %v7054 = vperm.slane %v6449, %v4426
      %v7055 = vsel %vm4428, %v7054, %v7053
      %v7056 = vperm.slane %v6452, %v4430
      %v7057 = vsel %vm4432, %v7056, %v7055
      %v7058 = vperm.slane %v6455, %v4434
      %v7059 = vsel %vm4436, %v7058, %v7057
      %v7060 = vperm.slane %v6458, %v4438
      %v7061 = vsel %vm4440, %v7060, %v7059
      %v7062 = vperm.slane %v6461, %v4442
      %v7063 = vsel %vm4444, %v7062, %v7061
      %v7064 = vperm.slane %v6464, %v4446
      %v7065 = vsel %vm4448, %v7064, %v7063
      %v7066 = vperm.slane %v6467, %v4450
      %v7067 = vsel %vm4452, %v7066, %v7065
      %v7068 = vperm.slane %v6470, %v4454
      %v7069 = vsel %vm4456, %v7068, %v7067
      %v7070 = vperm.slane %v6473, %v4458
      %v7071 = vsel %vm4460, %v7070, %v7069
      %v7072 = vperm.slane %v6476, %v4400
      %v7073 = vperm.slane %v6479, %v4402
      %v7074 = vsel %vm4404, %v7073, %v7072
      %v7075 = vperm.slane %v6482, %v4406
      %v7076 = vsel %vm4408, %v7075, %v7074
      %v7077 = vperm.slane %v6485, %v4410
      %v7078 = vsel %vm4412, %v7077, %v7076
      %v7079 = vperm.slane %v6488, %v4414
      %v7080 = vsel %vm4416, %v7079, %v7078
      %v7081 = vperm.slane %v6491, %v4418
      %v7082 = vsel %vm4420, %v7081, %v7080
      %v7083 = vperm.slane %v6494, %v4422
      %v7084 = vsel %vm4424, %v7083, %v7082
      %v7085 = vperm.slane %v6497, %v4426
      %v7086 = vsel %vm4428, %v7085, %v7084
      %v7087 = vperm.slane %v6500, %v4430
      %v7088 = vsel %vm4432, %v7087, %v7086
      %v7089 = vperm.slane %v6503, %v4434
      %v7090 = vsel %vm4436, %v7089, %v7088
      %v7091 = vperm.slane %v6506, %v4438
      %v7092 = vsel %vm4440, %v7091, %v7090
      %v7093 = vperm.slane %v6509, %v4442
      %v7094 = vsel %vm4444, %v7093, %v7092
      %v7095 = vperm.slane %v6512, %v4446
      %v7096 = vsel %vm4448, %v7095, %v7094
      %v7097 = vperm.slane %v6515, %v4450
      %v7098 = vsel %vm4452, %v7097, %v7096
      %v7099 = vperm.slane %v6518, %v4454
      %v7100 = vsel %vm4456, %v7099, %v7098
      %v7101 = vperm.slane %v6521, %v4458
      %v7102 = vsel %vm4460, %v7101, %v7100
      %v7103 = vperm.slane %v6524, %v4400
      %v7104 = vperm.slane %v6527, %v4402
      %v7105 = vsel %vm4404, %v7104, %v7103
      %v7106 = vperm.slane %v6530, %v4406
      %v7107 = vsel %vm4408, %v7106, %v7105
      %v7108 = vperm.slane %v6533, %v4410
      %v7109 = vsel %vm4412, %v7108, %v7107
      %v7110 = vperm.slane %v6536, %v4414
      %v7111 = vsel %vm4416, %v7110, %v7109
      %v7112 = vperm.slane %v6539, %v4418
      %v7113 = vsel %vm4420, %v7112, %v7111
      %v7114 = vperm.slane %v6542, %v4422
      %v7115 = vsel %vm4424, %v7114, %v7113
      %v7116 = vperm.slane %v6545, %v4426
      %v7117 = vsel %vm4428, %v7116, %v7115
      %v7118 = vperm.slane %v6548, %v4430
      %v7119 = vsel %vm4432, %v7118, %v7117
      %v7120 = vperm.slane %v6551, %v4434
      %v7121 = vsel %vm4436, %v7120, %v7119
      %v7122 = vperm.slane %v6554, %v4438
      %v7123 = vsel %vm4440, %v7122, %v7121
      %v7124 = vperm.slane %v6557, %v4442
      %v7125 = vsel %vm4444, %v7124, %v7123
      %v7126 = vperm.slane %v6560, %v4446
      %v7127 = vsel %vm4448, %v7126, %v7125
      %v7128 = vperm.slane %v6563, %v4450
      %v7129 = vsel %vm4452, %v7128, %v7127
      %v7130 = vperm.slane %v6566, %v4454
      %v7131 = vsel %vm4456, %v7130, %v7129
      %v7132 = vperm.slane %v6569, %v4458
      %v7133 = vsel %vm4460, %v7132, %v7131
      %v7134 = vperm.slane %v6572, %v4400
      %v7135 = vperm.slane %v6575, %v4402
      %v7136 = vsel %vm4404, %v7135, %v7134
      %v7137 = vperm.slane %v6578, %v4406
      %v7138 = vsel %vm4408, %v7137, %v7136
      %v7139 = vperm.slane %v6581, %v4410
      %v7140 = vsel %vm4412, %v7139, %v7138
      %v7141 = vperm.slane %v6584, %v4414
      %v7142 = vsel %vm4416, %v7141, %v7140
      %v7143 = vperm.slane %v6587, %v4418
      %v7144 = vsel %vm4420, %v7143, %v7142
      %v7145 = vperm.slane %v6590, %v4422
      %v7146 = vsel %vm4424, %v7145, %v7144
      %v7147 = vperm.slane %v6593, %v4426
      %v7148 = vsel %vm4428, %v7147, %v7146
      %v7149 = vperm.slane %v6596, %v4430
      %v7150 = vsel %vm4432, %v7149, %v7148
      %v7151 = vperm.slane %v6599, %v4434
      %v7152 = vsel %vm4436, %v7151, %v7150
      %v7153 = vperm.slane %v6602, %v4438
      %v7154 = vsel %vm4440, %v7153, %v7152
      %v7155 = vperm.slane %v6605, %v4442
      %v7156 = vsel %vm4444, %v7155, %v7154
      %v7157 = vperm.slane %v6608, %v4446
      %v7158 = vsel %vm4448, %v7157, %v7156
      %v7159 = vperm.slane %v6611, %v4450
      %v7160 = vsel %vm4452, %v7159, %v7158
      %v7161 = vperm.slane %v6614, %v4454
      %v7162 = vsel %vm4456, %v7161, %v7160
      %v7163 = vperm.slane %v6617, %v4458
      %v7164 = vsel %vm4460, %v7163, %v7162
      %v7165 = vperm.slane %v6620, %v4400
      %v7166 = vperm.slane %v6623, %v4402
      %v7167 = vsel %vm4404, %v7166, %v7165
      %v7168 = vperm.slane %v6626, %v4406
      %v7169 = vsel %vm4408, %v7168, %v7167
      %v7170 = vperm.slane %v6629, %v4410
      %v7171 = vsel %vm4412, %v7170, %v7169
      %v7172 = vperm.slane %v6632, %v4414
      %v7173 = vsel %vm4416, %v7172, %v7171
      %v7174 = vperm.slane %v6635, %v4418
      %v7175 = vsel %vm4420, %v7174, %v7173
      %v7176 = vperm.slane %v6638, %v4422
      %v7177 = vsel %vm4424, %v7176, %v7175
      %v7178 = vperm.slane %v6641, %v4426
      %v7179 = vsel %vm4428, %v7178, %v7177
      %v7180 = vperm.slane %v6644, %v4430
      %v7181 = vsel %vm4432, %v7180, %v7179
      %v7182 = vperm.slane %v6647, %v4434
      %v7183 = vsel %vm4436, %v7182, %v7181
      %v7184 = vperm.slane %v6650, %v4438
      %v7185 = vsel %vm4440, %v7184, %v7183
      %v7186 = vperm.slane %v6653, %v4442
      %v7187 = vsel %vm4444, %v7186, %v7185
      %v7188 = vperm.slane %v6656, %v4446
      %v7189 = vsel %vm4448, %v7188, %v7187
      %v7190 = vperm.slane %v6659, %v4450
      %v7191 = vsel %vm4452, %v7190, %v7189
      %v7192 = vperm.slane %v6662, %v4454
      %v7193 = vsel %vm4456, %v7192, %v7191
      %v7194 = vperm.slane %v6665, %v4458
      %v7195 = vsel %vm4460, %v7194, %v7193
      %v7196 = vperm.slane %v6668, %v4400
      %v7197 = vperm.slane %v6671, %v4402
      %v7198 = vsel %vm4404, %v7197, %v7196
      %v7199 = vperm.slane %v6674, %v4406
      %v7200 = vsel %vm4408, %v7199, %v7198
      %v7201 = vperm.slane %v6677, %v4410
      %v7202 = vsel %vm4412, %v7201, %v7200
      %v7203 = vperm.slane %v6680, %v4414
      %v7204 = vsel %vm4416, %v7203, %v7202
      %v7205 = vperm.slane %v6683, %v4418
      %v7206 = vsel %vm4420, %v7205, %v7204
      %v7207 = vperm.slane %v6686, %v4422
      %v7208 = vsel %vm4424, %v7207, %v7206
      %v7209 = vperm.slane %v6689, %v4426
      %v7210 = vsel %vm4428, %v7209, %v7208
      %v7211 = vperm.slane %v6692, %v4430
      %v7212 = vsel %vm4432, %v7211, %v7210
      %v7213 = vperm.slane %v6695, %v4434
      %v7214 = vsel %vm4436, %v7213, %v7212
      %v7215 = vperm.slane %v6698, %v4438
      %v7216 = vsel %vm4440, %v7215, %v7214
      %v7217 = vperm.slane %v6701, %v4442
      %v7218 = vsel %vm4444, %v7217, %v7216
      %v7219 = vperm.slane %v6704, %v4446
      %v7220 = vsel %vm4448, %v7219, %v7218
      %v7221 = vperm.slane %v6707, %v4450
      %v7222 = vsel %vm4452, %v7221, %v7220
      %v7223 = vperm.slane %v6710, %v4454
      %v7224 = vsel %vm4456, %v7223, %v7222
      %v7225 = vperm.slane %v6713, %v4458
      %v7226 = vsel %vm4460, %v7225, %v7224
      %v7227 = vperm.slane %v6716, %v4400
      %v7228 = vperm.slane %v6719, %v4402
      %v7229 = vsel %vm4404, %v7228, %v7227
      %v7230 = vperm.slane %v6722, %v4406
      %v7231 = vsel %vm4408, %v7230, %v7229
      %v7232 = vperm.slane %v6725, %v4410
      %v7233 = vsel %vm4412, %v7232, %v7231
      %v7234 = vperm.slane %v6728, %v4414
      %v7235 = vsel %vm4416, %v7234, %v7233
      %v7236 = vperm.slane %v6731, %v4418
      %v7237 = vsel %vm4420, %v7236, %v7235
      %v7238 = vperm.slane %v6734, %v4422
      %v7239 = vsel %vm4424, %v7238, %v7237
      %v7240 = vperm.slane %v6737, %v4426
      %v7241 = vsel %vm4428, %v7240, %v7239
      %v7242 = vperm.slane %v6740, %v4430
      %v7243 = vsel %vm4432, %v7242, %v7241
      %v7244 = vperm.slane %v6743, %v4434
      %v7245 = vsel %vm4436, %v7244, %v7243
      %v7246 = vperm.slane %v6746, %v4438
      %v7247 = vsel %vm4440, %v7246, %v7245
      %v7248 = vperm.slane %v6749, %v4442
      %v7249 = vsel %vm4444, %v7248, %v7247
      %v7250 = vperm.slane %v6752, %v4446
      %v7251 = vsel %vm4448, %v7250, %v7249
      %v7252 = vperm.slane %v6755, %v4450
      %v7253 = vsel %vm4452, %v7252, %v7251
      %v7254 = vperm.slane %v6758, %v4454
      %v7255 = vsel %vm4456, %v7254, %v7253
      %v7256 = vperm.slane %v6761, %v4458
      %v7257 = vsel %vm4460, %v7256, %v7255
      %v7258 = vsel %vm4927, %v6854, %v6792
      %v7259 = vsel %vm4929, %v6916, %v7258
      %v7260 = vsel %vm4931, %v6978, %v7259
      %v7261 = vsel %vm4933, %v7040, %v7260
      %v7262 = vsel %vm4935, %v7102, %v7261
      %v7263 = vsel %vm4937, %v7164, %v7262
      %v7264 = vsel %vm4939, %v7226, %v7263
      %v7265 = vsel %vm4927, %v6885, %v6823
      %v7266 = vsel %vm4929, %v6947, %v7265
      %v7267 = vsel %vm4931, %v7009, %v7266
      %v7268 = vsel %vm4933, %v7071, %v7267
      %v7269 = vsel %vm4935, %v7133, %v7268
      %v7270 = vsel %vm4937, %v7195, %v7269
      %v7271 = vsel %vm4939, %v7257, %v7270
      %v7274 = vadd.f32 %v7264, %v7271
      %7275 = vadd.xlane.f32.xlu0 %v7274
      %v7276 = vpop.xlane.xlu0 %7275
      %v7278 = vperm.slane %v7276, 0
      %v7279 = vperm.slane %v7276, 1
      %v7280 = vperm.slane %v7276, 2
      %v7281 = vperm.slane %v7276, 3
      %v7282 = vperm.slane %v7276, 4
      %v7283 = vperm.slane %v7276, 5
      %v7284 = vperm.slane %v7276, 6
      %v7285 = vperm.slane %v7276, 7
      %v7294 = vrcp.pop %v7278
      %v7295 = vmul.f32 %v7278, %v7294
      %v7296 = vsub.f32 1.0, %v7295
      %v7297 = vmul.f32 %v7294, %v7296
      %v7298 = vadd.f32 %v7294, %v7297
      %vm7299 = vweird.f32 %v7278
      %vm7300 = vweird.f32 %v7294
      %vm7301 = vmor %vm7299, %vm7300
      %v7302 = vsel %vm7301, %v7294, %v7298
      %v7303 = vand.u32 2147483647, %v7278
      %vm7304 = vcmp.eq.f32.partialorder %v7303, 8.507059e+37
      %v7305 = vand.u32 %v7278, 2147483648
      %v7306 = vor.u32 1.1754944e-38, %v7305
      %v7307 = vsel %vm7304, %v7306, %v7302
      %v7308 = vmul.f32 %v5227, %v7307
      %v7309 = vmul.f32 %v5229, %v7307
      %v7310 = vmul.f32 %v5231, %v7307
      %v7311 = vmul.f32 %v5233, %v7307
      %v7312 = vmul.f32 %v5235, %v7307
      %v7313 = vmul.f32 %v5237, %v7307
      %v7314 = vmul.f32 %v5239, %v7307
      %v7315 = vmul.f32 %v5241, %v7307
      %v7316 = vmul.f32 %v5243, %v7307
      %v7317 = vmul.f32 %v5245, %v7307
      %v7318 = vmul.f32 %v5247, %v7307
      %v7319 = vmul.f32 %v5249, %v7307
      %v7320 = vmul.f32 %v5251, %v7307
      %v7321 = vmul.f32 %v5253, %v7307
      %v7322 = vmul.f32 %v5255, %v7307
      %v7323 = vmul.f32 %v5257, %v7307
      %v7324 = vmul.f32 %v5259, %v7307
      %v7325 = vmul.f32 %v5261, %v7307
      %v7326 = vmul.f32 %v5263, %v7307
      %v7327 = vmul.f32 %v5265, %v7307
      %v7328 = vmul.f32 %v5267, %v7307
      %v7329 = vmul.f32 %v5269, %v7307
      %v7330 = vmul.f32 %v5271, %v7307
      %v7331 = vmul.f32 %v5273, %v7307
      %v7332 = vmul.f32 %v5275, %v7307
      %v7333 = vmul.f32 %v5277, %v7307
      %v7334 = vmul.f32 %v5279, %v7307
      %v7335 = vmul.f32 %v5281, %v7307
      %v7336 = vmul.f32 %v5283, %v7307
      %v7337 = vmul.f32 %v5285, %v7307
      %v7338 = vmul.f32 %v5287, %v7307
      %v7339 = vmul.f32 %v5289, %v7307
      %v7340 = vrcp.pop %v7279
      %v7341 = vmul.f32 %v7279, %v7340
      %v7342 = vsub.f32 1.0, %v7341
      %v7343 = vmul.f32 %v7340, %v7342
      %v7344 = vadd.f32 %v7340, %v7343
      %vm7345 = vweird.f32 %v7279
      %vm7346 = vweird.f32 %v7340
      %vm7347 = vmor %vm7345, %vm7346
      %v7348 = vsel %vm7347, %v7340, %v7344
      %v7349 = vand.u32 2147483647, %v7279
      %vm7350 = vcmp.eq.f32.partialorder %v7349, 8.507059e+37
      %v7351 = vand.u32 %v7279, 2147483648
      %v7352 = vor.u32 1.1754944e-38, %v7351
      %v7353 = vsel %vm7350, %v7352, %v7348
      %v7354 = vmul.f32 %v5291, %v7353
      %v7355 = vmul.f32 %v5293, %v7353
      %v7356 = vmul.f32 %v5295, %v7353
      %v7357 = vmul.f32 %v5297, %v7353
      %v7358 = vmul.f32 %v5299, %v7353
      %v7359 = vmul.f32 %v5301, %v7353
      %v7360 = vmul.f32 %v5303, %v7353
      %v7361 = vmul.f32 %v5305, %v7353
      %v7362 = vmul.f32 %v5307, %v7353
      %v7363 = vmul.f32 %v5309, %v7353
      %v7364 = vmul.f32 %v5311, %v7353
      %v7365 = vmul.f32 %v5313, %v7353
      %v7366 = vmul.f32 %v5315, %v7353
      %v7367 = vmul.f32 %v5317, %v7353
      %v7368 = vmul.f32 %v5319, %v7353
      %v7369 = vmul.f32 %v5321, %v7353
      %v7370 = vmul.f32 %v5323, %v7353
      %v7371 = vmul.f32 %v5325, %v7353
      %v7372 = vmul.f32 %v5327, %v7353
      %v7373 = vmul.f32 %v5329, %v7353
      %v7374 = vmul.f32 %v5331, %v7353
      %v7375 = vmul.f32 %v5333, %v7353
      %v7376 = vmul.f32 %v5335, %v7353
      %v7377 = vmul.f32 %v5337, %v7353
      %v7378 = vmul.f32 %v5339, %v7353
      %v7379 = vmul.f32 %v5341, %v7353
      %v7380 = vmul.f32 %v5343, %v7353
      %v7381 = vmul.f32 %v5345, %v7353
      %v7382 = vmul.f32 %v5347, %v7353
      %v7383 = vmul.f32 %v5349, %v7353
      %v7384 = vmul.f32 %v5351, %v7353
      %v7385 = vmul.f32 %v5353, %v7353
      %v7386 = vrcp.pop %v7280
      %v7387 = vmul.f32 %v7280, %v7386
      %v7388 = vsub.f32 1.0, %v7387
      %v7389 = vmul.f32 %v7386, %v7388
      %v7390 = vadd.f32 %v7386, %v7389
      %vm7391 = vweird.f32 %v7280
      %vm7392 = vweird.f32 %v7386
      %vm7393 = vmor %vm7391, %vm7392
      %v7394 = vsel %vm7393, %v7386, %v7390
      %v7395 = vand.u32 2147483647, %v7280
      %vm7396 = vcmp.eq.f32.partialorder %v7395, 8.507059e+37
      %v7397 = vand.u32 %v7280, 2147483648
      %v7398 = vor.u32 1.1754944e-38, %v7397
      %v7399 = vsel %vm7396, %v7398, %v7394
      %v7400 = vmul.f32 %v5355, %v7399
      %v7401 = vmul.f32 %v5357, %v7399
      %v7402 = vmul.f32 %v5359, %v7399
      %v7403 = vmul.f32 %v5361, %v7399
      %v7404 = vmul.f32 %v5363, %v7399
      %v7405 = vmul.f32 %v5365, %v7399
      %v7406 = vmul.f32 %v5367, %v7399
      %v7407 = vmul.f32 %v5369, %v7399
      %v7408 = vmul.f32 %v5371, %v7399
      %v7409 = vmul.f32 %v5373, %v7399
      %v7410 = vmul.f32 %v5375, %v7399
      %v7411 = vmul.f32 %v5377, %v7399
      %v7412 = vmul.f32 %v5379, %v7399
      %v7413 = vmul.f32 %v5381, %v7399
      %v7414 = vmul.f32 %v5383, %v7399
      %v7415 = vmul.f32 %v5385, %v7399
      %v7416 = vmul.f32 %v5387, %v7399
      %v7417 = vmul.f32 %v5389, %v7399
      %v7418 = vmul.f32 %v5391, %v7399
      %v7419 = vmul.f32 %v5393, %v7399
      %v7420 = vmul.f32 %v5395, %v7399
      %v7421 = vmul.f32 %v5397, %v7399
      %v7422 = vmul.f32 %v5399, %v7399
      %v7423 = vmul.f32 %v5401, %v7399
      %v7424 = vmul.f32 %v5403, %v7399
      %v7425 = vmul.f32 %v5405, %v7399
      %v7426 = vmul.f32 %v5407, %v7399
      %v7427 = vmul.f32 %v5409, %v7399
      %v7428 = vmul.f32 %v5411, %v7399
      %v7429 = vmul.f32 %v5413, %v7399
      %v7430 = vmul.f32 %v5415, %v7399
      %v7431 = vmul.f32 %v5417, %v7399
      %v7432 = vrcp.pop %v7281
      %v7433 = vmul.f32 %v7281, %v7432
      %v7434 = vsub.f32 1.0, %v7433
      %v7435 = vmul.f32 %v7432, %v7434
      %v7436 = vadd.f32 %v7432, %v7435
      %vm7437 = vweird.f32 %v7281
      %vm7438 = vweird.f32 %v7432
      %vm7439 = vmor %vm7437, %vm7438
      %v7440 = vsel %vm7439, %v7432, %v7436
      %v7441 = vand.u32 2147483647, %v7281
      %vm7442 = vcmp.eq.f32.partialorder %v7441, 8.507059e+37
      %v7443 = vand.u32 %v7281, 2147483648
      %v7444 = vor.u32 1.1754944e-38, %v7443
      %v7445 = vsel %vm7442, %v7444, %v7440
      %v7446 = vmul.f32 %v5419, %v7445
      %v7447 = vmul.f32 %v5421, %v7445
      %v7448 = vmul.f32 %v5423, %v7445
      %v7449 = vmul.f32 %v5425, %v7445
      %v7450 = vmul.f32 %v5427, %v7445
      %v7451 = vmul.f32 %v5429, %v7445
      %v7452 = vmul.f32 %v5431, %v7445
      %v7453 = vmul.f32 %v5433, %v7445
      %v7454 = vmul.f32 %v5435, %v7445
      %v7455 = vmul.f32 %v5437, %v7445
      %v7456 = vmul.f32 %v5439, %v7445
      %v7457 = vmul.f32 %v5441, %v7445
      %v7458 = vmul.f32 %v5443, %v7445
      %v7459 = vmul.f32 %v5445, %v7445
      %v7460 = vmul.f32 %v5447, %v7445
      %v7461 = vmul.f32 %v5449, %v7445
      %v7462 = vmul.f32 %v5451, %v7445
      %v7463 = vmul.f32 %v5453, %v7445
      %v7464 = vmul.f32 %v5455, %v7445
      %v7465 = vmul.f32 %v5457, %v7445
      %v7466 = vmul.f32 %v5459, %v7445
      %v7467 = vmul.f32 %v5461, %v7445
      %v7468 = vmul.f32 %v5463, %v7445
      %v7469 = vmul.f32 %v5465, %v7445
      %v7470 = vmul.f32 %v5467, %v7445
      %v7471 = vmul.f32 %v5469, %v7445
      %v7472 = vmul.f32 %v5471, %v7445
      %v7473 = vmul.f32 %v5473, %v7445
      %v7474 = vmul.f32 %v5475, %v7445
      %v7475 = vmul.f32 %v5477, %v7445
      %v7476 = vmul.f32 %v5479, %v7445
      %v7477 = vmul.f32 %v5481, %v7445
      %v7478 = vrcp.pop %v7282
      %v7479 = vmul.f32 %v7282, %v7478
      %v7480 = vsub.f32 1.0, %v7479
      %v7481 = vmul.f32 %v7478, %v7480
      %v7482 = vadd.f32 %v7478, %v7481
      %vm7483 = vweird.f32 %v7282
      %vm7484 = vweird.f32 %v7478
      %vm7485 = vmor %vm7483, %vm7484
      %v7486 = vsel %vm7485, %v7478, %v7482
      %v7487 = vand.u32 2147483647, %v7282
      %vm7488 = vcmp.eq.f32.partialorder %v7487, 8.507059e+37
      %v7489 = vand.u32 %v7282, 2147483648
      %v7490 = vor.u32 1.1754944e-38, %v7489
      %v7491 = vsel %vm7488, %v7490, %v7486
      %v7492 = vmul.f32 %v5483, %v7491
      %v7493 = vmul.f32 %v5485, %v7491
      %v7494 = vmul.f32 %v5487, %v7491
      %v7495 = vmul.f32 %v5489, %v7491
      %v7496 = vmul.f32 %v5491, %v7491
      %v7497 = vmul.f32 %v5493, %v7491
      %v7498 = vmul.f32 %v5495, %v7491
      %v7499 = vmul.f32 %v5497, %v7491
      %v7500 = vmul.f32 %v5499, %v7491
      %v7501 = vmul.f32 %v5501, %v7491
      %v7502 = vmul.f32 %v5503, %v7491
      %v7503 = vmul.f32 %v5505, %v7491
      %v7504 = vmul.f32 %v5507, %v7491
      %v7505 = vmul.f32 %v5509, %v7491
      %v7506 = vmul.f32 %v5511, %v7491
      %v7507 = vmul.f32 %v5513, %v7491
      %v7508 = vmul.f32 %v5515, %v7491
      %v7509 = vmul.f32 %v5517, %v7491
      %v7510 = vmul.f32 %v5519, %v7491
      %v7511 = vmul.f32 %v5521, %v7491
      %v7512 = vmul.f32 %v5523, %v7491
      %v7513 = vmul.f32 %v5525, %v7491
      %v7514 = vmul.f32 %v5527, %v7491
      %v7515 = vmul.f32 %v5529, %v7491
      %v7516 = vmul.f32 %v5531, %v7491
      %v7517 = vmul.f32 %v5533, %v7491
      %v7518 = vmul.f32 %v5535, %v7491
      %v7519 = vmul.f32 %v5537, %v7491
      %v7520 = vmul.f32 %v5539, %v7491
      %v7521 = vmul.f32 %v5541, %v7491
      %v7522 = vmul.f32 %v5543, %v7491
      %v7523 = vmul.f32 %v5545, %v7491
      %v7524 = vrcp.pop %v7283
      %v7525 = vmul.f32 %v7283, %v7524
      %v7526 = vsub.f32 1.0, %v7525
      %v7527 = vmul.f32 %v7524, %v7526
      %v7528 = vadd.f32 %v7524, %v7527
      %vm7529 = vweird.f32 %v7283
      %vm7530 = vweird.f32 %v7524
      %vm7531 = vmor %vm7529, %vm7530
      %v7532 = vsel %vm7531, %v7524, %v7528
      %v7533 = vand.u32 2147483647, %v7283
      %vm7534 = vcmp.eq.f32.partialorder %v7533, 8.507059e+37
      %v7535 = vand.u32 %v7283, 2147483648
      %v7536 = vor.u32 1.1754944e-38, %v7535
      %v7537 = vsel %vm7534, %v7536, %v7532
      %v7538 = vmul.f32 %v5547, %v7537
      %v7539 = vmul.f32 %v5549, %v7537
      %v7540 = vmul.f32 %v5551, %v7537
      %v7541 = vmul.f32 %v5553, %v7537
      %v7542 = vmul.f32 %v5555, %v7537
      %v7543 = vmul.f32 %v5557, %v7537
      %v7544 = vmul.f32 %v5559, %v7537
      %v7545 = vmul.f32 %v5561, %v7537
      %v7546 = vmul.f32 %v5563, %v7537
      %v7547 = vmul.f32 %v5565, %v7537
      %v7548 = vmul.f32 %v5567, %v7537
      %v7549 = vmul.f32 %v5569, %v7537
      %v7550 = vmul.f32 %v5571, %v7537
      %v7551 = vmul.f32 %v5573, %v7537
      %v7552 = vmul.f32 %v5575, %v7537
      %v7553 = vmul.f32 %v5577, %v7537
      %v7554 = vmul.f32 %v5579, %v7537
      %v7555 = vmul.f32 %v5581, %v7537
      %v7556 = vmul.f32 %v5583, %v7537
      %v7557 = vmul.f32 %v5585, %v7537
      %v7558 = vmul.f32 %v5587, %v7537
      %v7559 = vmul.f32 %v5589, %v7537
      %v7560 = vmul.f32 %v5591, %v7537
      %v7561 = vmul.f32 %v5593, %v7537
      %v7562 = vmul.f32 %v5595, %v7537
      %v7563 = vmul.f32 %v5597, %v7537
      %v7564 = vmul.f32 %v5599, %v7537
      %v7565 = vmul.f32 %v5601, %v7537
      %v7566 = vmul.f32 %v5603, %v7537
      %v7567 = vmul.f32 %v5605, %v7537
      %v7568 = vmul.f32 %v5607, %v7537
      %v7569 = vmul.f32 %v5609, %v7537
      %v7570 = vrcp.pop %v7284
      %v7571 = vmul.f32 %v7284, %v7570
      %v7572 = vsub.f32 1.0, %v7571
      %v7573 = vmul.f32 %v7570, %v7572
      %v7574 = vadd.f32 %v7570, %v7573
      %vm7575 = vweird.f32 %v7284
      %vm7576 = vweird.f32 %v7570
      %vm7577 = vmor %vm7575, %vm7576
      %v7578 = vsel %vm7577, %v7570, %v7574
      %v7579 = vand.u32 2147483647, %v7284
      %vm7580 = vcmp.eq.f32.partialorder %v7579, 8.507059e+37
      %v7581 = vand.u32 %v7284, 2147483648
      %v7582 = vor.u32 1.1754944e-38, %v7581
      %v7583 = vsel %vm7580, %v7582, %v7578
      %v7584 = vmul.f32 %v5611, %v7583
      %v7585 = vmul.f32 %v5613, %v7583
      %v7586 = vmul.f32 %v5615, %v7583
      %v7587 = vmul.f32 %v5617, %v7583
      %v7588 = vmul.f32 %v5619, %v7583
      %v7589 = vmul.f32 %v5621, %v7583
      %v7590 = vmul.f32 %v5623, %v7583
      %v7591 = vmul.f32 %v5625, %v7583
      %v7592 = vmul.f32 %v5627, %v7583
      %v7593 = vmul.f32 %v5629, %v7583
      %v7594 = vmul.f32 %v5631, %v7583
      %v7595 = vmul.f32 %v5633, %v7583
      %v7596 = vmul.f32 %v5635, %v7583
      %v7597 = vmul.f32 %v5637, %v7583
      %v7598 = vmul.f32 %v5639, %v7583
      %v7599 = vmul.f32 %v5641, %v7583
      %v7600 = vmul.f32 %v5643, %v7583
      %v7601 = vmul.f32 %v5645, %v7583
      %v7602 = vmul.f32 %v5647, %v7583
      %v7603 = vmul.f32 %v5649, %v7583
      %v7604 = vmul.f32 %v5651, %v7583
      %v7605 = vmul.f32 %v5653, %v7583
      %v7606 = vmul.f32 %v5655, %v7583
      %v7607 = vmul.f32 %v5657, %v7583
      %v7608 = vmul.f32 %v5659, %v7583
      %v7609 = vmul.f32 %v5661, %v7583
      %v7610 = vmul.f32 %v5663, %v7583
      %v7611 = vmul.f32 %v5665, %v7583
      %v7612 = vmul.f32 %v5667, %v7583
      %v7613 = vmul.f32 %v5669, %v7583
      %v7614 = vmul.f32 %v5671, %v7583
      %v7615 = vmul.f32 %v5673, %v7583
      %v7616 = vrcp.pop %v7285
      %v7617 = vmul.f32 %v7285, %v7616
      %v7618 = vsub.f32 1.0, %v7617
      %v7619 = vmul.f32 %v7616, %v7618
      %v7620 = vadd.f32 %v7616, %v7619
      %vm7621 = vweird.f32 %v7285
      %vm7622 = vweird.f32 %v7616
      %vm7623 = vmor %vm7621, %vm7622
      %v7624 = vsel %vm7623, %v7616, %v7620
      %v7625 = vand.u32 2147483647, %v7285
      %vm7626 = vcmp.eq.f32.partialorder %v7625, 8.507059e+37
      %v7627 = vand.u32 %v7285, 2147483648
      %v7628 = vor.u32 1.1754944e-38, %v7627
      %v7629 = vsel %vm7626, %v7628, %v7624
      %v7630 = vmul.f32 %v5675, %v7629
      %v7631 = vmul.f32 %v5677, %v7629
      %v7632 = vmul.f32 %v5679, %v7629
      %v7633 = vmul.f32 %v5681, %v7629
      %v7634 = vmul.f32 %v5683, %v7629
      %v7635 = vmul.f32 %v5685, %v7629
      %v7636 = vmul.f32 %v5687, %v7629
      %v7637 = vmul.f32 %v5689, %v7629
      %v7638 = vmul.f32 %v5691, %v7629
      %v7639 = vmul.f32 %v5693, %v7629
      %v7640 = vmul.f32 %v5695, %v7629
      %v7641 = vmul.f32 %v5697, %v7629
      %v7642 = vmul.f32 %v5699, %v7629
      %v7643 = vmul.f32 %v5701, %v7629
      %v7644 = vmul.f32 %v5703, %v7629
      %v7645 = vmul.f32 %v5705, %v7629
      %v7646 = vmul.f32 %v5707, %v7629
      %v7647 = vmul.f32 %v5709, %v7629
      %v7648 = vmul.f32 %v5711, %v7629
      %v7649 = vmul.f32 %v5713, %v7629
      %v7650 = vmul.f32 %v5715, %v7629
      %v7651 = vmul.f32 %v5717, %v7629
      %v7652 = vmul.f32 %v5719, %v7629
      %v7653 = vmul.f32 %v5721, %v7629
      %v7654 = vmul.f32 %v5723, %v7629
      %v7655 = vmul.f32 %v5725, %v7629
      %v7656 = vmul.f32 %v5727, %v7629
      %v7657 = vmul.f32 %v5729, %v7629
      %v7658 = vmul.f32 %v5731, %v7629
      %v7659 = vmul.f32 %v5733, %v7629
      %v7660 = vmul.f32 %v5735, %v7629
      %v7661 = vmul.f32 %v5737, %v7629
      %7918 = vset.pattern.permute.xlu0 0
      %7919 = vperm.xlu0 %7918, %v7308
      %v7920 = vpop.permute.xlu0 %7919
      %7921 = vset.pattern.permute.xlu0 0
      %7922 = vperm.xlu0 %7921, %v7309
      %v7923 = vpop.permute.xlu0 %7922
      %7924 = vset.pattern.permute.xlu0 0
      %7925 = vperm.xlu0 %7924, %v7310
      %v7926 = vpop.permute.xlu0 %7925
      %7927 = vset.pattern.permute.xlu0 0
      %7928 = vperm.xlu0 %7927, %v7311
      %v7929 = vpop.permute.xlu0 %7928
      %7930 = vset.pattern.permute.xlu0 0
      %7931 = vperm.xlu0 %7930, %v7312
      %v7932 = vpop.permute.xlu0 %7931
      %7933 = vset.pattern.permute.xlu0 0
      %7934 = vperm.xlu0 %7933, %v7313
      %v7935 = vpop.permute.xlu0 %7934
      %7936 = vset.pattern.permute.xlu0 0
      %7937 = vperm.xlu0 %7936, %v7314
      %v7938 = vpop.permute.xlu0 %7937
      %7939 = vset.pattern.permute.xlu0 0
      %7940 = vperm.xlu0 %7939, %v7315
      %v7941 = vpop.permute.xlu0 %7940
      %7942 = vset.pattern.permute.xlu0 0
      %7943 = vperm.xlu0 %7942, %v7316
      %v7944 = vpop.permute.xlu0 %7943
      %7945 = vset.pattern.permute.xlu0 0
      %7946 = vperm.xlu0 %7945, %v7317
      %v7947 = vpop.permute.xlu0 %7946
      %7948 = vset.pattern.permute.xlu0 0
      %7949 = vperm.xlu0 %7948, %v7318
      %v7950 = vpop.permute.xlu0 %7949
      %7951 = vset.pattern.permute.xlu0 0
      %7952 = vperm.xlu0 %7951, %v7319
      %v7953 = vpop.permute.xlu0 %7952
      %7954 = vset.pattern.permute.xlu0 0
      %7955 = vperm.xlu0 %7954, %v7320
      %v7956 = vpop.permute.xlu0 %7955
      %7957 = vset.pattern.permute.xlu0 0
      %7958 = vperm.xlu0 %7957, %v7321
      %v7959 = vpop.permute.xlu0 %7958
      %7960 = vset.pattern.permute.xlu0 0
      %7961 = vperm.xlu0 %7960, %v7322
      %v7962 = vpop.permute.xlu0 %7961
      %7963 = vset.pattern.permute.xlu0 0
      %7964 = vperm.xlu0 %7963, %v7323
      %v7965 = vpop.permute.xlu0 %7964
      %7966 = vset.pattern.permute.xlu0 0
      %7967 = vperm.xlu0 %7966, %v7324
      %v7968 = vpop.permute.xlu0 %7967
      %7969 = vset.pattern.permute.xlu0 0
      %7970 = vperm.xlu0 %7969, %v7325
      %v7971 = vpop.permute.xlu0 %7970
      %7972 = vset.pattern.permute.xlu0 0
      %7973 = vperm.xlu0 %7972, %v7326
      %v7974 = vpop.permute.xlu0 %7973
      %7975 = vset.pattern.permute.xlu0 0
      %7976 = vperm.xlu0 %7975, %v7327
      %v7977 = vpop.permute.xlu0 %7976
      %7978 = vset.pattern.permute.xlu0 0
      %7979 = vperm.xlu0 %7978, %v7328
      %v7980 = vpop.permute.xlu0 %7979
      %7981 = vset.pattern.permute.xlu0 0
      %7982 = vperm.xlu0 %7981, %v7329
      %v7983 = vpop.permute.xlu0 %7982
      %7984 = vset.pattern.permute.xlu0 0
      %7985 = vperm.xlu0 %7984, %v7330
      %v7986 = vpop.permute.xlu0 %7985
      %7987 = vset.pattern.permute.xlu0 0
      %7988 = vperm.xlu0 %7987, %v7331
      %v7989 = vpop.permute.xlu0 %7988
      %7990 = vset.pattern.permute.xlu0 0
      %7991 = vperm.xlu0 %7990, %v7332
      %v7992 = vpop.permute.xlu0 %7991
      %7993 = vset.pattern.permute.xlu0 0
      %7994 = vperm.xlu0 %7993, %v7333
      %v7995 = vpop.permute.xlu0 %7994
      %7996 = vset.pattern.permute.xlu0 0
      %7997 = vperm.xlu0 %7996, %v7334
      %v7998 = vpop.permute.xlu0 %7997
      %7999 = vset.pattern.permute.xlu0 0
      %8000 = vperm.xlu0 %7999, %v7335
      %v8001 = vpop.permute.xlu0 %8000
      %8002 = vset.pattern.permute.xlu0 0
      %8003 = vperm.xlu0 %8002, %v7336
      %v8004 = vpop.permute.xlu0 %8003
      %8005 = vset.pattern.permute.xlu0 0
      %8006 = vperm.xlu0 %8005, %v7337
      %v8007 = vpop.permute.xlu0 %8006
      %8008 = vset.pattern.permute.xlu0 0
      %8009 = vperm.xlu0 %8008, %v7338
      %v8010 = vpop.permute.xlu0 %8009
      %8011 = vset.pattern.permute.xlu0 0
      %8012 = vperm.xlu0 %8011, %v7339
      %v8013 = vpop.permute.xlu0 %8012
      %8014 = vset.pattern.permute.xlu0 0
      %8015 = vperm.xlu0 %8014, %v7354
      %v8016 = vpop.permute.xlu0 %8015
      %8017 = vset.pattern.permute.xlu0 0
      %8018 = vperm.xlu0 %8017, %v7355
      %v8019 = vpop.permute.xlu0 %8018
      %8020 = vset.pattern.permute.xlu0 0
      %8021 = vperm.xlu0 %8020, %v7356
      %v8022 = vpop.permute.xlu0 %8021
      %8023 = vset.pattern.permute.xlu0 0
      %8024 = vperm.xlu0 %8023, %v7357
      %v8025 = vpop.permute.xlu0 %8024
      %8026 = vset.pattern.permute.xlu0 0
      %8027 = vperm.xlu0 %8026, %v7358
      %v8028 = vpop.permute.xlu0 %8027
      %8029 = vset.pattern.permute.xlu0 0
      %8030 = vperm.xlu0 %8029, %v7359
      %v8031 = vpop.permute.xlu0 %8030
      %8032 = vset.pattern.permute.xlu0 0
      %8033 = vperm.xlu0 %8032, %v7360
      %v8034 = vpop.permute.xlu0 %8033
      %8035 = vset.pattern.permute.xlu0 0
      %8036 = vperm.xlu0 %8035, %v7361
      %v8037 = vpop.permute.xlu0 %8036
      %8038 = vset.pattern.permute.xlu0 0
      %8039 = vperm.xlu0 %8038, %v7362
      %v8040 = vpop.permute.xlu0 %8039
      %8041 = vset.pattern.permute.xlu0 0
      %8042 = vperm.xlu0 %8041, %v7363
      %v8043 = vpop.permute.xlu0 %8042
      %8044 = vset.pattern.permute.xlu0 0
      %8045 = vperm.xlu0 %8044, %v7364
      %v8046 = vpop.permute.xlu0 %8045
      %8047 = vset.pattern.permute.xlu0 0
      %8048 = vperm.xlu0 %8047, %v7365
      %v8049 = vpop.permute.xlu0 %8048
      %8050 = vset.pattern.permute.xlu0 0
      %8051 = vperm.xlu0 %8050, %v7366
      %v8052 = vpop.permute.xlu0 %8051
      %8053 = vset.pattern.permute.xlu0 0
      %8054 = vperm.xlu0 %8053, %v7367
      %v8055 = vpop.permute.xlu0 %8054
      %8056 = vset.pattern.permute.xlu0 0
      %8057 = vperm.xlu0 %8056, %v7368
      %v8058 = vpop.permute.xlu0 %8057
      %8059 = vset.pattern.permute.xlu0 0
      %8060 = vperm.xlu0 %8059, %v7369
      %v8061 = vpop.permute.xlu0 %8060
      %8062 = vset.pattern.permute.xlu0 0
      %8063 = vperm.xlu0 %8062, %v7370
      %v8064 = vpop.permute.xlu0 %8063
      %8065 = vset.pattern.permute.xlu0 0
      %8066 = vperm.xlu0 %8065, %v7371
      %v8067 = vpop.permute.xlu0 %8066
      %8068 = vset.pattern.permute.xlu0 0
      %8069 = vperm.xlu0 %8068, %v7372
      %v8070 = vpop.permute.xlu0 %8069
      %8071 = vset.pattern.permute.xlu0 0
      %8072 = vperm.xlu0 %8071, %v7373
      %v8073 = vpop.permute.xlu0 %8072
      %8074 = vset.pattern.permute.xlu0 0
      %8075 = vperm.xlu0 %8074, %v7374
      %v8076 = vpop.permute.xlu0 %8075
      %8077 = vset.pattern.permute.xlu0 0
      %8078 = vperm.xlu0 %8077, %v7375
      %v8079 = vpop.permute.xlu0 %8078
      %8080 = vset.pattern.permute.xlu0 0
      %8081 = vperm.xlu0 %8080, %v7376
      %v8082 = vpop.permute.xlu0 %8081
      %8083 = vset.pattern.permute.xlu0 0
      %8084 = vperm.xlu0 %8083, %v7377
      %v8085 = vpop.permute.xlu0 %8084
      %8086 = vset.pattern.permute.xlu0 0
      %8087 = vperm.xlu0 %8086, %v7378
      %v8088 = vpop.permute.xlu0 %8087
      %8089 = vset.pattern.permute.xlu0 0
      %8090 = vperm.xlu0 %8089, %v7379
      %v8091 = vpop.permute.xlu0 %8090
      %8092 = vset.pattern.permute.xlu0 0
      %8093 = vperm.xlu0 %8092, %v7380
      %v8094 = vpop.permute.xlu0 %8093
      %8095 = vset.pattern.permute.xlu0 0
      %8096 = vperm.xlu0 %8095, %v7381
      %v8097 = vpop.permute.xlu0 %8096
      %8098 = vset.pattern.permute.xlu0 0
      %8099 = vperm.xlu0 %8098, %v7382
      %v8100 = vpop.permute.xlu0 %8099
      %8101 = vset.pattern.permute.xlu0 0
      %8102 = vperm.xlu0 %8101, %v7383
      %v8103 = vpop.permute.xlu0 %8102
      %8104 = vset.pattern.permute.xlu0 0
      %8105 = vperm.xlu0 %8104, %v7384
      %v8106 = vpop.permute.xlu0 %8105
      %8107 = vset.pattern.permute.xlu0 0
      %8108 = vperm.xlu0 %8107, %v7385
      %v8109 = vpop.permute.xlu0 %8108
      %8110 = vset.pattern.permute.xlu0 0
      %8111 = vperm.xlu0 %8110, %v7400
      %v8112 = vpop.permute.xlu0 %8111
      %8113 = vset.pattern.permute.xlu0 0
      %8114 = vperm.xlu0 %8113, %v7401
      %v8115 = vpop.permute.xlu0 %8114
      %8116 = vset.pattern.permute.xlu0 0
      %8117 = vperm.xlu0 %8116, %v7402
      %v8118 = vpop.permute.xlu0 %8117
      %8119 = vset.pattern.permute.xlu0 0
      %8120 = vperm.xlu0 %8119, %v7403
      %v8121 = vpop.permute.xlu0 %8120
      %8122 = vset.pattern.permute.xlu0 0
      %8123 = vperm.xlu0 %8122, %v7404
      %v8124 = vpop.permute.xlu0 %8123
      %8125 = vset.pattern.permute.xlu0 0
      %8126 = vperm.xlu0 %8125, %v7405
      %v8127 = vpop.permute.xlu0 %8126
      %8128 = vset.pattern.permute.xlu0 0
      %8129 = vperm.xlu0 %8128, %v7406
      %v8130 = vpop.permute.xlu0 %8129
      %8131 = vset.pattern.permute.xlu0 0
      %8132 = vperm.xlu0 %8131, %v7407
      %v8133 = vpop.permute.xlu0 %8132
      %8134 = vset.pattern.permute.xlu0 0
      %8135 = vperm.xlu0 %8134, %v7408
      %v8136 = vpop.permute.xlu0 %8135
      %8137 = vset.pattern.permute.xlu0 0
      %8138 = vperm.xlu0 %8137, %v7409
      %v8139 = vpop.permute.xlu0 %8138
      %8140 = vset.pattern.permute.xlu0 0
      %8141 = vperm.xlu0 %8140, %v7410
      %v8142 = vpop.permute.xlu0 %8141
      %8143 = vset.pattern.permute.xlu0 0
      %8144 = vperm.xlu0 %8143, %v7411
      %v8145 = vpop.permute.xlu0 %8144
      %8146 = vset.pattern.permute.xlu0 0
      %8147 = vperm.xlu0 %8146, %v7412
      %v8148 = vpop.permute.xlu0 %8147
      %8149 = vset.pattern.permute.xlu0 0
      %8150 = vperm.xlu0 %8149, %v7413
      %v8151 = vpop.permute.xlu0 %8150
      %8152 = vset.pattern.permute.xlu0 0
      %8153 = vperm.xlu0 %8152, %v7414
      %v8154 = vpop.permute.xlu0 %8153
      %8155 = vset.pattern.permute.xlu0 0
      %8156 = vperm.xlu0 %8155, %v7415
      %v8157 = vpop.permute.xlu0 %8156
      %8158 = vset.pattern.permute.xlu0 0
      %8159 = vperm.xlu0 %8158, %v7416
      %v8160 = vpop.permute.xlu0 %8159
      %8161 = vset.pattern.permute.xlu0 0
      %8162 = vperm.xlu0 %8161, %v7417
      %v8163 = vpop.permute.xlu0 %8162
      %8164 = vset.pattern.permute.xlu0 0
      %8165 = vperm.xlu0 %8164, %v7418
      %v8166 = vpop.permute.xlu0 %8165
      %8167 = vset.pattern.permute.xlu0 0
      %8168 = vperm.xlu0 %8167, %v7419
      %v8169 = vpop.permute.xlu0 %8168
      %8170 = vset.pattern.permute.xlu0 0
      %8171 = vperm.xlu0 %8170, %v7420
      %v8172 = vpop.permute.xlu0 %8171
      %8173 = vset.pattern.permute.xlu0 0
      %8174 = vperm.xlu0 %8173, %v7421
      %v8175 = vpop.permute.xlu0 %8174
      %8176 = vset.pattern.permute.xlu0 0
      %8177 = vperm.xlu0 %8176, %v7422
      %v8178 = vpop.permute.xlu0 %8177
      %8179 = vset.pattern.permute.xlu0 0
      %8180 = vperm.xlu0 %8179, %v7423
      %v8181 = vpop.permute.xlu0 %8180
      %8182 = vset.pattern.permute.xlu0 0
      %8183 = vperm.xlu0 %8182, %v7424
      %v8184 = vpop.permute.xlu0 %8183
      %8185 = vset.pattern.permute.xlu0 0
      %8186 = vperm.xlu0 %8185, %v7425
      %v8187 = vpop.permute.xlu0 %8186
      %8188 = vset.pattern.permute.xlu0 0
      %8189 = vperm.xlu0 %8188, %v7426
      %v8190 = vpop.permute.xlu0 %8189
      %8191 = vset.pattern.permute.xlu0 0
      %8192 = vperm.xlu0 %8191, %v7427
      %v8193 = vpop.permute.xlu0 %8192
      %8194 = vset.pattern.permute.xlu0 0
      %8195 = vperm.xlu0 %8194, %v7428
      %v8196 = vpop.permute.xlu0 %8195
      %8197 = vset.pattern.permute.xlu0 0
      %8198 = vperm.xlu0 %8197, %v7429
      %v8199 = vpop.permute.xlu0 %8198
      %8200 = vset.pattern.permute.xlu0 0
      %8201 = vperm.xlu0 %8200, %v7430
      %v8202 = vpop.permute.xlu0 %8201
      %8203 = vset.pattern.permute.xlu0 0
      %8204 = vperm.xlu0 %8203, %v7431
      %v8205 = vpop.permute.xlu0 %8204
      %8206 = vset.pattern.permute.xlu0 0
      %8207 = vperm.xlu0 %8206, %v7446
      %v8208 = vpop.permute.xlu0 %8207
      %8209 = vset.pattern.permute.xlu0 0
      %8210 = vperm.xlu0 %8209, %v7447
      %v8211 = vpop.permute.xlu0 %8210
      %8212 = vset.pattern.permute.xlu0 0
      %8213 = vperm.xlu0 %8212, %v7448
      %v8214 = vpop.permute.xlu0 %8213
      %8215 = vset.pattern.permute.xlu0 0
      %8216 = vperm.xlu0 %8215, %v7449
      %v8217 = vpop.permute.xlu0 %8216
      %8218 = vset.pattern.permute.xlu0 0
      %8219 = vperm.xlu0 %8218, %v7450
      %v8220 = vpop.permute.xlu0 %8219
      %8221 = vset.pattern.permute.xlu0 0
      %8222 = vperm.xlu0 %8221, %v7451
      %v8223 = vpop.permute.xlu0 %8222
      %8224 = vset.pattern.permute.xlu0 0
      %8225 = vperm.xlu0 %8224, %v7452
      %v8226 = vpop.permute.xlu0 %8225
      %8227 = vset.pattern.permute.xlu0 0
      %8228 = vperm.xlu0 %8227, %v7453
      %v8229 = vpop.permute.xlu0 %8228
      %8230 = vset.pattern.permute.xlu0 0
      %8231 = vperm.xlu0 %8230, %v7454
      %v8232 = vpop.permute.xlu0 %8231
      %8233 = vset.pattern.permute.xlu0 0
      %8234 = vperm.xlu0 %8233, %v7455
      %v8235 = vpop.permute.xlu0 %8234
      %8236 = vset.pattern.permute.xlu0 0
      %8237 = vperm.xlu0 %8236, %v7456
      %v8238 = vpop.permute.xlu0 %8237
      %8239 = vset.pattern.permute.xlu0 0
      %8240 = vperm.xlu0 %8239, %v7457
      %v8241 = vpop.permute.xlu0 %8240
      %8242 = vset.pattern.permute.xlu0 0
      %8243 = vperm.xlu0 %8242, %v7458
      %v8244 = vpop.permute.xlu0 %8243
      %8245 = vset.pattern.permute.xlu0 0
      %8246 = vperm.xlu0 %8245, %v7459
      %v8247 = vpop.permute.xlu0 %8246
      %8248 = vset.pattern.permute.xlu0 0
      %8249 = vperm.xlu0 %8248, %v7460
      %v8250 = vpop.permute.xlu0 %8249
      %8251 = vset.pattern.permute.xlu0 0
      %8252 = vperm.xlu0 %8251, %v7461
      %v8253 = vpop.permute.xlu0 %8252
      %8254 = vset.pattern.permute.xlu0 0
      %8255 = vperm.xlu0 %8254, %v7462
      %v8256 = vpop.permute.xlu0 %8255
      %8257 = vset.pattern.permute.xlu0 0
      %8258 = vperm.xlu0 %8257, %v7463
      %v8259 = vpop.permute.xlu0 %8258
      %8260 = vset.pattern.permute.xlu0 0
      %8261 = vperm.xlu0 %8260, %v7464
      %v8262 = vpop.permute.xlu0 %8261
      %8263 = vset.pattern.permute.xlu0 0
      %8264 = vperm.xlu0 %8263, %v7465
      %v8265 = vpop.permute.xlu0 %8264
      %8266 = vset.pattern.permute.xlu0 0
      %8267 = vperm.xlu0 %8266, %v7466
      %v8268 = vpop.permute.xlu0 %8267
      %8269 = vset.pattern.permute.xlu0 0
      %8270 = vperm.xlu0 %8269, %v7467
      %v8271 = vpop.permute.xlu0 %8270
      %8272 = vset.pattern.permute.xlu0 0
      %8273 = vperm.xlu0 %8272, %v7468
      %v8274 = vpop.permute.xlu0 %8273
      %8275 = vset.pattern.permute.xlu0 0
      %8276 = vperm.xlu0 %8275, %v7469
      %v8277 = vpop.permute.xlu0 %8276
      %8278 = vset.pattern.permute.xlu0 0
      %8279 = vperm.xlu0 %8278, %v7470
      %v8280 = vpop.permute.xlu0 %8279
      %8281 = vset.pattern.permute.xlu0 0
      %8282 = vperm.xlu0 %8281, %v7471
      %v8283 = vpop.permute.xlu0 %8282
      %8284 = vset.pattern.permute.xlu0 0
      %8285 = vperm.xlu0 %8284, %v7472
      %v8286 = vpop.permute.xlu0 %8285
      %8287 = vset.pattern.permute.xlu0 0
      %8288 = vperm.xlu0 %8287, %v7473
      %v8289 = vpop.permute.xlu0 %8288
      %8290 = vset.pattern.permute.xlu0 0
      %8291 = vperm.xlu0 %8290, %v7474
      %v8292 = vpop.permute.xlu0 %8291
      %8293 = vset.pattern.permute.xlu0 0
      %8294 = vperm.xlu0 %8293, %v7475
      %v8295 = vpop.permute.xlu0 %8294
      %8296 = vset.pattern.permute.xlu0 0
      %8297 = vperm.xlu0 %8296, %v7476
      %v8298 = vpop.permute.xlu0 %8297
      %8299 = vset.pattern.permute.xlu0 0
      %8300 = vperm.xlu0 %8299, %v7477
      %v8301 = vpop.permute.xlu0 %8300
      %8302 = vset.pattern.permute.xlu0 0
      %8303 = vperm.xlu0 %8302, %v7492
      %v8304 = vpop.permute.xlu0 %8303
      %8305 = vset.pattern.permute.xlu0 0
      %8306 = vperm.xlu0 %8305, %v7493
      %v8307 = vpop.permute.xlu0 %8306
      %8308 = vset.pattern.permute.xlu0 0
      %8309 = vperm.xlu0 %8308, %v7494
      %v8310 = vpop.permute.xlu0 %8309
      %8311 = vset.pattern.permute.xlu0 0
      %8312 = vperm.xlu0 %8311, %v7495
      %v8313 = vpop.permute.xlu0 %8312
      %8314 = vset.pattern.permute.xlu0 0
      %8315 = vperm.xlu0 %8314, %v7496
      %v8316 = vpop.permute.xlu0 %8315
      %8317 = vset.pattern.permute.xlu0 0
      %8318 = vperm.xlu0 %8317, %v7497
      %v8319 = vpop.permute.xlu0 %8318
      %8320 = vset.pattern.permute.xlu0 0
      %8321 = vperm.xlu0 %8320, %v7498
      %v8322 = vpop.permute.xlu0 %8321
      %8323 = vset.pattern.permute.xlu0 0
      %8324 = vperm.xlu0 %8323, %v7499
      %v8325 = vpop.permute.xlu0 %8324
      %8326 = vset.pattern.permute.xlu0 0
      %8327 = vperm.xlu0 %8326, %v7500
      %v8328 = vpop.permute.xlu0 %8327
      %8329 = vset.pattern.permute.xlu0 0
      %8330 = vperm.xlu0 %8329, %v7501
      %v8331 = vpop.permute.xlu0 %8330
      %8332 = vset.pattern.permute.xlu0 0
      %8333 = vperm.xlu0 %8332, %v7502
      %v8334 = vpop.permute.xlu0 %8333
      %8335 = vset.pattern.permute.xlu0 0
      %8336 = vperm.xlu0 %8335, %v7503
      %v8337 = vpop.permute.xlu0 %8336
      %8338 = vset.pattern.permute.xlu0 0
      %8339 = vperm.xlu0 %8338, %v7504
      %v8340 = vpop.permute.xlu0 %8339
      %8341 = vset.pattern.permute.xlu0 0
      %8342 = vperm.xlu0 %8341, %v7505
      %v8343 = vpop.permute.xlu0 %8342
      %8344 = vset.pattern.permute.xlu0 0
      %8345 = vperm.xlu0 %8344, %v7506
      %v8346 = vpop.permute.xlu0 %8345
      %8347 = vset.pattern.permute.xlu0 0
      %8348 = vperm.xlu0 %8347, %v7507
      %v8349 = vpop.permute.xlu0 %8348
      %8350 = vset.pattern.permute.xlu0 0
      %8351 = vperm.xlu0 %8350, %v7508
      %v8352 = vpop.permute.xlu0 %8351
      %8353 = vset.pattern.permute.xlu0 0
      %8354 = vperm.xlu0 %8353, %v7509
      %v8355 = vpop.permute.xlu0 %8354
      %8356 = vset.pattern.permute.xlu0 0
      %8357 = vperm.xlu0 %8356, %v7510
      %v8358 = vpop.permute.xlu0 %8357
      %8359 = vset.pattern.permute.xlu0 0
      %8360 = vperm.xlu0 %8359, %v7511
      %v8361 = vpop.permute.xlu0 %8360
      %8362 = vset.pattern.permute.xlu0 0
      %8363 = vperm.xlu0 %8362, %v7512
      %v8364 = vpop.permute.xlu0 %8363
      %8365 = vset.pattern.permute.xlu0 0
      %8366 = vperm.xlu0 %8365, %v7513
      %v8367 = vpop.permute.xlu0 %8366
      %8368 = vset.pattern.permute.xlu0 0
      %8369 = vperm.xlu0 %8368, %v7514
      %v8370 = vpop.permute.xlu0 %8369
      %8371 = vset.pattern.permute.xlu0 0
      %8372 = vperm.xlu0 %8371, %v7515
      %v8373 = vpop.permute.xlu0 %8372
      %8374 = vset.pattern.permute.xlu0 0
      %8375 = vperm.xlu0 %8374, %v7516
      %v8376 = vpop.permute.xlu0 %8375
      %8377 = vset.pattern.permute.xlu0 0
      %8378 = vperm.xlu0 %8377, %v7517
      %v8379 = vpop.permute.xlu0 %8378
      %8380 = vset.pattern.permute.xlu0 0
      %8381 = vperm.xlu0 %8380, %v7518
      %v8382 = vpop.permute.xlu0 %8381
      %8383 = vset.pattern.permute.xlu0 0
      %8384 = vperm.xlu0 %8383, %v7519
      %v8385 = vpop.permute.xlu0 %8384
      %8386 = vset.pattern.permute.xlu0 0
      %8387 = vperm.xlu0 %8386, %v7520
      %v8388 = vpop.permute.xlu0 %8387
      %8389 = vset.pattern.permute.xlu0 0
      %8390 = vperm.xlu0 %8389, %v7521
      %v8391 = vpop.permute.xlu0 %8390
      %8392 = vset.pattern.permute.xlu0 0
      %8393 = vperm.xlu0 %8392, %v7522
      %v8394 = vpop.permute.xlu0 %8393
      %8395 = vset.pattern.permute.xlu0 0
      %8396 = vperm.xlu0 %8395, %v7523
      %v8397 = vpop.permute.xlu0 %8396
      %8398 = vset.pattern.permute.xlu0 0
      %8399 = vperm.xlu0 %8398, %v7538
      %v8400 = vpop.permute.xlu0 %8399
      %8401 = vset.pattern.permute.xlu0 0
      %8402 = vperm.xlu0 %8401, %v7539
      %v8403 = vpop.permute.xlu0 %8402
      %8404 = vset.pattern.permute.xlu0 0
      %8405 = vperm.xlu0 %8404, %v7540
      %v8406 = vpop.permute.xlu0 %8405
      %8407 = vset.pattern.permute.xlu0 0
      %8408 = vperm.xlu0 %8407, %v7541
      %v8409 = vpop.permute.xlu0 %8408
      %8410 = vset.pattern.permute.xlu0 0
      %8411 = vperm.xlu0 %8410, %v7542
      %v8412 = vpop.permute.xlu0 %8411
      %8413 = vset.pattern.permute.xlu0 0
      %8414 = vperm.xlu0 %8413, %v7543
      %v8415 = vpop.permute.xlu0 %8414
      %8416 = vset.pattern.permute.xlu0 0
      %8417 = vperm.xlu0 %8416, %v7544
      %v8418 = vpop.permute.xlu0 %8417
      %8419 = vset.pattern.permute.xlu0 0
      %8420 = vperm.xlu0 %8419, %v7545
      %v8421 = vpop.permute.xlu0 %8420
      %8422 = vset.pattern.permute.xlu0 0
      %8423 = vperm.xlu0 %8422, %v7546
      %v8424 = vpop.permute.xlu0 %8423
      %8425 = vset.pattern.permute.xlu0 0
      %8426 = vperm.xlu0 %8425, %v7547
      %v8427 = vpop.permute.xlu0 %8426
      %8428 = vset.pattern.permute.xlu0 0
      %8429 = vperm.xlu0 %8428, %v7548
      %v8430 = vpop.permute.xlu0 %8429
      %8431 = vset.pattern.permute.xlu0 0
      %8432 = vperm.xlu0 %8431, %v7549
      %v8433 = vpop.permute.xlu0 %8432
      %8434 = vset.pattern.permute.xlu0 0
      %8435 = vperm.xlu0 %8434, %v7550
      %v8436 = vpop.permute.xlu0 %8435
      %8437 = vset.pattern.permute.xlu0 0
      %8438 = vperm.xlu0 %8437, %v7551
      %v8439 = vpop.permute.xlu0 %8438
      %8440 = vset.pattern.permute.xlu0 0
      %8441 = vperm.xlu0 %8440, %v7552
      %v8442 = vpop.permute.xlu0 %8441
      %8443 = vset.pattern.permute.xlu0 0
      %8444 = vperm.xlu0 %8443, %v7553
      %v8445 = vpop.permute.xlu0 %8444
      %8446 = vset.pattern.permute.xlu0 0
      %8447 = vperm.xlu0 %8446, %v7554
      %v8448 = vpop.permute.xlu0 %8447
      %8449 = vset.pattern.permute.xlu0 0
      %8450 = vperm.xlu0 %8449, %v7555
      %v8451 = vpop.permute.xlu0 %8450
      %8452 = vset.pattern.permute.xlu0 0
      %8453 = vperm.xlu0 %8452, %v7556
      %v8454 = vpop.permute.xlu0 %8453
      %8455 = vset.pattern.permute.xlu0 0
      %8456 = vperm.xlu0 %8455, %v7557
      %v8457 = vpop.permute.xlu0 %8456
      %8458 = vset.pattern.permute.xlu0 0
      %8459 = vperm.xlu0 %8458, %v7558
      %v8460 = vpop.permute.xlu0 %8459
      %8461 = vset.pattern.permute.xlu0 0
      %8462 = vperm.xlu0 %8461, %v7559
      %v8463 = vpop.permute.xlu0 %8462
      %8464 = vset.pattern.permute.xlu0 0
      %8465 = vperm.xlu0 %8464, %v7560
      %v8466 = vpop.permute.xlu0 %8465
      %8467 = vset.pattern.permute.xlu0 0
      %8468 = vperm.xlu0 %8467, %v7561
      %v8469 = vpop.permute.xlu0 %8468
      %8470 = vset.pattern.permute.xlu0 0
      %8471 = vperm.xlu0 %8470, %v7562
      %v8472 = vpop.permute.xlu0 %8471
      %8473 = vset.pattern.permute.xlu0 0
      %8474 = vperm.xlu0 %8473, %v7563
      %v8475 = vpop.permute.xlu0 %8474
      %8476 = vset.pattern.permute.xlu0 0
      %8477 = vperm.xlu0 %8476, %v7564
      %v8478 = vpop.permute.xlu0 %8477
      %8479 = vset.pattern.permute.xlu0 0
      %8480 = vperm.xlu0 %8479, %v7565
      %v8481 = vpop.permute.xlu0 %8480
      %8482 = vset.pattern.permute.xlu0 0
      %8483 = vperm.xlu0 %8482, %v7566
      %v8484 = vpop.permute.xlu0 %8483
      %8485 = vset.pattern.permute.xlu0 0
      %8486 = vperm.xlu0 %8485, %v7567
      %v8487 = vpop.permute.xlu0 %8486
      %8488 = vset.pattern.permute.xlu0 0
      %8489 = vperm.xlu0 %8488, %v7568
      %v8490 = vpop.permute.xlu0 %8489
      %8491 = vset.pattern.permute.xlu0 0
      %8492 = vperm.xlu0 %8491, %v7569
      %v8493 = vpop.permute.xlu0 %8492
      %8494 = vset.pattern.permute.xlu0 0
      %8495 = vperm.xlu0 %8494, %v7584
      %v8496 = vpop.permute.xlu0 %8495
      %8497 = vset.pattern.permute.xlu0 0
      %8498 = vperm.xlu0 %8497, %v7585
      %v8499 = vpop.permute.xlu0 %8498
      %8500 = vset.pattern.permute.xlu0 0
      %8501 = vperm.xlu0 %8500, %v7586
      %v8502 = vpop.permute.xlu0 %8501
      %8503 = vset.pattern.permute.xlu0 0
      %8504 = vperm.xlu0 %8503, %v7587
      %v8505 = vpop.permute.xlu0 %8504
      %8506 = vset.pattern.permute.xlu0 0
      %8507 = vperm.xlu0 %8506, %v7588
      %v8508 = vpop.permute.xlu0 %8507
      %8509 = vset.pattern.permute.xlu0 0
      %8510 = vperm.xlu0 %8509, %v7589
      %v8511 = vpop.permute.xlu0 %8510
      %8512 = vset.pattern.permute.xlu0 0
      %8513 = vperm.xlu0 %8512, %v7590
      %v8514 = vpop.permute.xlu0 %8513
      %8515 = vset.pattern.permute.xlu0 0
      %8516 = vperm.xlu0 %8515, %v7591
      %v8517 = vpop.permute.xlu0 %8516
      %8518 = vset.pattern.permute.xlu0 0
      %8519 = vperm.xlu0 %8518, %v7592
      %v8520 = vpop.permute.xlu0 %8519
      %8521 = vset.pattern.permute.xlu0 0
      %8522 = vperm.xlu0 %8521, %v7593
      %v8523 = vpop.permute.xlu0 %8522
      %8524 = vset.pattern.permute.xlu0 0
      %8525 = vperm.xlu0 %8524, %v7594
      %v8526 = vpop.permute.xlu0 %8525
      %8527 = vset.pattern.permute.xlu0 0
      %8528 = vperm.xlu0 %8527, %v7595
      %v8529 = vpop.permute.xlu0 %8528
      %8530 = vset.pattern.permute.xlu0 0
      %8531 = vperm.xlu0 %8530, %v7596
      %v8532 = vpop.permute.xlu0 %8531
      %8533 = vset.pattern.permute.xlu0 0
      %8534 = vperm.xlu0 %8533, %v7597
      %v8535 = vpop.permute.xlu0 %8534
      %8536 = vset.pattern.permute.xlu0 0
      %8537 = vperm.xlu0 %8536, %v7598
      %v8538 = vpop.permute.xlu0 %8537
      %8539 = vset.pattern.permute.xlu0 0
      %8540 = vperm.xlu0 %8539, %v7599
      %v8541 = vpop.permute.xlu0 %8540
      %8542 = vset.pattern.permute.xlu0 0
      %8543 = vperm.xlu0 %8542, %v7600
      %v8544 = vpop.permute.xlu0 %8543
      %8545 = vset.pattern.permute.xlu0 0
      %8546 = vperm.xlu0 %8545, %v7601
      %v8547 = vpop.permute.xlu0 %8546
      %8548 = vset.pattern.permute.xlu0 0
      %8549 = vperm.xlu0 %8548, %v7602
      %v8550 = vpop.permute.xlu0 %8549
      %8551 = vset.pattern.permute.xlu0 0
      %8552 = vperm.xlu0 %8551, %v7603
      %v8553 = vpop.permute.xlu0 %8552
      %8554 = vset.pattern.permute.xlu0 0
      %8555 = vperm.xlu0 %8554, %v7604
      %v8556 = vpop.permute.xlu0 %8555
      %8557 = vset.pattern.permute.xlu0 0
      %8558 = vperm.xlu0 %8557, %v7605
      %v8559 = vpop.permute.xlu0 %8558
      %8560 = vset.pattern.permute.xlu0 0
      %8561 = vperm.xlu0 %8560, %v7606
      %v8562 = vpop.permute.xlu0 %8561
      %8563 = vset.pattern.permute.xlu0 0
      %8564 = vperm.xlu0 %8563, %v7607
      %v8565 = vpop.permute.xlu0 %8564
      %8566 = vset.pattern.permute.xlu0 0
      %8567 = vperm.xlu0 %8566, %v7608
      %v8568 = vpop.permute.xlu0 %8567
      %8569 = vset.pattern.permute.xlu0 0
      %8570 = vperm.xlu0 %8569, %v7609
      %v8571 = vpop.permute.xlu0 %8570
      %8572 = vset.pattern.permute.xlu0 0
      %8573 = vperm.xlu0 %8572, %v7610
      %v8574 = vpop.permute.xlu0 %8573
      %8575 = vset.pattern.permute.xlu0 0
      %8576 = vperm.xlu0 %8575, %v7611
      %v8577 = vpop.permute.xlu0 %8576
      %8578 = vset.pattern.permute.xlu0 0
      %8579 = vperm.xlu0 %8578, %v7612
      %v8580 = vpop.permute.xlu0 %8579
      %8581 = vset.pattern.permute.xlu0 0
      %8582 = vperm.xlu0 %8581, %v7613
      %v8583 = vpop.permute.xlu0 %8582
      %8584 = vset.pattern.permute.xlu0 0
      %8585 = vperm.xlu0 %8584, %v7614
      %v8586 = vpop.permute.xlu0 %8585
      %8587 = vset.pattern.permute.xlu0 0
      %8588 = vperm.xlu0 %8587, %v7615
      %v8589 = vpop.permute.xlu0 %8588
      %8590 = vset.pattern.permute.xlu0 0
      %8591 = vperm.xlu0 %8590, %v7630
      %v8592 = vpop.permute.xlu0 %8591
      %8593 = vset.pattern.permute.xlu0 0
      %8594 = vperm.xlu0 %8593, %v7631
      %v8595 = vpop.permute.xlu0 %8594
      %8596 = vset.pattern.permute.xlu0 0
      %8597 = vperm.xlu0 %8596, %v7632
      %v8598 = vpop.permute.xlu0 %8597
      %8599 = vset.pattern.permute.xlu0 0
      %8600 = vperm.xlu0 %8599, %v7633
      %v8601 = vpop.permute.xlu0 %8600
      %8602 = vset.pattern.permute.xlu0 0
      %8603 = vperm.xlu0 %8602, %v7634
      %v8604 = vpop.permute.xlu0 %8603
      %8605 = vset.pattern.permute.xlu0 0
      %8606 = vperm.xlu0 %8605, %v7635
      %v8607 = vpop.permute.xlu0 %8606
      %8608 = vset.pattern.permute.xlu0 0
      %8609 = vperm.xlu0 %8608, %v7636
      %v8610 = vpop.permute.xlu0 %8609
      %8611 = vset.pattern.permute.xlu0 0
      %8612 = vperm.xlu0 %8611, %v7637
      %v8613 = vpop.permute.xlu0 %8612
      %8614 = vset.pattern.permute.xlu0 0
      %8615 = vperm.xlu0 %8614, %v7638
      %v8616 = vpop.permute.xlu0 %8615
      %8617 = vset.pattern.permute.xlu0 0
      %8618 = vperm.xlu0 %8617, %v7639
      %v8619 = vpop.permute.xlu0 %8618
      %8620 = vset.pattern.permute.xlu0 0
      %8621 = vperm.xlu0 %8620, %v7640
      %v8622 = vpop.permute.xlu0 %8621
      %8623 = vset.pattern.permute.xlu0 0
      %8624 = vperm.xlu0 %8623, %v7641
      %v8625 = vpop.permute.xlu0 %8624
      %8626 = vset.pattern.permute.xlu0 0
      %8627 = vperm.xlu0 %8626, %v7642
      %v8628 = vpop.permute.xlu0 %8627
      %8629 = vset.pattern.permute.xlu0 0
      %8630 = vperm.xlu0 %8629, %v7643
      %v8631 = vpop.permute.xlu0 %8630
      %8632 = vset.pattern.permute.xlu0 0
      %8633 = vperm.xlu0 %8632, %v7644
      %v8634 = vpop.permute.xlu0 %8633
      %8635 = vset.pattern.permute.xlu0 0
      %8636 = vperm.xlu0 %8635, %v7645
      %v8637 = vpop.permute.xlu0 %8636
      %8638 = vset.pattern.permute.xlu0 0
      %8639 = vperm.xlu0 %8638, %v7646
      %v8640 = vpop.permute.xlu0 %8639
      %8641 = vset.pattern.permute.xlu0 0
      %8642 = vperm.xlu0 %8641, %v7647
      %v8643 = vpop.permute.xlu0 %8642
      %8644 = vset.pattern.permute.xlu0 0
      %8645 = vperm.xlu0 %8644, %v7648
      %v8646 = vpop.permute.xlu0 %8645
      %8647 = vset.pattern.permute.xlu0 0
      %8648 = vperm.xlu0 %8647, %v7649
      %v8649 = vpop.permute.xlu0 %8648
      %8650 = vset.pattern.permute.xlu0 0
      %8651 = vperm.xlu0 %8650, %v7650
      %v8652 = vpop.permute.xlu0 %8651
      %8653 = vset.pattern.permute.xlu0 0
      %8654 = vperm.xlu0 %8653, %v7651
      %v8655 = vpop.permute.xlu0 %8654
      %8656 = vset.pattern.permute.xlu0 0
      %8657 = vperm.xlu0 %8656, %v7652
      %v8658 = vpop.permute.xlu0 %8657
      %8659 = vset.pattern.permute.xlu0 0
      %8660 = vperm.xlu0 %8659, %v7653
      %v8661 = vpop.permute.xlu0 %8660
      %8662 = vset.pattern.permute.xlu0 0
      %8663 = vperm.xlu0 %8662, %v7654
      %v8664 = vpop.permute.xlu0 %8663
      %8665 = vset.pattern.permute.xlu0 0
      %8666 = vperm.xlu0 %8665, %v7655
      %v8667 = vpop.permute.xlu0 %8666
      %8668 = vset.pattern.permute.xlu0 0
      %8669 = vperm.xlu0 %8668, %v7656
      %v8670 = vpop.permute.xlu0 %8669
      %8671 = vset.pattern.permute.xlu0 0
      %8672 = vperm.xlu0 %8671, %v7657
      %v8673 = vpop.permute.xlu0 %8672
      %8674 = vset.pattern.permute.xlu0 0
      %8675 = vperm.xlu0 %8674, %v7658
      %v8676 = vpop.permute.xlu0 %8675
      %8677 = vset.pattern.permute.xlu0 0
      %8678 = vperm.xlu0 %8677, %v7659
      %v8679 = vpop.permute.xlu0 %8678
      %8680 = vset.pattern.permute.xlu0 0
      %8681 = vperm.xlu0 %8680, %v7660
      %v8682 = vpop.permute.xlu0 %8681
      %8683 = vset.pattern.permute.xlu0 0
      %8684 = vperm.xlu0 %8683, %v7661
      %v8685 = vpop.permute.xlu0 %8684
      %v8686 = vperm.slane %v7920, %v4400
      %v8687 = vperm.slane %v7923, %v4402
      %v8688 = vsel %vm4404, %v8687, %v8686
      %v8689 = vperm.slane %v7926, %v4406
      %v8690 = vsel %vm4408, %v8689, %v8688
      %v8691 = vperm.slane %v7929, %v4410
      %v8692 = vsel %vm4412, %v8691, %v8690
      %v8693 = vperm.slane %v7932, %v4414
      %v8694 = vsel %vm4416, %v8693, %v8692
      %v8695 = vperm.slane %v7935, %v4418
      %v8696 = vsel %vm4420, %v8695, %v8694
      %v8697 = vperm.slane %v7938, %v4422
      %v8698 = vsel %vm4424, %v8697, %v8696
      %v8699 = vperm.slane %v7941, %v4426
      %v8700 = vsel %vm4428, %v8699, %v8698
      %v8701 = vperm.slane %v7944, %v4430
      %v8702 = vsel %vm4432, %v8701, %v8700
      %v8703 = vperm.slane %v7947, %v4434
      %v8704 = vsel %vm4436, %v8703, %v8702
      %v8705 = vperm.slane %v7950, %v4438
      %v8706 = vsel %vm4440, %v8705, %v8704
      %v8707 = vperm.slane %v7953, %v4442
      %v8708 = vsel %vm4444, %v8707, %v8706
      %v8709 = vperm.slane %v7956, %v4446
      %v8710 = vsel %vm4448, %v8709, %v8708
      %v8711 = vperm.slane %v7959, %v4450
      %v8712 = vsel %vm4452, %v8711, %v8710
      %v8713 = vperm.slane %v7962, %v4454
      %v8714 = vsel %vm4456, %v8713, %v8712
      %v8715 = vperm.slane %v7965, %v4458
      %v8716 = vsel %vm4460, %v8715, %v8714
      %v8717 = vperm.slane %v7968, %v4400
      %v8718 = vperm.slane %v7971, %v4402
      %v8719 = vsel %vm4404, %v8718, %v8717
      %v8720 = vperm.slane %v7974, %v4406
      %v8721 = vsel %vm4408, %v8720, %v8719
      %v8722 = vperm.slane %v7977, %v4410
      %v8723 = vsel %vm4412, %v8722, %v8721
      %v8724 = vperm.slane %v7980, %v4414
      %v8725 = vsel %vm4416, %v8724, %v8723
      %v8726 = vperm.slane %v7983, %v4418
      %v8727 = vsel %vm4420, %v8726, %v8725
      %v8728 = vperm.slane %v7986, %v4422
      %v8729 = vsel %vm4424, %v8728, %v8727
      %v8730 = vperm.slane %v7989, %v4426
      %v8731 = vsel %vm4428, %v8730, %v8729
      %v8732 = vperm.slane %v7992, %v4430
      %v8733 = vsel %vm4432, %v8732, %v8731
      %v8734 = vperm.slane %v7995, %v4434
      %v8735 = vsel %vm4436, %v8734, %v8733
      %v8736 = vperm.slane %v7998, %v4438
      %v8737 = vsel %vm4440, %v8736, %v8735
      %v8738 = vperm.slane %v8001, %v4442
      %v8739 = vsel %vm4444, %v8738, %v8737
      %v8740 = vperm.slane %v8004, %v4446
      %v8741 = vsel %vm4448, %v8740, %v8739
      %v8742 = vperm.slane %v8007, %v4450
      %v8743 = vsel %vm4452, %v8742, %v8741
      %v8744 = vperm.slane %v8010, %v4454
      %v8745 = vsel %vm4456, %v8744, %v8743
      %v8746 = vperm.slane %v8013, %v4458
      %v8747 = vsel %vm4460, %v8746, %v8745
      %v8748 = vperm.slane %v8016, %v4400
      %v8749 = vperm.slane %v8019, %v4402
      %v8750 = vsel %vm4404, %v8749, %v8748
      %v8751 = vperm.slane %v8022, %v4406
      %v8752 = vsel %vm4408, %v8751, %v8750
      %v8753 = vperm.slane %v8025, %v4410
      %v8754 = vsel %vm4412, %v8753, %v8752
      %v8755 = vperm.slane %v8028, %v4414
      %v8756 = vsel %vm4416, %v8755, %v8754
      %v8757 = vperm.slane %v8031, %v4418
      %v8758 = vsel %vm4420, %v8757, %v8756
      %v8759 = vperm.slane %v8034, %v4422
      %v8760 = vsel %vm4424, %v8759, %v8758
      %v8761 = vperm.slane %v8037, %v4426
      %v8762 = vsel %vm4428, %v8761, %v8760
      %v8763 = vperm.slane %v8040, %v4430
      %v8764 = vsel %vm4432, %v8763, %v8762
      %v8765 = vperm.slane %v8043, %v4434
      %v8766 = vsel %vm4436, %v8765, %v8764
      %v8767 = vperm.slane %v8046, %v4438
      %v8768 = vsel %vm4440, %v8767, %v8766
      %v8769 = vperm.slane %v8049, %v4442
      %v8770 = vsel %vm4444, %v8769, %v8768
      %v8771 = vperm.slane %v8052, %v4446
      %v8772 = vsel %vm4448, %v8771, %v8770
      %v8773 = vperm.slane %v8055, %v4450
      %v8774 = vsel %vm4452, %v8773, %v8772
      %v8775 = vperm.slane %v8058, %v4454
      %v8776 = vsel %vm4456, %v8775, %v8774
      %v8777 = vperm.slane %v8061, %v4458
      %v8778 = vsel %vm4460, %v8777, %v8776
      %v8779 = vperm.slane %v8064, %v4400
      %v8780 = vperm.slane %v8067, %v4402
      %v8781 = vsel %vm4404, %v8780, %v8779
      %v8782 = vperm.slane %v8070, %v4406
      %v8783 = vsel %vm4408, %v8782, %v8781
      %v8784 = vperm.slane %v8073, %v4410
      %v8785 = vsel %vm4412, %v8784, %v8783
      %v8786 = vperm.slane %v8076, %v4414
      %v8787 = vsel %vm4416, %v8786, %v8785
      %v8788 = vperm.slane %v8079, %v4418
      %v8789 = vsel %vm4420, %v8788, %v8787
      %v8790 = vperm.slane %v8082, %v4422
      %v8791 = vsel %vm4424, %v8790, %v8789
      %v8792 = vperm.slane %v8085, %v4426
      %v8793 = vsel %vm4428, %v8792, %v8791
      %v8794 = vperm.slane %v8088, %v4430
      %v8795 = vsel %vm4432, %v8794, %v8793
      %v8796 = vperm.slane %v8091, %v4434
      %v8797 = vsel %vm4436, %v8796, %v8795
      %v8798 = vperm.slane %v8094, %v4438
      %v8799 = vsel %vm4440, %v8798, %v8797
      %v8800 = vperm.slane %v8097, %v4442
      %v8801 = vsel %vm4444, %v8800, %v8799
      %v8802 = vperm.slane %v8100, %v4446
      %v8803 = vsel %vm4448, %v8802, %v8801
      %v8804 = vperm.slane %v8103, %v4450
      %v8805 = vsel %vm4452, %v8804, %v8803
      %v8806 = vperm.slane %v8106, %v4454
      %v8807 = vsel %vm4456, %v8806, %v8805
      %v8808 = vperm.slane %v8109, %v4458
      %v8809 = vsel %vm4460, %v8808, %v8807
      %v8810 = vperm.slane %v8112, %v4400
      %v8811 = vperm.slane %v8115, %v4402
      %v8812 = vsel %vm4404, %v8811, %v8810
      %v8813 = vperm.slane %v8118, %v4406
      %v8814 = vsel %vm4408, %v8813, %v8812
      %v8815 = vperm.slane %v8121, %v4410
      %v8816 = vsel %vm4412, %v8815, %v8814
      %v8817 = vperm.slane %v8124, %v4414
      %v8818 = vsel %vm4416, %v8817, %v8816
      %v8819 = vperm.slane %v8127, %v4418
      %v8820 = vsel %vm4420, %v8819, %v8818
      %v8821 = vperm.slane %v8130, %v4422
      %v8822 = vsel %vm4424, %v8821, %v8820
      %v8823 = vperm.slane %v8133, %v4426
      %v8824 = vsel %vm4428, %v8823, %v8822
      %v8825 = vperm.slane %v8136, %v4430
      %v8826 = vsel %vm4432, %v8825, %v8824
      %v8827 = vperm.slane %v8139, %v4434
      %v8828 = vsel %vm4436, %v8827, %v8826
      %v8829 = vperm.slane %v8142, %v4438
      %v8830 = vsel %vm4440, %v8829, %v8828
      %v8831 = vperm.slane %v8145, %v4442
      %v8832 = vsel %vm4444, %v8831, %v8830
      %v8833 = vperm.slane %v8148, %v4446
      %v8834 = vsel %vm4448, %v8833, %v8832
      %v8835 = vperm.slane %v8151, %v4450
      %v8836 = vsel %vm4452, %v8835, %v8834
      %v8837 = vperm.slane %v8154, %v4454
      %v8838 = vsel %vm4456, %v8837, %v8836
      %v8839 = vperm.slane %v8157, %v4458
      %v8840 = vsel %vm4460, %v8839, %v8838
      %v8841 = vperm.slane %v8160, %v4400
      %v8842 = vperm.slane %v8163, %v4402
      %v8843 = vsel %vm4404, %v8842, %v8841
      %v8844 = vperm.slane %v8166, %v4406
      %v8845 = vsel %vm4408, %v8844, %v8843
      %v8846 = vperm.slane %v8169, %v4410
      %v8847 = vsel %vm4412, %v8846, %v8845
      %v8848 = vperm.slane %v8172, %v4414
      %v8849 = vsel %vm4416, %v8848, %v8847
      %v8850 = vperm.slane %v8175, %v4418
      %v8851 = vsel %vm4420, %v8850, %v8849
      %v8852 = vperm.slane %v8178, %v4422
      %v8853 = vsel %vm4424, %v8852, %v8851
      %v8854 = vperm.slane %v8181, %v4426
      %v8855 = vsel %vm4428, %v8854, %v8853
      %v8856 = vperm.slane %v8184, %v4430
      %v8857 = vsel %vm4432, %v8856, %v8855
      %v8858 = vperm.slane %v8187, %v4434
      %v8859 = vsel %vm4436, %v8858, %v8857
      %v8860 = vperm.slane %v8190, %v4438
      %v8861 = vsel %vm4440, %v8860, %v8859
      %v8862 = vperm.slane %v8193, %v4442
      %v8863 = vsel %vm4444, %v8862, %v8861
      %v8864 = vperm.slane %v8196, %v4446
      %v8865 = vsel %vm4448, %v8864, %v8863
      %v8866 = vperm.slane %v8199, %v4450
      %v8867 = vsel %vm4452, %v8866, %v8865
      %v8868 = vperm.slane %v8202, %v4454
      %v8869 = vsel %vm4456, %v8868, %v8867
      %v8870 = vperm.slane %v8205, %v4458
      %v8871 = vsel %vm4460, %v8870, %v8869
      %v8872 = vperm.slane %v8208, %v4400
      %v8873 = vperm.slane %v8211, %v4402
      %v8874 = vsel %vm4404, %v8873, %v8872
      %v8875 = vperm.slane %v8214, %v4406
      %v8876 = vsel %vm4408, %v8875, %v8874
      %v8877 = vperm.slane %v8217, %v4410
      %v8878 = vsel %vm4412, %v8877, %v8876
      %v8879 = vperm.slane %v8220, %v4414
      %v8880 = vsel %vm4416, %v8879, %v8878
      %v8881 = vperm.slane %v8223, %v4418
      %v8882 = vsel %vm4420, %v8881, %v8880
      %v8883 = vperm.slane %v8226, %v4422
      %v8884 = vsel %vm4424, %v8883, %v8882
      %v8885 = vperm.slane %v8229, %v4426
      %v8886 = vsel %vm4428, %v8885, %v8884
      %v8887 = vperm.slane %v8232, %v4430
      %v8888 = vsel %vm4432, %v8887, %v8886
      %v8889 = vperm.slane %v8235, %v4434
      %v8890 = vsel %vm4436, %v8889, %v8888
      %v8891 = vperm.slane %v8238, %v4438
      %v8892 = vsel %vm4440, %v8891, %v8890
      %v8893 = vperm.slane %v8241, %v4442
      %v8894 = vsel %vm4444, %v8893, %v8892
      %v8895 = vperm.slane %v8244, %v4446
      %v8896 = vsel %vm4448, %v8895, %v8894
      %v8897 = vperm.slane %v8247, %v4450
      %v8898 = vsel %vm4452, %v8897, %v8896
      %v8899 = vperm.slane %v8250, %v4454
      %v8900 = vsel %vm4456, %v8899, %v8898
      %v8901 = vperm.slane %v8253, %v4458
      %v8902 = vsel %vm4460, %v8901, %v8900
      %v8903 = vperm.slane %v8256, %v4400
      %v8904 = vperm.slane %v8259, %v4402
      %v8905 = vsel %vm4404, %v8904, %v8903
      %v8906 = vperm.slane %v8262, %v4406
      %v8907 = vsel %vm4408, %v8906, %v8905
      %v8908 = vperm.slane %v8265, %v4410
      %v8909 = vsel %vm4412, %v8908, %v8907
      %v8910 = vperm.slane %v8268, %v4414
      %v8911 = vsel %vm4416, %v8910, %v8909
      %v8912 = vperm.slane %v8271, %v4418
      %v8913 = vsel %vm4420, %v8912, %v8911
      %v8914 = vperm.slane %v8274, %v4422
      %v8915 = vsel %vm4424, %v8914, %v8913
      %v8916 = vperm.slane %v8277, %v4426
      %v8917 = vsel %vm4428, %v8916, %v8915
      %v8918 = vperm.slane %v8280, %v4430
      %v8919 = vsel %vm4432, %v8918, %v8917
      %v8920 = vperm.slane %v8283, %v4434
      %v8921 = vsel %vm4436, %v8920, %v8919
      %v8922 = vperm.slane %v8286, %v4438
      %v8923 = vsel %vm4440, %v8922, %v8921
      %v8924 = vperm.slane %v8289, %v4442
      %v8925 = vsel %vm4444, %v8924, %v8923
      %v8926 = vperm.slane %v8292, %v4446
      %v8927 = vsel %vm4448, %v8926, %v8925
      %v8928 = vperm.slane %v8295, %v4450
      %v8929 = vsel %vm4452, %v8928, %v8927
      %v8930 = vperm.slane %v8298, %v4454
      %v8931 = vsel %vm4456, %v8930, %v8929
      %v8932 = vperm.slane %v8301, %v4458
      %v8933 = vsel %vm4460, %v8932, %v8931
      %v8934 = vperm.slane %v8304, %v4400
      %v8935 = vperm.slane %v8307, %v4402
      %v8936 = vsel %vm4404, %v8935, %v8934
      %v8937 = vperm.slane %v8310, %v4406
      %v8938 = vsel %vm4408, %v8937, %v8936
      %v8939 = vperm.slane %v8313, %v4410
      %v8940 = vsel %vm4412, %v8939, %v8938
      %v8941 = vperm.slane %v8316, %v4414
      %v8942 = vsel %vm4416, %v8941, %v8940
      %v8943 = vperm.slane %v8319, %v4418
      %v8944 = vsel %vm4420, %v8943, %v8942
      %v8945 = vperm.slane %v8322, %v4422
      %v8946 = vsel %vm4424, %v8945, %v8944
      %v8947 = vperm.slane %v8325, %v4426
      %v8948 = vsel %vm4428, %v8947, %v8946
      %v8949 = vperm.slane %v8328, %v4430
      %v8950 = vsel %vm4432, %v8949, %v8948
      %v8951 = vperm.slane %v8331, %v4434
      %v8952 = vsel %vm4436, %v8951, %v8950
      %v8953 = vperm.slane %v8334, %v4438
      %v8954 = vsel %vm4440, %v8953, %v8952
      %v8955 = vperm.slane %v8337, %v4442
      %v8956 = vsel %vm4444, %v8955, %v8954
      %v8957 = vperm.slane %v8340, %v4446
      %v8958 = vsel %vm4448, %v8957, %v8956
      %v8959 = vperm.slane %v8343, %v4450
      %v8960 = vsel %vm4452, %v8959, %v8958
      %v8961 = vperm.slane %v8346, %v4454
      %v8962 = vsel %vm4456, %v8961, %v8960
      %v8963 = vperm.slane %v8349, %v4458
      %v8964 = vsel %vm4460, %v8963, %v8962
      %v8965 = vperm.slane %v8352, %v4400
      %v8966 = vperm.slane %v8355, %v4402
      %v8967 = vsel %vm4404, %v8966, %v8965
      %v8968 = vperm.slane %v8358, %v4406
      %v8969 = vsel %vm4408, %v8968, %v8967
      %v8970 = vperm.slane %v8361, %v4410
      %v8971 = vsel %vm4412, %v8970, %v8969
      %v8972 = vperm.slane %v8364, %v4414
      %v8973 = vsel %vm4416, %v8972, %v8971
      %v8974 = vperm.slane %v8367, %v4418
      %v8975 = vsel %vm4420, %v8974, %v8973
      %v8976 = vperm.slane %v8370, %v4422
      %v8977 = vsel %vm4424, %v8976, %v8975
      %v8978 = vperm.slane %v8373, %v4426
      %v8979 = vsel %vm4428, %v8978, %v8977
      %v8980 = vperm.slane %v8376, %v4430
      %v8981 = vsel %vm4432, %v8980, %v8979
      %v8982 = vperm.slane %v8379, %v4434
      %v8983 = vsel %vm4436, %v8982, %v8981
      %v8984 = vperm.slane %v8382, %v4438
      %v8985 = vsel %vm4440, %v8984, %v8983
      %v8986 = vperm.slane %v8385, %v4442
      %v8987 = vsel %vm4444, %v8986, %v8985
      %v8988 = vperm.slane %v8388, %v4446
      %v8989 = vsel %vm4448, %v8988, %v8987
      %v8990 = vperm.slane %v8391, %v4450
      %v8991 = vsel %vm4452, %v8990, %v8989
      %v8992 = vperm.slane %v8394, %v4454
      %v8993 = vsel %vm4456, %v8992, %v8991
      %v8994 = vperm.slane %v8397, %v4458
      %v8995 = vsel %vm4460, %v8994, %v8993
      %v8996 = vperm.slane %v8400, %v4400
      %v8997 = vperm.slane %v8403, %v4402
      %v8998 = vsel %vm4404, %v8997, %v8996
      %v8999 = vperm.slane %v8406, %v4406
      %v9000 = vsel %vm4408, %v8999, %v8998
      %v9001 = vperm.slane %v8409, %v4410
      %v9002 = vsel %vm4412, %v9001, %v9000
      %v9003 = vperm.slane %v8412, %v4414
      %v9004 = vsel %vm4416, %v9003, %v9002
      %v9005 = vperm.slane %v8415, %v4418
      %v9006 = vsel %vm4420, %v9005, %v9004
      %v9007 = vperm.slane %v8418, %v4422
      %v9008 = vsel %vm4424, %v9007, %v9006
      %v9009 = vperm.slane %v8421, %v4426
      %v9010 = vsel %vm4428, %v9009, %v9008
      %v9011 = vperm.slane %v8424, %v4430
      %v9012 = vsel %vm4432, %v9011, %v9010
      %v9013 = vperm.slane %v8427, %v4434
      %v9014 = vsel %vm4436, %v9013, %v9012
      %v9015 = vperm.slane %v8430, %v4438
      %v9016 = vsel %vm4440, %v9015, %v9014
      %v9017 = vperm.slane %v8433, %v4442
      %v9018 = vsel %vm4444, %v9017, %v9016
      %v9019 = vperm.slane %v8436, %v4446
      %v9020 = vsel %vm4448, %v9019, %v9018
      %v9021 = vperm.slane %v8439, %v4450
      %v9022 = vsel %vm4452, %v9021, %v9020
      %v9023 = vperm.slane %v8442, %v4454
      %v9024 = vsel %vm4456, %v9023, %v9022
      %v9025 = vperm.slane %v8445, %v4458
      %v9026 = vsel %vm4460, %v9025, %v9024
      %v9027 = vperm.slane %v8448, %v4400
      %v9028 = vperm.slane %v8451, %v4402
      %v9029 = vsel %vm4404, %v9028, %v9027
      %v9030 = vperm.slane %v8454, %v4406
      %v9031 = vsel %vm4408, %v9030, %v9029
      %v9032 = vperm.slane %v8457, %v4410
      %v9033 = vsel %vm4412, %v9032, %v9031
      %v9034 = vperm.slane %v8460, %v4414
      %v9035 = vsel %vm4416, %v9034, %v9033
      %v9036 = vperm.slane %v8463, %v4418
      %v9037 = vsel %vm4420, %v9036, %v9035
      %v9038 = vperm.slane %v8466, %v4422
      %v9039 = vsel %vm4424, %v9038, %v9037
      %v9040 = vperm.slane %v8469, %v4426
      %v9041 = vsel %vm4428, %v9040, %v9039
      %v9042 = vperm.slane %v8472, %v4430
      %v9043 = vsel %vm4432, %v9042, %v9041
      %v9044 = vperm.slane %v8475, %v4434
      %v9045 = vsel %vm4436, %v9044, %v9043
      %v9046 = vperm.slane %v8478, %v4438
      %v9047 = vsel %vm4440, %v9046, %v9045
      %v9048 = vperm.slane %v8481, %v4442
      %v9049 = vsel %vm4444, %v9048, %v9047
      %v9050 = vperm.slane %v8484, %v4446
      %v9051 = vsel %vm4448, %v9050, %v9049
      %v9052 = vperm.slane %v8487, %v4450
      %v9053 = vsel %vm4452, %v9052, %v9051
      %v9054 = vperm.slane %v8490, %v4454
      %v9055 = vsel %vm4456, %v9054, %v9053
      %v9056 = vperm.slane %v8493, %v4458
      %v9057 = vsel %vm4460, %v9056, %v9055
      %v9058 = vperm.slane %v8496, %v4400
      %v9059 = vperm.slane %v8499, %v4402
      %v9060 = vsel %vm4404, %v9059, %v9058
      %v9061 = vperm.slane %v8502, %v4406
      %v9062 = vsel %vm4408, %v9061, %v9060
      %v9063 = vperm.slane %v8505, %v4410
      %v9064 = vsel %vm4412, %v9063, %v9062
      %v9065 = vperm.slane %v8508, %v4414
      %v9066 = vsel %vm4416, %v9065, %v9064
      %v9067 = vperm.slane %v8511, %v4418
      %v9068 = vsel %vm4420, %v9067, %v9066
      %v9069 = vperm.slane %v8514, %v4422
      %v9070 = vsel %vm4424, %v9069, %v9068
      %v9071 = vperm.slane %v8517, %v4426
      %v9072 = vsel %vm4428, %v9071, %v9070
      %v9073 = vperm.slane %v8520, %v4430
      %v9074 = vsel %vm4432, %v9073, %v9072
      %v9075 = vperm.slane %v8523, %v4434
      %v9076 = vsel %vm4436, %v9075, %v9074
      %v9077 = vperm.slane %v8526, %v4438
      %v9078 = vsel %vm4440, %v9077, %v9076
      %v9079 = vperm.slane %v8529, %v4442
      %v9080 = vsel %vm4444, %v9079, %v9078
      %v9081 = vperm.slane %v8532, %v4446
      %v9082 = vsel %vm4448, %v9081, %v9080
      %v9083 = vperm.slane %v8535, %v4450
      %v9084 = vsel %vm4452, %v9083, %v9082
      %v9085 = vperm.slane %v8538, %v4454
      %v9086 = vsel %vm4456, %v9085, %v9084
      %v9087 = vperm.slane %v8541, %v4458
      %v9088 = vsel %vm4460, %v9087, %v9086
      %v9089 = vperm.slane %v8544, %v4400
      %v9090 = vperm.slane %v8547, %v4402
      %v9091 = vsel %vm4404, %v9090, %v9089
      %v9092 = vperm.slane %v8550, %v4406
      %v9093 = vsel %vm4408, %v9092, %v9091
      %v9094 = vperm.slane %v8553, %v4410
      %v9095 = vsel %vm4412, %v9094, %v9093
      %v9096 = vperm.slane %v8556, %v4414
      %v9097 = vsel %vm4416, %v9096, %v9095
      %v9098 = vperm.slane %v8559, %v4418
      %v9099 = vsel %vm4420, %v9098, %v9097
      %v9100 = vperm.slane %v8562, %v4422
      %v9101 = vsel %vm4424, %v9100, %v9099
      %v9102 = vperm.slane %v8565, %v4426
      %v9103 = vsel %vm4428, %v9102, %v9101
      %v9104 = vperm.slane %v8568, %v4430
      %v9105 = vsel %vm4432, %v9104, %v9103
      %v9106 = vperm.slane %v8571, %v4434
      %v9107 = vsel %vm4436, %v9106, %v9105
      %v9108 = vperm.slane %v8574, %v4438
      %v9109 = vsel %vm4440, %v9108, %v9107
      %v9110 = vperm.slane %v8577, %v4442
      %v9111 = vsel %vm4444, %v9110, %v9109
      %v9112 = vperm.slane %v8580, %v4446
      %v9113 = vsel %vm4448, %v9112, %v9111
      %v9114 = vperm.slane %v8583, %v4450
      %v9115 = vsel %vm4452, %v9114, %v9113
      %v9116 = vperm.slane %v8586, %v4454
      %v9117 = vsel %vm4456, %v9116, %v9115
      %v9118 = vperm.slane %v8589, %v4458
      %v9119 = vsel %vm4460, %v9118, %v9117
      %v9120 = vperm.slane %v8592, %v4400
      %v9121 = vperm.slane %v8595, %v4402
      %v9122 = vsel %vm4404, %v9121, %v9120
      %v9123 = vperm.slane %v8598, %v4406
      %v9124 = vsel %vm4408, %v9123, %v9122
      %v9125 = vperm.slane %v8601, %v4410
      %v9126 = vsel %vm4412, %v9125, %v9124
      %v9127 = vperm.slane %v8604, %v4414
      %v9128 = vsel %vm4416, %v9127, %v9126
      %v9129 = vperm.slane %v8607, %v4418
      %v9130 = vsel %vm4420, %v9129, %v9128
      %v9131 = vperm.slane %v8610, %v4422
      %v9132 = vsel %vm4424, %v9131, %v9130
      %v9133 = vperm.slane %v8613, %v4426
      %v9134 = vsel %vm4428, %v9133, %v9132
      %v9135 = vperm.slane %v8616, %v4430
      %v9136 = vsel %vm4432, %v9135, %v9134
      %v9137 = vperm.slane %v8619, %v4434
      %v9138 = vsel %vm4436, %v9137, %v9136
      %v9139 = vperm.slane %v8622, %v4438
      %v9140 = vsel %vm4440, %v9139, %v9138
      %v9141 = vperm.slane %v8625, %v4442
      %v9142 = vsel %vm4444, %v9141, %v9140
      %v9143 = vperm.slane %v8628, %v4446
      %v9144 = vsel %vm4448, %v9143, %v9142
      %v9145 = vperm.slane %v8631, %v4450
      %v9146 = vsel %vm4452, %v9145, %v9144
      %v9147 = vperm.slane %v8634, %v4454
      %v9148 = vsel %vm4456, %v9147, %v9146
      %v9149 = vperm.slane %v8637, %v4458
      %v9150 = vsel %vm4460, %v9149, %v9148
      %v9151 = vperm.slane %v8640, %v4400
      %v9152 = vperm.slane %v8643, %v4402
      %v9153 = vsel %vm4404, %v9152, %v9151
      %v9154 = vperm.slane %v8646, %v4406
      %v9155 = vsel %vm4408, %v9154, %v9153
      %v9156 = vperm.slane %v8649, %v4410
      %v9157 = vsel %vm4412, %v9156, %v9155
      %v9158 = vperm.slane %v8652, %v4414
      %v9159 = vsel %vm4416, %v9158, %v9157
      %v9160 = vperm.slane %v8655, %v4418
      %v9161 = vsel %vm4420, %v9160, %v9159
      %v9162 = vperm.slane %v8658, %v4422
      %v9163 = vsel %vm4424, %v9162, %v9161
      %v9164 = vperm.slane %v8661, %v4426
      %v9165 = vsel %vm4428, %v9164, %v9163
      %v9166 = vperm.slane %v8664, %v4430
      %v9167 = vsel %vm4432, %v9166, %v9165
      %v9168 = vperm.slane %v8667, %v4434
      %v9169 = vsel %vm4436, %v9168, %v9167
      %v9170 = vperm.slane %v8670, %v4438
      %v9171 = vsel %vm4440, %v9170, %v9169
      %v9172 = vperm.slane %v8673, %v4442
      %v9173 = vsel %vm4444, %v9172, %v9171
      %v9174 = vperm.slane %v8676, %v4446
      %v9175 = vsel %vm4448, %v9174, %v9173
      %v9176 = vperm.slane %v8679, %v4450
      %v9177 = vsel %vm4452, %v9176, %v9175
      %v9178 = vperm.slane %v8682, %v4454
      %v9179 = vsel %vm4456, %v9178, %v9177
      %v9180 = vperm.slane %v8685, %v4458
      %v9181 = vsel %vm4460, %v9180, %v9179
      %v9182 = vsel %vm4927, %v8778, %v8716
      %v9183 = vsel %vm4929, %v8840, %v9182
      %v9184 = vsel %vm4931, %v8902, %v9183
      %v9185 = vsel %vm4933, %v8964, %v9184
      %v9186 = vsel %vm4935, %v9026, %v9185
      %v9187 = vsel %vm4937, %v9088, %v9186
      %v9188 = vsel %vm4939, %v9150, %v9187
      %v9189 = vsel %vm4927, %v8809, %v8747
      %v9190 = vsel %vm4929, %v8871, %v9189
      %v9191 = vsel %vm4931, %v8933, %v9190
      %v9192 = vsel %vm4933, %v8995, %v9191
      %v9193 = vsel %vm4935, %v9057, %v9192
      %v9194 = vsel %vm4937, %v9119, %v9193
      %v9195 = vsel %vm4939, %v9181, %v9194
      %9198 = vst [vmem:[%s425] sm:$0xff] %v9188
      %9199 = vst [vmem:[%s425 + $0x8] sm:$0xff] %v9195
      %v9200 = vpack.c.bf16 %v7308, %v7308
      %v9201 = vpack.c.bf16 %v7309, %v7309
      %v9202 = vpack.c.bf16 %v7310, %v7310
      %v9203 = vpack.c.bf16 %v7311, %v7311
      %v9204 = vpack.c.bf16 %v7312, %v7312
      %v9205 = vpack.c.bf16 %v7313, %v7313
      %v9206 = vpack.c.bf16 %v7314, %v7314
      %v9207 = vpack.c.bf16 %v7315, %v7315
      %v9208 = vpack.c.bf16 %v7316, %v7316
      %v9209 = vpack.c.bf16 %v7317, %v7317
      %v9210 = vpack.c.bf16 %v7318, %v7318
      %v9211 = vpack.c.bf16 %v7319, %v7319
      %v9212 = vpack.c.bf16 %v7320, %v7320
      %v9213 = vpack.c.bf16 %v7321, %v7321
      %v9214 = vpack.c.bf16 %v7322, %v7322
      %v9215 = vpack.c.bf16 %v7323, %v7323
      %v9216 = vpack.c.bf16 %v7324, %v7324
      %v9217 = vpack.c.bf16 %v7325, %v7325
      %v9218 = vpack.c.bf16 %v7326, %v7326
      %v9219 = vpack.c.bf16 %v7327, %v7327
      %v9220 = vpack.c.bf16 %v7328, %v7328
      %v9221 = vpack.c.bf16 %v7329, %v7329
      %v9222 = vpack.c.bf16 %v7330, %v7330
      %v9223 = vpack.c.bf16 %v7331, %v7331
      %v9224 = vpack.c.bf16 %v7332, %v7332
      %v9225 = vpack.c.bf16 %v7333, %v7333
      %v9226 = vpack.c.bf16 %v7334, %v7334
      %v9227 = vpack.c.bf16 %v7335, %v7335
      %v9228 = vpack.c.bf16 %v7336, %v7336
      %v9229 = vpack.c.bf16 %v7337, %v7337
      %v9230 = vpack.c.bf16 %v7338, %v7338
      %v9231 = vpack.c.bf16 %v7339, %v7339
      %v9232 = vpack.c.bf16 %v7354, %v7354
      %v9233 = vpack.c.bf16 %v7355, %v7355
      %v9234 = vpack.c.bf16 %v7356, %v7356
      %v9235 = vpack.c.bf16 %v7357, %v7357
      %v9236 = vpack.c.bf16 %v7358, %v7358
      %v9237 = vpack.c.bf16 %v7359, %v7359
      %v9238 = vpack.c.bf16 %v7360, %v7360
      %v9239 = vpack.c.bf16 %v7361, %v7361
      %v9240 = vpack.c.bf16 %v7362, %v7362
      %v9241 = vpack.c.bf16 %v7363, %v7363
      %v9242 = vpack.c.bf16 %v7364, %v7364
      %v9243 = vpack.c.bf16 %v7365, %v7365
      %v9244 = vpack.c.bf16 %v7366, %v7366
      %v9245 = vpack.c.bf16 %v7367, %v7367
      %v9246 = vpack.c.bf16 %v7368, %v7368
      %v9247 = vpack.c.bf16 %v7369, %v7369
      %v9248 = vpack.c.bf16 %v7370, %v7370
      %v9249 = vpack.c.bf16 %v7371, %v7371
      %v9250 = vpack.c.bf16 %v7372, %v7372
      %v9251 = vpack.c.bf16 %v7373, %v7373
      %v9252 = vpack.c.bf16 %v7374, %v7374
      %v9253 = vpack.c.bf16 %v7375, %v7375
      %v9254 = vpack.c.bf16 %v7376, %v7376
      %v9255 = vpack.c.bf16 %v7377, %v7377
      %v9256 = vpack.c.bf16 %v7378, %v7378
      %v9257 = vpack.c.bf16 %v7379, %v7379
      %v9258 = vpack.c.bf16 %v7380, %v7380
      %v9259 = vpack.c.bf16 %v7381, %v7381
      %v9260 = vpack.c.bf16 %v7382, %v7382
      %v9261 = vpack.c.bf16 %v7383, %v7383
      %v9262 = vpack.c.bf16 %v7384, %v7384
      %v9263 = vpack.c.bf16 %v7385, %v7385
      %v9264 = vpack.c.bf16 %v7400, %v7400
      %v9265 = vpack.c.bf16 %v7401, %v7401
      %v9266 = vpack.c.bf16 %v7402, %v7402
      %v9267 = vpack.c.bf16 %v7403, %v7403
      %v9268 = vpack.c.bf16 %v7404, %v7404
      %v9269 = vpack.c.bf16 %v7405, %v7405
      %v9270 = vpack.c.bf16 %v7406, %v7406
      %v9271 = vpack.c.bf16 %v7407, %v7407
      %v9272 = vpack.c.bf16 %v7408, %v7408
      %v9273 = vpack.c.bf16 %v7409, %v7409
      %v9274 = vpack.c.bf16 %v7410, %v7410
      %v9275 = vpack.c.bf16 %v7411, %v7411
      %v9276 = vpack.c.bf16 %v7412, %v7412
      %v9277 = vpack.c.bf16 %v7413, %v7413
      %v9278 = vpack.c.bf16 %v7414, %v7414
      %v9279 = vpack.c.bf16 %v7415, %v7415
      %v9280 = vpack.c.bf16 %v7416, %v7416
      %v9281 = vpack.c.bf16 %v7417, %v7417
      %v9282 = vpack.c.bf16 %v7418, %v7418
      %v9283 = vpack.c.bf16 %v7419, %v7419
      %v9284 = vpack.c.bf16 %v7420, %v7420
      %v9285 = vpack.c.bf16 %v7421, %v7421
      %v9286 = vpack.c.bf16 %v7422, %v7422
      %v9287 = vpack.c.bf16 %v7423, %v7423
      %v9288 = vpack.c.bf16 %v7424, %v7424
      %v9289 = vpack.c.bf16 %v7425, %v7425
      %v9290 = vpack.c.bf16 %v7426, %v7426
      %v9291 = vpack.c.bf16 %v7427, %v7427
      %v9292 = vpack.c.bf16 %v7428, %v7428
      %v9293 = vpack.c.bf16 %v7429, %v7429
      %v9294 = vpack.c.bf16 %v7430, %v7430
      %v9295 = vpack.c.bf16 %v7431, %v7431
      %v9296 = vpack.c.bf16 %v7446, %v7446
      %v9297 = vpack.c.bf16 %v7447, %v7447
      %v9298 = vpack.c.bf16 %v7448, %v7448
      %v9299 = vpack.c.bf16 %v7449, %v7449
      %v9300 = vpack.c.bf16 %v7450, %v7450
      %v9301 = vpack.c.bf16 %v7451, %v7451
      %v9302 = vpack.c.bf16 %v7452, %v7452
      %v9303 = vpack.c.bf16 %v7453, %v7453
      %v9304 = vpack.c.bf16 %v7454, %v7454
      %v9305 = vpack.c.bf16 %v7455, %v7455
      %v9306 = vpack.c.bf16 %v7456, %v7456
      %v9307 = vpack.c.bf16 %v7457, %v7457
      %v9308 = vpack.c.bf16 %v7458, %v7458
      %v9309 = vpack.c.bf16 %v7459, %v7459
      %v9310 = vpack.c.bf16 %v7460, %v7460
      %v9311 = vpack.c.bf16 %v7461, %v7461
      %v9312 = vpack.c.bf16 %v7462, %v7462
      %v9313 = vpack.c.bf16 %v7463, %v7463
      %v9314 = vpack.c.bf16 %v7464, %v7464
      %v9315 = vpack.c.bf16 %v7465, %v7465
      %v9316 = vpack.c.bf16 %v7466, %v7466
      %v9317 = vpack.c.bf16 %v7467, %v7467
      %v9318 = vpack.c.bf16 %v7468, %v7468
      %v9319 = vpack.c.bf16 %v7469, %v7469
      %v9320 = vpack.c.bf16 %v7470, %v7470
      %v9321 = vpack.c.bf16 %v7471, %v7471
      %v9322 = vpack.c.bf16 %v7472, %v7472
      %v9323 = vpack.c.bf16 %v7473, %v7473
      %v9324 = vpack.c.bf16 %v7474, %v7474
      %v9325 = vpack.c.bf16 %v7475, %v7475
      %v9326 = vpack.c.bf16 %v7476, %v7476
      %v9327 = vpack.c.bf16 %v7477, %v7477
      %v9328 = vpack.c.bf16 %v7492, %v7492
      %v9329 = vpack.c.bf16 %v7493, %v7493
      %v9330 = vpack.c.bf16 %v7494, %v7494
      %v9331 = vpack.c.bf16 %v7495, %v7495
      %v9332 = vpack.c.bf16 %v7496, %v7496
      %v9333 = vpack.c.bf16 %v7497, %v7497
      %v9334 = vpack.c.bf16 %v7498, %v7498
      %v9335 = vpack.c.bf16 %v7499, %v7499
      %v9336 = vpack.c.bf16 %v7500, %v7500
      %v9337 = vpack.c.bf16 %v7501, %v7501
      %v9338 = vpack.c.bf16 %v7502, %v7502
      %v9339 = vpack.c.bf16 %v7503, %v7503
      %v9340 = vpack.c.bf16 %v7504, %v7504
      %v9341 = vpack.c.bf16 %v7505, %v7505
      %v9342 = vpack.c.bf16 %v7506, %v7506
      %v9343 = vpack.c.bf16 %v7507, %v7507
      %v9344 = vpack.c.bf16 %v7508, %v7508
      %v9345 = vpack.c.bf16 %v7509, %v7509
      %v9346 = vpack.c.bf16 %v7510, %v7510
      %v9347 = vpack.c.bf16 %v7511, %v7511
      %v9348 = vpack.c.bf16 %v7512, %v7512
      %v9349 = vpack.c.bf16 %v7513, %v7513
      %v9350 = vpack.c.bf16 %v7514, %v7514
      %v9351 = vpack.c.bf16 %v7515, %v7515
      %v9352 = vpack.c.bf16 %v7516, %v7516
      %v9353 = vpack.c.bf16 %v7517, %v7517
      %v9354 = vpack.c.bf16 %v7518, %v7518
      %v9355 = vpack.c.bf16 %v7519, %v7519
      %v9356 = vpack.c.bf16 %v7520, %v7520
      %v9357 = vpack.c.bf16 %v7521, %v7521
      %v9358 = vpack.c.bf16 %v7522, %v7522
      %v9359 = vpack.c.bf16 %v7523, %v7523
      %v9360 = vpack.c.bf16 %v7538, %v7538
      %v9361 = vpack.c.bf16 %v7539, %v7539
      %v9362 = vpack.c.bf16 %v7540, %v7540
      %v9363 = vpack.c.bf16 %v7541, %v7541
      %v9364 = vpack.c.bf16 %v7542, %v7542
      %v9365 = vpack.c.bf16 %v7543, %v7543
      %v9366 = vpack.c.bf16 %v7544, %v7544
      %v9367 = vpack.c.bf16 %v7545, %v7545
      %v9368 = vpack.c.bf16 %v7546, %v7546
      %v9369 = vpack.c.bf16 %v7547, %v7547
      %v9370 = vpack.c.bf16 %v7548, %v7548
      %v9371 = vpack.c.bf16 %v7549, %v7549
      %v9372 = vpack.c.bf16 %v7550, %v7550
      %v9373 = vpack.c.bf16 %v7551, %v7551
      %v9374 = vpack.c.bf16 %v7552, %v7552
      %v9375 = vpack.c.bf16 %v7553, %v7553
      %v9376 = vpack.c.bf16 %v7554, %v7554
      %v9377 = vpack.c.bf16 %v7555, %v7555
      %v9378 = vpack.c.bf16 %v7556, %v7556
      %v9379 = vpack.c.bf16 %v7557, %v7557
      %v9380 = vpack.c.bf16 %v7558, %v7558
      %v9381 = vpack.c.bf16 %v7559, %v7559
      %v9382 = vpack.c.bf16 %v7560, %v7560
      %v9383 = vpack.c.bf16 %v7561, %v7561
      %v9384 = vpack.c.bf16 %v7562, %v7562
      %v9385 = vpack.c.bf16 %v7563, %v7563
      %v9386 = vpack.c.bf16 %v7564, %v7564
      %v9387 = vpack.c.bf16 %v7565, %v7565
      %v9388 = vpack.c.bf16 %v7566, %v7566
      %v9389 = vpack.c.bf16 %v7567, %v7567
      %v9390 = vpack.c.bf16 %v7568, %v7568
      %v9391 = vpack.c.bf16 %v7569, %v7569
      %v9392 = vpack.c.bf16 %v7584, %v7584
      %v9393 = vpack.c.bf16 %v7585, %v7585
      %v9394 = vpack.c.bf16 %v7586, %v7586
      %v9395 = vpack.c.bf16 %v7587, %v7587
      %v9396 = vpack.c.bf16 %v7588, %v7588
      %v9397 = vpack.c.bf16 %v7589, %v7589
      %v9398 = vpack.c.bf16 %v7590, %v7590
      %v9399 = vpack.c.bf16 %v7591, %v7591
      %v9400 = vpack.c.bf16 %v7592, %v7592
      %v9401 = vpack.c.bf16 %v7593, %v7593
      %v9402 = vpack.c.bf16 %v7594, %v7594
      %v9403 = vpack.c.bf16 %v7595, %v7595
      %v9404 = vpack.c.bf16 %v7596, %v7596
      %v9405 = vpack.c.bf16 %v7597, %v7597
      %v9406 = vpack.c.bf16 %v7598, %v7598
      %v9407 = vpack.c.bf16 %v7599, %v7599
      %v9408 = vpack.c.bf16 %v7600, %v7600
      %v9409 = vpack.c.bf16 %v7601, %v7601
      %v9410 = vpack.c.bf16 %v7602, %v7602
      %v9411 = vpack.c.bf16 %v7603, %v7603
      %v9412 = vpack.c.bf16 %v7604, %v7604
      %v9413 = vpack.c.bf16 %v7605, %v7605
      %v9414 = vpack.c.bf16 %v7606, %v7606
      %v9415 = vpack.c.bf16 %v7607, %v7607
      %v9416 = vpack.c.bf16 %v7608, %v7608
      %v9417 = vpack.c.bf16 %v7609, %v7609
      %v9418 = vpack.c.bf16 %v7610, %v7610
      %v9419 = vpack.c.bf16 %v7611, %v7611
      %v9420 = vpack.c.bf16 %v7612, %v7612
      %v9421 = vpack.c.bf16 %v7613, %v7613
      %v9422 = vpack.c.bf16 %v7614, %v7614
      %v9423 = vpack.c.bf16 %v7615, %v7615
      %v9424 = vpack.c.bf16 %v7630, %v7630
      %v9425 = vpack.c.bf16 %v7631, %v7631
      %v9426 = vpack.c.bf16 %v7632, %v7632
      %v9427 = vpack.c.bf16 %v7633, %v7633
      %v9428 = vpack.c.bf16 %v7634, %v7634
      %v9429 = vpack.c.bf16 %v7635, %v7635
      %v9430 = vpack.c.bf16 %v7636, %v7636
      %v9431 = vpack.c.bf16 %v7637, %v7637
      %v9432 = vpack.c.bf16 %v7638, %v7638
      %v9433 = vpack.c.bf16 %v7639, %v7639
      %v9434 = vpack.c.bf16 %v7640, %v7640
      %v9435 = vpack.c.bf16 %v7641, %v7641
      %v9436 = vpack.c.bf16 %v7642, %v7642
      %v9437 = vpack.c.bf16 %v7643, %v7643
      %v9438 = vpack.c.bf16 %v7644, %v7644
      %v9439 = vpack.c.bf16 %v7645, %v7645
      %v9440 = vpack.c.bf16 %v7646, %v7646
      %v9441 = vpack.c.bf16 %v7647, %v7647
      %v9442 = vpack.c.bf16 %v7648, %v7648
      %v9443 = vpack.c.bf16 %v7649, %v7649
      %v9444 = vpack.c.bf16 %v7650, %v7650
      %v9445 = vpack.c.bf16 %v7651, %v7651
      %v9446 = vpack.c.bf16 %v7652, %v7652
      %v9447 = vpack.c.bf16 %v7653, %v7653
      %v9448 = vpack.c.bf16 %v7654, %v7654
      %v9449 = vpack.c.bf16 %v7655, %v7655
      %v9450 = vpack.c.bf16 %v7656, %v7656
      %v9451 = vpack.c.bf16 %v7657, %v7657
      %v9452 = vpack.c.bf16 %v7658, %v7658
      %v9453 = vpack.c.bf16 %v7659, %v7659
      %v9454 = vpack.c.bf16 %v7660, %v7660
      %v9455 = vpack.c.bf16 %v7661, %v7661
      %v9712 = vunpack.c.l.b16 %v9200
      %v9713 = vunpack.c.l.b16 %v9201
      %v9714 = vunpack.c.l.b16 %v9202
      %v9715 = vunpack.c.l.b16 %v9203
      %v9716 = vunpack.c.l.b16 %v9204
      %v9717 = vunpack.c.l.b16 %v9205
      %v9718 = vunpack.c.l.b16 %v9206
      %v9719 = vunpack.c.l.b16 %v9207
      %v9720 = vunpack.c.l.b16 %v9208
      %v9721 = vunpack.c.l.b16 %v9209
      %v9722 = vunpack.c.l.b16 %v9210
      %v9723 = vunpack.c.l.b16 %v9211
      %v9724 = vunpack.c.l.b16 %v9212
      %v9725 = vunpack.c.l.b16 %v9213
      %v9726 = vunpack.c.l.b16 %v9214
      %v9727 = vunpack.c.l.b16 %v9215
      %v9728 = vunpack.c.l.b16 %v9216
      %v9729 = vunpack.c.l.b16 %v9217
      %v9730 = vunpack.c.l.b16 %v9218
      %v9731 = vunpack.c.l.b16 %v9219
      %v9732 = vunpack.c.l.b16 %v9220
      %v9733 = vunpack.c.l.b16 %v9221
      %v9734 = vunpack.c.l.b16 %v9222
      %v9735 = vunpack.c.l.b16 %v9223
      %v9736 = vunpack.c.l.b16 %v9224
      %v9737 = vunpack.c.l.b16 %v9225
      %v9738 = vunpack.c.l.b16 %v9226
      %v9739 = vunpack.c.l.b16 %v9227
      %v9740 = vunpack.c.l.b16 %v9228
      %v9741 = vunpack.c.l.b16 %v9229
      %v9742 = vunpack.c.l.b16 %v9230
      %v9743 = vunpack.c.l.b16 %v9231
      %v9744 = vunpack.c.l.b16 %v9232
      %v9745 = vunpack.c.l.b16 %v9233
      %v9746 = vunpack.c.l.b16 %v9234
      %v9747 = vunpack.c.l.b16 %v9235
      %v9748 = vunpack.c.l.b16 %v9236
      %v9749 = vunpack.c.l.b16 %v9237
      %v9750 = vunpack.c.l.b16 %v9238
      %v9751 = vunpack.c.l.b16 %v9239
      %v9752 = vunpack.c.l.b16 %v9240
      %v9753 = vunpack.c.l.b16 %v9241
      %v9754 = vunpack.c.l.b16 %v9242
      %v9755 = vunpack.c.l.b16 %v9243
      %v9756 = vunpack.c.l.b16 %v9244
      %v9757 = vunpack.c.l.b16 %v9245
      %v9758 = vunpack.c.l.b16 %v9246
      %v9759 = vunpack.c.l.b16 %v9247
      %v9760 = vunpack.c.l.b16 %v9248
      %v9761 = vunpack.c.l.b16 %v9249
      %v9762 = vunpack.c.l.b16 %v9250
      %v9763 = vunpack.c.l.b16 %v9251
      %v9764 = vunpack.c.l.b16 %v9252
      %v9765 = vunpack.c.l.b16 %v9253
      %v9766 = vunpack.c.l.b16 %v9254
      %v9767 = vunpack.c.l.b16 %v9255
      %v9768 = vunpack.c.l.b16 %v9256
      %v9769 = vunpack.c.l.b16 %v9257
      %v9770 = vunpack.c.l.b16 %v9258
      %v9771 = vunpack.c.l.b16 %v9259
      %v9772 = vunpack.c.l.b16 %v9260
      %v9773 = vunpack.c.l.b16 %v9261
      %v9774 = vunpack.c.l.b16 %v9262
      %v9775 = vunpack.c.l.b16 %v9263
      %v9776 = vunpack.c.l.b16 %v9264
      %v9777 = vunpack.c.l.b16 %v9265
      %v9778 = vunpack.c.l.b16 %v9266
      %v9779 = vunpack.c.l.b16 %v9267
      %v9780 = vunpack.c.l.b16 %v9268
      %v9781 = vunpack.c.l.b16 %v9269
      %v9782 = vunpack.c.l.b16 %v9270
      %v9783 = vunpack.c.l.b16 %v9271
      %v9784 = vunpack.c.l.b16 %v9272
      %v9785 = vunpack.c.l.b16 %v9273
      %v9786 = vunpack.c.l.b16 %v9274
      %v9787 = vunpack.c.l.b16 %v9275
      %v9788 = vunpack.c.l.b16 %v9276
      %v9789 = vunpack.c.l.b16 %v9277
      %v9790 = vunpack.c.l.b16 %v9278
      %v9791 = vunpack.c.l.b16 %v9279
      %v9792 = vunpack.c.l.b16 %v9280
      %v9793 = vunpack.c.l.b16 %v9281
      %v9794 = vunpack.c.l.b16 %v9282
      %v9795 = vunpack.c.l.b16 %v9283
      %v9796 = vunpack.c.l.b16 %v9284
      %v9797 = vunpack.c.l.b16 %v9285
      %v9798 = vunpack.c.l.b16 %v9286
      %v9799 = vunpack.c.l.b16 %v9287
      %v9800 = vunpack.c.l.b16 %v9288
      %v9801 = vunpack.c.l.b16 %v9289
      %v9802 = vunpack.c.l.b16 %v9290
      %v9803 = vunpack.c.l.b16 %v9291
      %v9804 = vunpack.c.l.b16 %v9292
      %v9805 = vunpack.c.l.b16 %v9293
      %v9806 = vunpack.c.l.b16 %v9294
      %v9807 = vunpack.c.l.b16 %v9295
      %v9808 = vunpack.c.l.b16 %v9296
      %v9809 = vunpack.c.l.b16 %v9297
      %v9810 = vunpack.c.l.b16 %v9298
      %v9811 = vunpack.c.l.b16 %v9299
      %v9812 = vunpack.c.l.b16 %v9300
      %v9813 = vunpack.c.l.b16 %v9301
      %v9814 = vunpack.c.l.b16 %v9302
      %v9815 = vunpack.c.l.b16 %v9303
      %v9816 = vunpack.c.l.b16 %v9304
      %v9817 = vunpack.c.l.b16 %v9305
      %v9818 = vunpack.c.l.b16 %v9306
      %v9819 = vunpack.c.l.b16 %v9307
      %v9820 = vunpack.c.l.b16 %v9308
      %v9821 = vunpack.c.l.b16 %v9309
      %v9822 = vunpack.c.l.b16 %v9310
      %v9823 = vunpack.c.l.b16 %v9311
      %v9824 = vunpack.c.l.b16 %v9312
      %v9825 = vunpack.c.l.b16 %v9313
      %v9826 = vunpack.c.l.b16 %v9314
      %v9827 = vunpack.c.l.b16 %v9315
      %v9828 = vunpack.c.l.b16 %v9316
      %v9829 = vunpack.c.l.b16 %v9317
      %v9830 = vunpack.c.l.b16 %v9318
      %v9831 = vunpack.c.l.b16 %v9319
      %v9832 = vunpack.c.l.b16 %v9320
      %v9833 = vunpack.c.l.b16 %v9321
      %v9834 = vunpack.c.l.b16 %v9322
      %v9835 = vunpack.c.l.b16 %v9323
      %v9836 = vunpack.c.l.b16 %v9324
      %v9837 = vunpack.c.l.b16 %v9325
      %v9838 = vunpack.c.l.b16 %v9326
      %v9839 = vunpack.c.l.b16 %v9327
      %v9840 = vunpack.c.l.b16 %v9328
      %v9841 = vunpack.c.l.b16 %v9329
      %v9842 = vunpack.c.l.b16 %v9330
      %v9843 = vunpack.c.l.b16 %v9331
      %v9844 = vunpack.c.l.b16 %v9332
      %v9845 = vunpack.c.l.b16 %v9333
      %v9846 = vunpack.c.l.b16 %v9334
      %v9847 = vunpack.c.l.b16 %v9335
      %v9848 = vunpack.c.l.b16 %v9336
      %v9849 = vunpack.c.l.b16 %v9337
      %v9850 = vunpack.c.l.b16 %v9338
      %v9851 = vunpack.c.l.b16 %v9339
      %v9852 = vunpack.c.l.b16 %v9340
      %v9853 = vunpack.c.l.b16 %v9341
      %v9854 = vunpack.c.l.b16 %v9342
      %v9855 = vunpack.c.l.b16 %v9343
      %v9856 = vunpack.c.l.b16 %v9344
      %v9857 = vunpack.c.l.b16 %v9345
      %v9858 = vunpack.c.l.b16 %v9346
      %v9859 = vunpack.c.l.b16 %v9347
      %v9860 = vunpack.c.l.b16 %v9348
      %v9861 = vunpack.c.l.b16 %v9349
      %v9862 = vunpack.c.l.b16 %v9350
      %v9863 = vunpack.c.l.b16 %v9351
      %v9864 = vunpack.c.l.b16 %v9352
      %v9865 = vunpack.c.l.b16 %v9353
      %v9866 = vunpack.c.l.b16 %v9354
      %v9867 = vunpack.c.l.b16 %v9355
      %v9868 = vunpack.c.l.b16 %v9356
      %v9869 = vunpack.c.l.b16 %v9357
      %v9870 = vunpack.c.l.b16 %v9358
      %v9871 = vunpack.c.l.b16 %v9359
      %v9872 = vunpack.c.l.b16 %v9360
      %v9873 = vunpack.c.l.b16 %v9361
      %v9874 = vunpack.c.l.b16 %v9362
      %v9875 = vunpack.c.l.b16 %v9363
      %v9876 = vunpack.c.l.b16 %v9364
      %v9877 = vunpack.c.l.b16 %v9365
      %v9878 = vunpack.c.l.b16 %v9366
      %v9879 = vunpack.c.l.b16 %v9367
      %v9880 = vunpack.c.l.b16 %v9368
      %v9881 = vunpack.c.l.b16 %v9369
      %v9882 = vunpack.c.l.b16 %v9370
      %v9883 = vunpack.c.l.b16 %v9371
      %v9884 = vunpack.c.l.b16 %v9372
      %v9885 = vunpack.c.l.b16 %v9373
      %v9886 = vunpack.c.l.b16 %v9374
      %v9887 = vunpack.c.l.b16 %v9375
      %v9888 = vunpack.c.l.b16 %v9376
      %v9889 = vunpack.c.l.b16 %v9377
      %v9890 = vunpack.c.l.b16 %v9378
      %v9891 = vunpack.c.l.b16 %v9379
      %v9892 = vunpack.c.l.b16 %v9380
      %v9893 = vunpack.c.l.b16 %v9381
      %v9894 = vunpack.c.l.b16 %v9382
      %v9895 = vunpack.c.l.b16 %v9383
      %v9896 = vunpack.c.l.b16 %v9384
      %v9897 = vunpack.c.l.b16 %v9385
      %v9898 = vunpack.c.l.b16 %v9386
      %v9899 = vunpack.c.l.b16 %v9387
      %v9900 = vunpack.c.l.b16 %v9388
      %v9901 = vunpack.c.l.b16 %v9389
      %v9902 = vunpack.c.l.b16 %v9390
      %v9903 = vunpack.c.l.b16 %v9391
      %v9904 = vunpack.c.l.b16 %v9392
      %v9905 = vunpack.c.l.b16 %v9393
      %v9906 = vunpack.c.l.b16 %v9394
      %v9907 = vunpack.c.l.b16 %v9395
      %v9908 = vunpack.c.l.b16 %v9396
      %v9909 = vunpack.c.l.b16 %v9397
      %v9910 = vunpack.c.l.b16 %v9398
      %v9911 = vunpack.c.l.b16 %v9399
      %v9912 = vunpack.c.l.b16 %v9400
      %v9913 = vunpack.c.l.b16 %v9401
      %v9914 = vunpack.c.l.b16 %v9402
      %v9915 = vunpack.c.l.b16 %v9403
      %v9916 = vunpack.c.l.b16 %v9404
      %v9917 = vunpack.c.l.b16 %v9405
      %v9918 = vunpack.c.l.b16 %v9406
      %v9919 = vunpack.c.l.b16 %v9407
      %v9920 = vunpack.c.l.b16 %v9408
      %v9921 = vunpack.c.l.b16 %v9409
      %v9922 = vunpack.c.l.b16 %v9410
      %v9923 = vunpack.c.l.b16 %v9411
      %v9924 = vunpack.c.l.b16 %v9412
      %v9925 = vunpack.c.l.b16 %v9413
      %v9926 = vunpack.c.l.b16 %v9414
      %v9927 = vunpack.c.l.b16 %v9415
      %v9928 = vunpack.c.l.b16 %v9416
      %v9929 = vunpack.c.l.b16 %v9417
      %v9930 = vunpack.c.l.b16 %v9418
      %v9931 = vunpack.c.l.b16 %v9419
      %v9932 = vunpack.c.l.b16 %v9420
      %v9933 = vunpack.c.l.b16 %v9421
      %v9934 = vunpack.c.l.b16 %v9422
      %v9935 = vunpack.c.l.b16 %v9423
      %v9936 = vunpack.c.l.b16 %v9424
      %v9937 = vunpack.c.l.b16 %v9425
      %v9938 = vunpack.c.l.b16 %v9426
      %v9939 = vunpack.c.l.b16 %v9427
      %v9940 = vunpack.c.l.b16 %v9428
      %v9941 = vunpack.c.l.b16 %v9429
      %v9942 = vunpack.c.l.b16 %v9430
      %v9943 = vunpack.c.l.b16 %v9431
      %v9944 = vunpack.c.l.b16 %v9432
      %v9945 = vunpack.c.l.b16 %v9433
      %v9946 = vunpack.c.l.b16 %v9434
      %v9947 = vunpack.c.l.b16 %v9435
      %v9948 = vunpack.c.l.b16 %v9436
      %v9949 = vunpack.c.l.b16 %v9437
      %v9950 = vunpack.c.l.b16 %v9438
      %v9951 = vunpack.c.l.b16 %v9439
      %v9952 = vunpack.c.l.b16 %v9440
      %v9953 = vunpack.c.l.b16 %v9441
      %v9954 = vunpack.c.l.b16 %v9442
      %v9955 = vunpack.c.l.b16 %v9443
      %v9956 = vunpack.c.l.b16 %v9444
      %v9957 = vunpack.c.l.b16 %v9445
      %v9958 = vunpack.c.l.b16 %v9446
      %v9959 = vunpack.c.l.b16 %v9447
      %v9960 = vunpack.c.l.b16 %v9448
      %v9961 = vunpack.c.l.b16 %v9449
      %v9962 = vunpack.c.l.b16 %v9450
      %v9963 = vunpack.c.l.b16 %v9451
      %v9964 = vunpack.c.l.b16 %v9452
      %v9965 = vunpack.c.l.b16 %v9453
      %v9966 = vunpack.c.l.b16 %v9454
      %v9967 = vunpack.c.l.b16 %v9455
      %v9968 = vpack.c.b16 %v9713, %v9712
      %v9969 = vpack.c.b16 %v9715, %v9714
      %v9970 = vpack.c.b16 %v9717, %v9716
      %v9971 = vpack.c.b16 %v9719, %v9718
      %v9972 = vpack.c.b16 %v9721, %v9720
      %v9973 = vpack.c.b16 %v9723, %v9722
      %v9974 = vpack.c.b16 %v9725, %v9724
      %v9975 = vpack.c.b16 %v9727, %v9726
      %v9976 = vpack.c.b16 %v9729, %v9728
      %v9977 = vpack.c.b16 %v9731, %v9730
      %v9978 = vpack.c.b16 %v9733, %v9732
      %v9979 = vpack.c.b16 %v9735, %v9734
      %v9980 = vpack.c.b16 %v9737, %v9736
      %v9981 = vpack.c.b16 %v9739, %v9738
      %v9982 = vpack.c.b16 %v9741, %v9740
      %v9983 = vpack.c.b16 %v9743, %v9742
      %v9984 = vpack.c.b16 %v9745, %v9744
      %v9985 = vpack.c.b16 %v9747, %v9746
      %v9986 = vpack.c.b16 %v9749, %v9748
      %v9987 = vpack.c.b16 %v9751, %v9750
      %v9988 = vpack.c.b16 %v9753, %v9752
      %v9989 = vpack.c.b16 %v9755, %v9754
      %v9990 = vpack.c.b16 %v9757, %v9756
      %v9991 = vpack.c.b16 %v9759, %v9758
      %v9992 = vpack.c.b16 %v9761, %v9760
      %v9993 = vpack.c.b16 %v9763, %v9762
      %v9994 = vpack.c.b16 %v9765, %v9764
      %v9995 = vpack.c.b16 %v9767, %v9766
      %v9996 = vpack.c.b16 %v9769, %v9768
      %v9997 = vpack.c.b16 %v9771, %v9770
      %v9998 = vpack.c.b16 %v9773, %v9772
      %v9999 = vpack.c.b16 %v9775, %v9774
      %v10000 = vpack.c.b16 %v9777, %v9776
      %v10001 = vpack.c.b16 %v9779, %v9778
      %v10002 = vpack.c.b16 %v9781, %v9780
      %v10003 = vpack.c.b16 %v9783, %v9782
      %v10004 = vpack.c.b16 %v9785, %v9784
      %v10005 = vpack.c.b16 %v9787, %v9786
      %v10006 = vpack.c.b16 %v9789, %v9788
      %v10007 = vpack.c.b16 %v9791, %v9790
      %v10008 = vpack.c.b16 %v9793, %v9792
      %v10009 = vpack.c.b16 %v9795, %v9794
      %v10010 = vpack.c.b16 %v9797, %v9796
      %v10011 = vpack.c.b16 %v9799, %v9798
      %v10012 = vpack.c.b16 %v9801, %v9800
      %v10013 = vpack.c.b16 %v9803, %v9802
      %v10014 = vpack.c.b16 %v9805, %v9804
      %v10015 = vpack.c.b16 %v9807, %v9806
      %v10016 = vpack.c.b16 %v9809, %v9808
      %v10017 = vpack.c.b16 %v9811, %v9810
      %v10018 = vpack.c.b16 %v9813, %v9812
      %v10019 = vpack.c.b16 %v9815, %v9814
      %v10020 = vpack.c.b16 %v9817, %v9816
      %v10021 = vpack.c.b16 %v9819, %v9818
      %v10022 = vpack.c.b16 %v9821, %v9820
      %v10023 = vpack.c.b16 %v9823, %v9822
      %v10024 = vpack.c.b16 %v9825, %v9824
      %v10025 = vpack.c.b16 %v9827, %v9826
      %v10026 = vpack.c.b16 %v9829, %v9828
      %v10027 = vpack.c.b16 %v9831, %v9830
      %v10028 = vpack.c.b16 %v9833, %v9832
      %v10029 = vpack.c.b16 %v9835, %v9834
      %v10030 = vpack.c.b16 %v9837, %v9836
      %v10031 = vpack.c.b16 %v9839, %v9838
      %v10032 = vpack.c.b16 %v9841, %v9840
      %v10033 = vpack.c.b16 %v9843, %v9842
      %v10034 = vpack.c.b16 %v9845, %v9844
      %v10035 = vpack.c.b16 %v9847, %v9846
      %v10036 = vpack.c.b16 %v9849, %v9848
      %v10037 = vpack.c.b16 %v9851, %v9850
      %v10038 = vpack.c.b16 %v9853, %v9852
      %v10039 = vpack.c.b16 %v9855, %v9854
      %v10040 = vpack.c.b16 %v9857, %v9856
      %v10041 = vpack.c.b16 %v9859, %v9858
      %v10042 = vpack.c.b16 %v9861, %v9860
      %v10043 = vpack.c.b16 %v9863, %v9862
      %v10044 = vpack.c.b16 %v9865, %v9864
      %v10045 = vpack.c.b16 %v9867, %v9866
      %v10046 = vpack.c.b16 %v9869, %v9868
      %v10047 = vpack.c.b16 %v9871, %v9870
      %v10048 = vpack.c.b16 %v9873, %v9872
      %v10049 = vpack.c.b16 %v9875, %v9874
      %v10050 = vpack.c.b16 %v9877, %v9876
      %v10051 = vpack.c.b16 %v9879, %v9878
      %v10052 = vpack.c.b16 %v9881, %v9880
      %v10053 = vpack.c.b16 %v9883, %v9882
      %v10054 = vpack.c.b16 %v9885, %v9884
      %v10055 = vpack.c.b16 %v9887, %v9886
      %v10056 = vpack.c.b16 %v9889, %v9888
      %v10057 = vpack.c.b16 %v9891, %v9890
      %v10058 = vpack.c.b16 %v9893, %v9892
      %v10059 = vpack.c.b16 %v9895, %v9894
      %v10060 = vpack.c.b16 %v9897, %v9896
      %v10061 = vpack.c.b16 %v9899, %v9898
      %v10062 = vpack.c.b16 %v9901, %v9900
      %v10063 = vpack.c.b16 %v9903, %v9902
      %v10064 = vpack.c.b16 %v9905, %v9904
      %v10065 = vpack.c.b16 %v9907, %v9906
      %v10066 = vpack.c.b16 %v9909, %v9908
      %v10067 = vpack.c.b16 %v9911, %v9910
      %v10068 = vpack.c.b16 %v9913, %v9912
      %v10069 = vpack.c.b16 %v9915, %v9914
      %v10070 = vpack.c.b16 %v9917, %v9916
      %v10071 = vpack.c.b16 %v9919, %v9918
      %v10072 = vpack.c.b16 %v9921, %v9920
      %v10073 = vpack.c.b16 %v9923, %v9922
      %v10074 = vpack.c.b16 %v9925, %v9924
      %v10075 = vpack.c.b16 %v9927, %v9926
      %v10076 = vpack.c.b16 %v9929, %v9928
      %v10077 = vpack.c.b16 %v9931, %v9930
      %v10078 = vpack.c.b16 %v9933, %v9932
      %v10079 = vpack.c.b16 %v9935, %v9934
      %v10080 = vpack.c.b16 %v9937, %v9936
      %v10081 = vpack.c.b16 %v9939, %v9938
      %v10082 = vpack.c.b16 %v9941, %v9940
      %v10083 = vpack.c.b16 %v9943, %v9942
      %v10084 = vpack.c.b16 %v9945, %v9944
      %v10085 = vpack.c.b16 %v9947, %v9946
      %v10086 = vpack.c.b16 %v9949, %v9948
      %v10087 = vpack.c.b16 %v9951, %v9950
      %v10088 = vpack.c.b16 %v9953, %v9952
      %v10089 = vpack.c.b16 %v9955, %v9954
      %v10090 = vpack.c.b16 %v9957, %v9956
      %v10091 = vpack.c.b16 %v9959, %v9958
      %v10092 = vpack.c.b16 %v9961, %v9960
      %v10093 = vpack.c.b16 %v9963, %v9962
      %v10094 = vpack.c.b16 %v9965, %v9964
      %v10095 = vpack.c.b16 %v9967, %v9966
      %v10096 = vunpack.c.l.b16 %v9968
      %v10097 = vunpack.c.h.b16 %v9968
      %v10098 = vunpack.c.l.b16 %v9969
      %v10099 = vunpack.c.h.b16 %v9969
      %v10100 = vunpack.c.l.b16 %v9970
      %v10101 = vunpack.c.h.b16 %v9970
      %v10102 = vunpack.c.l.b16 %v9971
      %v10103 = vunpack.c.h.b16 %v9971
      %v10104 = vunpack.c.l.b16 %v9972
      %v10105 = vunpack.c.h.b16 %v9972
      %v10106 = vunpack.c.l.b16 %v9973
      %v10107 = vunpack.c.h.b16 %v9973
      %v10108 = vunpack.c.l.b16 %v9974
      %v10109 = vunpack.c.h.b16 %v9974
      %v10110 = vunpack.c.l.b16 %v9975
      %v10111 = vunpack.c.h.b16 %v9975
      %v10112 = vunpack.c.l.b16 %v9976
      %v10113 = vunpack.c.h.b16 %v9976
      %v10114 = vunpack.c.l.b16 %v9977
      %v10115 = vunpack.c.h.b16 %v9977
      %v10116 = vunpack.c.l.b16 %v9978
      %v10117 = vunpack.c.h.b16 %v9978
      %v10118 = vunpack.c.l.b16 %v9979
      %v10119 = vunpack.c.h.b16 %v9979
      %v10120 = vunpack.c.l.b16 %v9980
      %v10121 = vunpack.c.h.b16 %v9980
      %v10122 = vunpack.c.l.b16 %v9981
      %v10123 = vunpack.c.h.b16 %v9981
      %v10124 = vunpack.c.l.b16 %v9982
      %v10125 = vunpack.c.h.b16 %v9982
      %v10126 = vunpack.c.l.b16 %v9983
      %v10127 = vunpack.c.h.b16 %v9983
      %v10128 = vunpack.c.l.b16 %v9984
      %v10129 = vunpack.c.h.b16 %v9984
      %v10130 = vunpack.c.l.b16 %v9985
      %v10131 = vunpack.c.h.b16 %v9985
      %v10132 = vunpack.c.l.b16 %v9986
      %v10133 = vunpack.c.h.b16 %v9986
      %v10134 = vunpack.c.l.b16 %v9987
      %v10135 = vunpack.c.h.b16 %v9987
      %v10136 = vunpack.c.l.b16 %v9988
      %v10137 = vunpack.c.h.b16 %v9988
      %v10138 = vunpack.c.l.b16 %v9989
      %v10139 = vunpack.c.h.b16 %v9989
      %v10140 = vunpack.c.l.b16 %v9990
      %v10141 = vunpack.c.h.b16 %v9990
      %v10142 = vunpack.c.l.b16 %v9991
      %v10143 = vunpack.c.h.b16 %v9991
      %v10144 = vunpack.c.l.b16 %v9992
      %v10145 = vunpack.c.h.b16 %v9992
      %v10146 = vunpack.c.l.b16 %v9993
      %v10147 = vunpack.c.h.b16 %v9993
      %v10148 = vunpack.c.l.b16 %v9994
      %v10149 = vunpack.c.h.b16 %v9994
      %v10150 = vunpack.c.l.b16 %v9995
      %v10151 = vunpack.c.h.b16 %v9995
      %v10152 = vunpack.c.l.b16 %v9996
      %v10153 = vunpack.c.h.b16 %v9996
      %v10154 = vunpack.c.l.b16 %v9997
      %v10155 = vunpack.c.h.b16 %v9997
      %v10156 = vunpack.c.l.b16 %v9998
      %v10157 = vunpack.c.h.b16 %v9998
      %v10158 = vunpack.c.l.b16 %v9999
      %v10159 = vunpack.c.h.b16 %v9999
      %v10160 = vunpack.c.l.b16 %v10000
      %v10161 = vunpack.c.h.b16 %v10000
      %v10162 = vunpack.c.l.b16 %v10001
      %v10163 = vunpack.c.h.b16 %v10001
      %v10164 = vunpack.c.l.b16 %v10002
      %v10165 = vunpack.c.h.b16 %v10002
      %v10166 = vunpack.c.l.b16 %v10003
      %v10167 = vunpack.c.h.b16 %v10003
      %v10168 = vunpack.c.l.b16 %v10004
      %v10169 = vunpack.c.h.b16 %v10004
      %v10170 = vunpack.c.l.b16 %v10005
      %v10171 = vunpack.c.h.b16 %v10005
      %v10172 = vunpack.c.l.b16 %v10006
      %v10173 = vunpack.c.h.b16 %v10006
      %v10174 = vunpack.c.l.b16 %v10007
      %v10175 = vunpack.c.h.b16 %v10007
      %v10176 = vunpack.c.l.b16 %v10008
      %v10177 = vunpack.c.h.b16 %v10008
      %v10178 = vunpack.c.l.b16 %v10009
      %v10179 = vunpack.c.h.b16 %v10009
      %v10180 = vunpack.c.l.b16 %v10010
      %v10181 = vunpack.c.h.b16 %v10010
      %v10182 = vunpack.c.l.b16 %v10011
      %v10183 = vunpack.c.h.b16 %v10011
      %v10184 = vunpack.c.l.b16 %v10012
      %v10185 = vunpack.c.h.b16 %v10012
      %v10186 = vunpack.c.l.b16 %v10013
      %v10187 = vunpack.c.h.b16 %v10013
      %v10188 = vunpack.c.l.b16 %v10014
      %v10189 = vunpack.c.h.b16 %v10014
      %v10190 = vunpack.c.l.b16 %v10015
      %v10191 = vunpack.c.h.b16 %v10015
      %v10192 = vunpack.c.l.b16 %v10016
      %v10193 = vunpack.c.h.b16 %v10016
      %v10194 = vunpack.c.l.b16 %v10017
      %v10195 = vunpack.c.h.b16 %v10017
      %v10196 = vunpack.c.l.b16 %v10018
      %v10197 = vunpack.c.h.b16 %v10018
      %v10198 = vunpack.c.l.b16 %v10019
      %v10199 = vunpack.c.h.b16 %v10019
      %v10200 = vunpack.c.l.b16 %v10020
      %v10201 = vunpack.c.h.b16 %v10020
      %v10202 = vunpack.c.l.b16 %v10021
      %v10203 = vunpack.c.h.b16 %v10021
      %v10204 = vunpack.c.l.b16 %v10022
      %v10205 = vunpack.c.h.b16 %v10022
      %v10206 = vunpack.c.l.b16 %v10023
      %v10207 = vunpack.c.h.b16 %v10023
      %v10208 = vunpack.c.l.b16 %v10024
      %v10209 = vunpack.c.h.b16 %v10024
      %v10210 = vunpack.c.l.b16 %v10025
      %v10211 = vunpack.c.h.b16 %v10025
      %v10212 = vunpack.c.l.b16 %v10026
      %v10213 = vunpack.c.h.b16 %v10026
      %v10214 = vunpack.c.l.b16 %v10027
      %v10215 = vunpack.c.h.b16 %v10027
      %v10216 = vunpack.c.l.b16 %v10028
      %v10217 = vunpack.c.h.b16 %v10028
      %v10218 = vunpack.c.l.b16 %v10029
      %v10219 = vunpack.c.h.b16 %v10029
      %v10220 = vunpack.c.l.b16 %v10030
      %v10221 = vunpack.c.h.b16 %v10030
      %v10222 = vunpack.c.l.b16 %v10031
      %v10223 = vunpack.c.h.b16 %v10031
      %v10224 = vunpack.c.l.b16 %v10032
      %v10225 = vunpack.c.h.b16 %v10032
      %v10226 = vunpack.c.l.b16 %v10033
      %v10227 = vunpack.c.h.b16 %v10033
      %v10228 = vunpack.c.l.b16 %v10034
      %v10229 = vunpack.c.h.b16 %v10034
      %v10230 = vunpack.c.l.b16 %v10035
      %v10231 = vunpack.c.h.b16 %v10035
      %v10232 = vunpack.c.l.b16 %v10036
      %v10233 = vunpack.c.h.b16 %v10036
      %v10234 = vunpack.c.l.b16 %v10037
      %v10235 = vunpack.c.h.b16 %v10037
      %v10236 = vunpack.c.l.b16 %v10038
      %v10237 = vunpack.c.h.b16 %v10038
      %v10238 = vunpack.c.l.b16 %v10039
      %v10239 = vunpack.c.h.b16 %v10039
      %v10240 = vunpack.c.l.b16 %v10040
      %v10241 = vunpack.c.h.b16 %v10040
      %v10242 = vunpack.c.l.b16 %v10041
      %v10243 = vunpack.c.h.b16 %v10041
      %v10244 = vunpack.c.l.b16 %v10042
      %v10245 = vunpack.c.h.b16 %v10042
      %v10246 = vunpack.c.l.b16 %v10043
      %v10247 = vunpack.c.h.b16 %v10043
      %v10248 = vunpack.c.l.b16 %v10044
      %v10249 = vunpack.c.h.b16 %v10044
      %v10250 = vunpack.c.l.b16 %v10045
      %v10251 = vunpack.c.h.b16 %v10045
      %v10252 = vunpack.c.l.b16 %v10046
      %v10253 = vunpack.c.h.b16 %v10046
      %v10254 = vunpack.c.l.b16 %v10047
      %v10255 = vunpack.c.h.b16 %v10047
      %v10256 = vunpack.c.l.b16 %v10048
      %v10257 = vunpack.c.h.b16 %v10048
      %v10258 = vunpack.c.l.b16 %v10049
      %v10259 = vunpack.c.h.b16 %v10049
      %v10260 = vunpack.c.l.b16 %v10050
      %v10261 = vunpack.c.h.b16 %v10050
      %v10262 = vunpack.c.l.b16 %v10051
      %v10263 = vunpack.c.h.b16 %v10051
      %v10264 = vunpack.c.l.b16 %v10052
      %v10265 = vunpack.c.h.b16 %v10052
      %v10266 = vunpack.c.l.b16 %v10053
      %v10267 = vunpack.c.h.b16 %v10053
      %v10268 = vunpack.c.l.b16 %v10054
      %v10269 = vunpack.c.h.b16 %v10054
      %v10270 = vunpack.c.l.b16 %v10055
      %v10271 = vunpack.c.h.b16 %v10055
      %v10272 = vunpack.c.l.b16 %v10056
      %v10273 = vunpack.c.h.b16 %v10056
      %v10274 = vunpack.c.l.b16 %v10057
      %v10275 = vunpack.c.h.b16 %v10057
      %v10276 = vunpack.c.l.b16 %v10058
      %v10277 = vunpack.c.h.b16 %v10058
      %v10278 = vunpack.c.l.b16 %v10059
      %v10279 = vunpack.c.h.b16 %v10059
      %v10280 = vunpack.c.l.b16 %v10060
      %v10281 = vunpack.c.h.b16 %v10060
      %v10282 = vunpack.c.l.b16 %v10061
      %v10283 = vunpack.c.h.b16 %v10061
      %v10284 = vunpack.c.l.b16 %v10062
      %v10285 = vunpack.c.h.b16 %v10062
      %v10286 = vunpack.c.l.b16 %v10063
      %v10287 = vunpack.c.h.b16 %v10063
      %v10288 = vunpack.c.l.b16 %v10064
      %v10289 = vunpack.c.h.b16 %v10064
      %v10290 = vunpack.c.l.b16 %v10065
      %v10291 = vunpack.c.h.b16 %v10065
      %v10292 = vunpack.c.l.b16 %v10066
      %v10293 = vunpack.c.h.b16 %v10066
      %v10294 = vunpack.c.l.b16 %v10067
      %v10295 = vunpack.c.h.b16 %v10067
      %v10296 = vunpack.c.l.b16 %v10068
      %v10297 = vunpack.c.h.b16 %v10068
      %v10298 = vunpack.c.l.b16 %v10069
      %v10299 = vunpack.c.h.b16 %v10069
      %v10300 = vunpack.c.l.b16 %v10070
      %v10301 = vunpack.c.h.b16 %v10070
      %v10302 = vunpack.c.l.b16 %v10071
      %v10303 = vunpack.c.h.b16 %v10071
      %v10304 = vunpack.c.l.b16 %v10072
      %v10305 = vunpack.c.h.b16 %v10072
      %v10306 = vunpack.c.l.b16 %v10073
      %v10307 = vunpack.c.h.b16 %v10073
      %v10308 = vunpack.c.l.b16 %v10074
      %v10309 = vunpack.c.h.b16 %v10074
      %v10310 = vunpack.c.l.b16 %v10075
      %v10311 = vunpack.c.h.b16 %v10075
      %v10312 = vunpack.c.l.b16 %v10076
      %v10313 = vunpack.c.h.b16 %v10076
      %v10314 = vunpack.c.l.b16 %v10077
      %v10315 = vunpack.c.h.b16 %v10077
      %v10316 = vunpack.c.l.b16 %v10078
      %v10317 = vunpack.c.h.b16 %v10078
      %v10318 = vunpack.c.l.b16 %v10079
      %v10319 = vunpack.c.h.b16 %v10079
      %v10320 = vunpack.c.l.b16 %v10080
      %v10321 = vunpack.c.h.b16 %v10080
      %v10322 = vunpack.c.l.b16 %v10081
      %v10323 = vunpack.c.h.b16 %v10081
      %v10324 = vunpack.c.l.b16 %v10082
      %v10325 = vunpack.c.h.b16 %v10082
      %v10326 = vunpack.c.l.b16 %v10083
      %v10327 = vunpack.c.h.b16 %v10083
      %v10328 = vunpack.c.l.b16 %v10084
      %v10329 = vunpack.c.h.b16 %v10084
      %v10330 = vunpack.c.l.b16 %v10085
      %v10331 = vunpack.c.h.b16 %v10085
      %v10332 = vunpack.c.l.b16 %v10086
      %v10333 = vunpack.c.h.b16 %v10086
      %v10334 = vunpack.c.l.b16 %v10087
      %v10335 = vunpack.c.h.b16 %v10087
      %v10336 = vunpack.c.l.b16 %v10088
      %v10337 = vunpack.c.h.b16 %v10088
      %v10338 = vunpack.c.l.b16 %v10089
      %v10339 = vunpack.c.h.b16 %v10089
      %v10340 = vunpack.c.l.b16 %v10090
      %v10341 = vunpack.c.h.b16 %v10090
      %v10342 = vunpack.c.l.b16 %v10091
      %v10343 = vunpack.c.h.b16 %v10091
      %v10344 = vunpack.c.l.b16 %v10092
      %v10345 = vunpack.c.h.b16 %v10092
      %v10346 = vunpack.c.l.b16 %v10093
      %v10347 = vunpack.c.h.b16 %v10093
      %v10348 = vunpack.c.l.b16 %v10094
      %v10349 = vunpack.c.h.b16 %v10094
      %v10350 = vunpack.c.l.b16 %v10095
      %v10351 = vunpack.c.h.b16 %v10095
      %10352 = vset.pattern.permute.xlu0 0
      %10353 = vperm.xlu0 %10352, %v10096
      %v10354 = vpop.permute.xlu0 %10353
      %10355 = vset.pattern.permute.xlu0 0
      %10356 = vperm.xlu0 %10355, %v10097
      %v10357 = vpop.permute.xlu0 %10356
      %10358 = vset.pattern.permute.xlu0 0
      %10359 = vperm.xlu0 %10358, %v10098
      %v10360 = vpop.permute.xlu0 %10359
      %10361 = vset.pattern.permute.xlu0 0
      %10362 = vperm.xlu0 %10361, %v10099
      %v10363 = vpop.permute.xlu0 %10362
      %10364 = vset.pattern.permute.xlu0 0
      %10365 = vperm.xlu0 %10364, %v10100
      %v10366 = vpop.permute.xlu0 %10365
      %10367 = vset.pattern.permute.xlu0 0
      %10368 = vperm.xlu0 %10367, %v10101
      %v10369 = vpop.permute.xlu0 %10368
      %10370 = vset.pattern.permute.xlu0 0
      %10371 = vperm.xlu0 %10370, %v10102
      %v10372 = vpop.permute.xlu0 %10371
      %10373 = vset.pattern.permute.xlu0 0
      %10374 = vperm.xlu0 %10373, %v10103
      %v10375 = vpop.permute.xlu0 %10374
      %10376 = vset.pattern.permute.xlu0 0
      %10377 = vperm.xlu0 %10376, %v10104
      %v10378 = vpop.permute.xlu0 %10377
      %10379 = vset.pattern.permute.xlu0 0
      %10380 = vperm.xlu0 %10379, %v10105
      %v10381 = vpop.permute.xlu0 %10380
      %10382 = vset.pattern.permute.xlu0 0
      %10383 = vperm.xlu0 %10382, %v10106
      %v10384 = vpop.permute.xlu0 %10383
      %10385 = vset.pattern.permute.xlu0 0
      %10386 = vperm.xlu0 %10385, %v10107
      %v10387 = vpop.permute.xlu0 %10386
      %10388 = vset.pattern.permute.xlu0 0
      %10389 = vperm.xlu0 %10388, %v10108
      %v10390 = vpop.permute.xlu0 %10389
      %10391 = vset.pattern.permute.xlu0 0
      %10392 = vperm.xlu0 %10391, %v10109
      %v10393 = vpop.permute.xlu0 %10392
      %10394 = vset.pattern.permute.xlu0 0
      %10395 = vperm.xlu0 %10394, %v10110
      %v10396 = vpop.permute.xlu0 %10395
      %10397 = vset.pattern.permute.xlu0 0
      %10398 = vperm.xlu0 %10397, %v10111
      %v10399 = vpop.permute.xlu0 %10398
      %10400 = vset.pattern.permute.xlu0 0
      %10401 = vperm.xlu0 %10400, %v10112
      %v10402 = vpop.permute.xlu0 %10401
      %10403 = vset.pattern.permute.xlu0 0
      %10404 = vperm.xlu0 %10403, %v10113
      %v10405 = vpop.permute.xlu0 %10404
      %10406 = vset.pattern.permute.xlu0 0
      %10407 = vperm.xlu0 %10406, %v10114
      %v10408 = vpop.permute.xlu0 %10407
      %10409 = vset.pattern.permute.xlu0 0
      %10410 = vperm.xlu0 %10409, %v10115
      %v10411 = vpop.permute.xlu0 %10410
      %10412 = vset.pattern.permute.xlu0 0
      %10413 = vperm.xlu0 %10412, %v10116
      %v10414 = vpop.permute.xlu0 %10413
      %10415 = vset.pattern.permute.xlu0 0
      %10416 = vperm.xlu0 %10415, %v10117
      %v10417 = vpop.permute.xlu0 %10416
      %10418 = vset.pattern.permute.xlu0 0
      %10419 = vperm.xlu0 %10418, %v10118
      %v10420 = vpop.permute.xlu0 %10419
      %10421 = vset.pattern.permute.xlu0 0
      %10422 = vperm.xlu0 %10421, %v10119
      %v10423 = vpop.permute.xlu0 %10422
      %10424 = vset.pattern.permute.xlu0 0
      %10425 = vperm.xlu0 %10424, %v10120
      %v10426 = vpop.permute.xlu0 %10425
      %10427 = vset.pattern.permute.xlu0 0
      %10428 = vperm.xlu0 %10427, %v10121
      %v10429 = vpop.permute.xlu0 %10428
      %10430 = vset.pattern.permute.xlu0 0
      %10431 = vperm.xlu0 %10430, %v10122
      %v10432 = vpop.permute.xlu0 %10431
      %10433 = vset.pattern.permute.xlu0 0
      %10434 = vperm.xlu0 %10433, %v10123
      %v10435 = vpop.permute.xlu0 %10434
      %10436 = vset.pattern.permute.xlu0 0
      %10437 = vperm.xlu0 %10436, %v10124
      %v10438 = vpop.permute.xlu0 %10437
      %10439 = vset.pattern.permute.xlu0 0
      %10440 = vperm.xlu0 %10439, %v10125
      %v10441 = vpop.permute.xlu0 %10440
      %10442 = vset.pattern.permute.xlu0 0
      %10443 = vperm.xlu0 %10442, %v10126
      %v10444 = vpop.permute.xlu0 %10443
      %10445 = vset.pattern.permute.xlu0 0
      %10446 = vperm.xlu0 %10445, %v10127
      %v10447 = vpop.permute.xlu0 %10446
      %10448 = vset.pattern.permute.xlu0 0
      %10449 = vperm.xlu0 %10448, %v10128
      %v10450 = vpop.permute.xlu0 %10449
      %10451 = vset.pattern.permute.xlu0 0
      %10452 = vperm.xlu0 %10451, %v10129
      %v10453 = vpop.permute.xlu0 %10452
      %10454 = vset.pattern.permute.xlu0 0
      %10455 = vperm.xlu0 %10454, %v10130
      %v10456 = vpop.permute.xlu0 %10455
      %10457 = vset.pattern.permute.xlu0 0
      %10458 = vperm.xlu0 %10457, %v10131
      %v10459 = vpop.permute.xlu0 %10458
      %10460 = vset.pattern.permute.xlu0 0
      %10461 = vperm.xlu0 %10460, %v10132
      %v10462 = vpop.permute.xlu0 %10461
      %10463 = vset.pattern.permute.xlu0 0
      %10464 = vperm.xlu0 %10463, %v10133
      %v10465 = vpop.permute.xlu0 %10464
      %10466 = vset.pattern.permute.xlu0 0
      %10467 = vperm.xlu0 %10466, %v10134
      %v10468 = vpop.permute.xlu0 %10467
      %10469 = vset.pattern.permute.xlu0 0
      %10470 = vperm.xlu0 %10469, %v10135
      %v10471 = vpop.permute.xlu0 %10470
      %10472 = vset.pattern.permute.xlu0 0
      %10473 = vperm.xlu0 %10472, %v10136
      %v10474 = vpop.permute.xlu0 %10473
      %10475 = vset.pattern.permute.xlu0 0
      %10476 = vperm.xlu0 %10475, %v10137
      %v10477 = vpop.permute.xlu0 %10476
      %10478 = vset.pattern.permute.xlu0 0
      %10479 = vperm.xlu0 %10478, %v10138
      %v10480 = vpop.permute.xlu0 %10479
      %10481 = vset.pattern.permute.xlu0 0
      %10482 = vperm.xlu0 %10481, %v10139
      %v10483 = vpop.permute.xlu0 %10482
      %10484 = vset.pattern.permute.xlu0 0
      %10485 = vperm.xlu0 %10484, %v10140
      %v10486 = vpop.permute.xlu0 %10485
      %10487 = vset.pattern.permute.xlu0 0
      %10488 = vperm.xlu0 %10487, %v10141
      %v10489 = vpop.permute.xlu0 %10488
      %10490 = vset.pattern.permute.xlu0 0
      %10491 = vperm.xlu0 %10490, %v10142
      %v10492 = vpop.permute.xlu0 %10491
      %10493 = vset.pattern.permute.xlu0 0
      %10494 = vperm.xlu0 %10493, %v10143
      %v10495 = vpop.permute.xlu0 %10494
      %10496 = vset.pattern.permute.xlu0 0
      %10497 = vperm.xlu0 %10496, %v10144
      %v10498 = vpop.permute.xlu0 %10497
      %10499 = vset.pattern.permute.xlu0 0
      %10500 = vperm.xlu0 %10499, %v10145
      %v10501 = vpop.permute.xlu0 %10500
      %10502 = vset.pattern.permute.xlu0 0
      %10503 = vperm.xlu0 %10502, %v10146
      %v10504 = vpop.permute.xlu0 %10503
      %10505 = vset.pattern.permute.xlu0 0
      %10506 = vperm.xlu0 %10505, %v10147
      %v10507 = vpop.permute.xlu0 %10506
      %10508 = vset.pattern.permute.xlu0 0
      %10509 = vperm.xlu0 %10508, %v10148
      %v10510 = vpop.permute.xlu0 %10509
      %10511 = vset.pattern.permute.xlu0 0
      %10512 = vperm.xlu0 %10511, %v10149
      %v10513 = vpop.permute.xlu0 %10512
      %10514 = vset.pattern.permute.xlu0 0
      %10515 = vperm.xlu0 %10514, %v10150
      %v10516 = vpop.permute.xlu0 %10515
      %10517 = vset.pattern.permute.xlu0 0
      %10518 = vperm.xlu0 %10517, %v10151
      %v10519 = vpop.permute.xlu0 %10518
      %10520 = vset.pattern.permute.xlu0 0
      %10521 = vperm.xlu0 %10520, %v10152
      %v10522 = vpop.permute.xlu0 %10521
      %10523 = vset.pattern.permute.xlu0 0
      %10524 = vperm.xlu0 %10523, %v10153
      %v10525 = vpop.permute.xlu0 %10524
      %10526 = vset.pattern.permute.xlu0 0
      %10527 = vperm.xlu0 %10526, %v10154
      %v10528 = vpop.permute.xlu0 %10527
      %10529 = vset.pattern.permute.xlu0 0
      %10530 = vperm.xlu0 %10529, %v10155
      %v10531 = vpop.permute.xlu0 %10530
      %10532 = vset.pattern.permute.xlu0 0
      %10533 = vperm.xlu0 %10532, %v10156
      %v10534 = vpop.permute.xlu0 %10533
      %10535 = vset.pattern.permute.xlu0 0
      %10536 = vperm.xlu0 %10535, %v10157
      %v10537 = vpop.permute.xlu0 %10536
      %10538 = vset.pattern.permute.xlu0 0
      %10539 = vperm.xlu0 %10538, %v10158
      %v10540 = vpop.permute.xlu0 %10539
      %10541 = vset.pattern.permute.xlu0 0
      %10542 = vperm.xlu0 %10541, %v10159
      %v10543 = vpop.permute.xlu0 %10542
      %10544 = vset.pattern.permute.xlu0 0
      %10545 = vperm.xlu0 %10544, %v10160
      %v10546 = vpop.permute.xlu0 %10545
      %10547 = vset.pattern.permute.xlu0 0
      %10548 = vperm.xlu0 %10547, %v10161
      %v10549 = vpop.permute.xlu0 %10548
      %10550 = vset.pattern.permute.xlu0 0
      %10551 = vperm.xlu0 %10550, %v10162
      %v10552 = vpop.permute.xlu0 %10551
      %10553 = vset.pattern.permute.xlu0 0
      %10554 = vperm.xlu0 %10553, %v10163
      %v10555 = vpop.permute.xlu0 %10554
      %10556 = vset.pattern.permute.xlu0 0
      %10557 = vperm.xlu0 %10556, %v10164
      %v10558 = vpop.permute.xlu0 %10557
      %10559 = vset.pattern.permute.xlu0 0
      %10560 = vperm.xlu0 %10559, %v10165
      %v10561 = vpop.permute.xlu0 %10560
      %10562 = vset.pattern.permute.xlu0 0
      %10563 = vperm.xlu0 %10562, %v10166
      %v10564 = vpop.permute.xlu0 %10563
      %10565 = vset.pattern.permute.xlu0 0
      %10566 = vperm.xlu0 %10565, %v10167
      %v10567 = vpop.permute.xlu0 %10566
      %10568 = vset.pattern.permute.xlu0 0
      %10569 = vperm.xlu0 %10568, %v10168
      %v10570 = vpop.permute.xlu0 %10569
      %10571 = vset.pattern.permute.xlu0 0
      %10572 = vperm.xlu0 %10571, %v10169
      %v10573 = vpop.permute.xlu0 %10572
      %10574 = vset.pattern.permute.xlu0 0
      %10575 = vperm.xlu0 %10574, %v10170
      %v10576 = vpop.permute.xlu0 %10575
      %10577 = vset.pattern.permute.xlu0 0
      %10578 = vperm.xlu0 %10577, %v10171
      %v10579 = vpop.permute.xlu0 %10578
      %10580 = vset.pattern.permute.xlu0 0
      %10581 = vperm.xlu0 %10580, %v10172
      %v10582 = vpop.permute.xlu0 %10581
      %10583 = vset.pattern.permute.xlu0 0
      %10584 = vperm.xlu0 %10583, %v10173
      %v10585 = vpop.permute.xlu0 %10584
      %10586 = vset.pattern.permute.xlu0 0
      %10587 = vperm.xlu0 %10586, %v10174
      %v10588 = vpop.permute.xlu0 %10587
      %10589 = vset.pattern.permute.xlu0 0
      %10590 = vperm.xlu0 %10589, %v10175
      %v10591 = vpop.permute.xlu0 %10590
      %10592 = vset.pattern.permute.xlu0 0
      %10593 = vperm.xlu0 %10592, %v10176
      %v10594 = vpop.permute.xlu0 %10593
      %10595 = vset.pattern.permute.xlu0 0
      %10596 = vperm.xlu0 %10595, %v10177
      %v10597 = vpop.permute.xlu0 %10596
      %10598 = vset.pattern.permute.xlu0 0
      %10599 = vperm.xlu0 %10598, %v10178
      %v10600 = vpop.permute.xlu0 %10599
      %10601 = vset.pattern.permute.xlu0 0
      %10602 = vperm.xlu0 %10601, %v10179
      %v10603 = vpop.permute.xlu0 %10602
      %10604 = vset.pattern.permute.xlu0 0
      %10605 = vperm.xlu0 %10604, %v10180
      %v10606 = vpop.permute.xlu0 %10605
      %10607 = vset.pattern.permute.xlu0 0
      %10608 = vperm.xlu0 %10607, %v10181
      %v10609 = vpop.permute.xlu0 %10608
      %10610 = vset.pattern.permute.xlu0 0
      %10611 = vperm.xlu0 %10610, %v10182
      %v10612 = vpop.permute.xlu0 %10611
      %10613 = vset.pattern.permute.xlu0 0
      %10614 = vperm.xlu0 %10613, %v10183
      %v10615 = vpop.permute.xlu0 %10614
      %10616 = vset.pattern.permute.xlu0 0
      %10617 = vperm.xlu0 %10616, %v10184
      %v10618 = vpop.permute.xlu0 %10617
      %10619 = vset.pattern.permute.xlu0 0
      %10620 = vperm.xlu0 %10619, %v10185
      %v10621 = vpop.permute.xlu0 %10620
      %10622 = vset.pattern.permute.xlu0 0
      %10623 = vperm.xlu0 %10622, %v10186
      %v10624 = vpop.permute.xlu0 %10623
      %10625 = vset.pattern.permute.xlu0 0
      %10626 = vperm.xlu0 %10625, %v10187
      %v10627 = vpop.permute.xlu0 %10626
      %10628 = vset.pattern.permute.xlu0 0
      %10629 = vperm.xlu0 %10628, %v10188
      %v10630 = vpop.permute.xlu0 %10629
      %10631 = vset.pattern.permute.xlu0 0
      %10632 = vperm.xlu0 %10631, %v10189
      %v10633 = vpop.permute.xlu0 %10632
      %10634 = vset.pattern.permute.xlu0 0
      %10635 = vperm.xlu0 %10634, %v10190
      %v10636 = vpop.permute.xlu0 %10635
      %10637 = vset.pattern.permute.xlu0 0
      %10638 = vperm.xlu0 %10637, %v10191
      %v10639 = vpop.permute.xlu0 %10638
      %10640 = vset.pattern.permute.xlu0 0
      %10641 = vperm.xlu0 %10640, %v10192
      %v10642 = vpop.permute.xlu0 %10641
      %10643 = vset.pattern.permute.xlu0 0
      %10644 = vperm.xlu0 %10643, %v10193
      %v10645 = vpop.permute.xlu0 %10644
      %10646 = vset.pattern.permute.xlu0 0
      %10647 = vperm.xlu0 %10646, %v10194
      %v10648 = vpop.permute.xlu0 %10647
      %10649 = vset.pattern.permute.xlu0 0
      %10650 = vperm.xlu0 %10649, %v10195
      %v10651 = vpop.permute.xlu0 %10650
      %10652 = vset.pattern.permute.xlu0 0
      %10653 = vperm.xlu0 %10652, %v10196
      %v10654 = vpop.permute.xlu0 %10653
      %10655 = vset.pattern.permute.xlu0 0
      %10656 = vperm.xlu0 %10655, %v10197
      %v10657 = vpop.permute.xlu0 %10656
      %10658 = vset.pattern.permute.xlu0 0
      %10659 = vperm.xlu0 %10658, %v10198
      %v10660 = vpop.permute.xlu0 %10659
      %10661 = vset.pattern.permute.xlu0 0
      %10662 = vperm.xlu0 %10661, %v10199
      %v10663 = vpop.permute.xlu0 %10662
      %10664 = vset.pattern.permute.xlu0 0
      %10665 = vperm.xlu0 %10664, %v10200
      %v10666 = vpop.permute.xlu0 %10665
      %10667 = vset.pattern.permute.xlu0 0
      %10668 = vperm.xlu0 %10667, %v10201
      %v10669 = vpop.permute.xlu0 %10668
      %10670 = vset.pattern.permute.xlu0 0
      %10671 = vperm.xlu0 %10670, %v10202
      %v10672 = vpop.permute.xlu0 %10671
      %10673 = vset.pattern.permute.xlu0 0
      %10674 = vperm.xlu0 %10673, %v10203
      %v10675 = vpop.permute.xlu0 %10674
      %10676 = vset.pattern.permute.xlu0 0
      %10677 = vperm.xlu0 %10676, %v10204
      %v10678 = vpop.permute.xlu0 %10677
      %10679 = vset.pattern.permute.xlu0 0
      %10680 = vperm.xlu0 %10679, %v10205
      %v10681 = vpop.permute.xlu0 %10680
      %10682 = vset.pattern.permute.xlu0 0
      %10683 = vperm.xlu0 %10682, %v10206
      %v10684 = vpop.permute.xlu0 %10683
      %10685 = vset.pattern.permute.xlu0 0
      %10686 = vperm.xlu0 %10685, %v10207
      %v10687 = vpop.permute.xlu0 %10686
      %10688 = vset.pattern.permute.xlu0 0
      %10689 = vperm.xlu0 %10688, %v10208
      %v10690 = vpop.permute.xlu0 %10689
      %10691 = vset.pattern.permute.xlu0 0
      %10692 = vperm.xlu0 %10691, %v10209
      %v10693 = vpop.permute.xlu0 %10692
      %10694 = vset.pattern.permute.xlu0 0
      %10695 = vperm.xlu0 %10694, %v10210
      %v10696 = vpop.permute.xlu0 %10695
      %10697 = vset.pattern.permute.xlu0 0
      %10698 = vperm.xlu0 %10697, %v10211
      %v10699 = vpop.permute.xlu0 %10698
      %10700 = vset.pattern.permute.xlu0 0
      %10701 = vperm.xlu0 %10700, %v10212
      %v10702 = vpop.permute.xlu0 %10701
      %10703 = vset.pattern.permute.xlu0 0
      %10704 = vperm.xlu0 %10703, %v10213
      %v10705 = vpop.permute.xlu0 %10704
      %10706 = vset.pattern.permute.xlu0 0
      %10707 = vperm.xlu0 %10706, %v10214
      %v10708 = vpop.permute.xlu0 %10707
      %10709 = vset.pattern.permute.xlu0 0
      %10710 = vperm.xlu0 %10709, %v10215
      %v10711 = vpop.permute.xlu0 %10710
      %10712 = vset.pattern.permute.xlu0 0
      %10713 = vperm.xlu0 %10712, %v10216
      %v10714 = vpop.permute.xlu0 %10713
      %10715 = vset.pattern.permute.xlu0 0
      %10716 = vperm.xlu0 %10715, %v10217
      %v10717 = vpop.permute.xlu0 %10716
      %10718 = vset.pattern.permute.xlu0 0
      %10719 = vperm.xlu0 %10718, %v10218
      %v10720 = vpop.permute.xlu0 %10719
      %10721 = vset.pattern.permute.xlu0 0
      %10722 = vperm.xlu0 %10721, %v10219
      %v10723 = vpop.permute.xlu0 %10722
      %10724 = vset.pattern.permute.xlu0 0
      %10725 = vperm.xlu0 %10724, %v10220
      %v10726 = vpop.permute.xlu0 %10725
      %10727 = vset.pattern.permute.xlu0 0
      %10728 = vperm.xlu0 %10727, %v10221
      %v10729 = vpop.permute.xlu0 %10728
      %10730 = vset.pattern.permute.xlu0 0
      %10731 = vperm.xlu0 %10730, %v10222
      %v10732 = vpop.permute.xlu0 %10731
      %10733 = vset.pattern.permute.xlu0 0
      %10734 = vperm.xlu0 %10733, %v10223
      %v10735 = vpop.permute.xlu0 %10734
      %10736 = vset.pattern.permute.xlu0 0
      %10737 = vperm.xlu0 %10736, %v10224
      %v10738 = vpop.permute.xlu0 %10737
      %10739 = vset.pattern.permute.xlu0 0
      %10740 = vperm.xlu0 %10739, %v10225
      %v10741 = vpop.permute.xlu0 %10740
      %10742 = vset.pattern.permute.xlu0 0
      %10743 = vperm.xlu0 %10742, %v10226
      %v10744 = vpop.permute.xlu0 %10743
      %10745 = vset.pattern.permute.xlu0 0
      %10746 = vperm.xlu0 %10745, %v10227
      %v10747 = vpop.permute.xlu0 %10746
      %10748 = vset.pattern.permute.xlu0 0
      %10749 = vperm.xlu0 %10748, %v10228
      %v10750 = vpop.permute.xlu0 %10749
      %10751 = vset.pattern.permute.xlu0 0
      %10752 = vperm.xlu0 %10751, %v10229
      %v10753 = vpop.permute.xlu0 %10752
      %10754 = vset.pattern.permute.xlu0 0
      %10755 = vperm.xlu0 %10754, %v10230
      %v10756 = vpop.permute.xlu0 %10755
      %10757 = vset.pattern.permute.xlu0 0
      %10758 = vperm.xlu0 %10757, %v10231
      %v10759 = vpop.permute.xlu0 %10758
      %10760 = vset.pattern.permute.xlu0 0
      %10761 = vperm.xlu0 %10760, %v10232
      %v10762 = vpop.permute.xlu0 %10761
      %10763 = vset.pattern.permute.xlu0 0
      %10764 = vperm.xlu0 %10763, %v10233
      %v10765 = vpop.permute.xlu0 %10764
      %10766 = vset.pattern.permute.xlu0 0
      %10767 = vperm.xlu0 %10766, %v10234
      %v10768 = vpop.permute.xlu0 %10767
      %10769 = vset.pattern.permute.xlu0 0
      %10770 = vperm.xlu0 %10769, %v10235
      %v10771 = vpop.permute.xlu0 %10770
      %10772 = vset.pattern.permute.xlu0 0
      %10773 = vperm.xlu0 %10772, %v10236
      %v10774 = vpop.permute.xlu0 %10773
      %10775 = vset.pattern.permute.xlu0 0
      %10776 = vperm.xlu0 %10775, %v10237
      %v10777 = vpop.permute.xlu0 %10776
      %10778 = vset.pattern.permute.xlu0 0
      %10779 = vperm.xlu0 %10778, %v10238
      %v10780 = vpop.permute.xlu0 %10779
      %10781 = vset.pattern.permute.xlu0 0
      %10782 = vperm.xlu0 %10781, %v10239
      %v10783 = vpop.permute.xlu0 %10782
      %10784 = vset.pattern.permute.xlu0 0
      %10785 = vperm.xlu0 %10784, %v10240
      %v10786 = vpop.permute.xlu0 %10785
      %10787 = vset.pattern.permute.xlu0 0
      %10788 = vperm.xlu0 %10787, %v10241
      %v10789 = vpop.permute.xlu0 %10788
      %10790 = vset.pattern.permute.xlu0 0
      %10791 = vperm.xlu0 %10790, %v10242
      %v10792 = vpop.permute.xlu0 %10791
      %10793 = vset.pattern.permute.xlu0 0
      %10794 = vperm.xlu0 %10793, %v10243
      %v10795 = vpop.permute.xlu0 %10794
      %10796 = vset.pattern.permute.xlu0 0
      %10797 = vperm.xlu0 %10796, %v10244
      %v10798 = vpop.permute.xlu0 %10797
      %10799 = vset.pattern.permute.xlu0 0
      %10800 = vperm.xlu0 %10799, %v10245
      %v10801 = vpop.permute.xlu0 %10800
      %10802 = vset.pattern.permute.xlu0 0
      %10803 = vperm.xlu0 %10802, %v10246
      %v10804 = vpop.permute.xlu0 %10803
      %10805 = vset.pattern.permute.xlu0 0
      %10806 = vperm.xlu0 %10805, %v10247
      %v10807 = vpop.permute.xlu0 %10806
      %10808 = vset.pattern.permute.xlu0 0
      %10809 = vperm.xlu0 %10808, %v10248
      %v10810 = vpop.permute.xlu0 %10809
      %10811 = vset.pattern.permute.xlu0 0
      %10812 = vperm.xlu0 %10811, %v10249
      %v10813 = vpop.permute.xlu0 %10812
      %10814 = vset.pattern.permute.xlu0 0
      %10815 = vperm.xlu0 %10814, %v10250
      %v10816 = vpop.permute.xlu0 %10815
      %10817 = vset.pattern.permute.xlu0 0
      %10818 = vperm.xlu0 %10817, %v10251
      %v10819 = vpop.permute.xlu0 %10818
      %10820 = vset.pattern.permute.xlu0 0
      %10821 = vperm.xlu0 %10820, %v10252
      %v10822 = vpop.permute.xlu0 %10821
      %10823 = vset.pattern.permute.xlu0 0
      %10824 = vperm.xlu0 %10823, %v10253
      %v10825 = vpop.permute.xlu0 %10824
      %10826 = vset.pattern.permute.xlu0 0
      %10827 = vperm.xlu0 %10826, %v10254
      %v10828 = vpop.permute.xlu0 %10827
      %10829 = vset.pattern.permute.xlu0 0
      %10830 = vperm.xlu0 %10829, %v10255
      %v10831 = vpop.permute.xlu0 %10830
      %10832 = vset.pattern.permute.xlu0 0
      %10833 = vperm.xlu0 %10832, %v10256
      %v10834 = vpop.permute.xlu0 %10833
      %10835 = vset.pattern.permute.xlu0 0
      %10836 = vperm.xlu0 %10835, %v10257
      %v10837 = vpop.permute.xlu0 %10836
      %10838 = vset.pattern.permute.xlu0 0
      %10839 = vperm.xlu0 %10838, %v10258
      %v10840 = vpop.permute.xlu0 %10839
      %10841 = vset.pattern.permute.xlu0 0
      %10842 = vperm.xlu0 %10841, %v10259
      %v10843 = vpop.permute.xlu0 %10842
      %10844 = vset.pattern.permute.xlu0 0
      %10845 = vperm.xlu0 %10844, %v10260
      %v10846 = vpop.permute.xlu0 %10845
      %10847 = vset.pattern.permute.xlu0 0
      %10848 = vperm.xlu0 %10847, %v10261
      %v10849 = vpop.permute.xlu0 %10848
      %10850 = vset.pattern.permute.xlu0 0
      %10851 = vperm.xlu0 %10850, %v10262
      %v10852 = vpop.permute.xlu0 %10851
      %10853 = vset.pattern.permute.xlu0 0
      %10854 = vperm.xlu0 %10853, %v10263
      %v10855 = vpop.permute.xlu0 %10854
      %10856 = vset.pattern.permute.xlu0 0
      %10857 = vperm.xlu0 %10856, %v10264
      %v10858 = vpop.permute.xlu0 %10857
      %10859 = vset.pattern.permute.xlu0 0
      %10860 = vperm.xlu0 %10859, %v10265
      %v10861 = vpop.permute.xlu0 %10860
      %10862 = vset.pattern.permute.xlu0 0
      %10863 = vperm.xlu0 %10862, %v10266
      %v10864 = vpop.permute.xlu0 %10863
      %10865 = vset.pattern.permute.xlu0 0
      %10866 = vperm.xlu0 %10865, %v10267
      %v10867 = vpop.permute.xlu0 %10866
      %10868 = vset.pattern.permute.xlu0 0
      %10869 = vperm.xlu0 %10868, %v10268
      %v10870 = vpop.permute.xlu0 %10869
      %10871 = vset.pattern.permute.xlu0 0
      %10872 = vperm.xlu0 %10871, %v10269
      %v10873 = vpop.permute.xlu0 %10872
      %10874 = vset.pattern.permute.xlu0 0
      %10875 = vperm.xlu0 %10874, %v10270
      %v10876 = vpop.permute.xlu0 %10875
      %10877 = vset.pattern.permute.xlu0 0
      %10878 = vperm.xlu0 %10877, %v10271
      %v10879 = vpop.permute.xlu0 %10878
      %10880 = vset.pattern.permute.xlu0 0
      %10881 = vperm.xlu0 %10880, %v10272
      %v10882 = vpop.permute.xlu0 %10881
      %10883 = vset.pattern.permute.xlu0 0
      %10884 = vperm.xlu0 %10883, %v10273
      %v10885 = vpop.permute.xlu0 %10884
      %10886 = vset.pattern.permute.xlu0 0
      %10887 = vperm.xlu0 %10886, %v10274
      %v10888 = vpop.permute.xlu0 %10887
      %10889 = vset.pattern.permute.xlu0 0
      %10890 = vperm.xlu0 %10889, %v10275
      %v10891 = vpop.permute.xlu0 %10890
      %10892 = vset.pattern.permute.xlu0 0
      %10893 = vperm.xlu0 %10892, %v10276
      %v10894 = vpop.permute.xlu0 %10893
      %10895 = vset.pattern.permute.xlu0 0
      %10896 = vperm.xlu0 %10895, %v10277
      %v10897 = vpop.permute.xlu0 %10896
      %10898 = vset.pattern.permute.xlu0 0
      %10899 = vperm.xlu0 %10898, %v10278
      %v10900 = vpop.permute.xlu0 %10899
      %10901 = vset.pattern.permute.xlu0 0
      %10902 = vperm.xlu0 %10901, %v10279
      %v10903 = vpop.permute.xlu0 %10902
      %10904 = vset.pattern.permute.xlu0 0
      %10905 = vperm.xlu0 %10904, %v10280
      %v10906 = vpop.permute.xlu0 %10905
      %10907 = vset.pattern.permute.xlu0 0
      %10908 = vperm.xlu0 %10907, %v10281
      %v10909 = vpop.permute.xlu0 %10908
      %10910 = vset.pattern.permute.xlu0 0
      %10911 = vperm.xlu0 %10910, %v10282
      %v10912 = vpop.permute.xlu0 %10911
      %10913 = vset.pattern.permute.xlu0 0
      %10914 = vperm.xlu0 %10913, %v10283
      %v10915 = vpop.permute.xlu0 %10914
      %10916 = vset.pattern.permute.xlu0 0
      %10917 = vperm.xlu0 %10916, %v10284
      %v10918 = vpop.permute.xlu0 %10917
      %10919 = vset.pattern.permute.xlu0 0
      %10920 = vperm.xlu0 %10919, %v10285
      %v10921 = vpop.permute.xlu0 %10920
      %10922 = vset.pattern.permute.xlu0 0
      %10923 = vperm.xlu0 %10922, %v10286
      %v10924 = vpop.permute.xlu0 %10923
      %10925 = vset.pattern.permute.xlu0 0
      %10926 = vperm.xlu0 %10925, %v10287
      %v10927 = vpop.permute.xlu0 %10926
      %10928 = vset.pattern.permute.xlu0 0
      %10929 = vperm.xlu0 %10928, %v10288
      %v10930 = vpop.permute.xlu0 %10929
      %10931 = vset.pattern.permute.xlu0 0
      %10932 = vperm.xlu0 %10931, %v10289
      %v10933 = vpop.permute.xlu0 %10932
      %10934 = vset.pattern.permute.xlu0 0
      %10935 = vperm.xlu0 %10934, %v10290
      %v10936 = vpop.permute.xlu0 %10935
      %10937 = vset.pattern.permute.xlu0 0
      %10938 = vperm.xlu0 %10937, %v10291
      %v10939 = vpop.permute.xlu0 %10938
      %10940 = vset.pattern.permute.xlu0 0
      %10941 = vperm.xlu0 %10940, %v10292
      %v10942 = vpop.permute.xlu0 %10941
      %10943 = vset.pattern.permute.xlu0 0
      %10944 = vperm.xlu0 %10943, %v10293
      %v10945 = vpop.permute.xlu0 %10944
      %10946 = vset.pattern.permute.xlu0 0
      %10947 = vperm.xlu0 %10946, %v10294
      %v10948 = vpop.permute.xlu0 %10947
      %10949 = vset.pattern.permute.xlu0 0
      %10950 = vperm.xlu0 %10949, %v10295
      %v10951 = vpop.permute.xlu0 %10950
      %10952 = vset.pattern.permute.xlu0 0
      %10953 = vperm.xlu0 %10952, %v10296
      %v10954 = vpop.permute.xlu0 %10953
      %10955 = vset.pattern.permute.xlu0 0
      %10956 = vperm.xlu0 %10955, %v10297
      %v10957 = vpop.permute.xlu0 %10956
      %10958 = vset.pattern.permute.xlu0 0
      %10959 = vperm.xlu0 %10958, %v10298
      %v10960 = vpop.permute.xlu0 %10959
      %10961 = vset.pattern.permute.xlu0 0
      %10962 = vperm.xlu0 %10961, %v10299
      %v10963 = vpop.permute.xlu0 %10962
      %10964 = vset.pattern.permute.xlu0 0
      %10965 = vperm.xlu0 %10964, %v10300
      %v10966 = vpop.permute.xlu0 %10965
      %10967 = vset.pattern.permute.xlu0 0
      %10968 = vperm.xlu0 %10967, %v10301
      %v10969 = vpop.permute.xlu0 %10968
      %10970 = vset.pattern.permute.xlu0 0
      %10971 = vperm.xlu0 %10970, %v10302
      %v10972 = vpop.permute.xlu0 %10971
      %10973 = vset.pattern.permute.xlu0 0
      %10974 = vperm.xlu0 %10973, %v10303
      %v10975 = vpop.permute.xlu0 %10974
      %10976 = vset.pattern.permute.xlu0 0
      %10977 = vperm.xlu0 %10976, %v10304
      %v10978 = vpop.permute.xlu0 %10977
      %10979 = vset.pattern.permute.xlu0 0
      %10980 = vperm.xlu0 %10979, %v10305
      %v10981 = vpop.permute.xlu0 %10980
      %10982 = vset.pattern.permute.xlu0 0
      %10983 = vperm.xlu0 %10982, %v10306
      %v10984 = vpop.permute.xlu0 %10983
      %10985 = vset.pattern.permute.xlu0 0
      %10986 = vperm.xlu0 %10985, %v10307
      %v10987 = vpop.permute.xlu0 %10986
      %10988 = vset.pattern.permute.xlu0 0
      %10989 = vperm.xlu0 %10988, %v10308
      %v10990 = vpop.permute.xlu0 %10989
      %10991 = vset.pattern.permute.xlu0 0
      %10992 = vperm.xlu0 %10991, %v10309
      %v10993 = vpop.permute.xlu0 %10992
      %10994 = vset.pattern.permute.xlu0 0
      %10995 = vperm.xlu0 %10994, %v10310
      %v10996 = vpop.permute.xlu0 %10995
      %10997 = vset.pattern.permute.xlu0 0
      %10998 = vperm.xlu0 %10997, %v10311
      %v10999 = vpop.permute.xlu0 %10998
      %11000 = vset.pattern.permute.xlu0 0
      %11001 = vperm.xlu0 %11000, %v10312
      %v11002 = vpop.permute.xlu0 %11001
      %11003 = vset.pattern.permute.xlu0 0
      %11004 = vperm.xlu0 %11003, %v10313
      %v11005 = vpop.permute.xlu0 %11004
      %11006 = vset.pattern.permute.xlu0 0
      %11007 = vperm.xlu0 %11006, %v10314
      %v11008 = vpop.permute.xlu0 %11007
      %11009 = vset.pattern.permute.xlu0 0
      %11010 = vperm.xlu0 %11009, %v10315
      %v11011 = vpop.permute.xlu0 %11010
      %11012 = vset.pattern.permute.xlu0 0
      %11013 = vperm.xlu0 %11012, %v10316
      %v11014 = vpop.permute.xlu0 %11013
      %11015 = vset.pattern.permute.xlu0 0
      %11016 = vperm.xlu0 %11015, %v10317
      %v11017 = vpop.permute.xlu0 %11016
      %11018 = vset.pattern.permute.xlu0 0
      %11019 = vperm.xlu0 %11018, %v10318
      %v11020 = vpop.permute.xlu0 %11019
      %11021 = vset.pattern.permute.xlu0 0
      %11022 = vperm.xlu0 %11021, %v10319
      %v11023 = vpop.permute.xlu0 %11022
      %11024 = vset.pattern.permute.xlu0 0
      %11025 = vperm.xlu0 %11024, %v10320
      %v11026 = vpop.permute.xlu0 %11025
      %11027 = vset.pattern.permute.xlu0 0
      %11028 = vperm.xlu0 %11027, %v10321
      %v11029 = vpop.permute.xlu0 %11028
      %11030 = vset.pattern.permute.xlu0 0
      %11031 = vperm.xlu0 %11030, %v10322
      %v11032 = vpop.permute.xlu0 %11031
      %11033 = vset.pattern.permute.xlu0 0
      %11034 = vperm.xlu0 %11033, %v10323
      %v11035 = vpop.permute.xlu0 %11034
      %11036 = vset.pattern.permute.xlu0 0
      %11037 = vperm.xlu0 %11036, %v10324
      %v11038 = vpop.permute.xlu0 %11037
      %11039 = vset.pattern.permute.xlu0 0
      %11040 = vperm.xlu0 %11039, %v10325
      %v11041 = vpop.permute.xlu0 %11040
      %11042 = vset.pattern.permute.xlu0 0
      %11043 = vperm.xlu0 %11042, %v10326
      %v11044 = vpop.permute.xlu0 %11043
      %11045 = vset.pattern.permute.xlu0 0
      %11046 = vperm.xlu0 %11045, %v10327
      %v11047 = vpop.permute.xlu0 %11046
      %11048 = vset.pattern.permute.xlu0 0
      %11049 = vperm.xlu0 %11048, %v10328
      %v11050 = vpop.permute.xlu0 %11049
      %11051 = vset.pattern.permute.xlu0 0
      %11052 = vperm.xlu0 %11051, %v10329
      %v11053 = vpop.permute.xlu0 %11052
      %11054 = vset.pattern.permute.xlu0 0
      %11055 = vperm.xlu0 %11054, %v10330
      %v11056 = vpop.permute.xlu0 %11055
      %11057 = vset.pattern.permute.xlu0 0
      %11058 = vperm.xlu0 %11057, %v10331
      %v11059 = vpop.permute.xlu0 %11058
      %11060 = vset.pattern.permute.xlu0 0
      %11061 = vperm.xlu0 %11060, %v10332
      %v11062 = vpop.permute.xlu0 %11061
      %11063 = vset.pattern.permute.xlu0 0
      %11064 = vperm.xlu0 %11063, %v10333
      %v11065 = vpop.permute.xlu0 %11064
      %11066 = vset.pattern.permute.xlu0 0
      %11067 = vperm.xlu0 %11066, %v10334
      %v11068 = vpop.permute.xlu0 %11067
      %11069 = vset.pattern.permute.xlu0 0
      %11070 = vperm.xlu0 %11069, %v10335
      %v11071 = vpop.permute.xlu0 %11070
      %11072 = vset.pattern.permute.xlu0 0
      %11073 = vperm.xlu0 %11072, %v10336
      %v11074 = vpop.permute.xlu0 %11073
      %11075 = vset.pattern.permute.xlu0 0
      %11076 = vperm.xlu0 %11075, %v10337
      %v11077 = vpop.permute.xlu0 %11076
      %11078 = vset.pattern.permute.xlu0 0
      %11079 = vperm.xlu0 %11078, %v10338
      %v11080 = vpop.permute.xlu0 %11079
      %11081 = vset.pattern.permute.xlu0 0
      %11082 = vperm.xlu0 %11081, %v10339
      %v11083 = vpop.permute.xlu0 %11082
      %11084 = vset.pattern.permute.xlu0 0
      %11085 = vperm.xlu0 %11084, %v10340
      %v11086 = vpop.permute.xlu0 %11085
      %11087 = vset.pattern.permute.xlu0 0
      %11088 = vperm.xlu0 %11087, %v10341
      %v11089 = vpop.permute.xlu0 %11088
      %11090 = vset.pattern.permute.xlu0 0
      %11091 = vperm.xlu0 %11090, %v10342
      %v11092 = vpop.permute.xlu0 %11091
      %11093 = vset.pattern.permute.xlu0 0
      %11094 = vperm.xlu0 %11093, %v10343
      %v11095 = vpop.permute.xlu0 %11094
      %11096 = vset.pattern.permute.xlu0 0
      %11097 = vperm.xlu0 %11096, %v10344
      %v11098 = vpop.permute.xlu0 %11097
      %11099 = vset.pattern.permute.xlu0 0
      %11100 = vperm.xlu0 %11099, %v10345
      %v11101 = vpop.permute.xlu0 %11100
      %11102 = vset.pattern.permute.xlu0 0
      %11103 = vperm.xlu0 %11102, %v10346
      %v11104 = vpop.permute.xlu0 %11103
      %11105 = vset.pattern.permute.xlu0 0
      %11106 = vperm.xlu0 %11105, %v10347
      %v11107 = vpop.permute.xlu0 %11106
      %11108 = vset.pattern.permute.xlu0 0
      %11109 = vperm.xlu0 %11108, %v10348
      %v11110 = vpop.permute.xlu0 %11109
      %11111 = vset.pattern.permute.xlu0 0
      %11112 = vperm.xlu0 %11111, %v10349
      %v11113 = vpop.permute.xlu0 %11112
      %11114 = vset.pattern.permute.xlu0 0
      %11115 = vperm.xlu0 %11114, %v10350
      %v11116 = vpop.permute.xlu0 %11115
      %11117 = vset.pattern.permute.xlu0 0
      %11118 = vperm.xlu0 %11117, %v10351
      %v11119 = vpop.permute.xlu0 %11118
      %v11120 = vperm.slane %v10354, %v4400
      %v11121 = vperm.slane %v10357, %v4402
      %v11122 = vsel %vm4404, %v11121, %v11120
      %v11123 = vperm.slane %v10360, %v4406
      %v11124 = vsel %vm4408, %v11123, %v11122
      %v11125 = vperm.slane %v10363, %v4410
      %v11126 = vsel %vm4412, %v11125, %v11124
      %v11127 = vperm.slane %v10366, %v4414
      %v11128 = vsel %vm4416, %v11127, %v11126
      %v11129 = vperm.slane %v10369, %v4418
      %v11130 = vsel %vm4420, %v11129, %v11128
      %v11131 = vperm.slane %v10372, %v4422
      %v11132 = vsel %vm4424, %v11131, %v11130
      %v11133 = vperm.slane %v10375, %v4426
      %v11134 = vsel %vm4428, %v11133, %v11132
      %v11135 = vperm.slane %v10378, %v4430
      %v11136 = vsel %vm4432, %v11135, %v11134
      %v11137 = vperm.slane %v10381, %v4434
      %v11138 = vsel %vm4436, %v11137, %v11136
      %v11139 = vperm.slane %v10384, %v4438
      %v11140 = vsel %vm4440, %v11139, %v11138
      %v11141 = vperm.slane %v10387, %v4442
      %v11142 = vsel %vm4444, %v11141, %v11140
      %v11143 = vperm.slane %v10390, %v4446
      %v11144 = vsel %vm4448, %v11143, %v11142
      %v11145 = vperm.slane %v10393, %v4450
      %v11146 = vsel %vm4452, %v11145, %v11144
      %v11147 = vperm.slane %v10396, %v4454
      %v11148 = vsel %vm4456, %v11147, %v11146
      %v11149 = vperm.slane %v10399, %v4458
      %v11150 = vsel %vm4460, %v11149, %v11148
      %v11151 = vperm.slane %v10402, %v4400
      %v11152 = vperm.slane %v10405, %v4402
      %v11153 = vsel %vm4404, %v11152, %v11151
      %v11154 = vperm.slane %v10408, %v4406
      %v11155 = vsel %vm4408, %v11154, %v11153
      %v11156 = vperm.slane %v10411, %v4410
      %v11157 = vsel %vm4412, %v11156, %v11155
      %v11158 = vperm.slane %v10414, %v4414
      %v11159 = vsel %vm4416, %v11158, %v11157
      %v11160 = vperm.slane %v10417, %v4418
      %v11161 = vsel %vm4420, %v11160, %v11159
      %v11162 = vperm.slane %v10420, %v4422
      %v11163 = vsel %vm4424, %v11162, %v11161
      %v11164 = vperm.slane %v10423, %v4426
      %v11165 = vsel %vm4428, %v11164, %v11163
      %v11166 = vperm.slane %v10426, %v4430
      %v11167 = vsel %vm4432, %v11166, %v11165
      %v11168 = vperm.slane %v10429, %v4434
      %v11169 = vsel %vm4436, %v11168, %v11167
      %v11170 = vperm.slane %v10432, %v4438
      %v11171 = vsel %vm4440, %v11170, %v11169
      %v11172 = vperm.slane %v10435, %v4442
      %v11173 = vsel %vm4444, %v11172, %v11171
      %v11174 = vperm.slane %v10438, %v4446
      %v11175 = vsel %vm4448, %v11174, %v11173
      %v11176 = vperm.slane %v10441, %v4450
      %v11177 = vsel %vm4452, %v11176, %v11175
      %v11178 = vperm.slane %v10444, %v4454
      %v11179 = vsel %vm4456, %v11178, %v11177
      %v11180 = vperm.slane %v10447, %v4458
      %v11181 = vsel %vm4460, %v11180, %v11179
      %v11182 = vperm.slane %v10450, %v4400
      %v11183 = vperm.slane %v10453, %v4402
      %v11184 = vsel %vm4404, %v11183, %v11182
      %v11185 = vperm.slane %v10456, %v4406
      %v11186 = vsel %vm4408, %v11185, %v11184
      %v11187 = vperm.slane %v10459, %v4410
      %v11188 = vsel %vm4412, %v11187, %v11186
      %v11189 = vperm.slane %v10462, %v4414
      %v11190 = vsel %vm4416, %v11189, %v11188
      %v11191 = vperm.slane %v10465, %v4418
      %v11192 = vsel %vm4420, %v11191, %v11190
      %v11193 = vperm.slane %v10468, %v4422
      %v11194 = vsel %vm4424, %v11193, %v11192
      %v11195 = vperm.slane %v10471, %v4426
      %v11196 = vsel %vm4428, %v11195, %v11194
      %v11197 = vperm.slane %v10474, %v4430
      %v11198 = vsel %vm4432, %v11197, %v11196
      %v11199 = vperm.slane %v10477, %v4434
      %v11200 = vsel %vm4436, %v11199, %v11198
      %v11201 = vperm.slane %v10480, %v4438
      %v11202 = vsel %vm4440, %v11201, %v11200
      %v11203 = vperm.slane %v10483, %v4442
      %v11204 = vsel %vm4444, %v11203, %v11202
      %v11205 = vperm.slane %v10486, %v4446
      %v11206 = vsel %vm4448, %v11205, %v11204
      %v11207 = vperm.slane %v10489, %v4450
      %v11208 = vsel %vm4452, %v11207, %v11206
      %v11209 = vperm.slane %v10492, %v4454
      %v11210 = vsel %vm4456, %v11209, %v11208
      %v11211 = vperm.slane %v10495, %v4458
      %v11212 = vsel %vm4460, %v11211, %v11210
      %v11213 = vperm.slane %v10498, %v4400
      %v11214 = vperm.slane %v10501, %v4402
      %v11215 = vsel %vm4404, %v11214, %v11213
      %v11216 = vperm.slane %v10504, %v4406
      %v11217 = vsel %vm4408, %v11216, %v11215
      %v11218 = vperm.slane %v10507, %v4410
      %v11219 = vsel %vm4412, %v11218, %v11217
      %v11220 = vperm.slane %v10510, %v4414
      %v11221 = vsel %vm4416, %v11220, %v11219
      %v11222 = vperm.slane %v10513, %v4418
      %v11223 = vsel %vm4420, %v11222, %v11221
      %v11224 = vperm.slane %v10516, %v4422
      %v11225 = vsel %vm4424, %v11224, %v11223
      %v11226 = vperm.slane %v10519, %v4426
      %v11227 = vsel %vm4428, %v11226, %v11225
      %v11228 = vperm.slane %v10522, %v4430
      %v11229 = vsel %vm4432, %v11228, %v11227
      %v11230 = vperm.slane %v10525, %v4434
      %v11231 = vsel %vm4436, %v11230, %v11229
      %v11232 = vperm.slane %v10528, %v4438
      %v11233 = vsel %vm4440, %v11232, %v11231
      %v11234 = vperm.slane %v10531, %v4442
      %v11235 = vsel %vm4444, %v11234, %v11233
      %v11236 = vperm.slane %v10534, %v4446
      %v11237 = vsel %vm4448, %v11236, %v11235
      %v11238 = vperm.slane %v10537, %v4450
      %v11239 = vsel %vm4452, %v11238, %v11237
      %v11240 = vperm.slane %v10540, %v4454
      %v11241 = vsel %vm4456, %v11240, %v11239
      %v11242 = vperm.slane %v10543, %v4458
      %v11243 = vsel %vm4460, %v11242, %v11241
      %v11244 = vperm.slane %v10546, %v4400
      %v11245 = vperm.slane %v10549, %v4402
      %v11246 = vsel %vm4404, %v11245, %v11244
      %v11247 = vperm.slane %v10552, %v4406
      %v11248 = vsel %vm4408, %v11247, %v11246
      %v11249 = vperm.slane %v10555, %v4410
      %v11250 = vsel %vm4412, %v11249, %v11248
      %v11251 = vperm.slane %v10558, %v4414
      %v11252 = vsel %vm4416, %v11251, %v11250
      %v11253 = vperm.slane %v10561, %v4418
      %v11254 = vsel %vm4420, %v11253, %v11252
      %v11255 = vperm.slane %v10564, %v4422
      %v11256 = vsel %vm4424, %v11255, %v11254
      %v11257 = vperm.slane %v10567, %v4426
      %v11258 = vsel %vm4428, %v11257, %v11256
      %v11259 = vperm.slane %v10570, %v4430
      %v11260 = vsel %vm4432, %v11259, %v11258
      %v11261 = vperm.slane %v10573, %v4434
      %v11262 = vsel %vm4436, %v11261, %v11260
      %v11263 = vperm.slane %v10576, %v4438
      %v11264 = vsel %vm4440, %v11263, %v11262
      %v11265 = vperm.slane %v10579, %v4442
      %v11266 = vsel %vm4444, %v11265, %v11264
      %v11267 = vperm.slane %v10582, %v4446
      %v11268 = vsel %vm4448, %v11267, %v11266
      %v11269 = vperm.slane %v10585, %v4450
      %v11270 = vsel %vm4452, %v11269, %v11268
      %v11271 = vperm.slane %v10588, %v4454
      %v11272 = vsel %vm4456, %v11271, %v11270
      %v11273 = vperm.slane %v10591, %v4458
      %v11274 = vsel %vm4460, %v11273, %v11272
      %v11275 = vperm.slane %v10594, %v4400
      %v11276 = vperm.slane %v10597, %v4402
      %v11277 = vsel %vm4404, %v11276, %v11275
      %v11278 = vperm.slane %v10600, %v4406
      %v11279 = vsel %vm4408, %v11278, %v11277
      %v11280 = vperm.slane %v10603, %v4410
      %v11281 = vsel %vm4412, %v11280, %v11279
      %v11282 = vperm.slane %v10606, %v4414
      %v11283 = vsel %vm4416, %v11282, %v11281
      %v11284 = vperm.slane %v10609, %v4418
      %v11285 = vsel %vm4420, %v11284, %v11283
      %v11286 = vperm.slane %v10612, %v4422
      %v11287 = vsel %vm4424, %v11286, %v11285
      %v11288 = vperm.slane %v10615, %v4426
      %v11289 = vsel %vm4428, %v11288, %v11287
      %v11290 = vperm.slane %v10618, %v4430
      %v11291 = vsel %vm4432, %v11290, %v11289
      %v11292 = vperm.slane %v10621, %v4434
      %v11293 = vsel %vm4436, %v11292, %v11291
      %v11294 = vperm.slane %v10624, %v4438
      %v11295 = vsel %vm4440, %v11294, %v11293
      %v11296 = vperm.slane %v10627, %v4442
      %v11297 = vsel %vm4444, %v11296, %v11295
      %v11298 = vperm.slane %v10630, %v4446
      %v11299 = vsel %vm4448, %v11298, %v11297
      %v11300 = vperm.slane %v10633, %v4450
      %v11301 = vsel %vm4452, %v11300, %v11299
      %v11302 = vperm.slane %v10636, %v4454
      %v11303 = vsel %vm4456, %v11302, %v11301
      %v11304 = vperm.slane %v10639, %v4458
      %v11305 = vsel %vm4460, %v11304, %v11303
      %v11306 = vperm.slane %v10642, %v4400
      %v11307 = vperm.slane %v10645, %v4402
      %v11308 = vsel %vm4404, %v11307, %v11306
      %v11309 = vperm.slane %v10648, %v4406
      %v11310 = vsel %vm4408, %v11309, %v11308
      %v11311 = vperm.slane %v10651, %v4410
      %v11312 = vsel %vm4412, %v11311, %v11310
      %v11313 = vperm.slane %v10654, %v4414
      %v11314 = vsel %vm4416, %v11313, %v11312
      %v11315 = vperm.slane %v10657, %v4418
      %v11316 = vsel %vm4420, %v11315, %v11314
      %v11317 = vperm.slane %v10660, %v4422
      %v11318 = vsel %vm4424, %v11317, %v11316
      %v11319 = vperm.slane %v10663, %v4426
      %v11320 = vsel %vm4428, %v11319, %v11318
      %v11321 = vperm.slane %v10666, %v4430
      %v11322 = vsel %vm4432, %v11321, %v11320
      %v11323 = vperm.slane %v10669, %v4434
      %v11324 = vsel %vm4436, %v11323, %v11322
      %v11325 = vperm.slane %v10672, %v4438
      %v11326 = vsel %vm4440, %v11325, %v11324
      %v11327 = vperm.slane %v10675, %v4442
      %v11328 = vsel %vm4444, %v11327, %v11326
      %v11329 = vperm.slane %v10678, %v4446
      %v11330 = vsel %vm4448, %v11329, %v11328
      %v11331 = vperm.slane %v10681, %v4450
      %v11332 = vsel %vm4452, %v11331, %v11330
      %v11333 = vperm.slane %v10684, %v4454
      %v11334 = vsel %vm4456, %v11333, %v11332
      %v11335 = vperm.slane %v10687, %v4458
      %v11336 = vsel %vm4460, %v11335, %v11334
      %v11337 = vperm.slane %v10690, %v4400
      %v11338 = vperm.slane %v10693, %v4402
      %v11339 = vsel %vm4404, %v11338, %v11337
      %v11340 = vperm.slane %v10696, %v4406
      %v11341 = vsel %vm4408, %v11340, %v11339
      %v11342 = vperm.slane %v10699, %v4410
      %v11343 = vsel %vm4412, %v11342, %v11341
      %v11344 = vperm.slane %v10702, %v4414
      %v11345 = vsel %vm4416, %v11344, %v11343
      %v11346 = vperm.slane %v10705, %v4418
      %v11347 = vsel %vm4420, %v11346, %v11345
      %v11348 = vperm.slane %v10708, %v4422
      %v11349 = vsel %vm4424, %v11348, %v11347
      %v11350 = vperm.slane %v10711, %v4426
      %v11351 = vsel %vm4428, %v11350, %v11349
      %v11352 = vperm.slane %v10714, %v4430
      %v11353 = vsel %vm4432, %v11352, %v11351
      %v11354 = vperm.slane %v10717, %v4434
      %v11355 = vsel %vm4436, %v11354, %v11353
      %v11356 = vperm.slane %v10720, %v4438
      %v11357 = vsel %vm4440, %v11356, %v11355
      %v11358 = vperm.slane %v10723, %v4442
      %v11359 = vsel %vm4444, %v11358, %v11357
      %v11360 = vperm.slane %v10726, %v4446
      %v11361 = vsel %vm4448, %v11360, %v11359
      %v11362 = vperm.slane %v10729, %v4450
      %v11363 = vsel %vm4452, %v11362, %v11361
      %v11364 = vperm.slane %v10732, %v4454
      %v11365 = vsel %vm4456, %v11364, %v11363
      %v11366 = vperm.slane %v10735, %v4458
      %v11367 = vsel %vm4460, %v11366, %v11365
      %v11368 = vperm.slane %v10738, %v4400
      %v11369 = vperm.slane %v10741, %v4402
      %v11370 = vsel %vm4404, %v11369, %v11368
      %v11371 = vperm.slane %v10744, %v4406
      %v11372 = vsel %vm4408, %v11371, %v11370
      %v11373 = vperm.slane %v10747, %v4410
      %v11374 = vsel %vm4412, %v11373, %v11372
      %v11375 = vperm.slane %v10750, %v4414
      %v11376 = vsel %vm4416, %v11375, %v11374
      %v11377 = vperm.slane %v10753, %v4418
      %v11378 = vsel %vm4420, %v11377, %v11376
      %v11379 = vperm.slane %v10756, %v4422
      %v11380 = vsel %vm4424, %v11379, %v11378
      %v11381 = vperm.slane %v10759, %v4426
      %v11382 = vsel %vm4428, %v11381, %v11380
      %v11383 = vperm.slane %v10762, %v4430
      %v11384 = vsel %vm4432, %v11383, %v11382
      %v11385 = vperm.slane %v10765, %v4434
      %v11386 = vsel %vm4436, %v11385, %v11384
      %v11387 = vperm.slane %v10768, %v4438
      %v11388 = vsel %vm4440, %v11387, %v11386
      %v11389 = vperm.slane %v10771, %v4442
      %v11390 = vsel %vm4444, %v11389, %v11388
      %v11391 = vperm.slane %v10774, %v4446
      %v11392 = vsel %vm4448, %v11391, %v11390
      %v11393 = vperm.slane %v10777, %v4450
      %v11394 = vsel %vm4452, %v11393, %v11392
      %v11395 = vperm.slane %v10780, %v4454
      %v11396 = vsel %vm4456, %v11395, %v11394
      %v11397 = vperm.slane %v10783, %v4458
      %v11398 = vsel %vm4460, %v11397, %v11396
      %v11399 = vperm.slane %v10786, %v4400
      %v11400 = vperm.slane %v10789, %v4402
      %v11401 = vsel %vm4404, %v11400, %v11399
      %v11402 = vperm.slane %v10792, %v4406
      %v11403 = vsel %vm4408, %v11402, %v11401
      %v11404 = vperm.slane %v10795, %v4410
      %v11405 = vsel %vm4412, %v11404, %v11403
      %v11406 = vperm.slane %v10798, %v4414
      %v11407 = vsel %vm4416, %v11406, %v11405
      %v11408 = vperm.slane %v10801, %v4418
      %v11409 = vsel %vm4420, %v11408, %v11407
      %v11410 = vperm.slane %v10804, %v4422
      %v11411 = vsel %vm4424, %v11410, %v11409
      %v11412 = vperm.slane %v10807, %v4426
      %v11413 = vsel %vm4428, %v11412, %v11411
      %v11414 = vperm.slane %v10810, %v4430
      %v11415 = vsel %vm4432, %v11414, %v11413
      %v11416 = vperm.slane %v10813, %v4434
      %v11417 = vsel %vm4436, %v11416, %v11415
      %v11418 = vperm.slane %v10816, %v4438
      %v11419 = vsel %vm4440, %v11418, %v11417
      %v11420 = vperm.slane %v10819, %v4442
      %v11421 = vsel %vm4444, %v11420, %v11419
      %v11422 = vperm.slane %v10822, %v4446
      %v11423 = vsel %vm4448, %v11422, %v11421
      %v11424 = vperm.slane %v10825, %v4450
      %v11425 = vsel %vm4452, %v11424, %v11423
      %v11426 = vperm.slane %v10828, %v4454
      %v11427 = vsel %vm4456, %v11426, %v11425
      %v11428 = vperm.slane %v10831, %v4458
      %v11429 = vsel %vm4460, %v11428, %v11427
      %v11430 = vperm.slane %v10834, %v4400
      %v11431 = vperm.slane %v10837, %v4402
      %v11432 = vsel %vm4404, %v11431, %v11430
      %v11433 = vperm.slane %v10840, %v4406
      %v11434 = vsel %vm4408, %v11433, %v11432
      %v11435 = vperm.slane %v10843, %v4410
      %v11436 = vsel %vm4412, %v11435, %v11434
      %v11437 = vperm.slane %v10846, %v4414
      %v11438 = vsel %vm4416, %v11437, %v11436
      %v11439 = vperm.slane %v10849, %v4418
      %v11440 = vsel %vm4420, %v11439, %v11438
      %v11441 = vperm.slane %v10852, %v4422
      %v11442 = vsel %vm4424, %v11441, %v11440
      %v11443 = vperm.slane %v10855, %v4426
      %v11444 = vsel %vm4428, %v11443, %v11442
      %v11445 = vperm.slane %v10858, %v4430
      %v11446 = vsel %vm4432, %v11445, %v11444
      %v11447 = vperm.slane %v10861, %v4434
      %v11448 = vsel %vm4436, %v11447, %v11446
      %v11449 = vperm.slane %v10864, %v4438
      %v11450 = vsel %vm4440, %v11449, %v11448
      %v11451 = vperm.slane %v10867, %v4442
      %v11452 = vsel %vm4444, %v11451, %v11450
      %v11453 = vperm.slane %v10870, %v4446
      %v11454 = vsel %vm4448, %v11453, %v11452
      %v11455 = vperm.slane %v10873, %v4450
      %v11456 = vsel %vm4452, %v11455, %v11454
      %v11457 = vperm.slane %v10876, %v4454
      %v11458 = vsel %vm4456, %v11457, %v11456
      %v11459 = vperm.slane %v10879, %v4458
      %v11460 = vsel %vm4460, %v11459, %v11458
      %v11461 = vperm.slane %v10882, %v4400
      %v11462 = vperm.slane %v10885, %v4402
      %v11463 = vsel %vm4404, %v11462, %v11461
      %v11464 = vperm.slane %v10888, %v4406
      %v11465 = vsel %vm4408, %v11464, %v11463
      %v11466 = vperm.slane %v10891, %v4410
      %v11467 = vsel %vm4412, %v11466, %v11465
      %v11468 = vperm.slane %v10894, %v4414
      %v11469 = vsel %vm4416, %v11468, %v11467
      %v11470 = vperm.slane %v10897, %v4418
      %v11471 = vsel %vm4420, %v11470, %v11469
      %v11472 = vperm.slane %v10900, %v4422
      %v11473 = vsel %vm4424, %v11472, %v11471
      %v11474 = vperm.slane %v10903, %v4426
      %v11475 = vsel %vm4428, %v11474, %v11473
      %v11476 = vperm.slane %v10906, %v4430
      %v11477 = vsel %vm4432, %v11476, %v11475
      %v11478 = vperm.slane %v10909, %v4434
      %v11479 = vsel %vm4436, %v11478, %v11477
      %v11480 = vperm.slane %v10912, %v4438
      %v11481 = vsel %vm4440, %v11480, %v11479
      %v11482 = vperm.slane %v10915, %v4442
      %v11483 = vsel %vm4444, %v11482, %v11481
      %v11484 = vperm.slane %v10918, %v4446
      %v11485 = vsel %vm4448, %v11484, %v11483
      %v11486 = vperm.slane %v10921, %v4450
      %v11487 = vsel %vm4452, %v11486, %v11485
      %v11488 = vperm.slane %v10924, %v4454
      %v11489 = vsel %vm4456, %v11488, %v11487
      %v11490 = vperm.slane %v10927, %v4458
      %v11491 = vsel %vm4460, %v11490, %v11489
      %v11492 = vperm.slane %v10930, %v4400
      %v11493 = vperm.slane %v10933, %v4402
      %v11494 = vsel %vm4404, %v11493, %v11492
      %v11495 = vperm.slane %v10936, %v4406
      %v11496 = vsel %vm4408, %v11495, %v11494
      %v11497 = vperm.slane %v10939, %v4410
      %v11498 = vsel %vm4412, %v11497, %v11496
      %v11499 = vperm.slane %v10942, %v4414
      %v11500 = vsel %vm4416, %v11499, %v11498
      %v11501 = vperm.slane %v10945, %v4418
      %v11502 = vsel %vm4420, %v11501, %v11500
      %v11503 = vperm.slane %v10948, %v4422
      %v11504 = vsel %vm4424, %v11503, %v11502
      %v11505 = vperm.slane %v10951, %v4426
      %v11506 = vsel %vm4428, %v11505, %v11504
      %v11507 = vperm.slane %v10954, %v4430
      %v11508 = vsel %vm4432, %v11507, %v11506
      %v11509 = vperm.slane %v10957, %v4434
      %v11510 = vsel %vm4436, %v11509, %v11508
      %v11511 = vperm.slane %v10960, %v4438
      %v11512 = vsel %vm4440, %v11511, %v11510
      %v11513 = vperm.slane %v10963, %v4442
      %v11514 = vsel %vm4444, %v11513, %v11512
      %v11515 = vperm.slane %v10966, %v4446
      %v11516 = vsel %vm4448, %v11515, %v11514
      %v11517 = vperm.slane %v10969, %v4450
      %v11518 = vsel %vm4452, %v11517, %v11516
      %v11519 = vperm.slane %v10972, %v4454
      %v11520 = vsel %vm4456, %v11519, %v11518
      %v11521 = vperm.slane %v10975, %v4458
      %v11522 = vsel %vm4460, %v11521, %v11520
      %v11523 = vperm.slane %v10978, %v4400
      %v11524 = vperm.slane %v10981, %v4402
      %v11525 = vsel %vm4404, %v11524, %v11523
      %v11526 = vperm.slane %v10984, %v4406
      %v11527 = vsel %vm4408, %v11526, %v11525
      %v11528 = vperm.slane %v10987, %v4410
      %v11529 = vsel %vm4412, %v11528, %v11527
      %v11530 = vperm.slane %v10990, %v4414
      %v11531 = vsel %vm4416, %v11530, %v11529
      %v11532 = vperm.slane %v10993, %v4418
      %v11533 = vsel %vm4420, %v11532, %v11531
      %v11534 = vperm.slane %v10996, %v4422
      %v11535 = vsel %vm4424, %v11534, %v11533
      %v11536 = vperm.slane %v10999, %v4426
      %v11537 = vsel %vm4428, %v11536, %v11535
      %v11538 = vperm.slane %v11002, %v4430
      %v11539 = vsel %vm4432, %v11538, %v11537
      %v11540 = vperm.slane %v11005, %v4434
      %v11541 = vsel %vm4436, %v11540, %v11539
      %v11542 = vperm.slane %v11008, %v4438
      %v11543 = vsel %vm4440, %v11542, %v11541
      %v11544 = vperm.slane %v11011, %v4442
      %v11545 = vsel %vm4444, %v11544, %v11543
      %v11546 = vperm.slane %v11014, %v4446
      %v11547 = vsel %vm4448, %v11546, %v11545
      %v11548 = vperm.slane %v11017, %v4450
      %v11549 = vsel %vm4452, %v11548, %v11547
      %v11550 = vperm.slane %v11020, %v4454
      %v11551 = vsel %vm4456, %v11550, %v11549
      %v11552 = vperm.slane %v11023, %v4458
      %v11553 = vsel %vm4460, %v11552, %v11551
      %v11554 = vperm.slane %v11026, %v4400
      %v11555 = vperm.slane %v11029, %v4402
      %v11556 = vsel %vm4404, %v11555, %v11554
      %v11557 = vperm.slane %v11032, %v4406
      %v11558 = vsel %vm4408, %v11557, %v11556
      %v11559 = vperm.slane %v11035, %v4410
      %v11560 = vsel %vm4412, %v11559, %v11558
      %v11561 = vperm.slane %v11038, %v4414
      %v11562 = vsel %vm4416, %v11561, %v11560
      %v11563 = vperm.slane %v11041, %v4418
      %v11564 = vsel %vm4420, %v11563, %v11562
      %v11565 = vperm.slane %v11044, %v4422
      %v11566 = vsel %vm4424, %v11565, %v11564
      %v11567 = vperm.slane %v11047, %v4426
      %v11568 = vsel %vm4428, %v11567, %v11566
      %v11569 = vperm.slane %v11050, %v4430
      %v11570 = vsel %vm4432, %v11569, %v11568
      %v11571 = vperm.slane %v11053, %v4434
      %v11572 = vsel %vm4436, %v11571, %v11570
      %v11573 = vperm.slane %v11056, %v4438
      %v11574 = vsel %vm4440, %v11573, %v11572
      %v11575 = vperm.slane %v11059, %v4442
      %v11576 = vsel %vm4444, %v11575, %v11574
      %v11577 = vperm.slane %v11062, %v4446
      %v11578 = vsel %vm4448, %v11577, %v11576
      %v11579 = vperm.slane %v11065, %v4450
      %v11580 = vsel %vm4452, %v11579, %v11578
      %v11581 = vperm.slane %v11068, %v4454
      %v11582 = vsel %vm4456, %v11581, %v11580
      %v11583 = vperm.slane %v11071, %v4458
      %v11584 = vsel %vm4460, %v11583, %v11582
      %v11585 = vperm.slane %v11074, %v4400
      %v11586 = vperm.slane %v11077, %v4402
      %v11587 = vsel %vm4404, %v11586, %v11585
      %v11588 = vperm.slane %v11080, %v4406
      %v11589 = vsel %vm4408, %v11588, %v11587
      %v11590 = vperm.slane %v11083, %v4410
      %v11591 = vsel %vm4412, %v11590, %v11589
      %v11592 = vperm.slane %v11086, %v4414
      %v11593 = vsel %vm4416, %v11592, %v11591
      %v11594 = vperm.slane %v11089, %v4418
      %v11595 = vsel %vm4420, %v11594, %v11593
      %v11596 = vperm.slane %v11092, %v4422
      %v11597 = vsel %vm4424, %v11596, %v11595
      %v11598 = vperm.slane %v11095, %v4426
      %v11599 = vsel %vm4428, %v11598, %v11597
      %v11600 = vperm.slane %v11098, %v4430
      %v11601 = vsel %vm4432, %v11600, %v11599
      %v11602 = vperm.slane %v11101, %v4434
      %v11603 = vsel %vm4436, %v11602, %v11601
      %v11604 = vperm.slane %v11104, %v4438
      %v11605 = vsel %vm4440, %v11604, %v11603
      %v11606 = vperm.slane %v11107, %v4442
      %v11607 = vsel %vm4444, %v11606, %v11605
      %v11608 = vperm.slane %v11110, %v4446
      %v11609 = vsel %vm4448, %v11608, %v11607
      %v11610 = vperm.slane %v11113, %v4450
      %v11611 = vsel %vm4452, %v11610, %v11609
      %v11612 = vperm.slane %v11116, %v4454
      %v11613 = vsel %vm4456, %v11612, %v11611
      %v11614 = vperm.slane %v11119, %v4458
      %v11615 = vsel %vm4460, %v11614, %v11613
      %v11616 = vsel %vm4927, %v11212, %v11150
      %v11617 = vsel %vm4929, %v11274, %v11616
      %v11618 = vsel %vm4931, %v11336, %v11617
      %v11619 = vsel %vm4933, %v11398, %v11618
      %v11620 = vsel %vm4935, %v11460, %v11619
      %v11621 = vsel %vm4937, %v11522, %v11620
      %v11622 = vsel %vm4939, %v11584, %v11621
      %v11623 = vsel %vm4927, %v11243, %v11181
      %v11624 = vsel %vm4929, %v11305, %v11623
      %v11625 = vsel %vm4931, %v11367, %v11624
      %v11626 = vsel %vm4933, %v11429, %v11625
      %v11627 = vsel %vm4935, %v11491, %v11626
      %v11628 = vsel %vm4937, %v11553, %v11627
      %v11629 = vsel %vm4939, %v11615, %v11628
      %v11630 = vpack.c.b16 %v11622, %v11622
      %v11631 = vpack.c.b16 %v11629, %v11629
      %v11634 = vld [vmem:[%s3] sm:$0xff]
      %v11635 = vld [vmem:[%s3 + $0x8] sm:$0xff]
      %v11636 = vld [vmem:[%s3 + $0x10] sm:$0xff]
      %v11637 = vld [vmem:[%s3 + $0x18] sm:$0xff]
      %v11638 = vld [vmem:[%s3 + $0x20] sm:$0xff]
      %v11639 = vld [vmem:[%s3 + $0x28] sm:$0xff]
      %v11640 = vld [vmem:[%s3 + $0x30] sm:$0xff]
      %v11641 = vld [vmem:[%s3 + $0x38] sm:$0xff]
      %v11642 = vunpack.c.l.bf16 %v11634
      %v11643 = vunpack.c.h.bf16 %v11634
      %v11644 = vunpack.c.l.bf16 %v11635
      %v11645 = vunpack.c.h.bf16 %v11635
      %v11646 = vunpack.c.l.bf16 %v11636
      %v11647 = vunpack.c.h.bf16 %v11636
      %v11648 = vunpack.c.l.bf16 %v11637
      %v11649 = vunpack.c.h.bf16 %v11637
      %v11650 = vunpack.c.l.bf16 %v11638
      %v11651 = vunpack.c.h.bf16 %v11638
      %v11652 = vunpack.c.l.bf16 %v11639
      %v11653 = vunpack.c.h.bf16 %v11639
      %v11654 = vunpack.c.l.bf16 %v11640
      %v11655 = vunpack.c.h.bf16 %v11640
      %v11656 = vunpack.c.l.bf16 %v11641
      %v11657 = vunpack.c.h.bf16 %v11641
      %v11658 = vunpack.c.l.bf16 %v11630
      %v11659 = vunpack.c.l.bf16 %v11631
      %v11660 = vmul.f32 %v11642, %v11658
      %v11661 = vmul.f32 %v11643, %v11659
      %v11662 = vmul.f32 %v11644, %v11658
      %v11663 = vmul.f32 %v11645, %v11659
      %v11664 = vmul.f32 %v11646, %v11658
      %v11665 = vmul.f32 %v11647, %v11659
      %v11666 = vmul.f32 %v11648, %v11658
      %v11667 = vmul.f32 %v11649, %v11659
      %v11668 = vmul.f32 %v11650, %v11658
      %v11669 = vmul.f32 %v11651, %v11659
      %v11670 = vmul.f32 %v11652, %v11658
      %v11671 = vmul.f32 %v11653, %v11659
      %v11672 = vmul.f32 %v11654, %v11658
      %v11673 = vmul.f32 %v11655, %v11659
      %v11674 = vmul.f32 %v11656, %v11658
      %v11675 = vmul.f32 %v11657, %v11659
      %v11676 = vpack.c.bf16 %v11660, %v11660
      %v11677 = vpack.c.bf16 %v11661, %v11661
      %v11678 = vpack.c.bf16 %v11662, %v11662
      %v11679 = vpack.c.bf16 %v11663, %v11663
      %v11680 = vpack.c.bf16 %v11664, %v11664
      %v11681 = vpack.c.bf16 %v11665, %v11665
      %v11682 = vpack.c.bf16 %v11666, %v11666
      %v11683 = vpack.c.bf16 %v11667, %v11667
      %v11684 = vpack.c.bf16 %v11668, %v11668
      %v11685 = vpack.c.bf16 %v11669, %v11669
      %v11686 = vpack.c.bf16 %v11670, %v11670
      %v11687 = vpack.c.bf16 %v11671, %v11671
      %v11688 = vpack.c.bf16 %v11672, %v11672
      %v11689 = vpack.c.bf16 %v11673, %v11673
      %v11690 = vpack.c.bf16 %v11674, %v11674
      %v11691 = vpack.c.bf16 %v11675, %v11675
      %11692 = vmatpush.bf16.msra.mxu0 %v1631
      %11693 = vmatpush.bf16.msra.mxu0 %v1630
      %11694 = vmatpush.bf16.msra.mxu0 %v1629
      %11695 = vmatpush.bf16.msra.mxu0 %v1628
      %11696 = vmatpush.bf16.msra.mxu0 %v1627
      %11697 = vmatpush.bf16.msra.mxu0 %v1626
      %11698 = vmatpush.bf16.msra.mxu0 %v1625
      %11699 = vmatpush.bf16.msra.mxu0 %v1624
      %11700 = vmatmul.bf16.gmra.mxu0 %v11676
      %v11701 = vpop.f32.mrf.mxu0
      %v11702 = vadd.f32 0.0, %v11701
      %v11703 = vpop.f32.mrf.mxu0
      %11704 = vdwg.mxu0
      %11705 = vmatpush.bf16.msra.mxu0 %v1639
      %11706 = vmatpush.bf16.msra.mxu0 %v1638
      %11707 = vmatpush.bf16.msra.mxu0 %v1637
      %11708 = vmatpush.bf16.msra.mxu0 %v1636
      %11709 = vmatpush.bf16.msra.mxu0 %v1635
      %11710 = vmatpush.bf16.msra.mxu0 %v1634
      %11711 = vmatpush.bf16.msra.mxu0 %v1633
      %11712 = vmatpush.bf16.msra.mxu0 %v1632
      %11713 = vmatmul.bf16.gmra.mxu0 %v11677
      %v11714 = vpop.f32.mrf.mxu0
      %v11715 = vadd.f32 %v11702, %v11714
      %v11716 = vpop.f32.mrf.mxu0
      %11717 = vdwg.mxu0
      %11718 = vmatpush.bf16.msra.mxu0 %v1647
      %11719 = vmatpush.bf16.msra.mxu0 %v1646
      %11720 = vmatpush.bf16.msra.mxu0 %v1645
      %11721 = vmatpush.bf16.msra.mxu0 %v1644
      %11722 = vmatpush.bf16.msra.mxu0 %v1643
      %11723 = vmatpush.bf16.msra.mxu0 %v1642
      %11724 = vmatpush.bf16.msra.mxu0 %v1641
      %11725 = vmatpush.bf16.msra.mxu0 %v1640
      %11726 = vmatmul.bf16.gmra.mxu0 %v11678
      %v11727 = vpop.f32.mrf.mxu0
      %v11728 = vadd.f32 %v11715, %v11727
      %v11729 = vpop.f32.mrf.mxu0
      %11730 = vdwg.mxu0
      %11731 = vmatpush.bf16.msra.mxu0 %v1655
      %11732 = vmatpush.bf16.msra.mxu0 %v1654
      %11733 = vmatpush.bf16.msra.mxu0 %v1653
      %11734 = vmatpush.bf16.msra.mxu0 %v1652
      %11735 = vmatpush.bf16.msra.mxu0 %v1651
      %11736 = vmatpush.bf16.msra.mxu0 %v1650
      %11737 = vmatpush.bf16.msra.mxu0 %v1649
      %11738 = vmatpush.bf16.msra.mxu0 %v1648
      %11739 = vmatmul.bf16.gmra.mxu0 %v11679
      %v11740 = vpop.f32.mrf.mxu0
      %v11741 = vadd.f32 %v11728, %v11740
      %v11742 = vpop.f32.mrf.mxu0
      %11743 = vdwg.mxu0
      %11744 = vmatpush.bf16.msra.mxu0 %v1663
      %11745 = vmatpush.bf16.msra.mxu0 %v1662
      %11746 = vmatpush.bf16.msra.mxu0 %v1661
      %11747 = vmatpush.bf16.msra.mxu0 %v1660
      %11748 = vmatpush.bf16.msra.mxu0 %v1659
      %11749 = vmatpush.bf16.msra.mxu0 %v1658
      %11750 = vmatpush.bf16.msra.mxu0 %v1657
      %11751 = vmatpush.bf16.msra.mxu0 %v1656
      %11752 = vmatmul.bf16.gmra.mxu0 %v11680
      %v11753 = vpop.f32.mrf.mxu0
      %v11754 = vadd.f32 %v11741, %v11753
      %v11755 = vpop.f32.mrf.mxu0
      %11756 = vdwg.mxu0
      %11757 = vmatpush.bf16.msra.mxu0 %v1671
      %11758 = vmatpush.bf16.msra.mxu0 %v1670
      %11759 = vmatpush.bf16.msra.mxu0 %v1669
      %11760 = vmatpush.bf16.msra.mxu0 %v1668
      %11761 = vmatpush.bf16.msra.mxu0 %v1667
      %11762 = vmatpush.bf16.msra.mxu0 %v1666
      %11763 = vmatpush.bf16.msra.mxu0 %v1665
      %11764 = vmatpush.bf16.msra.mxu0 %v1664
      %11765 = vmatmul.bf16.gmra.mxu0 %v11681
      %v11766 = vpop.f32.mrf.mxu0
      %v11767 = vadd.f32 %v11754, %v11766
      %v11768 = vpop.f32.mrf.mxu0
      %11769 = vdwg.mxu0
      %11770 = vmatpush.bf16.msra.mxu0 %v1679
      %11771 = vmatpush.bf16.msra.mxu0 %v1678
      %11772 = vmatpush.bf16.msra.mxu0 %v1677
      %11773 = vmatpush.bf16.msra.mxu0 %v1676
      %11774 = vmatpush.bf16.msra.mxu0 %v1675
      %11775 = vmatpush.bf16.msra.mxu0 %v1674
      %11776 = vmatpush.bf16.msra.mxu0 %v1673
      %11777 = vmatpush.bf16.msra.mxu0 %v1672
      %11778 = vmatmul.bf16.gmra.mxu0 %v11682
      %v11779 = vpop.f32.mrf.mxu0
      %v11780 = vadd.f32 %v11767, %v11779
      %v11781 = vpop.f32.mrf.mxu0
      %11782 = vdwg.mxu0
      %11783 = vmatpush.bf16.msra.mxu0 %v1687
      %11784 = vmatpush.bf16.msra.mxu0 %v1686
      %11785 = vmatpush.bf16.msra.mxu0 %v1685
      %11786 = vmatpush.bf16.msra.mxu0 %v1684
      %11787 = vmatpush.bf16.msra.mxu0 %v1683
      %11788 = vmatpush.bf16.msra.mxu0 %v1682
      %11789 = vmatpush.bf16.msra.mxu0 %v1681
      %11790 = vmatpush.bf16.msra.mxu0 %v1680
      %11791 = vmatmul.bf16.gmra.mxu0 %v11683
      %v11792 = vpop.f32.mrf.mxu0
      %v11793 = vadd.f32 %v11780, %v11792
      %v11794 = vpop.f32.mrf.mxu0
      %11795 = vdwg.mxu0
      %11796 = vmatpush.bf16.msra.mxu0 %v1695
      %11797 = vmatpush.bf16.msra.mxu0 %v1694
      %11798 = vmatpush.bf16.msra.mxu0 %v1693
      %11799 = vmatpush.bf16.msra.mxu0 %v1692
      %11800 = vmatpush.bf16.msra.mxu0 %v1691
      %11801 = vmatpush.bf16.msra.mxu0 %v1690
      %11802 = vmatpush.bf16.msra.mxu0 %v1689
      %11803 = vmatpush.bf16.msra.mxu0 %v1688
      %11804 = vmatmul.bf16.gmra.mxu0 %v11684
      %v11805 = vpop.f32.mrf.mxu0
      %v11806 = vadd.f32 %v11793, %v11805
      %v11807 = vpop.f32.mrf.mxu0
      %11808 = vdwg.mxu0
      %11809 = vmatpush.bf16.msra.mxu0 %v1703
      %11810 = vmatpush.bf16.msra.mxu0 %v1702
      %11811 = vmatpush.bf16.msra.mxu0 %v1701
      %11812 = vmatpush.bf16.msra.mxu0 %v1700
      %11813 = vmatpush.bf16.msra.mxu0 %v1699
      %11814 = vmatpush.bf16.msra.mxu0 %v1698
      %11815 = vmatpush.bf16.msra.mxu0 %v1697
      %11816 = vmatpush.bf16.msra.mxu0 %v1696
      %11817 = vmatmul.bf16.gmra.mxu0 %v11685
      %v11818 = vpop.f32.mrf.mxu0
      %v11819 = vadd.f32 %v11806, %v11818
      %v11820 = vpop.f32.mrf.mxu0
      %11821 = vdwg.mxu0
      %11822 = vmatpush.bf16.msra.mxu0 %v1711
      %11823 = vmatpush.bf16.msra.mxu0 %v1710
      %11824 = vmatpush.bf16.msra.mxu0 %v1709
      %11825 = vmatpush.bf16.msra.mxu0 %v1708
      %11826 = vmatpush.bf16.msra.mxu0 %v1707
      %11827 = vmatpush.bf16.msra.mxu0 %v1706
      %11828 = vmatpush.bf16.msra.mxu0 %v1705
      %11829 = vmatpush.bf16.msra.mxu0 %v1704
      %11830 = vmatmul.bf16.gmra.mxu0 %v11686
      %v11831 = vpop.f32.mrf.mxu0
      %v11832 = vadd.f32 %v11819, %v11831
      %v11833 = vpop.f32.mrf.mxu0
      %11834 = vdwg.mxu0
      %11835 = vmatpush.bf16.msra.mxu0 %v1719
      %11836 = vmatpush.bf16.msra.mxu0 %v1718
      %11837 = vmatpush.bf16.msra.mxu0 %v1717
      %11838 = vmatpush.bf16.msra.mxu0 %v1716
      %11839 = vmatpush.bf16.msra.mxu0 %v1715
      %11840 = vmatpush.bf16.msra.mxu0 %v1714
      %11841 = vmatpush.bf16.msra.mxu0 %v1713
      %11842 = vmatpush.bf16.msra.mxu0 %v1712
      %11843 = vmatmul.bf16.gmra.mxu0 %v11687
      %v11844 = vpop.f32.mrf.mxu0
      %v11845 = vadd.f32 %v11832, %v11844
      %v11846 = vpop.f32.mrf.mxu0
      %11847 = vdwg.mxu0
      %11848 = vmatpush.bf16.msra.mxu0 %v1727
      %11849 = vmatpush.bf16.msra.mxu0 %v1726
      %11850 = vmatpush.bf16.msra.mxu0 %v1725
      %11851 = vmatpush.bf16.msra.mxu0 %v1724
      %11852 = vmatpush.bf16.msra.mxu0 %v1723
      %11853 = vmatpush.bf16.msra.mxu0 %v1722
      %11854 = vmatpush.bf16.msra.mxu0 %v1721
      %11855 = vmatpush.bf16.msra.mxu0 %v1720
      %11856 = vmatmul.bf16.gmra.mxu0 %v11688
      %v11857 = vpop.f32.mrf.mxu0
      %v11858 = vadd.f32 %v11845, %v11857
      %v11859 = vpop.f32.mrf.mxu0
      %11860 = vdwg.mxu0
      %11861 = vmatpush.bf16.msra.mxu0 %v1735
      %11862 = vmatpush.bf16.msra.mxu0 %v1734
      %11863 = vmatpush.bf16.msra.mxu0 %v1733
      %11864 = vmatpush.bf16.msra.mxu0 %v1732
      %11865 = vmatpush.bf16.msra.mxu0 %v1731
      %11866 = vmatpush.bf16.msra.mxu0 %v1730
      %11867 = vmatpush.bf16.msra.mxu0 %v1729
      %11868 = vmatpush.bf16.msra.mxu0 %v1728
      %11869 = vmatmul.bf16.gmra.mxu0 %v11689
      %v11870 = vpop.f32.mrf.mxu0
      %v11871 = vadd.f32 %v11858, %v11870
      %v11872 = vpop.f32.mrf.mxu0
      %11873 = vdwg.mxu0
      %11874 = vmatpush.bf16.msra.mxu0 %v1743
      %11875 = vmatpush.bf16.msra.mxu0 %v1742
      %11876 = vmatpush.bf16.msra.mxu0 %v1741
      %11877 = vmatpush.bf16.msra.mxu0 %v1740
      %11878 = vmatpush.bf16.msra.mxu0 %v1739
      %11879 = vmatpush.bf16.msra.mxu0 %v1738
      %11880 = vmatpush.bf16.msra.mxu0 %v1737
      %11881 = vmatpush.bf16.msra.mxu0 %v1736
      %11882 = vmatmul.bf16.gmra.mxu0 %v11690
      %v11883 = vpop.f32.mrf.mxu0
      %v11884 = vadd.f32 %v11871, %v11883
      %v11885 = vpop.f32.mrf.mxu0
      %11886 = vdwg.mxu0
      %11887 = vmatpush.bf16.msra.mxu0 %v1751
      %11888 = vmatpush.bf16.msra.mxu0 %v1750
      %11889 = vmatpush.bf16.msra.mxu0 %v1749
      %11890 = vmatpush.bf16.msra.mxu0 %v1748
      %11891 = vmatpush.bf16.msra.mxu0 %v1747
      %11892 = vmatpush.bf16.msra.mxu0 %v1746
      %11893 = vmatpush.bf16.msra.mxu0 %v1745
      %11894 = vmatpush.bf16.msra.mxu0 %v1744
      %11895 = vmatmul.bf16.gmra.mxu0 %v11691
      %v11896 = vpop.f32.mrf.mxu0
      %v11897 = vadd.f32 %v11884, %v11896
      %v11898 = vpop.f32.mrf.mxu0
      %11899 = vdwg.mxu0
      %v11900 = vmul.f32 %v1091, %v11897
      %v11901 = vpack.c.bf16 %v11900, %v11900
      %v11902 = vld [vmem:[%s10] sm:$0xff]
      %v11903 = vld [vmem:[%s10 + $0x8] sm:$0xff]
      %v11904 = vld [vmem:[%s10 + $0x10] sm:$0xff]
      %v11905 = vld [vmem:[%s10 + $0x18] sm:$0xff]
      %v11906 = vld [vmem:[%s10 + $0x20] sm:$0xff]
      %v11907 = vld [vmem:[%s10 + $0x28] sm:$0xff]
      %v11908 = vld [vmem:[%s10 + $0x30] sm:$0xff]
      %v11909 = vld [vmem:[%s10 + $0x38] sm:$0xff]
      %v11910 = vld [vmem:[%s10 + $0x40] sm:$0xff]
      %v11911 = vld [vmem:[%s10 + $0x48] sm:$0xff]
      %v11912 = vld [vmem:[%s10 + $0x50] sm:$0xff]
      %v11913 = vld [vmem:[%s10 + $0x58] sm:$0xff]
      %v11914 = vld [vmem:[%s10 + $0x60] sm:$0xff]
      %v11915 = vld [vmem:[%s10 + $0x68] sm:$0xff]
      %v11916 = vld [vmem:[%s10 + $0x70] sm:$0xff]
      %v11917 = vld [vmem:[%s10 + $0x78] sm:$0xff]
      %v11918 = vld [vmem:[%s10 + $0x80] sm:$0xff]
      %v11919 = vld [vmem:[%s10 + $0x88] sm:$0xff]
      %v11920 = vld [vmem:[%s10 + $0x90] sm:$0xff]
      %v11921 = vld [vmem:[%s10 + $0x98] sm:$0xff]
      %v11922 = vld [vmem:[%s10 + $0xa0] sm:$0xff]
      %v11923 = vld [vmem:[%s10 + $0xa8] sm:$0xff]
      %v11924 = vld [vmem:[%s10 + $0xb0] sm:$0xff]
      %v11925 = vld [vmem:[%s10 + $0xb8] sm:$0xff]
      %v11926 = vld [vmem:[%s10 + $0xc0] sm:$0xff]
      %v11927 = vld [vmem:[%s10 + $0xc8] sm:$0xff]
      %v11928 = vld [vmem:[%s10 + $0xd0] sm:$0xff]
      %v11929 = vld [vmem:[%s10 + $0xd8] sm:$0xff]
      %v11930 = vld [vmem:[%s10 + $0xe0] sm:$0xff]
      %v11931 = vld [vmem:[%s10 + $0xe8] sm:$0xff]
      %v11932 = vld [vmem:[%s10 + $0xf0] sm:$0xff]
      %v11933 = vld [vmem:[%s10 + $0xf8] sm:$0xff]
      %v11966 = vunpack.c.l.b16 %v11902
      %v11967 = vunpack.c.h.b16 %v11902
      %v11968 = vunpack.c.l.b16 %v11903
      %v11969 = vunpack.c.h.b16 %v11903
      %v11970 = vunpack.c.l.b16 %v11904
      %v11971 = vunpack.c.h.b16 %v11904
      %v11972 = vunpack.c.l.b16 %v11905
      %v11973 = vunpack.c.h.b16 %v11905
      %v11974 = vunpack.c.l.b16 %v11906
      %v11975 = vunpack.c.h.b16 %v11906
      %v11976 = vunpack.c.l.b16 %v11907
      %v11977 = vunpack.c.h.b16 %v11907
      %v11978 = vunpack.c.l.b16 %v11908
      %v11979 = vunpack.c.h.b16 %v11908
      %v11980 = vunpack.c.l.b16 %v11909
      %v11981 = vunpack.c.h.b16 %v11909
      %v11982 = vunpack.c.l.b16 %v11910
      %v11983 = vunpack.c.h.b16 %v11910
      %v11984 = vunpack.c.l.b16 %v11911
      %v11985 = vunpack.c.h.b16 %v11911
      %v11986 = vunpack.c.l.b16 %v11912
      %v11987 = vunpack.c.h.b16 %v11912
      %v11988 = vunpack.c.l.b16 %v11913
      %v11989 = vunpack.c.h.b16 %v11913
      %v11990 = vunpack.c.l.b16 %v11914
      %v11991 = vunpack.c.h.b16 %v11914
      %v11992 = vunpack.c.l.b16 %v11915
      %v11993 = vunpack.c.h.b16 %v11915
      %v11994 = vunpack.c.l.b16 %v11916
      %v11995 = vunpack.c.h.b16 %v11916
      %v11996 = vunpack.c.l.b16 %v11917
      %v11997 = vunpack.c.h.b16 %v11917
      %v11998 = vunpack.c.l.b16 %v11918
      %v11999 = vunpack.c.h.b16 %v11918
      %v12000 = vunpack.c.l.b16 %v11919
      %v12001 = vunpack.c.h.b16 %v11919
      %v12002 = vunpack.c.l.b16 %v11920
      %v12003 = vunpack.c.h.b16 %v11920
      %v12004 = vunpack.c.l.b16 %v11921
      %v12005 = vunpack.c.h.b16 %v11921
      %v12006 = vunpack.c.l.b16 %v11922
      %v12007 = vunpack.c.h.b16 %v11922
      %v12008 = vunpack.c.l.b16 %v11923
      %v12009 = vunpack.c.h.b16 %v11923
      %v12010 = vunpack.c.l.b16 %v11924
      %v12011 = vunpack.c.h.b16 %v11924
      %v12012 = vunpack.c.l.b16 %v11925
      %v12013 = vunpack.c.h.b16 %v11925
      %v12014 = vunpack.c.l.b16 %v11926
      %v12015 = vunpack.c.h.b16 %v11926
      %v12016 = vunpack.c.l.b16 %v11927
      %v12017 = vunpack.c.h.b16 %v11927
      %v12018 = vunpack.c.l.b16 %v11928
      %v12019 = vunpack.c.h.b16 %v11928
      %v12020 = vunpack.c.l.b16 %v11929
      %v12021 = vunpack.c.h.b16 %v11929
      %v12022 = vunpack.c.l.b16 %v11930
      %v12023 = vunpack.c.h.b16 %v11930
      %v12024 = vunpack.c.l.b16 %v11931
      %v12025 = vunpack.c.h.b16 %v11931
      %v12026 = vunpack.c.l.b16 %v11932
      %v12027 = vunpack.c.h.b16 %v11932
      %v12028 = vunpack.c.l.b16 %v11933
      %v12029 = vunpack.c.h.b16 %v11933
      %v12030 = vpack.c.b16 %v11970, %v11966
      %v12031 = vpack.c.b16 %v11971, %v11967
      %v12032 = vpack.c.b16 %v11972, %v11968
      %v12033 = vpack.c.b16 %v11973, %v11969
      %v12034 = vpack.c.b16 %v11978, %v11974
      %v12035 = vpack.c.b16 %v11979, %v11975
      %v12036 = vpack.c.b16 %v11980, %v11976
      %v12037 = vpack.c.b16 %v11981, %v11977
      %v12038 = vpack.c.b16 %v11986, %v11982
      %v12039 = vpack.c.b16 %v11987, %v11983
      %v12040 = vpack.c.b16 %v11988, %v11984
      %v12041 = vpack.c.b16 %v11989, %v11985
      %v12042 = vpack.c.b16 %v11994, %v11990
      %v12043 = vpack.c.b16 %v11995, %v11991
      %v12044 = vpack.c.b16 %v11996, %v11992
      %v12045 = vpack.c.b16 %v11997, %v11993
      %v12046 = vpack.c.b16 %v12002, %v11998
      %v12047 = vpack.c.b16 %v12003, %v11999
      %v12048 = vpack.c.b16 %v12004, %v12000
      %v12049 = vpack.c.b16 %v12005, %v12001
      %v12050 = vpack.c.b16 %v12010, %v12006
      %v12051 = vpack.c.b16 %v12011, %v12007
      %v12052 = vpack.c.b16 %v12012, %v12008
      %v12053 = vpack.c.b16 %v12013, %v12009
      %v12054 = vpack.c.b16 %v12018, %v12014
      %v12055 = vpack.c.b16 %v12019, %v12015
      %v12056 = vpack.c.b16 %v12020, %v12016
      %v12057 = vpack.c.b16 %v12021, %v12017
      %v12058 = vpack.c.b16 %v12026, %v12022
      %v12059 = vpack.c.b16 %v12027, %v12023
      %v12060 = vpack.c.b16 %v12028, %v12024
      %v12061 = vpack.c.b16 %v12029, %v12025
      %12094 = vmatpush.bf16.msra.mxu0 %v12058
      %12095 = vmatpush.bf16.msra.mxu0 %v12054
      %12096 = vmatpush.bf16.msra.mxu0 %v12050
      %12097 = vmatpush.bf16.msra.mxu0 %v12046
      %12098 = vmatpush.bf16.msra.mxu0 %v12042
      %12099 = vmatpush.bf16.msra.mxu0 %v12038
      %12100 = vmatpush.bf16.msra.mxu0 %v12034
      %12101 = vmatpush.bf16.msra.mxu0 %v12030
      %12102 = vmatmul.bf16.gmra.mxu0 %v11901
      %v12103 = vpop.f32.mrf.mxu0
      %v12104 = vadd.f32 %v1031, %v12103
      %v12105 = vpop.f32.mrf.mxu0
      %12106 = vdwg.mxu0
      %12107 = vmatpush.bf16.msra.mxu0 %v12059
      %12108 = vmatpush.bf16.msra.mxu0 %v12055
      %12109 = vmatpush.bf16.msra.mxu0 %v12051
      %12110 = vmatpush.bf16.msra.mxu0 %v12047
      %12111 = vmatpush.bf16.msra.mxu0 %v12043
      %12112 = vmatpush.bf16.msra.mxu0 %v12039
      %12113 = vmatpush.bf16.msra.mxu0 %v12035
      %12114 = vmatpush.bf16.msra.mxu0 %v12031
      %12115 = vmatmul.bf16.gmra.mxu0 %v11901
      %v12116 = vpop.f32.mrf.mxu0
      %v12117 = vadd.f32 %v1044, %v12116
      %v12118 = vpop.f32.mrf.mxu0
      %12119 = vdwg.mxu0
      %12120 = vmatpush.bf16.msra.mxu0 %v12060
      %12121 = vmatpush.bf16.msra.mxu0 %v12056
      %12122 = vmatpush.bf16.msra.mxu0 %v12052
      %12123 = vmatpush.bf16.msra.mxu0 %v12048
      %12124 = vmatpush.bf16.msra.mxu0 %v12044
      %12125 = vmatpush.bf16.msra.mxu0 %v12040
      %12126 = vmatpush.bf16.msra.mxu0 %v12036
      %12127 = vmatpush.bf16.msra.mxu0 %v12032
      %12128 = vmatmul.bf16.gmra.mxu0 %v11901
      %v12129 = vpop.f32.mrf.mxu0
      %v12130 = vadd.f32 %v1057, %v12129
      %v12131 = vpop.f32.mrf.mxu0
      %12132 = vdwg.mxu0
      %12133 = vmatpush.bf16.msra.mxu0 %v12061
      %12134 = vmatpush.bf16.msra.mxu0 %v12057
      %12135 = vmatpush.bf16.msra.mxu0 %v12053
      %12136 = vmatpush.bf16.msra.mxu0 %v12049
      %12137 = vmatpush.bf16.msra.mxu0 %v12045
      %12138 = vmatpush.bf16.msra.mxu0 %v12041
      %12139 = vmatpush.bf16.msra.mxu0 %v12037
      %12140 = vmatpush.bf16.msra.mxu0 %v12033
      %12141 = vmatmul.bf16.gmra.mxu0 %v11901
      %v12142 = vpop.f32.mrf.mxu0
      %v12143 = vadd.f32 %v1070, %v12142
      %v12144 = vpop.f32.mrf.mxu0
      %12145 = vdwg.mxu0
      %v12146 = vxor.u32 %v12104, 2147483648
      %v12147 = vmul.f32 %v12146, 1.442695
      %v12148 = vpow.pop %v12147
      %v12149 = vadd.f32 %v12148, 1.0
      %v12150 = vrcp.pop %v12149
      %v12151 = vmul.f32 %v12149, %v12150
      %v12152 = vsub.f32 1.0, %v12151
      %v12153 = vmul.f32 %v12150, %v12152
      %v12154 = vadd.f32 %v12150, %v12153
      %vm12155 = vweird.f32 %v12149
      %vm12156 = vweird.f32 %v12150
      %vm12157 = vmor %vm12155, %vm12156
      %v12158 = vsel %vm12157, %v12150, %v12154
      %v12159 = vand.u32 2147483647, %v12149
      %vm12160 = vcmp.eq.f32.partialorder %v12159, 8.507059e+37
      %v12161 = vand.u32 %v12149, 2147483648
      %v12162 = vor.u32 1.1754944e-38, %v12161
      %v12163 = vsel %vm12160, %v12162, %v12158
      %v12164 = vmul.f32 1.0, %v12163
      %v12165 = vxor.u32 %v12117, 2147483648
      %v12166 = vmul.f32 %v12165, 1.442695
      %v12167 = vpow.pop %v12166
      %v12168 = vadd.f32 %v12167, 1.0
      %v12169 = vrcp.pop %v12168
      %v12170 = vmul.f32 %v12168, %v12169
      %v12171 = vsub.f32 1.0, %v12170
      %v12172 = vmul.f32 %v12169, %v12171
      %v12173 = vadd.f32 %v12169, %v12172
      %vm12174 = vweird.f32 %v12168
      %vm12175 = vweird.f32 %v12169
      %vm12176 = vmor %vm12174, %vm12175
      %v12177 = vsel %vm12176, %v12169, %v12173
      %v12178 = vand.u32 2147483647, %v12168
      %vm12179 = vcmp.eq.f32.partialorder %v12178, 8.507059e+37
      %v12180 = vand.u32 %v12168, 2147483648
      %v12181 = vor.u32 1.1754944e-38, %v12180
      %v12182 = vsel %vm12179, %v12181, %v12177
      %v12183 = vmul.f32 1.0, %v12182
      %v12184 = vtanh.pop %v12130
      %v12185 = vxor.u32 %v12143, 2147483648
      %v12186 = vmul.f32 %v12185, 1.442695
      %v12187 = vpow.pop %v12186
      %v12188 = vadd.f32 %v12187, 1.0
      %v12189 = vrcp.pop %v12188
      %v12190 = vmul.f32 %v12188, %v12189
      %v12191 = vsub.f32 1.0, %v12190
      %v12192 = vmul.f32 %v12189, %v12191
      %v12193 = vadd.f32 %v12189, %v12192
      %vm12194 = vweird.f32 %v12188
      %vm12195 = vweird.f32 %v12189
      %vm12196 = vmor %vm12194, %vm12195
      %v12197 = vsel %vm12196, %v12189, %v12193
      %v12198 = vand.u32 2147483647, %v12188
      %vm12199 = vcmp.eq.f32.partialorder %v12198, 8.507059e+37
      %v12200 = vand.u32 %v12188, 2147483648
      %v12201 = vor.u32 1.1754944e-38, %v12200
      %v12202 = vsel %vm12199, %v12201, %v12197
      %v12203 = vmul.f32 1.0, %v12202
      %v12204 = vmul.f32 %v12183, %v691
      %v12205 = vmul.f32 %v12164, %v12184
      %v12206 = vadd.f32 %v12204, %v12205
      %v12207 = vtanh.pop %v12206
      %v12208 = vmul.f32 %v12203, %v12207
      %12209 = vst [vmem:[#allocation2] sm:$0xff] %v12208
      %12210 = vst [vmem:[#allocation3] sm:$0xff] %v12206
      %12211 = vst [vmem:[%s420] sm:$0xff] %v12208
      %p12212 = scmp.lt.s32.totalorder %s25, 3
      %s12213 = scalar_select %p12212, %s25, 3
      %s12214 = smul.addr %s12213, 8
      %s12215 = scalar_lea.vmem %s11, %s12214
      %p12216 = scmp.lt.s32.totalorder %s25, 3
      %s12217 = scalar_select %p12216, %s25, 3
      %s12218 = smul.addr %s12217, 2
      %s12219 = smul.addr %s12218, 8
      %s12220 = scalar_lea.vmem %s12, %s12219
      // Predicated region
      $region69: #{decoder_forward.1} parent=63 // pred_check
        %p12221 = pneg %p279
      $region70: #{decoder_forward.1} parent=63 // pred_check_branch
        %12223 = sbr.rel (%p12221) target = $region72
      $region71: #{decoder_forward.1} parent=63 // pred_region
        _
      $region72: #{decoder_forward.1} parent=63 // pred_fallthru
        _
      // Predicated region
      $region73: #{decoder_forward.1} parent=63 // pred_check
        %p12224 = pneg %p305
      $region74: #{decoder_forward.1} parent=63 // pred_check_branch
        %12226 = sbr.rel (%p12224) target = $region76
      $region75: #{decoder_forward.1} parent=63 // pred_region
        _
      $region76: #{decoder_forward.1} parent=63 // pred_fallthru
        _
    $region64: #{decoder_forward.1} parent=5 // pred_fallthru
      _
    %p12227 = scmp.le.s32.totalorder 2, %s20
    // Predicated region
    $region77: #{decoder_forward.1} parent=5 // pred_check
      %p12228 = pneg %p12227
    $region78: #{decoder_forward.1} parent=5 // pred_check_branch
      %12230 = sbr.rel (%p12228) target = $region80
    $region79: #{decoder_forward.1} parent=5 // pred_region
      %s12231 = ssub.s32 %s20, 2
      // Predicated region
      $region81: #{decoder_forward.1} parent=79 // pred_check
        %p12232 = pneg %p285
      $region82: #{decoder_forward.1} parent=79 // pred_check_branch
        %12234 = sbr.rel (%p12232) target = $region84
      $region83: #{decoder_forward.1} parent=79 // pred_region
        %p12235 = scmp.lt.s32.totalorder %s26, 3
        %s12236 = scalar_select %p12235, %s26, 3
        %s12237 = smul.addr %s12236, 8
        %s12238 = scalar_lea.vmem %s11, %s12237
      $region84: #{decoder_forward.1} parent=79 // pred_fallthru
        _
      // Predicated region
      $region85: #{decoder_forward.1} parent=79 // pred_check
        %p12239 = pneg %p311
      $region86: #{decoder_forward.1} parent=79 // pred_check_branch
        %12241 = sbr.rel (%p12239) target = $region88
      $region87: #{decoder_forward.1} parent=79 // pred_region
        %p12242 = scmp.lt.s32.totalorder %s26, 3
        %s12243 = scalar_select %p12242, %s26, 3
        %s12244 = smul.addr %s12243, 2
        %s12245 = smul.addr %s12244, 8
        %s12246 = scalar_lea.vmem %s12, %s12245
      $region88: #{decoder_forward.1} parent=79 // pred_fallthru
        _
    $region80: #{decoder_forward.1} parent=5 // pred_fallthru
      _
  $region6: #{decoder_forward.1} parent=0 // loop_footer
    %s24 = sadd.s32 1, %s20
  $region7: #{decoder_forward.1} parent=0 // loop_footer_branch
    %19 = sbr.rel target = $region3
  $region8: #{decoder_forward.1} parent=0 // loop_exit
    _

</llo_original>
